<compile_context>
chip_gen: v7x
topology: tpu7x:2x2x1
jax: 0.10.0
libtpu: 0.0.40
codegen_flags: <defaults>
</compile_context>

<pallas_src>
import functools

import jax
import jax.numpy as jnp
from jax.experimental import pallas as pl
from jax.experimental.pallas import tpu as pltpu


# ------------------------------ configuration ------------------------------ #

class Config:
    img_size = 16
    patch = 4
    in_chans = 3
    embed_dim = 32   # == num_features
    heads = 4
    mlp_ratio = 2


HEAD_PAD = 128       # lane-dense padding for the 1-wide regression head output
LN_EPS = 1e-6        # timm ViT uses LayerNorm(eps=1e-6)

# Rows of the packed per-model vector table (f32, width HEAD_PAD).
(ROW_LN1_G, ROW_LN1_B, ROW_PROJ_B, ROW_LN2_G, ROW_LN2_B,
 ROW_FC1_B, ROW_FC2_B, ROW_LNF_G, ROW_LNF_B, ROW_HEAD_B) = range(10)
N_VEC_ROWS = 10


# --------------------------- in-kernel math helpers ------------------------- #

def _erf(x):
    # Abramowitz & Stegun 7.1.26 polynomial approximation (|err| < ~1e-6 with the
    # approx reciprocal).  exp goes to the EUP; the divide is replaced by
    # pl.reciprocal(approx=True) which also runs on the (otherwise idle) EUP,
    # keeping VALU slots free for the polynomial.
    a1, a2, a3, a4, a5 = 0.254829592, -0.284496736, 1.421413741, -1.453152027, 1.061405429
    pc = 0.3275911
    sign = jnp.where(x >= 0.0, 1.0, -1.0)
    ax = x * sign
    t = pl.reciprocal(1.0 + pc * ax, approx=True)
    poly = ((((a5 * t + a4) * t + a3) * t + a2) * t + a1) * t
    return sign * (1.0 - poly * jnp.exp(-ax * ax))


def _gelu_exact(x):
    # erf-based GELU (PyTorch nn.GELU default), not the tanh approximation.
    return 0.5 * x * (1.0 + _erf(x * 0.7071067811865476))


def _layernorm(x, g, b, eps=LN_EPS):
    mean = jnp.mean(x, axis=-1, keepdims=True)
    var = jnp.mean(jnp.square(x - mean), axis=-1, keepdims=True)
    return (x - mean) * jax.lax.rsqrt(var + eps) * g + b


# ------------------------------- fused kernel ------------------------------- #

def _vit_fused_kernel(patches_ref, posb_ref, patch_w_ref,
                      wqkv_ref, bqkv_ref, wproj_ref,
                      fc1_w_ref, fc2_w_ref, head_w_ref, vecs_ref,
                      out_ref,
                      *, bt, seq, heads, head_dim, mlp_hidden):
    f32 = jnp.float32
    bf16 = jnp.bfloat16
    D = heads * head_dim
    N = bt * seq                       # rows per grid step (Bt batch elems stacked)

    def vrow(r, w):
        # static (1, w) slice of the packed vector table — broadcasts over rows
        return vecs_ref[r:r + 1, :w]

    # --- patch embedding + positional embedding (Bt elements stacked on rows) ---
    tok = (jnp.dot(patches_ref[...], patch_w_ref[...],
                   preferred_element_type=f32)
           + posb_ref[...])                                          # (N, D) f32

    # --- pre-norm attention block ---
    h1 = _layernorm(tok, vrow(ROW_LN1_G, D), vrow(ROW_LN1_B, D))
    h1b = h1.astype(bf16)

    attn = jnp.zeros((N, D), f32)
    for hi in range(heads):                                          # static unroll
        # Per-head Q/K/V via leading-dim-indexed weights (no runtime lane slices).
        # Softmax scale is already folded into the Q weights/bias.
        q = (jnp.dot(h1b, wqkv_ref[hi], preferred_element_type=f32)
             + bqkv_ref[hi:hi + 1, :]).reshape(bt, seq, head_dim)
        k = (jnp.dot(h1b, wqkv_ref[heads + hi], preferred_element_type=f32)
             + bqkv_ref[heads + hi:heads + hi + 1, :]).reshape(bt, seq, head_dim)
        v = (jnp.dot(h1b, wqkv_ref[2 * heads + hi], preferred_element_type=f32)
             + bqkv_ref[2 * heads + hi:2 * heads + hi + 1, :]).reshape(bt, seq, head_dim)

        # Batched over the Bt batch elements; contraction on the feature dim
        # (no explicit K transpose).
        s = jnp.einsum('bqd,bkd->bqk', q.astype(bf16), k.astype(bf16),
                       preferred_element_type=f32)                   # (Bt, S, S)
        s = s - jnp.max(s, axis=-1, keepdims=True)
        p = jnp.exp(s)
        inv = pl.reciprocal(jnp.sum(p, axis=-1, keepdims=True), approx=True)
        o = jnp.einsum('bqk,bkd->bqd', p.astype(bf16), v.astype(bf16),
                       preferred_element_type=f32) * inv             # (Bt, S, Dh)

        # Head merge via the out-projection's per-head row block — no concatenate.
        attn = attn + jnp.dot(o.reshape(N, head_dim).astype(bf16),
                              wproj_ref[hi], preferred_element_type=f32)
    attn = attn + vrow(ROW_PROJ_B, D)
    x2 = tok + attn                                                  # residual

    # --- pre-norm MLP block (exact-erf GELU) ---
    h2 = _layernorm(x2, vrow(ROW_LN2_G, D), vrow(ROW_LN2_B, D))
    m = (jnp.dot(h2.astype(bf16), fc1_w_ref[...], preferred_element_type=f32)
         + vrow(ROW_FC1_B, mlp_hidden))
    m = _gelu_exact(m)
    m = (jnp.dot(m.astype(bf16), fc2_w_ref[...], preferred_element_type=f32)
         + vrow(ROW_FC2_B, D))
    x3 = x2 + m                                                      # residual

    # --- final LN + per-element mean pool + regression head (lane-padded) ---
    xf = _layernorm(x3, vrow(ROW_LNF_G, D), vrow(ROW_LNF_B, D))
    feats = jnp.mean(xf.reshape(bt, seq, D), axis=1)                 # (Bt, D)
    out = (jnp.dot(feats.astype(bf16), head_w_ref[...],
                   preferred_element_type=f32)
           + vrow(ROW_HEAD_B, HEAD_PAD))                             # (Bt, 128)
    out_ref[...] = out


# ------------------------------ model wrapper ------------------------------- #

def init_params(key, cfg):
    D = cfg.embed_dim
    P = cfg.patch
    patch_dim = cfg.in_chans * P * P
    Hd = D * cfg.mlp_ratio
    S = (cfg.img_size // P) ** 2
    keys = jax.random.split(key, 8)
    s = 0.02
    return dict(
        patch_w=jax.random.normal(keys[0], (patch_dim, D), jnp.float32) * s,
        patch_b=jnp.zeros((D,), jnp.float32),
        pos=jax.random.normal(keys[1], (S, D), jnp.float32) * s,
        ln1_g=jnp.ones((D,), jnp.float32), ln1_b=jnp.zeros((D,), jnp.float32),
        qkv_w=jax.random.normal(keys[2], (D, 3 * D), jnp.float32) * s,
        qkv_b=jnp.zeros((3 * D,), jnp.float32),
        proj_w=jax.random.normal(keys[3], (D, D), jnp.float32) * s,
        proj_b=jnp.zeros((D,), jnp.float32),
        ln2_g=jnp.ones((D,), jnp.float32), ln2_b=jnp.zeros((D,), jnp.float32),
        fc1_w=jax.random.normal(keys[4], (D, Hd), jnp.float32) * s,
        fc1_b=jnp.zeros((Hd,), jnp.float32),
        fc2_w=jax.random.normal(keys[5], (Hd, D), jnp.float32) * s,
        fc2_b=jnp.zeros((D,), jnp.float32),
        lnf_g=jnp.ones((D,), jnp.float32), lnf_b=jnp.zeros((D,), jnp.float32),
        # self.linear = nn.Linear(num_features, 1)
        head_w=jax.random.normal(keys[6], (D, 1), jnp.float32) * s,
        head_b=jnp.zeros((1,), jnp.float32),
    )


def transformer_model_forward(params, x, cfg, bt=8):
    """x: (B, 3, H, W) float32 (NCHW, like PyTorch) -> (B, 1)."""
    B, C, H, W = x.shape
    P, D, Hn = cfg.patch, cfg.embed_dim, cfg.heads
    Dh = D // Hn
    S = (H // P) * (W // P)
    patch_dim = C * P * P
    Hd = D * cfg.mlp_ratio
    bf16 = jnp.bfloat16

    # Batch-stacking: Bt elements per grid step -> M = Bt*S = 128 rows per matmul.
    Bt = min(bt, B)
    B_pad = ((B + Bt - 1) // Bt) * Bt
    G = B_pad // Bt
    N = Bt * S

    # patchify NCHW -> (B_pad*S, patch_dim) and cast the (only) streamed input to bf16.
    patches = x.reshape(B, C, H // P, P, W // P, P)
    patches = patches.transpose(0, 2, 4, 1, 3, 5).reshape(B, S, patch_dim)
    if B_pad != B:
        patches = jnp.concatenate(
            [patches, jnp.zeros((B_pad - B, S, patch_dim), patches.dtype)], axis=0)
    patches = patches.reshape(B_pad * S, patch_dim).astype(bf16)

    # ---------- trace-time weight packing (free; no in-kernel cost) ----------
    scale = 1.0 / float(Dh) ** 0.5
    # qkv columns are [Q heads | K heads | V heads]; split per head and fold the
    # softmax scale into the Q weights/bias.
    wqkv = (params["qkv_w"].reshape(D, 3, Hn, Dh)
            .transpose(1, 2, 0, 3).reshape(3 * Hn, D, Dh))
    bqkv = params["qkv_b"].reshape(3 * Hn, Dh)
    wqkv = wqkv.at[:Hn].multiply(scale)
    bqkv = bqkv.at[:Hn].multiply(scale)
    wproj = params["proj_w"].reshape(Hn, Dh, D)          # per-head row blocks

    # pos embedding + patch bias, pre-tiled for Bt stacked elements (resident).
    posb = jnp.tile(params["pos"], (Bt, 1)) + params["patch_b"][None, :]   # (N, D)

    head_w_pad = jnp.zeros((D, HEAD_PAD), jnp.float32).at[:, :1].set(params["head_w"])

    # Pack all LN gammas/betas + biases into one small f32 table (static rows).
    vecs = jnp.zeros((N_VEC_ROWS, HEAD_PAD), jnp.float32)
    vecs = vecs.at[ROW_LN1_G, :D].set(params["ln1_g"])
    vecs = vecs.at[ROW_LN1_B, :D].set(params["ln1_b"])
    vecs = vecs.at[ROW_PROJ_B, :D].set(params["proj_b"])
    vecs = vecs.at[ROW_LN2_G, :D].set(params["ln2_g"])
    vecs = vecs.at[ROW_LN2_B, :D].set(params["ln2_b"])
    vecs = vecs.at[ROW_FC1_B, :Hd].set(params["fc1_b"])
    vecs = vecs.at[ROW_FC2_B, :D].set(params["fc2_b"])
    vecs = vecs.at[ROW_LNF_G, :D].set(params["lnf_g"])
    vecs = vecs.at[ROW_LNF_B, :D].set(params["lnf_b"])
    vecs = vecs.at[ROW_HEAD_B, 0].set(params["head_b"][0])

    def full(shape):
        zeros = (0,) * len(shape)
        return pl.BlockSpec(shape, lambda g, _z=zeros: _z)

    out_padded = pl.pallas_call(
        functools.partial(_vit_fused_kernel, bt=Bt, seq=S, heads=Hn,
                          head_dim=Dh, mlp_hidden=Hd),
        out_shape=jax.ShapeDtypeStruct((B_pad, HEAD_PAD), jnp.float32),
        grid=(G,),
        in_specs=[
            pl.BlockSpec((N, patch_dim), lambda g: (g, 0)),   # patches (streamed, bf16)
            full((N, D)),                                     # pos + patch bias (resident)
            full((patch_dim, D)),                             # patch-embed weight
            full((3 * Hn, D, Dh)),                            # per-head Q/K/V weights
            full((3 * Hn, Dh)),                               # per-head Q/K/V biases
            full((Hn, Dh, D)),                                # per-head out-proj rows
            full((D, Hd)), full((Hd, D)),                     # MLP weights
            full((D, HEAD_PAD)),                              # lane-padded regression head
            full((N_VEC_ROWS, HEAD_PAD)),                     # packed LN/bias table
        ],
        out_specs=pl.BlockSpec((Bt, HEAD_PAD), lambda g: (g, 0)),
        # "parallel" lets the runtime shard the batch grid across v7x's two
        # TensorCores; grid = B/Bt >= 2 whenever B > Bt so both cores get work.
        compiler_params=pltpu.CompilerParams(
            dimension_semantics=("parallel",)),
    )(
        patches, posb,
        params["patch_w"].astype(bf16),
        wqkv.astype(bf16), bqkv,
        wproj.astype(bf16),
        params["fc1_w"].astype(bf16), params["fc2_w"].astype(bf16),
        head_w_pad.astype(bf16),
        vecs,
    )
    return out_padded[:B, :1]                                # (B, 1)


# ----------------------------------- main ----------------------------------- #

if __name__ == "__main__":
    cfg = Config()
    key = jax.random.PRNGKey(0)
    pkey, xkey = jax.random.split(key)

    params = init_params(pkey, cfg)
    B = 16   # grid = B / Bt = 2 steps of 128-row matmuls
    x = jax.random.normal(xkey, (B, cfg.in_chans, cfg.img_size, cfg.img_size),
                          dtype=jnp.float32)

    fwd = jax.jit(functools.partial(transformer_model_forward, cfg=cfg))
    out = fwd(params, x)
    out = jax.block_until_ready(out)
    assert out.shape == (B, 1) and out.dtype == jnp.float32
    print("KERNEL_OK")
</pallas_src>

<mosaic_0001>
module attributes {stable_mosaic.version = 11 : i64} {
  func.func @_vit_fused_kernel(%arg0: i32, %arg1: memref<128x48xbf16, #tpu.memory_space<vmem>>, %arg2: memref<128x32xf32, #tpu.memory_space<vmem>>, %arg3: memref<48x32xbf16, #tpu.memory_space<vmem>>, %arg4: memref<12x32x8xbf16, #tpu.memory_space<vmem>>, %arg5: memref<12x8xf32, #tpu.memory_space<vmem>>, %arg6: memref<4x8x32xbf16, #tpu.memory_space<vmem>>, %arg7: memref<32x64xbf16, #tpu.memory_space<vmem>>, %arg8: memref<64x32xbf16, #tpu.memory_space<vmem>>, %arg9: memref<32x128xbf16, #tpu.memory_space<vmem>>, %arg10: memref<10x128xf32, #tpu.memory_space<vmem>>, %arg11: memref<8x128xf32, #tpu.memory_space<vmem>>) attributes {dimension_semantics = [#tpu.dimension_semantics<parallel>], iteration_bounds = array<i64: 2>, scalar_prefetch = 0 : i64, scratch_operands = 0 : i64, tpu.core_type = #tpu.core_type<tc>, window_params = [{transform_indices = @transform_0, window_bounds = array<i64: 128, 48>}, {pipeline_mode = #tpu.pipeline_mode<synchronous>, transform_indices = @transform_1, window_bounds = array<i64: 128, 32>}, {pipeline_mode = #tpu.pipeline_mode<synchronous>, transform_indices = @transform_2, window_bounds = array<i64: 48, 32>}, {pipeline_mode = #tpu.pipeline_mode<synchronous>, transform_indices = @transform_3, window_bounds = array<i64: 12, 32, 8>}, {pipeline_mode = #tpu.pipeline_mode<synchronous>, transform_indices = @transform_4, window_bounds = array<i64: 12, 8>}, {pipeline_mode = #tpu.pipeline_mode<synchronous>, transform_indices = @transform_5, window_bounds = array<i64: 4, 8, 32>}, {pipeline_mode = #tpu.pipeline_mode<synchronous>, transform_indices = @transform_6, window_bounds = array<i64: 32, 64>}, {pipeline_mode = #tpu.pipeline_mode<synchronous>, transform_indices = @transform_7, window_bounds = array<i64: 64, 32>}, {pipeline_mode = #tpu.pipeline_mode<synchronous>, transform_indices = @transform_8, window_bounds = array<i64: 32, 128>}, {pipeline_mode = #tpu.pipeline_mode<synchronous>, transform_indices = @transform_9, window_bounds = array<i64: 10, 128>}, {transform_indices = @transform_10, window_bounds = array<i64: 8, 128>}]} {
    %c0 = arith.constant 0 : index
    %c0_0 = arith.constant 0 : index
    %0 = vector.load %arg1[%c0, %c0_0] : memref<128x48xbf16, #tpu.memory_space<vmem>>, vector<128x48xbf16>
    %c0_1 = arith.constant 0 : index
    %c0_2 = arith.constant 0 : index
    %1 = vector.load %arg3[%c0_1, %c0_2] : memref<48x32xbf16, #tpu.memory_space<vmem>>, vector<48x32xbf16>
    %cst = arith.constant dense<0.000000e+00> : vector<128x32xf32>
    %2 = tpu.matmul %0, %1, %cst {dimension_numbers = #tpu.dot_dimension_numbers<[1], [0], [0], [1], [0, 0, 1, 1], [], []>} : vector<128x48xbf16>, vector<48x32xbf16>, vector<128x32xf32> -> vector<128x32xf32>
    %c0_3 = arith.constant 0 : index
    %c0_4 = arith.constant 0 : index
    %3 = vector.load %arg2[%c0_3, %c0_4] : memref<128x32xf32, #tpu.memory_space<vmem>>, vector<128x32xf32>
    %4 = arith.addf %2, %3 : vector<128x32xf32>
    %c0_5 = arith.constant 0 : index
    %c0_6 = arith.constant 0 : index
    %5 = vector.load %arg10[%c0_5, %c0_6] : memref<10x128xf32, #tpu.memory_space<vmem>>, vector<1x32xf32>
    %c1 = arith.constant 1 : index
    %c0_7 = arith.constant 0 : index
    %6 = vector.load %arg10[%c1, %c0_7] : memref<10x128xf32, #tpu.memory_space<vmem>>, vector<1x32xf32>
    %cst_8 = arith.constant dense<0.000000e+00> : vector<128xf32>
    %7 = vector.multi_reduction <add>, %4, %cst_8 [1] : vector<128x32xf32> to vector<128xf32>
    %8 = vector.shape_cast %7 : vector<128xf32> to vector<128x1xf32>
    %cst_9 = arith.constant 3.200000e+01 : f32
    %9 = vector.broadcast %cst_9 : f32 to vector<128x1xf32>
    %10 = arith.divf %8, %9 : vector<128x1xf32>
    %11 = vector.broadcast %10 : vector<128x1xf32> to vector<128x32xf32>
    %12 = arith.subf %4, %11 : vector<128x32xf32>
    %13 = arith.mulf %12, %12 : vector<128x32xf32>
    %cst_10 = arith.constant dense<0.000000e+00> : vector<128xf32>
    %14 = vector.multi_reduction <add>, %13, %cst_10 [1] : vector<128x32xf32> to vector<128xf32>
    %15 = vector.shape_cast %14 : vector<128xf32> to vector<128x1xf32>
    %cst_11 = arith.constant 3.200000e+01 : f32
    %16 = vector.broadcast %cst_11 : f32 to vector<128x1xf32>
    %17 = arith.divf %15, %16 : vector<128x1xf32>
    %18 = vector.broadcast %10 : vector<128x1xf32> to vector<128x32xf32>
    %19 = arith.subf %4, %18 : vector<128x32xf32>
    %cst_12 = arith.constant 9.99999997E-7 : f32
    %20 = vector.broadcast %cst_12 : f32 to vector<128x1xf32>
    %21 = arith.addf %17, %20 : vector<128x1xf32>
    %22 = math.rsqrt %21 : vector<128x1xf32>
    %23 = vector.broadcast %22 : vector<128x1xf32> to vector<128x32xf32>
    %24 = arith.mulf %19, %23 : vector<128x32xf32>
    %25 = vector.broadcast %5 : vector<1x32xf32> to vector<128x32xf32>
    %26 = arith.mulf %24, %25 : vector<128x32xf32>
    %27 = vector.broadcast %6 : vector<1x32xf32> to vector<128x32xf32>
    %28 = arith.addf %26, %27 : vector<128x32xf32>
    %29 = arith.truncf %28 : vector<128x32xf32> to vector<128x32xbf16>
    %cst_13 = arith.constant 0.000000e+00 : f32
    %30 = vector.broadcast %cst_13 : f32 to vector<128x32xf32>
    %c0_14 = arith.constant 0 : index
    %c0_15 = arith.constant 0 : index
    %c0_16 = arith.constant 0 : index
    %31 = vector.load %arg4[%c0_14, %c0_15, %c0_16] : memref<12x32x8xbf16, #tpu.memory_space<vmem>>, vector<1x32x8xbf16>
    %32 = vector.shape_cast %31 : vector<1x32x8xbf16> to vector<32x8xbf16>
    %cst_17 = arith.constant dense<0.000000e+00> : vector<128x8xf32>
    %33 = tpu.matmul %29, %32, %cst_17 {dimension_numbers = #tpu.dot_dimension_numbers<[1], [0], [0], [1], [0, 0, 1, 1], [], []>} : vector<128x32xbf16>, vector<32x8xbf16>, vector<128x8xf32> -> vector<128x8xf32>
    %c0_18 = arith.constant 0 : index
    %c0_19 = arith.constant 0 : index
    %34 = vector.load %arg5[%c0_18, %c0_19] : memref<12x8xf32, #tpu.memory_space<vmem>>, vector<1x8xf32>
    %35 = vector.broadcast %34 : vector<1x8xf32> to vector<128x8xf32>
    %36 = arith.addf %33, %35 : vector<128x8xf32>
    %37 = vector.shape_cast %36 : vector<128x8xf32> to vector<8x16x8xf32>
    %c4 = arith.constant 4 : index
    %c0_20 = arith.constant 0 : index
    %c0_21 = arith.constant 0 : index
    %38 = vector.load %arg4[%c4, %c0_20, %c0_21] : memref<12x32x8xbf16, #tpu.memory_space<vmem>>, vector<1x32x8xbf16>
    %39 = vector.shape_cast %38 : vector<1x32x8xbf16> to vector<32x8xbf16>
    %cst_22 = arith.constant dense<0.000000e+00> : vector<128x8xf32>
    %40 = tpu.matmul %29, %39, %cst_22 {dimension_numbers = #tpu.dot_dimension_numbers<[1], [0], [0], [1], [0, 0, 1, 1], [], []>} : vector<128x32xbf16>, vector<32x8xbf16>, vector<128x8xf32> -> vector<128x8xf32>
    %c4_23 = arith.constant 4 : index
    %c0_24 = arith.constant 0 : index
    %41 = vector.load %arg5[%c4_23, %c0_24] : memref<12x8xf32, #tpu.memory_space<vmem>>, vector<1x8xf32>
    %42 = vector.broadcast %41 : vector<1x8xf32> to vector<128x8xf32>
    %43 = arith.addf %40, %42 : vector<128x8xf32>
    %44 = vector.shape_cast %43 : vector<128x8xf32> to vector<8x16x8xf32>
    %c8 = arith.constant 8 : index
    %c0_25 = arith.constant 0 : index
    %c0_26 = arith.constant 0 : index
    %45 = vector.load %arg4[%c8, %c0_25, %c0_26] : memref<12x32x8xbf16, #tpu.memory_space<vmem>>, vector<1x32x8xbf16>
    %46 = vector.shape_cast %45 : vector<1x32x8xbf16> to vector<32x8xbf16>
    %cst_27 = arith.constant dense<0.000000e+00> : vector<128x8xf32>
    %47 = tpu.matmul %29, %46, %cst_27 {dimension_numbers = #tpu.dot_dimension_numbers<[1], [0], [0], [1], [0, 0, 1, 1], [], []>} : vector<128x32xbf16>, vector<32x8xbf16>, vector<128x8xf32> -> vector<128x8xf32>
    %c8_28 = arith.constant 8 : index
    %c0_29 = arith.constant 0 : index
    %48 = vector.load %arg5[%c8_28, %c0_29] : memref<12x8xf32, #tpu.memory_space<vmem>>, vector<1x8xf32>
    %49 = vector.broadcast %48 : vector<1x8xf32> to vector<128x8xf32>
    %50 = arith.addf %47, %49 : vector<128x8xf32>
    %51 = vector.shape_cast %50 : vector<128x8xf32> to vector<8x16x8xf32>
    %52 = arith.truncf %37 : vector<8x16x8xf32> to vector<8x16x8xbf16>
    %53 = arith.truncf %44 : vector<8x16x8xf32> to vector<8x16x8xbf16>
    "tpu.trace_start"() <{level = 10 : i32, message = "bqd,bkd->bqk"}> : () -> ()
    %cst_30 = arith.constant dense<0.000000e+00> : vector<8x16x16xf32>
    %54 = tpu.matmul %52, %53, %cst_30 {dimension_numbers = #tpu.dot_dimension_numbers<[2], [2], [1], [1], [0, 0, 0, 1, 1, 1], [0], [0]>} : vector<8x16x8xbf16>, vector<8x16x8xbf16>, vector<8x16x16xf32> -> vector<8x16x16xf32>
    "tpu.trace_stop"() : () -> ()
    %cst_31 = arith.constant dense<0xFF800000> : vector<8x16xf32>
    %55 = vector.multi_reduction <maximumf>, %54, %cst_31 [2] : vector<8x16x16xf32> to vector<8x16xf32>
    %56 = vector.shape_cast %55 : vector<8x16xf32> to vector<8x16x1xf32>
    %57 = vector.broadcast %56 : vector<8x16x1xf32> to vector<8x16x16xf32>
    %58 = arith.subf %54, %57 : vector<8x16x16xf32>
    %59 = math.exp %58 : vector<8x16x16xf32>
    %cst_32 = arith.constant dense<0.000000e+00> : vector<8x16xf32>
    %60 = vector.multi_reduction <add>, %59, %cst_32 [2] : vector<8x16x16xf32> to vector<8x16xf32>
    %61 = vector.shape_cast %60 : vector<8x16xf32> to vector<8x16x1xf32>
    %62 = tpu.reciprocal %61 {approx = true} : vector<8x16x1xf32> -> vector<8x16x1xf32>
    %63 = arith.truncf %59 : vector<8x16x16xf32> to vector<8x16x16xbf16>
    %64 = arith.truncf %51 : vector<8x16x8xf32> to vector<8x16x8xbf16>
    "tpu.trace_start"() <{level = 10 : i32, message = "bqk,bkd->bqd"}> : () -> ()
    %cst_33 = arith.constant dense<0.000000e+00> : vector<8x16x8xf32>
    %65 = tpu.matmul %63, %64, %cst_33 {dimension_numbers = #tpu.dot_dimension_numbers<[2], [1], [1], [2], [0, 0, 0, 1, 1, 2], [0], [0]>} : vector<8x16x16xbf16>, vector<8x16x8xbf16>, vector<8x16x8xf32> -> vector<8x16x8xf32>
    "tpu.trace_stop"() : () -> ()
    %66 = vector.broadcast %62 : vector<8x16x1xf32> to vector<8x16x8xf32>
    %67 = arith.mulf %65, %66 : vector<8x16x8xf32>
    %68 = vector.shape_cast %67 : vector<8x16x8xf32> to vector<128x8xf32>
    %69 = arith.truncf %68 : vector<128x8xf32> to vector<128x8xbf16>
    %c0_34 = arith.constant 0 : index
    %c0_35 = arith.constant 0 : index
    %c0_36 = arith.constant 0 : index
    %70 = vector.load %arg6[%c0_34, %c0_35, %c0_36] : memref<4x8x32xbf16, #tpu.memory_space<vmem>>, vector<1x8x32xbf16>
    %71 = vector.shape_cast %70 : vector<1x8x32xbf16> to vector<8x32xbf16>
    %cst_37 = arith.constant dense<0.000000e+00> : vector<128x32xf32>
    %72 = tpu.matmul %69, %71, %cst_37 {dimension_numbers = #tpu.dot_dimension_numbers<[1], [0], [0], [1], [0, 0, 1, 1], [], []>} : vector<128x8xbf16>, vector<8x32xbf16>, vector<128x32xf32> -> vector<128x32xf32>
    %73 = arith.addf %30, %72 : vector<128x32xf32>
    %c1_38 = arith.constant 1 : index
    %c0_39 = arith.constant 0 : index
    %c0_40 = arith.constant 0 : index
    %74 = vector.load %arg4[%c1_38, %c0_39, %c0_40] : memref<12x32x8xbf16, #tpu.memory_space<vmem>>, vector<1x32x8xbf16>
    %75 = vector.shape_cast %74 : vector<1x32x8xbf16> to vector<32x8xbf16>
    %cst_41 = arith.constant dense<0.000000e+00> : vector<128x8xf32>
    %76 = tpu.matmul %29, %75, %cst_41 {dimension_numbers = #tpu.dot_dimension_numbers<[1], [0], [0], [1], [0, 0, 1, 1], [], []>} : vector<128x32xbf16>, vector<32x8xbf16>, vector<128x8xf32> -> vector<128x8xf32>
    %c1_42 = arith.constant 1 : index
    %c0_43 = arith.constant 0 : index
    %77 = vector.load %arg5[%c1_42, %c0_43] : memref<12x8xf32, #tpu.memory_space<vmem>>, vector<1x8xf32>
    %78 = vector.broadcast %77 : vector<1x8xf32> to vector<128x8xf32>
    %79 = arith.addf %76, %78 : vector<128x8xf32>
    %80 = vector.shape_cast %79 : vector<128x8xf32> to vector<8x16x8xf32>
    %c5 = arith.constant 5 : index
    %c0_44 = arith.constant 0 : index
    %c0_45 = arith.constant 0 : index
    %81 = vector.load %arg4[%c5, %c0_44, %c0_45] : memref<12x32x8xbf16, #tpu.memory_space<vmem>>, vector<1x32x8xbf16>
    %82 = vector.shape_cast %81 : vector<1x32x8xbf16> to vector<32x8xbf16>
    %cst_46 = arith.constant dense<0.000000e+00> : vector<128x8xf32>
    %83 = tpu.matmul %29, %82, %cst_46 {dimension_numbers = #tpu.dot_dimension_numbers<[1], [0], [0], [1], [0, 0, 1, 1], [], []>} : vector<128x32xbf16>, vector<32x8xbf16>, vector<128x8xf32> -> vector<128x8xf32>
    %c5_47 = arith.constant 5 : index
    %c0_48 = arith.constant 0 : index
    %84 = vector.load %arg5[%c5_47, %c0_48] : memref<12x8xf32, #tpu.memory_space<vmem>>, vector<1x8xf32>
    %85 = vector.broadcast %84 : vector<1x8xf32> to vector<128x8xf32>
    %86 = arith.addf %83, %85 : vector<128x8xf32>
    %87 = vector.shape_cast %86 : vector<128x8xf32> to vector<8x16x8xf32>
    %c9 = arith.constant 9 : index
    %c0_49 = arith.constant 0 : index
    %c0_50 = arith.constant 0 : index
    %88 = vector.load %arg4[%c9, %c0_49, %c0_50] : memref<12x32x8xbf16, #tpu.memory_space<vmem>>, vector<1x32x8xbf16>
    %89 = vector.shape_cast %88 : vector<1x32x8xbf16> to vector<32x8xbf16>
    %cst_51 = arith.constant dense<0.000000e+00> : vector<128x8xf32>
    %90 = tpu.matmul %29, %89, %cst_51 {dimension_numbers = #tpu.dot_dimension_numbers<[1], [0], [0], [1], [0, 0, 1, 1], [], []>} : vector<128x32xbf16>, vector<32x8xbf16>, vector<128x8xf32> -> vector<128x8xf32>
    %c9_52 = arith.constant 9 : index
    %c0_53 = arith.constant 0 : index
    %91 = vector.load %arg5[%c9_52, %c0_53] : memref<12x8xf32, #tpu.memory_space<vmem>>, vector<1x8xf32>
    %92 = vector.broadcast %91 : vector<1x8xf32> to vector<128x8xf32>
    %93 = arith.addf %90, %92 : vector<128x8xf32>
    %94 = vector.shape_cast %93 : vector<128x8xf32> to vector<8x16x8xf32>
    %95 = arith.truncf %80 : vector<8x16x8xf32> to vector<8x16x8xbf16>
    %96 = arith.truncf %87 : vector<8x16x8xf32> to vector<8x16x8xbf16>
    "tpu.trace_start"() <{level = 10 : i32, message = "bqd,bkd->bqk"}> : () -> ()
    %cst_54 = arith.constant dense<0.000000e+00> : vector<8x16x16xf32>
    %97 = tpu.matmul %95, %96, %cst_54 {dimension_numbers = #tpu.dot_dimension_numbers<[2], [2], [1], [1], [0, 0, 0, 1, 1, 1], [0], [0]>} : vector<8x16x8xbf16>, vector<8x16x8xbf16>, vector<8x16x16xf32> -> vector<8x16x16xf32>
    "tpu.trace_stop"() : () -> ()
    %cst_55 = arith.constant dense<0xFF800000> : vector<8x16xf32>
    %98 = vector.multi_reduction <maximumf>, %97, %cst_55 [2] : vector<8x16x16xf32> to vector<8x16xf32>
    %99 = vector.shape_cast %98 : vector<8x16xf32> to vector<8x16x1xf32>
    %100 = vector.broadcast %99 : vector<8x16x1xf32> to vector<8x16x16xf32>
    %101 = arith.subf %97, %100 : vector<8x16x16xf32>
    %102 = math.exp %101 : vector<8x16x16xf32>
    %cst_56 = arith.constant dense<0.000000e+00> : vector<8x16xf32>
    %103 = vector.multi_reduction <add>, %102, %cst_56 [2] : vector<8x16x16xf32> to vector<8x16xf32>
    %104 = vector.shape_cast %103 : vector<8x16xf32> to vector<8x16x1xf32>
    %105 = tpu.reciprocal %104 {approx = true} : vector<8x16x1xf32> -> vector<8x16x1xf32>
    %106 = arith.truncf %102 : vector<8x16x16xf32> to vector<8x16x16xbf16>
    %107 = arith.truncf %94 : vector<8x16x8xf32> to vector<8x16x8xbf16>
    "tpu.trace_start"() <{level = 10 : i32, message = "bqk,bkd->bqd"}> : () -> ()
    %cst_57 = arith.constant dense<0.000000e+00> : vector<8x16x8xf32>
    %108 = tpu.matmul %106, %107, %cst_57 {dimension_numbers = #tpu.dot_dimension_numbers<[2], [1], [1], [2], [0, 0, 0, 1, 1, 2], [0], [0]>} : vector<8x16x16xbf16>, vector<8x16x8xbf16>, vector<8x16x8xf32> -> vector<8x16x8xf32>
    "tpu.trace_stop"() : () -> ()
    %109 = vector.broadcast %105 : vector<8x16x1xf32> to vector<8x16x8xf32>
    %110 = arith.mulf %108, %109 : vector<8x16x8xf32>
    %111 = vector.shape_cast %110 : vector<8x16x8xf32> to vector<128x8xf32>
    %112 = arith.truncf %111 : vector<128x8xf32> to vector<128x8xbf16>
    %c1_58 = arith.constant 1 : index
    %c0_59 = arith.constant 0 : index
    %c0_60 = arith.constant 0 : index
    %113 = vector.load %arg6[%c1_58, %c0_59, %c0_60] : memref<4x8x32xbf16, #tpu.memory_space<vmem>>, vector<1x8x32xbf16>
    %114 = vector.shape_cast %113 : vector<1x8x32xbf16> to vector<8x32xbf16>
    %cst_61 = arith.constant dense<0.000000e+00> : vector<128x32xf32>
    %115 = tpu.matmul %112, %114, %cst_61 {dimension_numbers = #tpu.dot_dimension_numbers<[1], [0], [0], [1], [0, 0, 1, 1], [], []>} : vector<128x8xbf16>, vector<8x32xbf16>, vector<128x32xf32> -> vector<128x32xf32>
    %116 = arith.addf %73, %115 : vector<128x32xf32>
    %c2 = arith.constant 2 : index
    %c0_62 = arith.constant 0 : index
    %c0_63 = arith.constant 0 : index
    %117 = vector.load %arg4[%c2, %c0_62, %c0_63] : memref<12x32x8xbf16, #tpu.memory_space<vmem>>, vector<1x32x8xbf16>
    %118 = vector.shape_cast %117 : vector<1x32x8xbf16> to vector<32x8xbf16>
    %cst_64 = arith.constant dense<0.000000e+00> : vector<128x8xf32>
    %119 = tpu.matmul %29, %118, %cst_64 {dimension_numbers = #tpu.dot_dimension_numbers<[1], [0], [0], [1], [0, 0, 1, 1], [], []>} : vector<128x32xbf16>, vector<32x8xbf16>, vector<128x8xf32> -> vector<128x8xf32>
    %c2_65 = arith.constant 2 : index
    %c0_66 = arith.constant 0 : index
    %120 = vector.load %arg5[%c2_65, %c0_66] : memref<12x8xf32, #tpu.memory_space<vmem>>, vector<1x8xf32>
    %121 = vector.broadcast %120 : vector<1x8xf32> to vector<128x8xf32>
    %122 = arith.addf %119, %121 : vector<128x8xf32>
    %123 = vector.shape_cast %122 : vector<128x8xf32> to vector<8x16x8xf32>
    %c6 = arith.constant 6 : index
    %c0_67 = arith.constant 0 : index
    %c0_68 = arith.constant 0 : index
    %124 = vector.load %arg4[%c6, %c0_67, %c0_68] : memref<12x32x8xbf16, #tpu.memory_space<vmem>>, vector<1x32x8xbf16>
    %125 = vector.shape_cast %124 : vector<1x32x8xbf16> to vector<32x8xbf16>
    %cst_69 = arith.constant dense<0.000000e+00> : vector<128x8xf32>
    %126 = tpu.matmul %29, %125, %cst_69 {dimension_numbers = #tpu.dot_dimension_numbers<[1], [0], [0], [1], [0, 0, 1, 1], [], []>} : vector<128x32xbf16>, vector<32x8xbf16>, vector<128x8xf32> -> vector<128x8xf32>
    %c6_70 = arith.constant 6 : index
    %c0_71 = arith.constant 0 : index
    %127 = vector.load %arg5[%c6_70, %c0_71] : memref<12x8xf32, #tpu.memory_space<vmem>>, vector<1x8xf32>
    %128 = vector.broadcast %127 : vector<1x8xf32> to vector<128x8xf32>
    %129 = arith.addf %126, %128 : vector<128x8xf32>
    %130 = vector.shape_cast %129 : vector<128x8xf32> to vector<8x16x8xf32>
    %c10 = arith.constant 10 : index
    %c0_72 = arith.constant 0 : index
    %c0_73 = arith.constant 0 : index
    %131 = vector.load %arg4[%c10, %c0_72, %c0_73] : memref<12x32x8xbf16, #tpu.memory_space<vmem>>, vector<1x32x8xbf16>
    %132 = vector.shape_cast %131 : vector<1x32x8xbf16> to vector<32x8xbf16>
    %cst_74 = arith.constant dense<0.000000e+00> : vector<128x8xf32>
    %133 = tpu.matmul %29, %132, %cst_74 {dimension_numbers = #tpu.dot_dimension_numbers<[1], [0], [0], [1], [0, 0, 1, 1], [], []>} : vector<128x32xbf16>, vector<32x8xbf16>, vector<128x8xf32> -> vector<128x8xf32>
    %c10_75 = arith.constant 10 : index
    %c0_76 = arith.constant 0 : index
    %134 = vector.load %arg5[%c10_75, %c0_76] : memref<12x8xf32, #tpu.memory_space<vmem>>, vector<1x8xf32>
    %135 = vector.broadcast %134 : vector<1x8xf32> to vector<128x8xf32>
    %136 = arith.addf %133, %135 : vector<128x8xf32>
    %137 = vector.shape_cast %136 : vector<128x8xf32> to vector<8x16x8xf32>
    %138 = arith.truncf %123 : vector<8x16x8xf32> to vector<8x16x8xbf16>
    %139 = arith.truncf %130 : vector<8x16x8xf32> to vector<8x16x8xbf16>
    "tpu.trace_start"() <{level = 10 : i32, message = "bqd,bkd->bqk"}> : () -> ()
    %cst_77 = arith.constant dense<0.000000e+00> : vector<8x16x16xf32>
    %140 = tpu.matmul %138, %139, %cst_77 {dimension_numbers = #tpu.dot_dimension_numbers<[2], [2], [1], [1], [0, 0, 0, 1, 1, 1], [0], [0]>} : vector<8x16x8xbf16>, vector<8x16x8xbf16>, vector<8x16x16xf32> -> vector<8x16x16xf32>
    "tpu.trace_stop"() : () -> ()
    %cst_78 = arith.constant dense<0xFF800000> : vector<8x16xf32>
    %141 = vector.multi_reduction <maximumf>, %140, %cst_78 [2] : vector<8x16x16xf32> to vector<8x16xf32>
    %142 = vector.shape_cast %141 : vector<8x16xf32> to vector<8x16x1xf32>
    %143 = vector.broadcast %142 : vector<8x16x1xf32> to vector<8x16x16xf32>
    %144 = arith.subf %140, %143 : vector<8x16x16xf32>
    %145 = math.exp %144 : vector<8x16x16xf32>
    %cst_79 = arith.constant dense<0.000000e+00> : vector<8x16xf32>
    %146 = vector.multi_reduction <add>, %145, %cst_79 [2] : vector<8x16x16xf32> to vector<8x16xf32>
    %147 = vector.shape_cast %146 : vector<8x16xf32> to vector<8x16x1xf32>
    %148 = tpu.reciprocal %147 {approx = true} : vector<8x16x1xf32> -> vector<8x16x1xf32>
    %149 = arith.truncf %145 : vector<8x16x16xf32> to vector<8x16x16xbf16>
    %150 = arith.truncf %137 : vector<8x16x8xf32> to vector<8x16x8xbf16>
    "tpu.trace_start"() <{level = 10 : i32, message = "bqk,bkd->bqd"}> : () -> ()
    %cst_80 = arith.constant dense<0.000000e+00> : vector<8x16x8xf32>
    %151 = tpu.matmul %149, %150, %cst_80 {dimension_numbers = #tpu.dot_dimension_numbers<[2], [1], [1], [2], [0, 0, 0, 1, 1, 2], [0], [0]>} : vector<8x16x16xbf16>, vector<8x16x8xbf16>, vector<8x16x8xf32> -> vector<8x16x8xf32>
    "tpu.trace_stop"() : () -> ()
    %152 = vector.broadcast %148 : vector<8x16x1xf32> to vector<8x16x8xf32>
    %153 = arith.mulf %151, %152 : vector<8x16x8xf32>
    %154 = vector.shape_cast %153 : vector<8x16x8xf32> to vector<128x8xf32>
    %155 = arith.truncf %154 : vector<128x8xf32> to vector<128x8xbf16>
    %c2_81 = arith.constant 2 : index
    %c0_82 = arith.constant 0 : index
    %c0_83 = arith.constant 0 : index
    %156 = vector.load %arg6[%c2_81, %c0_82, %c0_83] : memref<4x8x32xbf16, #tpu.memory_space<vmem>>, vector<1x8x32xbf16>
    %157 = vector.shape_cast %156 : vector<1x8x32xbf16> to vector<8x32xbf16>
    %cst_84 = arith.constant dense<0.000000e+00> : vector<128x32xf32>
    %158 = tpu.matmul %155, %157, %cst_84 {dimension_numbers = #tpu.dot_dimension_numbers<[1], [0], [0], [1], [0, 0, 1, 1], [], []>} : vector<128x8xbf16>, vector<8x32xbf16>, vector<128x32xf32> -> vector<128x32xf32>
    %159 = arith.addf %116, %158 : vector<128x32xf32>
    %c3 = arith.constant 3 : index
    %c0_85 = arith.constant 0 : index
    %c0_86 = arith.constant 0 : index
    %160 = vector.load %arg4[%c3, %c0_85, %c0_86] : memref<12x32x8xbf16, #tpu.memory_space<vmem>>, vector<1x32x8xbf16>
    %161 = vector.shape_cast %160 : vector<1x32x8xbf16> to vector<32x8xbf16>
    %cst_87 = arith.constant dense<0.000000e+00> : vector<128x8xf32>
    %162 = tpu.matmul %29, %161, %cst_87 {dimension_numbers = #tpu.dot_dimension_numbers<[1], [0], [0], [1], [0, 0, 1, 1], [], []>} : vector<128x32xbf16>, vector<32x8xbf16>, vector<128x8xf32> -> vector<128x8xf32>
    %c3_88 = arith.constant 3 : index
    %c0_89 = arith.constant 0 : index
    %163 = vector.load %arg5[%c3_88, %c0_89] : memref<12x8xf32, #tpu.memory_space<vmem>>, vector<1x8xf32>
    %164 = vector.broadcast %163 : vector<1x8xf32> to vector<128x8xf32>
    %165 = arith.addf %162, %164 : vector<128x8xf32>
    %166 = vector.shape_cast %165 : vector<128x8xf32> to vector<8x16x8xf32>
    %c7 = arith.constant 7 : index
    %c0_90 = arith.constant 0 : index
    %c0_91 = arith.constant 0 : index
    %167 = vector.load %arg4[%c7, %c0_90, %c0_91] : memref<12x32x8xbf16, #tpu.memory_space<vmem>>, vector<1x32x8xbf16>
    %168 = vector.shape_cast %167 : vector<1x32x8xbf16> to vector<32x8xbf16>
    %cst_92 = arith.constant dense<0.000000e+00> : vector<128x8xf32>
    %169 = tpu.matmul %29, %168, %cst_92 {dimension_numbers = #tpu.dot_dimension_numbers<[1], [0], [0], [1], [0, 0, 1, 1], [], []>} : vector<128x32xbf16>, vector<32x8xbf16>, vector<128x8xf32> -> vector<128x8xf32>
    %c7_93 = arith.constant 7 : index
    %c0_94 = arith.constant 0 : index
    %170 = vector.load %arg5[%c7_93, %c0_94] : memref<12x8xf32, #tpu.memory_space<vmem>>, vector<1x8xf32>
    %171 = vector.broadcast %170 : vector<1x8xf32> to vector<128x8xf32>
    %172 = arith.addf %169, %171 : vector<128x8xf32>
    %173 = vector.shape_cast %172 : vector<128x8xf32> to vector<8x16x8xf32>
    %c11 = arith.constant 11 : index
    %c0_95 = arith.constant 0 : index
    %c0_96 = arith.constant 0 : index
    %174 = vector.load %arg4[%c11, %c0_95, %c0_96] : memref<12x32x8xbf16, #tpu.memory_space<vmem>>, vector<1x32x8xbf16>
    %175 = vector.shape_cast %174 : vector<1x32x8xbf16> to vector<32x8xbf16>
    %cst_97 = arith.constant dense<0.000000e+00> : vector<128x8xf32>
    %176 = tpu.matmul %29, %175, %cst_97 {dimension_numbers = #tpu.dot_dimension_numbers<[1], [0], [0], [1], [0, 0, 1, 1], [], []>} : vector<128x32xbf16>, vector<32x8xbf16>, vector<128x8xf32> -> vector<128x8xf32>
    %c11_98 = arith.constant 11 : index
    %c0_99 = arith.constant 0 : index
    %177 = vector.load %arg5[%c11_98, %c0_99] : memref<12x8xf32, #tpu.memory_space<vmem>>, vector<1x8xf32>
    %178 = vector.broadcast %177 : vector<1x8xf32> to vector<128x8xf32>
    %179 = arith.addf %176, %178 : vector<128x8xf32>
    %180 = vector.shape_cast %179 : vector<128x8xf32> to vector<8x16x8xf32>
    %181 = arith.truncf %166 : vector<8x16x8xf32> to vector<8x16x8xbf16>
    %182 = arith.truncf %173 : vector<8x16x8xf32> to vector<8x16x8xbf16>
    "tpu.trace_start"() <{level = 10 : i32, message = "bqd,bkd->bqk"}> : () -> ()
    %cst_100 = arith.constant dense<0.000000e+00> : vector<8x16x16xf32>
    %183 = tpu.matmul %181, %182, %cst_100 {dimension_numbers = #tpu.dot_dimension_numbers<[2], [2], [1], [1], [0, 0, 0, 1, 1, 1], [0], [0]>} : vector<8x16x8xbf16>, vector<8x16x8xbf16>, vector<8x16x16xf32> -> vector<8x16x16xf32>
    "tpu.trace_stop"() : () -> ()
    %cst_101 = arith.constant dense<0xFF800000> : vector<8x16xf32>
    %184 = vector.multi_reduction <maximumf>, %183, %cst_101 [2] : vector<8x16x16xf32> to vector<8x16xf32>
    %185 = vector.shape_cast %184 : vector<8x16xf32> to vector<8x16x1xf32>
    %186 = vector.broadcast %185 : vector<8x16x1xf32> to vector<8x16x16xf32>
    %187 = arith.subf %183, %186 : vector<8x16x16xf32>
    %188 = math.exp %187 : vector<8x16x16xf32>
    %cst_102 = arith.constant dense<0.000000e+00> : vector<8x16xf32>
    %189 = vector.multi_reduction <add>, %188, %cst_102 [2] : vector<8x16x16xf32> to vector<8x16xf32>
    %190 = vector.shape_cast %189 : vector<8x16xf32> to vector<8x16x1xf32>
    %191 = tpu.reciprocal %190 {approx = true} : vector<8x16x1xf32> -> vector<8x16x1xf32>
    %192 = arith.truncf %188 : vector<8x16x16xf32> to vector<8x16x16xbf16>
    %193 = arith.truncf %180 : vector<8x16x8xf32> to vector<8x16x8xbf16>
    "tpu.trace_start"() <{level = 10 : i32, message = "bqk,bkd->bqd"}> : () -> ()
    %cst_103 = arith.constant dense<0.000000e+00> : vector<8x16x8xf32>
    %194 = tpu.matmul %192, %193, %cst_103 {dimension_numbers = #tpu.dot_dimension_numbers<[2], [1], [1], [2], [0, 0, 0, 1, 1, 2], [0], [0]>} : vector<8x16x16xbf16>, vector<8x16x8xbf16>, vector<8x16x8xf32> -> vector<8x16x8xf32>
    "tpu.trace_stop"() : () -> ()
    %195 = vector.broadcast %191 : vector<8x16x1xf32> to vector<8x16x8xf32>
    %196 = arith.mulf %194, %195 : vector<8x16x8xf32>
    %197 = vector.shape_cast %196 : vector<8x16x8xf32> to vector<128x8xf32>
    %198 = arith.truncf %197 : vector<128x8xf32> to vector<128x8xbf16>
    %c3_104 = arith.constant 3 : index
    %c0_105 = arith.constant 0 : index
    %c0_106 = arith.constant 0 : index
    %199 = vector.load %arg6[%c3_104, %c0_105, %c0_106] : memref<4x8x32xbf16, #tpu.memory_space<vmem>>, vector<1x8x32xbf16>
    %200 = vector.shape_cast %199 : vector<1x8x32xbf16> to vector<8x32xbf16>
    %cst_107 = arith.constant dense<0.000000e+00> : vector<128x32xf32>
    %201 = tpu.matmul %198, %200, %cst_107 {dimension_numbers = #tpu.dot_dimension_numbers<[1], [0], [0], [1], [0, 0, 1, 1], [], []>} : vector<128x8xbf16>, vector<8x32xbf16>, vector<128x32xf32> -> vector<128x32xf32>
    %202 = arith.addf %159, %201 : vector<128x32xf32>
    %c2_108 = arith.constant 2 : index
    %c0_109 = arith.constant 0 : index
    %203 = vector.load %arg10[%c2_108, %c0_109] : memref<10x128xf32, #tpu.memory_space<vmem>>, vector<1x32xf32>
    %204 = vector.broadcast %203 : vector<1x32xf32> to vector<128x32xf32>
    %205 = arith.addf %202, %204 : vector<128x32xf32>
    %206 = arith.addf %4, %205 : vector<128x32xf32>
    %c3_110 = arith.constant 3 : index
    %c0_111 = arith.constant 0 : index
    %207 = vector.load %arg10[%c3_110, %c0_111] : memref<10x128xf32, #tpu.memory_space<vmem>>, vector<1x32xf32>
    %c4_112 = arith.constant 4 : index
    %c0_113 = arith.constant 0 : index
    %208 = vector.load %arg10[%c4_112, %c0_113] : memref<10x128xf32, #tpu.memory_space<vmem>>, vector<1x32xf32>
    %cst_114 = arith.constant dense<0.000000e+00> : vector<128xf32>
    %209 = vector.multi_reduction <add>, %206, %cst_114 [1] : vector<128x32xf32> to vector<128xf32>
    %210 = vector.shape_cast %209 : vector<128xf32> to vector<128x1xf32>
    %cst_115 = arith.constant 3.200000e+01 : f32
    %211 = vector.broadcast %cst_115 : f32 to vector<128x1xf32>
    %212 = arith.divf %210, %211 : vector<128x1xf32>
    %213 = vector.broadcast %212 : vector<128x1xf32> to vector<128x32xf32>
    %214 = arith.subf %206, %213 : vector<128x32xf32>
    %215 = arith.mulf %214, %214 : vector<128x32xf32>
    %cst_116 = arith.constant dense<0.000000e+00> : vector<128xf32>
    %216 = vector.multi_reduction <add>, %215, %cst_116 [1] : vector<128x32xf32> to vector<128xf32>
    %217 = vector.shape_cast %216 : vector<128xf32> to vector<128x1xf32>
    %cst_117 = arith.constant 3.200000e+01 : f32
    %218 = vector.broadcast %cst_117 : f32 to vector<128x1xf32>
    %219 = arith.divf %217, %218 : vector<128x1xf32>
    %220 = vector.broadcast %212 : vector<128x1xf32> to vector<128x32xf32>
    %221 = arith.subf %206, %220 : vector<128x32xf32>
    %cst_118 = arith.constant 9.99999997E-7 : f32
    %222 = vector.broadcast %cst_118 : f32 to vector<128x1xf32>
    %223 = arith.addf %219, %222 : vector<128x1xf32>
    %224 = math.rsqrt %223 : vector<128x1xf32>
    %225 = vector.broadcast %224 : vector<128x1xf32> to vector<128x32xf32>
    %226 = arith.mulf %221, %225 : vector<128x32xf32>
    %227 = vector.broadcast %207 : vector<1x32xf32> to vector<128x32xf32>
    %228 = arith.mulf %226, %227 : vector<128x32xf32>
    %229 = vector.broadcast %208 : vector<1x32xf32> to vector<128x32xf32>
    %230 = arith.addf %228, %229 : vector<128x32xf32>
    %231 = arith.truncf %230 : vector<128x32xf32> to vector<128x32xbf16>
    %c0_119 = arith.constant 0 : index
    %c0_120 = arith.constant 0 : index
    %232 = vector.load %arg7[%c0_119, %c0_120] : memref<32x64xbf16, #tpu.memory_space<vmem>>, vector<32x64xbf16>
    %cst_121 = arith.constant dense<0.000000e+00> : vector<128x64xf32>
    %233 = tpu.matmul %231, %232, %cst_121 {dimension_numbers = #tpu.dot_dimension_numbers<[1], [0], [0], [1], [0, 0, 1, 1], [], []>} : vector<128x32xbf16>, vector<32x64xbf16>, vector<128x64xf32> -> vector<128x64xf32>
    %c5_122 = arith.constant 5 : index
    %c0_123 = arith.constant 0 : index
    %234 = vector.load %arg10[%c5_122, %c0_123] : memref<10x128xf32, #tpu.memory_space<vmem>>, vector<1x64xf32>
    %235 = vector.broadcast %234 : vector<1x64xf32> to vector<128x64xf32>
    %236 = arith.addf %233, %235 : vector<128x64xf32>
    %cst_124 = arith.constant 5.000000e-01 : f32
    %237 = vector.broadcast %cst_124 : f32 to vector<128x64xf32>
    %238 = arith.mulf %237, %236 : vector<128x64xf32>
    %cst_125 = arith.constant 0.707106769 : f32
    %239 = vector.broadcast %cst_125 : f32 to vector<128x64xf32>
    %240 = arith.mulf %236, %239 : vector<128x64xf32>
    %cst_126 = arith.constant 0.000000e+00 : f32
    %241 = vector.broadcast %cst_126 : f32 to vector<128x64xf32>
    %242 = arith.cmpf oge, %240, %241 : vector<128x64xf32>
    %cst_127 = arith.constant 1.000000e+00 : f32
    %cst_128 = arith.constant -1.000000e+00 : f32
    %243 = vector.broadcast %cst_127 : f32 to vector<128x64xf32>
    %244 = vector.broadcast %cst_128 : f32 to vector<128x64xf32>
    %245 = arith.select %242, %243, %244 : vector<128x64xi1>, vector<128x64xf32>
    %246 = arith.mulf %240, %245 : vector<128x64xf32>
    %cst_129 = arith.constant 0.327591091 : f32
    %247 = vector.broadcast %cst_129 : f32 to vector<128x64xf32>
    %248 = arith.mulf %247, %246 : vector<128x64xf32>
    %cst_130 = arith.constant 1.000000e+00 : f32
    %249 = vector.broadcast %cst_130 : f32 to vector<128x64xf32>
    %250 = arith.addf %249, %248 : vector<128x64xf32>
    %251 = tpu.reciprocal %250 {approx = true} : vector<128x64xf32> -> vector<128x64xf32>
    %cst_131 = arith.constant 1.06140542 : f32
    %252 = vector.broadcast %cst_131 : f32 to vector<128x64xf32>
    %253 = arith.mulf %252, %251 : vector<128x64xf32>
    %cst_132 = arith.constant -1.45315206 : f32
    %254 = vector.broadcast %cst_132 : f32 to vector<128x64xf32>
    %255 = arith.addf %253, %254 : vector<128x64xf32>
    %256 = arith.mulf %255, %251 : vector<128x64xf32>
    %cst_133 = arith.constant 1.42141378 : f32
    %257 = vector.broadcast %cst_133 : f32 to vector<128x64xf32>
    %258 = arith.addf %256, %257 : vector<128x64xf32>
    %259 = arith.mulf %258, %251 : vector<128x64xf32>
    %cst_134 = arith.constant -0.284496725 : f32
    %260 = vector.broadcast %cst_134 : f32 to vector<128x64xf32>
    %261 = arith.addf %259, %260 : vector<128x64xf32>
    %262 = arith.mulf %261, %251 : vector<128x64xf32>
    %cst_135 = arith.constant 0.254829586 : f32
    %263 = vector.broadcast %cst_135 : f32 to vector<128x64xf32>
    %264 = arith.addf %262, %263 : vector<128x64xf32>
    %265 = arith.mulf %264, %251 : vector<128x64xf32>
    %cst_136 = arith.constant 0.000000e+00 : f32
    %266 = vector.broadcast %cst_136 : f32 to vector<128x64xf32>
    %267 = arith.subf %266, %246 : vector<128x64xf32>
    %268 = arith.mulf %267, %246 : vector<128x64xf32>
    %269 = math.exp %268 : vector<128x64xf32>
    %270 = arith.mulf %265, %269 : vector<128x64xf32>
    %cst_137 = arith.constant 1.000000e+00 : f32
    %271 = vector.broadcast %cst_137 : f32 to vector<128x64xf32>
    %272 = arith.subf %271, %270 : vector<128x64xf32>
    %273 = arith.mulf %245, %272 : vector<128x64xf32>
    %cst_138 = arith.constant 1.000000e+00 : f32
    %274 = vector.broadcast %cst_138 : f32 to vector<128x64xf32>
    %275 = arith.addf %274, %273 : vector<128x64xf32>
    %276 = arith.mulf %238, %275 : vector<128x64xf32>
    %277 = arith.truncf %276 : vector<128x64xf32> to vector<128x64xbf16>
    %c0_139 = arith.constant 0 : index
    %c0_140 = arith.constant 0 : index
    %278 = vector.load %arg8[%c0_139, %c0_140] : memref<64x32xbf16, #tpu.memory_space<vmem>>, vector<64x32xbf16>
    %cst_141 = arith.constant dense<0.000000e+00> : vector<128x32xf32>
    %279 = tpu.matmul %277, %278, %cst_141 {dimension_numbers = #tpu.dot_dimension_numbers<[1], [0], [0], [1], [0, 0, 1, 1], [], []>} : vector<128x64xbf16>, vector<64x32xbf16>, vector<128x32xf32> -> vector<128x32xf32>
    %c6_142 = arith.constant 6 : index
    %c0_143 = arith.constant 0 : index
    %280 = vector.load %arg10[%c6_142, %c0_143] : memref<10x128xf32, #tpu.memory_space<vmem>>, vector<1x32xf32>
    %281 = vector.broadcast %280 : vector<1x32xf32> to vector<128x32xf32>
    %282 = arith.addf %279, %281 : vector<128x32xf32>
    %283 = arith.addf %206, %282 : vector<128x32xf32>
    %c7_144 = arith.constant 7 : index
    %c0_145 = arith.constant 0 : index
    %284 = vector.load %arg10[%c7_144, %c0_145] : memref<10x128xf32, #tpu.memory_space<vmem>>, vector<1x32xf32>
    %c8_146 = arith.constant 8 : index
    %c0_147 = arith.constant 0 : index
    %285 = vector.load %arg10[%c8_146, %c0_147] : memref<10x128xf32, #tpu.memory_space<vmem>>, vector<1x32xf32>
    %cst_148 = arith.constant dense<0.000000e+00> : vector<128xf32>
    %286 = vector.multi_reduction <add>, %283, %cst_148 [1] : vector<128x32xf32> to vector<128xf32>
    %287 = vector.shape_cast %286 : vector<128xf32> to vector<128x1xf32>
    %cst_149 = arith.constant 3.200000e+01 : f32
    %288 = vector.broadcast %cst_149 : f32 to vector<128x1xf32>
    %289 = arith.divf %287, %288 : vector<128x1xf32>
    %290 = vector.broadcast %289 : vector<128x1xf32> to vector<128x32xf32>
    %291 = arith.subf %283, %290 : vector<128x32xf32>
    %292 = arith.mulf %291, %291 : vector<128x32xf32>
    %cst_150 = arith.constant dense<0.000000e+00> : vector<128xf32>
    %293 = vector.multi_reduction <add>, %292, %cst_150 [1] : vector<128x32xf32> to vector<128xf32>
    %294 = vector.shape_cast %293 : vector<128xf32> to vector<128x1xf32>
    %cst_151 = arith.constant 3.200000e+01 : f32
    %295 = vector.broadcast %cst_151 : f32 to vector<128x1xf32>
    %296 = arith.divf %294, %295 : vector<128x1xf32>
    %297 = vector.broadcast %289 : vector<128x1xf32> to vector<128x32xf32>
    %298 = arith.subf %283, %297 : vector<128x32xf32>
    %cst_152 = arith.constant 9.99999997E-7 : f32
    %299 = vector.broadcast %cst_152 : f32 to vector<128x1xf32>
    %300 = arith.addf %296, %299 : vector<128x1xf32>
    %301 = math.rsqrt %300 : vector<128x1xf32>
    %302 = vector.broadcast %301 : vector<128x1xf32> to vector<128x32xf32>
    %303 = arith.mulf %298, %302 : vector<128x32xf32>
    %304 = vector.broadcast %284 : vector<1x32xf32> to vector<128x32xf32>
    %305 = arith.mulf %303, %304 : vector<128x32xf32>
    %306 = vector.broadcast %285 : vector<1x32xf32> to vector<128x32xf32>
    %307 = arith.addf %305, %306 : vector<128x32xf32>
    %308 = vector.shape_cast %307 : vector<128x32xf32> to vector<8x16x32xf32>
    %cst_153 = arith.constant dense<0.000000e+00> : vector<8x32xf32>
    %309 = vector.multi_reduction <add>, %308, %cst_153 [1] : vector<8x16x32xf32> to vector<8x32xf32>
    %cst_154 = arith.constant 1.600000e+01 : f32
    %310 = vector.broadcast %cst_154 : f32 to vector<8x32xf32>
    %311 = arith.divf %309, %310 : vector<8x32xf32>
    %312 = arith.truncf %311 : vector<8x32xf32> to vector<8x32xbf16>
    %c0_155 = arith.constant 0 : index
    %c0_156 = arith.constant 0 : index
    %313 = vector.load %arg9[%c0_155, %c0_156] : memref<32x128xbf16, #tpu.memory_space<vmem>>, vector<32x128xbf16>
    %cst_157 = arith.constant dense<0.000000e+00> : vector<8x128xf32>
    %314 = tpu.matmul %312, %313, %cst_157 {dimension_numbers = #tpu.dot_dimension_numbers<[1], [0], [0], [1], [0, 0, 1, 1], [], []>} : vector<8x32xbf16>, vector<32x128xbf16>, vector<8x128xf32> -> vector<8x128xf32>
    %c9_158 = arith.constant 9 : index
    %c0_159 = arith.constant 0 : index
    %315 = vector.load %arg10[%c9_158, %c0_159] : memref<10x128xf32, #tpu.memory_space<vmem>>, vector<1x128xf32>
    %316 = vector.broadcast %315 : vector<1x128xf32> to vector<8x128xf32>
    %317 = arith.addf %314, %316 : vector<8x128xf32>
    %c0_160 = arith.constant 0 : index
    %c0_161 = arith.constant 0 : index
    %318 = vector.load %arg11[%c0_160, %c0_161] : memref<8x128xf32, #tpu.memory_space<vmem>>, vector<8x128xf32>
    tpu.vector_store %arg11[%c0_160, %c0_161], %317 {strides = array<i32>} : memref<8x128xf32, #tpu.memory_space<vmem>>, vector<8x128xf32>,
    return
  }
  func.func @transform_0(%arg0: i32) -> (i32, i32) {
    %c0_i32 = arith.constant 0 : i32
    %c0_i32_0 = arith.constant 0 : i32
    return %arg0, %c0_i32 : i32, i32
  }
  func.func @transform_1(%arg0: i32) -> (i32, i32) {
    %c0_i32 = arith.constant 0 : i32
    %c0_i32_0 = arith.constant 0 : i32
    %c0_i32_1 = arith.constant 0 : i32
    return %c0_i32, %c0_i32_0 : i32, i32
  }
  func.func @transform_2(%arg0: i32) -> (i32, i32) {
    %c0_i32 = arith.constant 0 : i32
    %c0_i32_0 = arith.constant 0 : i32
    %c0_i32_1 = arith.constant 0 : i32
    return %c0_i32, %c0_i32_0 : i32, i32
  }
  func.func @transform_3(%arg0: i32) -> (i32, i32, i32) {
    %c0_i32 = arith.constant 0 : i32
    %c0_i32_0 = arith.constant 0 : i32
    %c0_i32_1 = arith.constant 0 : i32
    %c0_i32_2 = arith.constant 0 : i32
    return %c0_i32, %c0_i32_0, %c0_i32_1 : i32, i32, i32
  }
  func.func @transform_4(%arg0: i32) -> (i32, i32) {
    %c0_i32 = arith.constant 0 : i32
    %c0_i32_0 = arith.constant 0 : i32
    %c0_i32_1 = arith.constant 0 : i32
    return %c0_i32, %c0_i32_0 : i32, i32
  }
  func.func @transform_5(%arg0: i32) -> (i32, i32, i32) {
    %c0_i32 = arith.constant 0 : i32
    %c0_i32_0 = arith.constant 0 : i32
    %c0_i32_1 = arith.constant 0 : i32
    %c0_i32_2 = arith.constant 0 : i32
    return %c0_i32, %c0_i32_0, %c0_i32_1 : i32, i32, i32
  }
  func.func @transform_6(%arg0: i32) -> (i32, i32) {
    %c0_i32 = arith.constant 0 : i32
    %c0_i32_0 = arith.constant 0 : i32
    %c0_i32_1 = arith.constant 0 : i32
    return %c0_i32, %c0_i32_0 : i32, i32
  }
  func.func @transform_7(%arg0: i32) -> (i32, i32) {
    %c0_i32 = arith.constant 0 : i32
    %c0_i32_0 = arith.constant 0 : i32
    %c0_i32_1 = arith.constant 0 : i32
    return %c0_i32, %c0_i32_0 : i32, i32
  }
  func.func @transform_8(%arg0: i32) -> (i32, i32) {
    %c0_i32 = arith.constant 0 : i32
    %c0_i32_0 = arith.constant 0 : i32
    %c0_i32_1 = arith.constant 0 : i32
    return %c0_i32, %c0_i32_0 : i32, i32
  }
  func.func @transform_9(%arg0: i32) -> (i32, i32) {
    %c0_i32 = arith.constant 0 : i32
    %c0_i32_0 = arith.constant 0 : i32
    %c0_i32_1 = arith.constant 0 : i32
    return %c0_i32, %c0_i32_0 : i32, i32
  }
  func.func @transform_10(%arg0: i32) -> (i32, i32) {
    %c0_i32 = arith.constant 0 : i32
    %c0_i32_0 = arith.constant 0 : i32
    return %arg0, %c0_i32 : i32, i32
  }
}

</mosaic_0001>

<llo_original>
// kernel: transformer_model_forward.1
$region0: #{transformer_model_forward.1}
  #allocation0 [shape = 'u32[]', space=smem, size = 0x4, offset = 0x4, fixed_abs, tag = 'smem constant byte address 0x4 - core index']
  #allocation1 [shape = 'u32[144,128]{1,0:T(1,128)}', space=vmem, size = 0x12000, scoped, tag = 'internal scratch']
  %s0 = inlined_call_operand.vmem [shape: bf16[256,48], index: 0, kind: input, shape index: {}]
  %s1 = inlined_call_operand.vmem [shape: f32[128,32], index: 1, kind: input, shape index: {}]
  %s2 = inlined_call_operand.vmem [shape: bf16[48,32], index: 2, kind: input, shape index: {}]
  %s3 = inlined_call_operand.vmem [shape: bf16[12,32,8], index: 3, kind: input, shape index: {}]
  %s4 = inlined_call_operand.vmem [shape: f32[12,8], index: 4, kind: input, shape index: {}]
  %s5 = inlined_call_operand.vmem [shape: bf16[4,8,32], index: 5, kind: input, shape index: {}]
  %s6 = inlined_call_operand.vmem [shape: bf16[32,64], index: 6, kind: input, shape index: {}]
  %s7 = inlined_call_operand.vmem [shape: bf16[64,32], index: 7, kind: input, shape index: {}]
  %s8 = inlined_call_operand.vmem [shape: bf16[32,128], index: 8, kind: input, shape index: {}]
  %s9 = inlined_call_operand.vmem [shape: f32[10,128], index: 9, kind: input, shape index: {}]
  %s10 = inlined_call_operand.vmem [shape: f32[16,128], index: 10, kind: output, shape index: {}]
  %s11 = sld [smem:[#allocation0]]
  $region73: #{transformer_model_forward.1} parent=0
    _
  %s13 = ssub.s32 1, %s11
  %s14 = scalar_select 0, %s13, %s11
  loop: start=0, step=1, limit=4
  $region2: #{transformer_model_forward.1} parent=0 // loop_pre_header
    _
  $region3: #{transformer_model_forward.1} parent=0 // loop_header
    %s16 = sphi 0, %s20
    %p17 = scmp.ge.s32.totalorder %s16, 4
    %s26 = sphi 0, %s28
    %s29 = sphi 0, %s26
    %s30 = sphi 0, %s29
    %s46 = sphi 0, %s30
    %s50 = sphi 0, %s50
    %s52 = sphi 0, %s50
    %s53 = sphi 0, %s52
    %s67 = sphi 0, %s53
    %s71 = sphi 0, %s71
    %s73 = sphi 0, %s71
    %s74 = sphi 0, %s73
    %s88 = sphi 0, %s74
    %s92 = sphi 0, %s92
    %s94 = sphi 0, %s92
    %s95 = sphi 0, %s94
    %s109 = sphi 0, %s95
    %s113 = sphi 0, %s113
    %s115 = sphi 0, %s113
    %s116 = sphi 0, %s115
    %s130 = sphi 0, %s116
    %s134 = sphi 0, %s134
    %s136 = sphi 0, %s134
    %s137 = sphi 0, %s136
    %s151 = sphi 0, %s137
    %s155 = sphi 0, %s155
    %s157 = sphi 0, %s155
    %s158 = sphi 0, %s157
    %s172 = sphi 0, %s158
    %s176 = sphi 0, %s176
    %s178 = sphi 0, %s176
    %s179 = sphi 0, %s178
    %s193 = sphi 0, %s179
    %s197 = sphi 0, %s197
    %s199 = sphi 0, %s197
    %s200 = sphi 0, %s199
    %s214 = sphi 0, %s200
    %s218 = sphi 0, %s218
    %s220 = sphi 0, %s218
    %s221 = sphi 0, %s220
    %s235 = sphi 0, %s221
    %s241 = sphi 0, %s243
    %s244 = sphi 0, %s241
    %s245 = sphi 0, %s244
    %s261 = sphi 0, %s245
  $region4: #{transformer_model_forward.1} parent=0 // loop_header_branch
    %19 = sbr.rel (%p17) target = $region8
  $region5: #{transformer_model_forward.1} parent=0 // loop_body
    %s21 = ssub.s32 %s16, 1
    %s22 = ssub.s32 %s16, 2
    %s23 = sadd.s32 %s16, 1
    %s24 = ssub.s32 %s16, %s23
    %p25 = scmp.eq.s32.totalorder %s24, 0
    %s27 = sadd.s32 %s26, 1
    %s28 = scalar_select %p25, %s26, %s27
    %p31 = pneg %p25
    %p32 = scmp.eq.s32.totalorder %s16, 1
    %p33 = por %p31, %p32
    %p34 = scmp.ne.s32.totalorder %s26, %s29
    %p35 = scmp.eq.s32.totalorder %s16, 0
    %p36 = por %p34, %p35
    %p37 = scmp.ne.s32.totalorder %s26, %s29
    %p38 = scmp.eq.s32.totalorder %s21, 1
    %p39 = por %p37, %p38
    %p40 = scmp.ne.s32.totalorder %s29, %s30
    %p41 = scmp.eq.s32.totalorder %s21, 0
    %p42 = por %p40, %p41
    %p43 = scmp.ne.s32.totalorder %s29, %s30
    %p44 = scmp.eq.s32.totalorder %s22, 1
    %p45 = por %p43, %p44
    %p47 = scmp.ne.s32.totalorder %s30, %s46
    %p48 = scmp.eq.s32.totalorder %s22, 0
    %p49 = por %p47, %p48
    %s51 = sadd.s32 %s50, 1
    %p54 = scmp.eq.s32.totalorder %s16, 1
    %p55 = scmp.ne.s32.totalorder %s50, %s52
    %p56 = scmp.eq.s32.totalorder %s16, 0
    %p57 = por %p55, %p56
    %p58 = scmp.ne.s32.totalorder %s50, %s52
    %p59 = scmp.eq.s32.totalorder %s21, 1
    %p60 = por %p58, %p59
    %p61 = scmp.ne.s32.totalorder %s52, %s53
    %p62 = scmp.eq.s32.totalorder %s21, 0
    %p63 = por %p61, %p62
    %p64 = scmp.ne.s32.totalorder %s52, %s53
    %p65 = scmp.eq.s32.totalorder %s22, 1
    %p66 = por %p64, %p65
    %p68 = scmp.ne.s32.totalorder %s53, %s67
    %p69 = scmp.eq.s32.totalorder %s22, 0
    %p70 = por %p68, %p69
    %s72 = sadd.s32 %s71, 1
    %p75 = scmp.eq.s32.totalorder %s16, 1
    %p76 = scmp.ne.s32.totalorder %s71, %s73
    %p77 = scmp.eq.s32.totalorder %s16, 0
    %p78 = por %p76, %p77
    %p79 = scmp.ne.s32.totalorder %s71, %s73
    %p80 = scmp.eq.s32.totalorder %s21, 1
    %p81 = por %p79, %p80
    %p82 = scmp.ne.s32.totalorder %s73, %s74
    %p83 = scmp.eq.s32.totalorder %s21, 0
    %p84 = por %p82, %p83
    %p85 = scmp.ne.s32.totalorder %s73, %s74
    %p86 = scmp.eq.s32.totalorder %s22, 1
    %p87 = por %p85, %p86
    %p89 = scmp.ne.s32.totalorder %s74, %s88
    %p90 = scmp.eq.s32.totalorder %s22, 0
    %p91 = por %p89, %p90
    %s93 = sadd.s32 %s92, 1
    %p96 = scmp.eq.s32.totalorder %s16, 1
    %p97 = scmp.ne.s32.totalorder %s92, %s94
    %p98 = scmp.eq.s32.totalorder %s16, 0
    %p99 = por %p97, %p98
    %p100 = scmp.ne.s32.totalorder %s92, %s94
    %p101 = scmp.eq.s32.totalorder %s21, 1
    %p102 = por %p100, %p101
    %p103 = scmp.ne.s32.totalorder %s94, %s95
    %p104 = scmp.eq.s32.totalorder %s21, 0
    %p105 = por %p103, %p104
    %p106 = scmp.ne.s32.totalorder %s94, %s95
    %p107 = scmp.eq.s32.totalorder %s22, 1
    %p108 = por %p106, %p107
    %p110 = scmp.ne.s32.totalorder %s95, %s109
    %p111 = scmp.eq.s32.totalorder %s22, 0
    %p112 = por %p110, %p111
    %s114 = sadd.s32 %s113, 1
    %p117 = scmp.eq.s32.totalorder %s16, 1
    %p118 = scmp.ne.s32.totalorder %s113, %s115
    %p119 = scmp.eq.s32.totalorder %s16, 0
    %p120 = por %p118, %p119
    %p121 = scmp.ne.s32.totalorder %s113, %s115
    %p122 = scmp.eq.s32.totalorder %s21, 1
    %p123 = por %p121, %p122
    %p124 = scmp.ne.s32.totalorder %s115, %s116
    %p125 = scmp.eq.s32.totalorder %s21, 0
    %p126 = por %p124, %p125
    %p127 = scmp.ne.s32.totalorder %s115, %s116
    %p128 = scmp.eq.s32.totalorder %s22, 1
    %p129 = por %p127, %p128
    %p131 = scmp.ne.s32.totalorder %s116, %s130
    %p132 = scmp.eq.s32.totalorder %s22, 0
    %p133 = por %p131, %p132
    %s135 = sadd.s32 %s134, 1
    %p138 = scmp.eq.s32.totalorder %s16, 1
    %p139 = scmp.ne.s32.totalorder %s134, %s136
    %p140 = scmp.eq.s32.totalorder %s16, 0
    %p141 = por %p139, %p140
    %p142 = scmp.ne.s32.totalorder %s134, %s136
    %p143 = scmp.eq.s32.totalorder %s21, 1
    %p144 = por %p142, %p143
    %p145 = scmp.ne.s32.totalorder %s136, %s137
    %p146 = scmp.eq.s32.totalorder %s21, 0
    %p147 = por %p145, %p146
    %p148 = scmp.ne.s32.totalorder %s136, %s137
    %p149 = scmp.eq.s32.totalorder %s22, 1
    %p150 = por %p148, %p149
    %p152 = scmp.ne.s32.totalorder %s137, %s151
    %p153 = scmp.eq.s32.totalorder %s22, 0
    %p154 = por %p152, %p153
    %s156 = sadd.s32 %s155, 1
    %p159 = scmp.eq.s32.totalorder %s16, 1
    %p160 = scmp.ne.s32.totalorder %s155, %s157
    %p161 = scmp.eq.s32.totalorder %s16, 0
    %p162 = por %p160, %p161
    %p163 = scmp.ne.s32.totalorder %s155, %s157
    %p164 = scmp.eq.s32.totalorder %s21, 1
    %p165 = por %p163, %p164
    %p166 = scmp.ne.s32.totalorder %s157, %s158
    %p167 = scmp.eq.s32.totalorder %s21, 0
    %p168 = por %p166, %p167
    %p169 = scmp.ne.s32.totalorder %s157, %s158
    %p170 = scmp.eq.s32.totalorder %s22, 1
    %p171 = por %p169, %p170
    %p173 = scmp.ne.s32.totalorder %s158, %s172
    %p174 = scmp.eq.s32.totalorder %s22, 0
    %p175 = por %p173, %p174
    %s177 = sadd.s32 %s176, 1
    %p180 = scmp.eq.s32.totalorder %s16, 1
    %p181 = scmp.ne.s32.totalorder %s176, %s178
    %p182 = scmp.eq.s32.totalorder %s16, 0
    %p183 = por %p181, %p182
    %p184 = scmp.ne.s32.totalorder %s176, %s178
    %p185 = scmp.eq.s32.totalorder %s21, 1
    %p186 = por %p184, %p185
    %p187 = scmp.ne.s32.totalorder %s178, %s179
    %p188 = scmp.eq.s32.totalorder %s21, 0
    %p189 = por %p187, %p188
    %p190 = scmp.ne.s32.totalorder %s178, %s179
    %p191 = scmp.eq.s32.totalorder %s22, 1
    %p192 = por %p190, %p191
    %p194 = scmp.ne.s32.totalorder %s179, %s193
    %p195 = scmp.eq.s32.totalorder %s22, 0
    %p196 = por %p194, %p195
    %s198 = sadd.s32 %s197, 1
    %p201 = scmp.eq.s32.totalorder %s16, 1
    %p202 = scmp.ne.s32.totalorder %s197, %s199
    %p203 = scmp.eq.s32.totalorder %s16, 0
    %p204 = por %p202, %p203
    %p205 = scmp.ne.s32.totalorder %s197, %s199
    %p206 = scmp.eq.s32.totalorder %s21, 1
    %p207 = por %p205, %p206
    %p208 = scmp.ne.s32.totalorder %s199, %s200
    %p209 = scmp.eq.s32.totalorder %s21, 0
    %p210 = por %p208, %p209
    %p211 = scmp.ne.s32.totalorder %s199, %s200
    %p212 = scmp.eq.s32.totalorder %s22, 1
    %p213 = por %p211, %p212
    %p215 = scmp.ne.s32.totalorder %s200, %s214
    %p216 = scmp.eq.s32.totalorder %s22, 0
    %p217 = por %p215, %p216
    %s219 = sadd.s32 %s218, 1
    %p222 = scmp.eq.s32.totalorder %s16, 1
    %p223 = scmp.ne.s32.totalorder %s218, %s220
    %p224 = scmp.eq.s32.totalorder %s16, 0
    %p225 = por %p223, %p224
    %p226 = scmp.ne.s32.totalorder %s218, %s220
    %p227 = scmp.eq.s32.totalorder %s21, 1
    %p228 = por %p226, %p227
    %p229 = scmp.ne.s32.totalorder %s220, %s221
    %p230 = scmp.eq.s32.totalorder %s21, 0
    %p231 = por %p229, %p230
    %p232 = scmp.ne.s32.totalorder %s220, %s221
    %p233 = scmp.eq.s32.totalorder %s22, 1
    %p234 = por %p232, %p233
    %p236 = scmp.ne.s32.totalorder %s221, %s235
    %p237 = scmp.eq.s32.totalorder %s22, 0
    %p238 = por %p236, %p237
    %s239 = ssub.s32 %s16, %s23
    %p240 = scmp.eq.s32.totalorder %s239, 0
    %s242 = sadd.s32 %s241, 1
    %s243 = scalar_select %p240, %s241, %s242
    %p246 = pneg %p240
    %p247 = scmp.eq.s32.totalorder %s16, 1
    %p248 = por %p246, %p247
    %p249 = scmp.ne.s32.totalorder %s241, %s244
    %p250 = scmp.eq.s32.totalorder %s16, 0
    %p251 = por %p249, %p250
    %p252 = scmp.ne.s32.totalorder %s241, %s244
    %p253 = scmp.eq.s32.totalorder %s21, 1
    %p254 = por %p252, %p253
    %p255 = scmp.ne.s32.totalorder %s244, %s245
    %p256 = scmp.eq.s32.totalorder %s21, 0
    %p257 = por %p255, %p256
    %p258 = scmp.ne.s32.totalorder %s244, %s245
    %p259 = scmp.eq.s32.totalorder %s22, 1
    %p260 = por %p258, %p259
    %p262 = scmp.ne.s32.totalorder %s245, %s261
    %p263 = scmp.eq.s32.totalorder %s22, 0
    %p264 = por %p262, %p263
    %p265 = scmp.le.s32.totalorder 1, %s16
    %p266 = scmp.lt.s32.totalorder %s16, 3
    %p267 = pnand %p265, %p266
    %p268 = pneg %p267
    // Predicated region
    $region9: #{transformer_model_forward.1} parent=5 // pred_check
      _
    $region10: #{transformer_model_forward.1} parent=5 // pred_check_branch
      %270 = sbr.rel (%p267) target = $region12
    $region11: #{transformer_model_forward.1} parent=5 // pred_region
      %s271 = ssub.s32 %s16, 1
      // Predicated region
      $region13: #{transformer_model_forward.1} parent=11 // pred_check
        %p272 = pneg %p63
      $region14: #{transformer_model_forward.1} parent=11 // pred_check_branch
        %274 = sbr.rel (%p272) target = $region16
      $region15: #{transformer_model_forward.1} parent=11 // pred_region
        _
      $region16: #{transformer_model_forward.1} parent=11 // pred_fallthru
        _
      // Predicated region
      $region17: #{transformer_model_forward.1} parent=11 // pred_check
        %p275 = pneg %p84
      $region18: #{transformer_model_forward.1} parent=11 // pred_check_branch
        %277 = sbr.rel (%p275) target = $region20
      $region19: #{transformer_model_forward.1} parent=11 // pred_region
        _
      $region20: #{transformer_model_forward.1} parent=11 // pred_fallthru
        _
      // Predicated region
      $region21: #{transformer_model_forward.1} parent=11 // pred_check
        %p278 = pneg %p105
      $region22: #{transformer_model_forward.1} parent=11 // pred_check_branch
        %280 = sbr.rel (%p278) target = $region24
      $region23: #{transformer_model_forward.1} parent=11 // pred_region
        _
      $region24: #{transformer_model_forward.1} parent=11 // pred_fallthru
        _
      // Predicated region
      $region25: #{transformer_model_forward.1} parent=11 // pred_check
        %p281 = pneg %p126
      $region26: #{transformer_model_forward.1} parent=11 // pred_check_branch
        %283 = sbr.rel (%p281) target = $region28
      $region27: #{transformer_model_forward.1} parent=11 // pred_region
        _
      $region28: #{transformer_model_forward.1} parent=11 // pred_fallthru
        _
      // Predicated region
      $region29: #{transformer_model_forward.1} parent=11 // pred_check
        %p284 = pneg %p147
      $region30: #{transformer_model_forward.1} parent=11 // pred_check_branch
        %286 = sbr.rel (%p284) target = $region32
      $region31: #{transformer_model_forward.1} parent=11 // pred_region
        _
      $region32: #{transformer_model_forward.1} parent=11 // pred_fallthru
        _
      // Predicated region
      $region33: #{transformer_model_forward.1} parent=11 // pred_check
        %p287 = pneg %p168
      $region34: #{transformer_model_forward.1} parent=11 // pred_check_branch
        %289 = sbr.rel (%p287) target = $region36
      $region35: #{transformer_model_forward.1} parent=11 // pred_region
        _
      $region36: #{transformer_model_forward.1} parent=11 // pred_fallthru
        _
      // Predicated region
      $region37: #{transformer_model_forward.1} parent=11 // pred_check
        %p290 = pneg %p189
      $region38: #{transformer_model_forward.1} parent=11 // pred_check_branch
        %292 = sbr.rel (%p290) target = $region40
      $region39: #{transformer_model_forward.1} parent=11 // pred_region
        _
      $region40: #{transformer_model_forward.1} parent=11 // pred_fallthru
        _
      // Predicated region
      $region41: #{transformer_model_forward.1} parent=11 // pred_check
        %p293 = pneg %p210
      $region42: #{transformer_model_forward.1} parent=11 // pred_check_branch
        %295 = sbr.rel (%p293) target = $region44
      $region43: #{transformer_model_forward.1} parent=11 // pred_region
        _
      $region44: #{transformer_model_forward.1} parent=11 // pred_fallthru
        _
      // Predicated region
      $region45: #{transformer_model_forward.1} parent=11 // pred_check
        %p296 = pneg %p231
      $region46: #{transformer_model_forward.1} parent=11 // pred_check_branch
        %298 = sbr.rel (%p296) target = $region48
      $region47: #{transformer_model_forward.1} parent=11 // pred_region
        _
      $region48: #{transformer_model_forward.1} parent=11 // pred_fallthru
        _
    $region12: #{transformer_model_forward.1} parent=5 // pred_fallthru
      _
    %p299 = scmp.lt.s32.totalorder %s16, 2
    // Predicated region
    $region49: #{transformer_model_forward.1} parent=5 // pred_check
      %p300 = pneg %p299
    $region50: #{transformer_model_forward.1} parent=5 // pred_check_branch
      %302 = sbr.rel (%p300) target = $region52
    $region51: #{transformer_model_forward.1} parent=5 // pred_region
      // Predicated region
      $region53: #{transformer_model_forward.1} parent=51 // pred_check
        %p303 = pneg %p36
      $region54: #{transformer_model_forward.1} parent=51 // pred_check_branch
        %305 = sbr.rel (%p303) target = $region56
      $region55: #{transformer_model_forward.1} parent=51 // pred_region
        %s306 = smul.u32 16, %s16
        %p307 = scmp.lt.s32.totalorder %s306, 31
        %s308 = scalar_select %p307, %s306, 31
        %s309 = smul.addr %s308, 4
        %s310 = scalar_lea.vmem %s0, %s309
        %s311 = smul.u32 16, %s16
      $region56: #{transformer_model_forward.1} parent=51 // pred_fallthru
        _
    $region52: #{transformer_model_forward.1} parent=5 // pred_fallthru
      _
    %p312 = scmp.le.s32.totalorder 1, %s16
    %p313 = scmp.lt.s32.totalorder %s16, 3
    %p314 = pnand %p312, %p313
    %p315 = pneg %p314
    // Predicated region
    $region57: #{transformer_model_forward.1} parent=5 // pred_check
      _
    $region58: #{transformer_model_forward.1} parent=5 // pred_check_branch
      %317 = sbr.rel (%p314) target = $region60
    $region59: #{transformer_model_forward.1} parent=5 // pred_region
      %s318 = ssub.s32 %s16, 1
      %s319 = smul.u32 16, %s21
      %p320 = scmp.lt.s32.totalorder %s319, 31
      %s321 = scalar_select %p320, %s319, 31
      %s322 = smul.addr %s321, 4
      %s323 = scalar_lea.vmem %s0, %s322
      %p324 = pneg %p42
      %p325 = pneg %p39
      %p326 = pneg %p63
      %p327 = pneg %p60
      %p328 = pneg %p84
      %p329 = pneg %p81
      %p330 = pneg %p105
      %p331 = pneg %p102
      %p332 = pneg %p126
      %p333 = pneg %p123
      %p334 = pneg %p147
      %p335 = pneg %p144
      %p336 = pneg %p168
      %p337 = pneg %p165
      %p338 = pneg %p189
      %p339 = pneg %p186
      %p340 = pneg %p210
      %p341 = pneg %p207
      %p342 = pneg %p231
      %p343 = pneg %p228
      %p344 = pneg %p257
      %p345 = pneg %p254
      %p346 = scmp.lt.s32.totalorder %s21, 1
      %s347 = scalar_select %p346, %s21, 1
      %s348 = smul.addr %s347, 8
      %s349 = scalar_lea.vmem %s10, %s348
      %s350 = smul.u32 16, %s21
      %p351 = scmp.lt.s32.totalorder %s350, 31
      %s352 = scalar_select %p351, %s350, 31
      %s353 = smul.addr %s352, 4
      %s354 = scalar_lea.vmem %s0, %s353
      %s355 = smul.u32 16, %s21
      %p356 = scmp.lt.s32.totalorder %s21, 1
      %s357 = scalar_select %p356, %s21, 1
      %s358 = smul.addr %s357, 8
      %s359 = scalar_lea.vmem %s10, %s358
      %v361 = vld [vmem:[%s354] sm:$0xf]
      %v362 = vld [vmem:[%s354 + $0x4] sm:$0xf]
      %v363 = vld [vmem:[%s354 + $0x8] sm:$0xf]
      %v364 = vld [vmem:[%s354 + $0xc] sm:$0xf]
      %v365 = vld [vmem:[%s354 + $0x10] sm:$0xf]
      %v366 = vld [vmem:[%s354 + $0x14] sm:$0xf]
      %v367 = vld [vmem:[%s354 + $0x18] sm:$0xf]
      %v368 = vld [vmem:[%s354 + $0x1c] sm:$0xf]
      %v369 = vld [vmem:[%s354 + $0x20] sm:$0xf]
      %v370 = vld [vmem:[%s354 + $0x24] sm:$0xf]
      %v371 = vld [vmem:[%s354 + $0x28] sm:$0xf]
      %v372 = vld [vmem:[%s354 + $0x2c] sm:$0xf]
      %v373 = vld [vmem:[%s354 + $0x30] sm:$0xf]
      %v374 = vld [vmem:[%s354 + $0x34] sm:$0xf]
      %v375 = vld [vmem:[%s354 + $0x38] sm:$0xf]
      %v376 = vld [vmem:[%s354 + $0x3c] sm:$0xf]
      %v377 = vld [vmem:[%s2] sm:$0xf]
      %v378 = vld [vmem:[%s2 + $0x4] sm:$0xf]
      %v379 = vld [vmem:[%s2 + $0x8] sm:$0xf]
      %v380 = vld [vmem:[%s2 + $0xc] sm:$0xf]
      %v381 = vld [vmem:[%s2 + $0x10] sm:$0xf]
      %v382 = vld [vmem:[%s2 + $0x14] sm:$0xf]
      %v383 = vld [vmem:[%s1] sm:$0xff]
      %v384 = vld [vmem:[%s1 + $0x8] sm:$0xff]
      %v385 = vld [vmem:[%s1 + $0x10] sm:$0xff]
      %v386 = vld [vmem:[%s1 + $0x18] sm:$0xff]
      %v387 = vld [vmem:[%s1 + $0x20] sm:$0xff]
      %v388 = vld [vmem:[%s1 + $0x28] sm:$0xff]
      %v389 = vld [vmem:[%s1 + $0x30] sm:$0xff]
      %v390 = vld [vmem:[%s1 + $0x38] sm:$0xff]
      %v391 = vld [vmem:[%s1 + $0x40] sm:$0xff]
      %v392 = vld [vmem:[%s1 + $0x48] sm:$0xff]
      %v393 = vld [vmem:[%s1 + $0x50] sm:$0xff]
      %v394 = vld [vmem:[%s1 + $0x58] sm:$0xff]
      %v395 = vld [vmem:[%s1 + $0x60] sm:$0xff]
      %v396 = vld [vmem:[%s1 + $0x68] sm:$0xff]
      %v397 = vld [vmem:[%s1 + $0x70] sm:$0xff]
      %v398 = vld [vmem:[%s1 + $0x78] sm:$0xff]
      %v415 = vunpack.c.l.b16 %v361
      %v416 = vunpack.c.l.b16 %v362
      %v417 = vunpack.c.l.b16 %v363
      %v418 = vunpack.c.l.b16 %v364
      %v419 = vunpack.c.l.b16 %v365
      %v420 = vunpack.c.l.b16 %v366
      %v421 = vunpack.c.l.b16 %v367
      %v422 = vunpack.c.l.b16 %v368
      %v423 = vunpack.c.l.b16 %v369
      %v424 = vunpack.c.l.b16 %v370
      %v425 = vunpack.c.l.b16 %v371
      %v426 = vunpack.c.l.b16 %v372
      %v427 = vunpack.c.l.b16 %v373
      %v428 = vunpack.c.l.b16 %v374
      %v429 = vunpack.c.l.b16 %v375
      %v430 = vunpack.c.l.b16 %v376
      %v431 = vpack.c.b16 %v416, %v415
      %v432 = vpack.c.b16 %v418, %v417
      %v433 = vpack.c.b16 %v420, %v419
      %v434 = vpack.c.b16 %v422, %v421
      %v435 = vpack.c.b16 %v424, %v423
      %v436 = vpack.c.b16 %v426, %v425
      %v437 = vpack.c.b16 %v428, %v427
      %v438 = vpack.c.b16 %v430, %v429
      %v445 = vunpack.c.l.b16 %v377
      %v446 = vunpack.c.l.b16 %v378
      %v447 = vunpack.c.l.b16 %v379
      %v448 = vunpack.c.l.b16 %v380
      %v449 = vunpack.c.l.b16 %v381
      %v450 = vunpack.c.l.b16 %v382
      %v451 = vpack.c.b16 %v446, %v445
      %v452 = vpack.c.b16 %v448, %v447
      %v453 = vpack.c.b16 %v450, %v449
      %vm457 = vcmask 392192
      %v459 = vsel %vm457, %v431, 0
      %v462 = vsel %vm457, %v432, 0
      %v465 = vsel %vm457, %v433, 0
      %v468 = vsel %vm457, %v434, 0
      %v471 = vsel %vm457, %v435, 0
      %v474 = vsel %vm457, %v436, 0
      %v477 = vsel %vm457, %v437, 0
      %v480 = vsel %vm457, %v438, 0
      %482 = vmatprep.subr.bf16.mxu0 0
      %483 = vmatpush1.bf16.msra.mxu0 %v451
      %484 = vmatprep.subr.bf16.mxu0 0
      %485 = vmatpush1.bf16.msra.mxu0 %v452
      %486 = vmatprep.subr.bf16.mxu0 0
      %487 = vmatpush1.bf16.msra.mxu0 %v453
      %488 = vmatprep.subr.bf16.mxu0 0
      %489 = vmatpush1.bf16.msra.mxu0 0
      %490 = vmatprep.subr.bf16.mxu0 0
      %491 = vmatpush1.bf16.msra.mxu0 0
      %492 = vmatprep.subr.bf16.mxu0 0
      %493 = vmatpush1.bf16.msra.mxu0 0
      %494 = vmatprep.subr.bf16.mxu0 0
      %495 = vmatpush1.bf16.msra.mxu0 0
      %496 = vmatprep.subr.bf16.mxu0 0
      %497 = vmatpush1.bf16.msra.mxu0 0
      %498 = vmatprep.subr.bf16.mxu0 0
      %499 = vmatpush1.bf16.msra.mxu0 0
      %500 = vmatprep.subr.bf16.mxu0 0
      %501 = vmatpush1.bf16.msra.mxu0 0
      %502 = vmatprep.subr.bf16.mxu0 0
      %503 = vmatpush1.bf16.msra.mxu0 0
      %504 = vmatprep.subr.bf16.mxu0 0
      %505 = vmatpush1.bf16.msra.mxu0 0
      %506 = vmatprep.subr.bf16.mxu0 0
      %507 = vmatpush1.bf16.msra.mxu0 0
      %508 = vmatprep.subr.bf16.mxu0 0
      %509 = vmatpush1.bf16.msra.mxu0 0
      %510 = vmatprep.subr.bf16.mxu0 0
      %511 = vmatpush1.bf16.msra.mxu0 0
      %512 = vmatprep.subr.bf16.mxu0 0
      %513 = vmatpush1.bf16.msra.mxu0 0
      %514 = vmatprep.mubr.bf16.mxu0 0
      %515 = vmatmul.mubr.bf16.gmra.mrb[0].mxu0 %v459
      %v516 = vpop.f32.mrb[0].mxu0
      %v517 = vadd.f32 %v383, %v516
      %v518 = vpop.f32.mrb[0].mxu0
      %v519 = vpop.f32.mrb[0].mxu0
      %v520 = vadd.f32 %v384, %v519
      %v521 = vpop.f32.mrb[0].mxu0
      %522 = vmatprep.mubr.bf16.mxu0 0
      %523 = vmatmul.mubr.bf16.gmra.mrb[0].mxu0 %v462
      %v524 = vpop.f32.mrb[0].mxu0
      %v525 = vadd.f32 %v385, %v524
      %v526 = vpop.f32.mrb[0].mxu0
      %v527 = vpop.f32.mrb[0].mxu0
      %v528 = vadd.f32 %v386, %v527
      %v529 = vpop.f32.mrb[0].mxu0
      %530 = vmatprep.mubr.bf16.mxu0 0
      %531 = vmatmul.mubr.bf16.gmra.mrb[0].mxu0 %v465
      %v532 = vpop.f32.mrb[0].mxu0
      %v533 = vadd.f32 %v387, %v532
      %v534 = vpop.f32.mrb[0].mxu0
      %v535 = vpop.f32.mrb[0].mxu0
      %v536 = vadd.f32 %v388, %v535
      %v537 = vpop.f32.mrb[0].mxu0
      %538 = vmatprep.mubr.bf16.mxu0 0
      %539 = vmatmul.mubr.bf16.gmra.mrb[0].mxu0 %v468
      %v540 = vpop.f32.mrb[0].mxu0
      %v541 = vadd.f32 %v389, %v540
      %v542 = vpop.f32.mrb[0].mxu0
      %v543 = vpop.f32.mrb[0].mxu0
      %v544 = vadd.f32 %v390, %v543
      %v545 = vpop.f32.mrb[0].mxu0
      %546 = vmatprep.mubr.bf16.mxu0 0
      %547 = vmatmul.mubr.bf16.gmra.mrb[0].mxu0 %v471
      %v548 = vpop.f32.mrb[0].mxu0
      %v549 = vadd.f32 %v391, %v548
      %v550 = vpop.f32.mrb[0].mxu0
      %v551 = vpop.f32.mrb[0].mxu0
      %v552 = vadd.f32 %v392, %v551
      %v553 = vpop.f32.mrb[0].mxu0
      %554 = vmatprep.mubr.bf16.mxu0 0
      %555 = vmatmul.mubr.bf16.gmra.mrb[0].mxu0 %v474
      %v556 = vpop.f32.mrb[0].mxu0
      %v557 = vadd.f32 %v393, %v556
      %v558 = vpop.f32.mrb[0].mxu0
      %v559 = vpop.f32.mrb[0].mxu0
      %v560 = vadd.f32 %v394, %v559
      %v561 = vpop.f32.mrb[0].mxu0
      %562 = vmatprep.mubr.bf16.mxu0 0
      %563 = vmatmul.mubr.bf16.gmra.mrb[0].mxu0 %v477
      %v564 = vpop.f32.mrb[0].mxu0
      %v565 = vadd.f32 %v395, %v564
      %v566 = vpop.f32.mrb[0].mxu0
      %v567 = vpop.f32.mrb[0].mxu0
      %v568 = vadd.f32 %v396, %v567
      %v569 = vpop.f32.mrb[0].mxu0
      %570 = vmatprep.mubr.bf16.mxu0 0
      %571 = vmatmul.mubr.bf16.gmra.mrb[0].mxu0 %v480
      %v572 = vpop.f32.mrb[0].mxu0
      %v573 = vadd.f32 %v397, %v572
      %v574 = vpop.f32.mrb[0].mxu0
      %v575 = vpop.f32.mrb[0].mxu0
      %v576 = vadd.f32 %v398, %v575
      %v577 = vpop.f32.mrb[0].mxu0
      %578 = vdwg.mxu0
      %v579 = vld [vmem:[%s9] sm:$0x1]
      %v580 = vld [vmem:[%s9 + $0x1] sm:$0x1]
      %vm581 = vcmask 261120
      %v582 = vsel %vm581, %v517, 0.0
      %583 = vadd.xlane.f32.xlu0 %v582
      %v584 = vpop.xlane.xlu0 %583
      %v585 = vsel %vm581, %v520, 0.0
      %586 = vadd.xlane.f32.xlu0 %v585
      %v587 = vpop.xlane.xlu0 %586
      %v588 = vsel %vm581, %v525, 0.0
      %589 = vadd.xlane.f32.xlu0 %v588
      %v590 = vpop.xlane.xlu0 %589
      %v591 = vsel %vm581, %v528, 0.0
      %592 = vadd.xlane.f32.xlu0 %v591
      %v593 = vpop.xlane.xlu0 %592
      %v594 = vsel %vm581, %v533, 0.0
      %595 = vadd.xlane.f32.xlu0 %v594
      %v596 = vpop.xlane.xlu0 %595
      %v597 = vsel %vm581, %v536, 0.0
      %598 = vadd.xlane.f32.xlu0 %v597
      %v599 = vpop.xlane.xlu0 %598
      %v600 = vsel %vm581, %v541, 0.0
      %601 = vadd.xlane.f32.xlu0 %v600
      %v602 = vpop.xlane.xlu0 %601
      %v603 = vsel %vm581, %v544, 0.0
      %604 = vadd.xlane.f32.xlu0 %v603
      %v605 = vpop.xlane.xlu0 %604
      %v606 = vsel %vm581, %v549, 0.0
      %607 = vadd.xlane.f32.xlu0 %v606
      %v608 = vpop.xlane.xlu0 %607
      %v609 = vsel %vm581, %v552, 0.0
      %610 = vadd.xlane.f32.xlu0 %v609
      %v611 = vpop.xlane.xlu0 %610
      %v612 = vsel %vm581, %v557, 0.0
      %613 = vadd.xlane.f32.xlu0 %v612
      %v614 = vpop.xlane.xlu0 %613
      %v615 = vsel %vm581, %v560, 0.0
      %616 = vadd.xlane.f32.xlu0 %v615
      %v617 = vpop.xlane.xlu0 %616
      %v618 = vsel %vm581, %v565, 0.0
      %619 = vadd.xlane.f32.xlu0 %v618
      %v620 = vpop.xlane.xlu0 %619
      %v621 = vsel %vm581, %v568, 0.0
      %622 = vadd.xlane.f32.xlu0 %v621
      %v623 = vpop.xlane.xlu0 %622
      %v624 = vsel %vm581, %v573, 0.0
      %625 = vadd.xlane.f32.xlu0 %v624
      %v626 = vpop.xlane.xlu0 %625
      %v627 = vsel %vm581, %v576, 0.0
      %628 = vadd.xlane.f32.xlu0 %v627
      %v629 = vpop.xlane.xlu0 %628
      %v630 = vrcp.pop 32.0
      %v631 = vmul.f32 %v584, %v630
      %v632 = vmul.f32 %v587, %v630
      %v633 = vmul.f32 %v590, %v630
      %v634 = vmul.f32 %v593, %v630
      %v635 = vmul.f32 %v596, %v630
      %v636 = vmul.f32 %v599, %v630
      %v637 = vmul.f32 %v602, %v630
      %v638 = vmul.f32 %v605, %v630
      %v639 = vmul.f32 %v608, %v630
      %v640 = vmul.f32 %v611, %v630
      %v641 = vmul.f32 %v614, %v630
      %v642 = vmul.f32 %v617, %v630
      %v643 = vmul.f32 %v620, %v630
      %v644 = vmul.f32 %v623, %v630
      %v645 = vmul.f32 %v626, %v630
      %v646 = vmul.f32 %v629, %v630
      %v647 = vsub.f32 %v517, %v631
      %v648 = vsub.f32 %v520, %v632
      %v649 = vsub.f32 %v525, %v633
      %v650 = vsub.f32 %v528, %v634
      %v651 = vsub.f32 %v533, %v635
      %v652 = vsub.f32 %v536, %v636
      %v653 = vsub.f32 %v541, %v637
      %v654 = vsub.f32 %v544, %v638
      %v655 = vsub.f32 %v549, %v639
      %v656 = vsub.f32 %v552, %v640
      %v657 = vsub.f32 %v557, %v641
      %v658 = vsub.f32 %v560, %v642
      %v659 = vsub.f32 %v565, %v643
      %v660 = vsub.f32 %v568, %v644
      %v661 = vsub.f32 %v573, %v645
      %v662 = vsub.f32 %v576, %v646
      %v663 = vmul.f32 %v647, %v647
      %v664 = vmul.f32 %v648, %v648
      %v665 = vmul.f32 %v649, %v649
      %v666 = vmul.f32 %v650, %v650
      %v667 = vmul.f32 %v651, %v651
      %v668 = vmul.f32 %v652, %v652
      %v669 = vmul.f32 %v653, %v653
      %v670 = vmul.f32 %v654, %v654
      %v671 = vmul.f32 %v655, %v655
      %v672 = vmul.f32 %v656, %v656
      %v673 = vmul.f32 %v657, %v657
      %v674 = vmul.f32 %v658, %v658
      %v675 = vmul.f32 %v659, %v659
      %v676 = vmul.f32 %v660, %v660
      %v677 = vmul.f32 %v661, %v661
      %v678 = vmul.f32 %v662, %v662
      %v679 = vsel %vm581, %v663, 0.0
      %680 = vadd.xlane.f32.xlu0 %v679
      %v681 = vpop.xlane.xlu0 %680
      %v682 = vsel %vm581, %v664, 0.0
      %683 = vadd.xlane.f32.xlu0 %v682
      %v684 = vpop.xlane.xlu0 %683
      %v685 = vsel %vm581, %v665, 0.0
      %686 = vadd.xlane.f32.xlu0 %v685
      %v687 = vpop.xlane.xlu0 %686
      %v688 = vsel %vm581, %v666, 0.0
      %689 = vadd.xlane.f32.xlu0 %v688
      %v690 = vpop.xlane.xlu0 %689
      %v691 = vsel %vm581, %v667, 0.0
      %692 = vadd.xlane.f32.xlu0 %v691
      %v693 = vpop.xlane.xlu0 %692
      %v694 = vsel %vm581, %v668, 0.0
      %695 = vadd.xlane.f32.xlu0 %v694
      %v696 = vpop.xlane.xlu0 %695
      %v697 = vsel %vm581, %v669, 0.0
      %698 = vadd.xlane.f32.xlu0 %v697
      %v699 = vpop.xlane.xlu0 %698
      %v700 = vsel %vm581, %v670, 0.0
      %701 = vadd.xlane.f32.xlu0 %v700
      %v702 = vpop.xlane.xlu0 %701
      %v703 = vsel %vm581, %v671, 0.0
      %704 = vadd.xlane.f32.xlu0 %v703
      %v705 = vpop.xlane.xlu0 %704
      %v706 = vsel %vm581, %v672, 0.0
      %707 = vadd.xlane.f32.xlu0 %v706
      %v708 = vpop.xlane.xlu0 %707
      %v709 = vsel %vm581, %v673, 0.0
      %710 = vadd.xlane.f32.xlu0 %v709
      %v711 = vpop.xlane.xlu0 %710
      %v712 = vsel %vm581, %v674, 0.0
      %713 = vadd.xlane.f32.xlu0 %v712
      %v714 = vpop.xlane.xlu0 %713
      %v715 = vsel %vm581, %v675, 0.0
      %716 = vadd.xlane.f32.xlu0 %v715
      %v717 = vpop.xlane.xlu0 %716
      %v718 = vsel %vm581, %v676, 0.0
      %719 = vadd.xlane.f32.xlu0 %v718
      %v720 = vpop.xlane.xlu0 %719
      %v721 = vsel %vm581, %v677, 0.0
      %722 = vadd.xlane.f32.xlu0 %v721
      %v723 = vpop.xlane.xlu0 %722
      %v724 = vsel %vm581, %v678, 0.0
      %725 = vadd.xlane.f32.xlu0 %v724
      %v726 = vpop.xlane.xlu0 %725
      %v727 = vmul.f32 %v681, %v630
      %v728 = vmul.f32 %v684, %v630
      %v729 = vmul.f32 %v687, %v630
      %v730 = vmul.f32 %v690, %v630
      %v731 = vmul.f32 %v693, %v630
      %v732 = vmul.f32 %v696, %v630
      %v733 = vmul.f32 %v699, %v630
      %v734 = vmul.f32 %v702, %v630
      %v735 = vmul.f32 %v705, %v630
      %v736 = vmul.f32 %v708, %v630
      %v737 = vmul.f32 %v711, %v630
      %v738 = vmul.f32 %v714, %v630
      %v739 = vmul.f32 %v717, %v630
      %v740 = vmul.f32 %v720, %v630
      %v741 = vmul.f32 %v723, %v630
      %v742 = vmul.f32 %v726, %v630
      %v743 = vadd.f32 %v727, 1e-06
      %v744 = vadd.f32 %v728, 1e-06
      %v745 = vadd.f32 %v729, 1e-06
      %v746 = vadd.f32 %v730, 1e-06
      %v747 = vadd.f32 %v731, 1e-06
      %v748 = vadd.f32 %v732, 1e-06
      %v749 = vadd.f32 %v733, 1e-06
      %v750 = vadd.f32 %v734, 1e-06
      %v751 = vadd.f32 %v735, 1e-06
      %v752 = vadd.f32 %v736, 1e-06
      %v753 = vadd.f32 %v737, 1e-06
      %v754 = vadd.f32 %v738, 1e-06
      %v755 = vadd.f32 %v739, 1e-06
      %v756 = vadd.f32 %v740, 1e-06
      %v757 = vadd.f32 %v741, 1e-06
      %v758 = vadd.f32 %v742, 1e-06
      %v759 = vrsqrt.pop %v743
      %v760 = vrsqrt.pop %v744
      %v761 = vrsqrt.pop %v745
      %v762 = vrsqrt.pop %v746
      %v763 = vrsqrt.pop %v747
      %v764 = vrsqrt.pop %v748
      %v765 = vrsqrt.pop %v749
      %v766 = vrsqrt.pop %v750
      %v767 = vrsqrt.pop %v751
      %v768 = vrsqrt.pop %v752
      %v769 = vrsqrt.pop %v753
      %v770 = vrsqrt.pop %v754
      %v771 = vrsqrt.pop %v755
      %v772 = vrsqrt.pop %v756
      %v773 = vrsqrt.pop %v757
      %v774 = vrsqrt.pop %v758
      %v775 = vmul.f32 %v647, %v759
      %v776 = vmul.f32 %v648, %v760
      %v777 = vmul.f32 %v649, %v761
      %v778 = vmul.f32 %v650, %v762
      %v779 = vmul.f32 %v651, %v763
      %v780 = vmul.f32 %v652, %v764
      %v781 = vmul.f32 %v653, %v765
      %v782 = vmul.f32 %v654, %v766
      %v783 = vmul.f32 %v655, %v767
      %v784 = vmul.f32 %v656, %v768
      %v785 = vmul.f32 %v657, %v769
      %v786 = vmul.f32 %v658, %v770
      %v787 = vmul.f32 %v659, %v771
      %v788 = vmul.f32 %v660, %v772
      %v789 = vmul.f32 %v661, %v773
      %v790 = vmul.f32 %v662, %v774
      %v791 = vlaneseq
      %v792 = vshrl.u32 %v791, 7
      %v793 = vsub.s32 0, %v792
      %v794 = vrot.slane %v579, %v793
      %v795 = vmul.f32 %v775, %v794
      %v796 = vmul.f32 %v776, %v794
      %v797 = vmul.f32 %v777, %v794
      %v798 = vmul.f32 %v778, %v794
      %v799 = vmul.f32 %v779, %v794
      %v800 = vmul.f32 %v780, %v794
      %v801 = vmul.f32 %v781, %v794
      %v802 = vmul.f32 %v782, %v794
      %v803 = vmul.f32 %v783, %v794
      %v804 = vmul.f32 %v784, %v794
      %v805 = vmul.f32 %v785, %v794
      %v806 = vmul.f32 %v786, %v794
      %v807 = vmul.f32 %v787, %v794
      %v808 = vmul.f32 %v788, %v794
      %v809 = vmul.f32 %v789, %v794
      %v810 = vmul.f32 %v790, %v794
      %v811 = vlaneseq
      %v812 = vshrl.u32 %v811, 7
      %v813 = vsub.s32 0, %v812
      %v814 = vrot.slane %v580, %v813
      %v815 = vadd.f32 %v795, %v814
      %v816 = vadd.f32 %v796, %v814
      %v817 = vadd.f32 %v797, %v814
      %v818 = vadd.f32 %v798, %v814
      %v819 = vadd.f32 %v799, %v814
      %v820 = vadd.f32 %v800, %v814
      %v821 = vadd.f32 %v801, %v814
      %v822 = vadd.f32 %v802, %v814
      %v823 = vadd.f32 %v803, %v814
      %v824 = vadd.f32 %v804, %v814
      %v825 = vadd.f32 %v805, %v814
      %v826 = vadd.f32 %v806, %v814
      %v827 = vadd.f32 %v807, %v814
      %v828 = vadd.f32 %v808, %v814
      %v829 = vadd.f32 %v809, %v814
      %v830 = vadd.f32 %v810, %v814
      %v831 = vpack.c.bf16 %v816, %v815
      %v832 = vpack.c.bf16 %v818, %v817
      %v833 = vpack.c.bf16 %v820, %v819
      %v834 = vpack.c.bf16 %v822, %v821
      %v835 = vpack.c.bf16 %v824, %v823
      %v836 = vpack.c.bf16 %v826, %v825
      %v837 = vpack.c.bf16 %v828, %v827
      %v838 = vpack.c.bf16 %v830, %v829
      %v839 = vld [vmem:[%s3] sm:$0xf]
      %v840 = vld [vmem:[%s3 + $0x4] sm:$0xf]
      %v841 = vld [vmem:[%s3 + $0x8] sm:$0xf]
      %v842 = vld [vmem:[%s3 + $0xc] sm:$0xf]
      %v843 = vld [vmem:[%s4] sm:$0x1]
      %v844 = vlaneseq
      %v845 = vshrl.u32 %v844, 7
      %v846 = vsub.s32 0, %v845
      %v847 = vrot.slane %v843, %v846
      %v852 = vunpack.c.l.b16 %v839
      %v853 = vunpack.c.l.b16 %v840
      %v854 = vunpack.c.l.b16 %v841
      %v855 = vunpack.c.l.b16 %v842
      %v856 = vpack.c.b16 %v853, %v852
      %v857 = vpack.c.b16 %v855, %v854
      %v861 = vsel %vm581, %v831, 0
      %v864 = vsel %vm581, %v832, 0
      %v867 = vsel %vm581, %v833, 0
      %v870 = vsel %vm581, %v834, 0
      %v873 = vsel %vm581, %v835, 0
      %v876 = vsel %vm581, %v836, 0
      %v879 = vsel %vm581, %v837, 0
      %v882 = vsel %vm581, %v838, 0
      %884 = vmatprep.subr.bf16.mxu0 0
      %885 = vmatpush1.bf16.msra.mxu0 %v856
      %886 = vmatprep.subr.bf16.mxu0 0
      %887 = vmatpush1.bf16.msra.mxu0 %v857
      %888 = vmatprep.subr.bf16.mxu0 0
      %889 = vmatpush1.bf16.msra.mxu0 0
      %890 = vmatprep.subr.bf16.mxu0 0
      %891 = vmatpush1.bf16.msra.mxu0 0
      %892 = vmatprep.subr.bf16.mxu0 0
      %893 = vmatpush1.bf16.msra.mxu0 0
      %894 = vmatprep.subr.bf16.mxu0 0
      %895 = vmatpush1.bf16.msra.mxu0 0
      %896 = vmatprep.subr.bf16.mxu0 0
      %897 = vmatpush1.bf16.msra.mxu0 0
      %898 = vmatprep.subr.bf16.mxu0 0
      %899 = vmatpush1.bf16.msra.mxu0 0
      %900 = vmatprep.subr.bf16.mxu0 0
      %901 = vmatpush1.bf16.msra.mxu0 0
      %902 = vmatprep.subr.bf16.mxu0 0
      %903 = vmatpush1.bf16.msra.mxu0 0
      %904 = vmatprep.subr.bf16.mxu0 0
      %905 = vmatpush1.bf16.msra.mxu0 0
      %906 = vmatprep.subr.bf16.mxu0 0
      %907 = vmatpush1.bf16.msra.mxu0 0
      %908 = vmatprep.subr.bf16.mxu0 0
      %909 = vmatpush1.bf16.msra.mxu0 0
      %910 = vmatprep.subr.bf16.mxu0 0
      %911 = vmatpush1.bf16.msra.mxu0 0
      %912 = vmatprep.subr.bf16.mxu0 0
      %913 = vmatpush1.bf16.msra.mxu0 0
      %914 = vmatprep.subr.bf16.mxu0 0
      %915 = vmatpush1.bf16.msra.mxu0 0
      %916 = vmatprep.mubr.bf16.mxu0 0
      %917 = vmatmul.mubr.bf16.gmra.mrb[0].mxu0 %v861
      %v918 = vpop.f32.mrb[0].mxu0
      %v919 = vadd.f32 %v847, %v918
      %v920 = vpop.f32.mrb[0].mxu0
      %v921 = vpop.f32.mrb[0].mxu0
      %v922 = vadd.f32 %v847, %v921
      %v923 = vpop.f32.mrb[0].mxu0
      %924 = vmatprep.mubr.bf16.mxu0 0
      %925 = vmatmul.mubr.bf16.gmra.mrb[0].mxu0 %v864
      %v926 = vpop.f32.mrb[0].mxu0
      %v927 = vadd.f32 %v847, %v926
      %v928 = vpop.f32.mrb[0].mxu0
      %v929 = vpop.f32.mrb[0].mxu0
      %v930 = vadd.f32 %v847, %v929
      %v931 = vpop.f32.mrb[0].mxu0
      %932 = vmatprep.mubr.bf16.mxu0 0
      %933 = vmatmul.mubr.bf16.gmra.mrb[0].mxu0 %v867
      %v934 = vpop.f32.mrb[0].mxu0
      %v935 = vadd.f32 %v847, %v934
      %v936 = vpop.f32.mrb[0].mxu0
      %v937 = vpop.f32.mrb[0].mxu0
      %v938 = vadd.f32 %v847, %v937
      %v939 = vpop.f32.mrb[0].mxu0
      %940 = vmatprep.mubr.bf16.mxu0 0
      %941 = vmatmul.mubr.bf16.gmra.mrb[0].mxu0 %v870
      %v942 = vpop.f32.mrb[0].mxu0
      %v943 = vadd.f32 %v847, %v942
      %v944 = vpop.f32.mrb[0].mxu0
      %v945 = vpop.f32.mrb[0].mxu0
      %v946 = vadd.f32 %v847, %v945
      %v947 = vpop.f32.mrb[0].mxu0
      %948 = vmatprep.mubr.bf16.mxu0 0
      %949 = vmatmul.mubr.bf16.gmra.mrb[0].mxu0 %v873
      %v950 = vpop.f32.mrb[0].mxu0
      %v951 = vadd.f32 %v847, %v950
      %v952 = vpop.f32.mrb[0].mxu0
      %v953 = vpop.f32.mrb[0].mxu0
      %v954 = vadd.f32 %v847, %v953
      %v955 = vpop.f32.mrb[0].mxu0
      %956 = vmatprep.mubr.bf16.mxu0 0
      %957 = vmatmul.mubr.bf16.gmra.mrb[0].mxu0 %v876
      %v958 = vpop.f32.mrb[0].mxu0
      %v959 = vadd.f32 %v847, %v958
      %v960 = vpop.f32.mrb[0].mxu0
      %v961 = vpop.f32.mrb[0].mxu0
      %v962 = vadd.f32 %v847, %v961
      %v963 = vpop.f32.mrb[0].mxu0
      %964 = vmatprep.mubr.bf16.mxu0 0
      %965 = vmatmul.mubr.bf16.gmra.mrb[0].mxu0 %v879
      %v966 = vpop.f32.mrb[0].mxu0
      %v967 = vadd.f32 %v847, %v966
      %v968 = vpop.f32.mrb[0].mxu0
      %v969 = vpop.f32.mrb[0].mxu0
      %v970 = vadd.f32 %v847, %v969
      %v971 = vpop.f32.mrb[0].mxu0
      %972 = vmatprep.mubr.bf16.mxu0 0
      %973 = vmatmul.mubr.bf16.gmra.mrb[0].mxu0 %v882
      %v974 = vpop.f32.mrb[0].mxu0
      %v975 = vadd.f32 %v847, %v974
      %v976 = vpop.f32.mrb[0].mxu0
      %v977 = vpop.f32.mrb[0].mxu0
      %v978 = vadd.f32 %v847, %v977
      %v979 = vpop.f32.mrb[0].mxu0
      %980 = vdwg.mxu0
      %s981 = scalar_lea.vmem %s3, 64
      %v982 = vld [vmem:[%s981] sm:$0xf]
      %v983 = vld [vmem:[%s981 + $0x4] sm:$0xf]
      %v984 = vld [vmem:[%s981 + $0x8] sm:$0xf]
      %v985 = vld [vmem:[%s981 + $0xc] sm:$0xf]
      %v986 = vld [vmem:[%s4 + $0x4] sm:$0x1]
      %v987 = vlaneseq
      %v988 = vshrl.u32 %v987, 7
      %v989 = vsub.s32 0, %v988
      %v990 = vrot.slane %v986, %v989
      %v995 = vunpack.c.l.b16 %v982
      %v996 = vunpack.c.l.b16 %v983
      %v997 = vunpack.c.l.b16 %v984
      %v998 = vunpack.c.l.b16 %v985
      %v999 = vpack.c.b16 %v996, %v995
      %v1000 = vpack.c.b16 %v998, %v997
      %1003 = vmatprep.subr.bf16.mxu0 0
      %1004 = vmatpush1.bf16.msra.mxu0 %v999
      %1005 = vmatprep.subr.bf16.mxu0 0
      %1006 = vmatpush1.bf16.msra.mxu0 %v1000
      %1007 = vmatprep.subr.bf16.mxu0 0
      %1008 = vmatpush1.bf16.msra.mxu0 0
      %1009 = vmatprep.subr.bf16.mxu0 0
      %1010 = vmatpush1.bf16.msra.mxu0 0
      %1011 = vmatprep.subr.bf16.mxu0 0
      %1012 = vmatpush1.bf16.msra.mxu0 0
      %1013 = vmatprep.subr.bf16.mxu0 0
      %1014 = vmatpush1.bf16.msra.mxu0 0
      %1015 = vmatprep.subr.bf16.mxu0 0
      %1016 = vmatpush1.bf16.msra.mxu0 0
      %1017 = vmatprep.subr.bf16.mxu0 0
      %1018 = vmatpush1.bf16.msra.mxu0 0
      %1019 = vmatprep.subr.bf16.mxu0 0
      %1020 = vmatpush1.bf16.msra.mxu0 0
      %1021 = vmatprep.subr.bf16.mxu0 0
      %1022 = vmatpush1.bf16.msra.mxu0 0
      %1023 = vmatprep.subr.bf16.mxu0 0
      %1024 = vmatpush1.bf16.msra.mxu0 0
      %1025 = vmatprep.subr.bf16.mxu0 0
      %1026 = vmatpush1.bf16.msra.mxu0 0
      %1027 = vmatprep.subr.bf16.mxu0 0
      %1028 = vmatpush1.bf16.msra.mxu0 0
      %1029 = vmatprep.subr.bf16.mxu0 0
      %1030 = vmatpush1.bf16.msra.mxu0 0
      %1031 = vmatprep.subr.bf16.mxu0 0
      %1032 = vmatpush1.bf16.msra.mxu0 0
      %1033 = vmatprep.subr.bf16.mxu0 0
      %1034 = vmatpush1.bf16.msra.mxu0 0
      %1035 = vmatprep.mubr.bf16.mxu0 0
      %1036 = vmatmul.mubr.bf16.gmra.mrb[0].mxu0 %v861
      %v1037 = vpop.f32.mrb[0].mxu0
      %v1038 = vadd.f32 %v990, %v1037
      %v1039 = vpop.f32.mrb[0].mxu0
      %v1040 = vpop.f32.mrb[0].mxu0
      %v1041 = vadd.f32 %v990, %v1040
      %v1042 = vpop.f32.mrb[0].mxu0
      %1043 = vmatprep.mubr.bf16.mxu0 0
      %1044 = vmatmul.mubr.bf16.gmra.mrb[0].mxu0 %v864
      %v1045 = vpop.f32.mrb[0].mxu0
      %v1046 = vadd.f32 %v990, %v1045
      %v1047 = vpop.f32.mrb[0].mxu0
      %v1048 = vpop.f32.mrb[0].mxu0
      %v1049 = vadd.f32 %v990, %v1048
      %v1050 = vpop.f32.mrb[0].mxu0
      %1051 = vmatprep.mubr.bf16.mxu0 0
      %1052 = vmatmul.mubr.bf16.gmra.mrb[0].mxu0 %v867
      %v1053 = vpop.f32.mrb[0].mxu0
      %v1054 = vadd.f32 %v990, %v1053
      %v1055 = vpop.f32.mrb[0].mxu0
      %v1056 = vpop.f32.mrb[0].mxu0
      %v1057 = vadd.f32 %v990, %v1056
      %v1058 = vpop.f32.mrb[0].mxu0
      %1059 = vmatprep.mubr.bf16.mxu0 0
      %1060 = vmatmul.mubr.bf16.gmra.mrb[0].mxu0 %v870
      %v1061 = vpop.f32.mrb[0].mxu0
      %v1062 = vadd.f32 %v990, %v1061
      %v1063 = vpop.f32.mrb[0].mxu0
      %v1064 = vpop.f32.mrb[0].mxu0
      %v1065 = vadd.f32 %v990, %v1064
      %v1066 = vpop.f32.mrb[0].mxu0
      %1067 = vmatprep.mubr.bf16.mxu0 0
      %1068 = vmatmul.mubr.bf16.gmra.mrb[0].mxu0 %v873
      %v1069 = vpop.f32.mrb[0].mxu0
      %v1070 = vadd.f32 %v990, %v1069
      %v1071 = vpop.f32.mrb[0].mxu0
      %v1072 = vpop.f32.mrb[0].mxu0
      %v1073 = vadd.f32 %v990, %v1072
      %v1074 = vpop.f32.mrb[0].mxu0
      %1075 = vmatprep.mubr.bf16.mxu0 0
      %1076 = vmatmul.mubr.bf16.gmra.mrb[0].mxu0 %v876
      %v1077 = vpop.f32.mrb[0].mxu0
      %v1078 = vadd.f32 %v990, %v1077
      %v1079 = vpop.f32.mrb[0].mxu0
      %v1080 = vpop.f32.mrb[0].mxu0
      %v1081 = vadd.f32 %v990, %v1080
      %v1082 = vpop.f32.mrb[0].mxu0
      %1083 = vmatprep.mubr.bf16.mxu0 0
      %1084 = vmatmul.mubr.bf16.gmra.mrb[0].mxu0 %v879
      %v1085 = vpop.f32.mrb[0].mxu0
      %v1086 = vadd.f32 %v990, %v1085
      %v1087 = vpop.f32.mrb[0].mxu0
      %v1088 = vpop.f32.mrb[0].mxu0
      %v1089 = vadd.f32 %v990, %v1088
      %v1090 = vpop.f32.mrb[0].mxu0
      %1091 = vmatprep.mubr.bf16.mxu0 0
      %1092 = vmatmul.mubr.bf16.gmra.mrb[0].mxu0 %v882
      %v1093 = vpop.f32.mrb[0].mxu0
      %v1094 = vadd.f32 %v990, %v1093
      %v1095 = vpop.f32.mrb[0].mxu0
      %v1096 = vpop.f32.mrb[0].mxu0
      %v1097 = vadd.f32 %v990, %v1096
      %v1098 = vpop.f32.mrb[0].mxu0
      %1099 = vdwg.mxu0
      %s1100 = scalar_lea.vmem %s3, 128
      %v1101 = vld [vmem:[%s1100] sm:$0xf]
      %v1102 = vld [vmem:[%s1100 + $0x4] sm:$0xf]
      %v1103 = vld [vmem:[%s1100 + $0x8] sm:$0xf]
      %v1104 = vld [vmem:[%s1100 + $0xc] sm:$0xf]
      %v1105 = vld [vmem:[%s4 + $0x8] sm:$0x1]
      %v1106 = vlaneseq
      %v1107 = vshrl.u32 %v1106, 7
      %v1108 = vsub.s32 0, %v1107
      %v1109 = vrot.slane %v1105, %v1108
      %v1114 = vunpack.c.l.b16 %v1101
      %v1115 = vunpack.c.l.b16 %v1102
      %v1116 = vunpack.c.l.b16 %v1103
      %v1117 = vunpack.c.l.b16 %v1104
      %v1118 = vpack.c.b16 %v1115, %v1114
      %v1119 = vpack.c.b16 %v1117, %v1116
      %1122 = vmatprep.subr.bf16.mxu0 0
      %1123 = vmatpush1.bf16.msra.mxu0 %v1118
      %1124 = vmatprep.subr.bf16.mxu0 0
      %1125 = vmatpush1.bf16.msra.mxu0 %v1119
      %1126 = vmatprep.subr.bf16.mxu0 0
      %1127 = vmatpush1.bf16.msra.mxu0 0
      %1128 = vmatprep.subr.bf16.mxu0 0
      %1129 = vmatpush1.bf16.msra.mxu0 0
      %1130 = vmatprep.subr.bf16.mxu0 0
      %1131 = vmatpush1.bf16.msra.mxu0 0
      %1132 = vmatprep.subr.bf16.mxu0 0
      %1133 = vmatpush1.bf16.msra.mxu0 0
      %1134 = vmatprep.subr.bf16.mxu0 0
      %1135 = vmatpush1.bf16.msra.mxu0 0
      %1136 = vmatprep.subr.bf16.mxu0 0
      %1137 = vmatpush1.bf16.msra.mxu0 0
      %1138 = vmatprep.subr.bf16.mxu0 0
      %1139 = vmatpush1.bf16.msra.mxu0 0
      %1140 = vmatprep.subr.bf16.mxu0 0
      %1141 = vmatpush1.bf16.msra.mxu0 0
      %1142 = vmatprep.subr.bf16.mxu0 0
      %1143 = vmatpush1.bf16.msra.mxu0 0
      %1144 = vmatprep.subr.bf16.mxu0 0
      %1145 = vmatpush1.bf16.msra.mxu0 0
      %1146 = vmatprep.subr.bf16.mxu0 0
      %1147 = vmatpush1.bf16.msra.mxu0 0
      %1148 = vmatprep.subr.bf16.mxu0 0
      %1149 = vmatpush1.bf16.msra.mxu0 0
      %1150 = vmatprep.subr.bf16.mxu0 0
      %1151 = vmatpush1.bf16.msra.mxu0 0
      %1152 = vmatprep.subr.bf16.mxu0 0
      %1153 = vmatpush1.bf16.msra.mxu0 0
      %1154 = vmatprep.mubr.bf16.mxu0 0
      %1155 = vmatmul.mubr.bf16.gmra.mrb[0].mxu0 %v861
      %v1156 = vpop.f32.mrb[0].mxu0
      %v1157 = vadd.f32 %v1109, %v1156
      %v1158 = vpop.f32.mrb[0].mxu0
      %v1159 = vpop.f32.mrb[0].mxu0
      %v1160 = vadd.f32 %v1109, %v1159
      %v1161 = vpop.f32.mrb[0].mxu0
      %1162 = vmatprep.mubr.bf16.mxu0 0
      %1163 = vmatmul.mubr.bf16.gmra.mrb[0].mxu0 %v864
      %v1164 = vpop.f32.mrb[0].mxu0
      %v1165 = vadd.f32 %v1109, %v1164
      %v1166 = vpop.f32.mrb[0].mxu0
      %v1167 = vpop.f32.mrb[0].mxu0
      %v1168 = vadd.f32 %v1109, %v1167
      %v1169 = vpop.f32.mrb[0].mxu0
      %1170 = vmatprep.mubr.bf16.mxu0 0
      %1171 = vmatmul.mubr.bf16.gmra.mrb[0].mxu0 %v867
      %v1172 = vpop.f32.mrb[0].mxu0
      %v1173 = vadd.f32 %v1109, %v1172
      %v1174 = vpop.f32.mrb[0].mxu0
      %v1175 = vpop.f32.mrb[0].mxu0
      %v1176 = vadd.f32 %v1109, %v1175
      %v1177 = vpop.f32.mrb[0].mxu0
      %1178 = vmatprep.mubr.bf16.mxu0 0
      %1179 = vmatmul.mubr.bf16.gmra.mrb[0].mxu0 %v870
      %v1180 = vpop.f32.mrb[0].mxu0
      %v1181 = vadd.f32 %v1109, %v1180
      %v1182 = vpop.f32.mrb[0].mxu0
      %v1183 = vpop.f32.mrb[0].mxu0
      %v1184 = vadd.f32 %v1109, %v1183
      %v1185 = vpop.f32.mrb[0].mxu0
      %1186 = vmatprep.mubr.bf16.mxu0 0
      %1187 = vmatmul.mubr.bf16.gmra.mrb[0].mxu0 %v873
      %v1188 = vpop.f32.mrb[0].mxu0
      %v1189 = vadd.f32 %v1109, %v1188
      %v1190 = vpop.f32.mrb[0].mxu0
      %v1191 = vpop.f32.mrb[0].mxu0
      %v1192 = vadd.f32 %v1109, %v1191
      %v1193 = vpop.f32.mrb[0].mxu0
      %1194 = vmatprep.mubr.bf16.mxu0 0
      %1195 = vmatmul.mubr.bf16.gmra.mrb[0].mxu0 %v876
      %v1196 = vpop.f32.mrb[0].mxu0
      %v1197 = vadd.f32 %v1109, %v1196
      %v1198 = vpop.f32.mrb[0].mxu0
      %v1199 = vpop.f32.mrb[0].mxu0
      %v1200 = vadd.f32 %v1109, %v1199
      %v1201 = vpop.f32.mrb[0].mxu0
      %1202 = vmatprep.mubr.bf16.mxu0 0
      %1203 = vmatmul.mubr.bf16.gmra.mrb[0].mxu0 %v879
      %v1204 = vpop.f32.mrb[0].mxu0
      %v1205 = vadd.f32 %v1109, %v1204
      %v1206 = vpop.f32.mrb[0].mxu0
      %v1207 = vpop.f32.mrb[0].mxu0
      %v1208 = vadd.f32 %v1109, %v1207
      %v1209 = vpop.f32.mrb[0].mxu0
      %1210 = vmatprep.mubr.bf16.mxu0 0
      %1211 = vmatmul.mubr.bf16.gmra.mrb[0].mxu0 %v882
      %v1212 = vpop.f32.mrb[0].mxu0
      %v1213 = vadd.f32 %v1109, %v1212
      %v1214 = vpop.f32.mrb[0].mxu0
      %v1215 = vpop.f32.mrb[0].mxu0
      %v1216 = vadd.f32 %v1109, %v1215
      %v1217 = vpop.f32.mrb[0].mxu0
      %1218 = vdwg.mxu0
      %v1219 = vpack.c.bf16 %v922, %v919
      %v1220 = vpack.c.bf16 %v930, %v927
      %v1221 = vpack.c.bf16 %v938, %v935
      %v1222 = vpack.c.bf16 %v946, %v943
      %v1223 = vpack.c.bf16 %v954, %v951
      %v1224 = vpack.c.bf16 %v962, %v959
      %v1225 = vpack.c.bf16 %v970, %v967
      %v1226 = vpack.c.bf16 %v978, %v975
      %v1227 = vpack.c.bf16 %v1041, %v1038
      %v1228 = vpack.c.bf16 %v1049, %v1046
      %v1229 = vpack.c.bf16 %v1057, %v1054
      %v1230 = vpack.c.bf16 %v1065, %v1062
      %v1231 = vpack.c.bf16 %v1073, %v1070
      %v1232 = vpack.c.bf16 %v1081, %v1078
      %v1233 = vpack.c.bf16 %v1089, %v1086
      %v1234 = vpack.c.bf16 %v1097, %v1094
      %vm1235 = vcmask 64512
      %v1237 = vsel %vm1235, %v1219, 0
      %v1240 = vsel %vm1235, %v1227, 0
      %1242 = vmatprep.subr.bf16.mxu0 0
      %1243 = vmatpush1.bf16.xpose.msra.mxu0 %v1240
      %1244 = vmatprep.subr.bf16.mxu0 0
      %1245 = vmatpush1.bf16.xpose.msra.mxu0 0
      %1246 = vmatprep.subr.bf16.mxu0 0
      %1247 = vmatpush1.bf16.xpose.msra.mxu0 0
      %1248 = vmatprep.subr.bf16.mxu0 0
      %1249 = vmatpush1.bf16.xpose.msra.mxu0 0
      %1250 = vmatprep.subr.bf16.mxu0 0
      %1251 = vmatpush1.bf16.xpose.msra.mxu0 0
      %1252 = vmatprep.subr.bf16.mxu0 0
      %1253 = vmatpush1.bf16.xpose.msra.mxu0 0
      %1254 = vmatprep.subr.bf16.mxu0 0
      %1255 = vmatpush1.bf16.xpose.msra.mxu0 0
      %1256 = vmatprep.subr.bf16.mxu0 0
      %1257 = vmatpush1.bf16.xpose.msra.mxu0 0
      %1258 = vmatprep.subr.bf16.mxu0 0
      %1259 = vmatpush1.bf16.xpose.msra.mxu0 0
      %1260 = vmatprep.subr.bf16.mxu0 0
      %1261 = vmatpush1.bf16.xpose.msra.mxu0 0
      %1262 = vmatprep.subr.bf16.mxu0 0
      %1263 = vmatpush1.bf16.xpose.msra.mxu0 0
      %1264 = vmatprep.subr.bf16.mxu0 0
      %1265 = vmatpush1.bf16.xpose.msra.mxu0 0
      %1266 = vmatprep.subr.bf16.mxu0 0
      %1267 = vmatpush1.bf16.xpose.msra.mxu0 0
      %1268 = vmatprep.subr.bf16.mxu0 0
      %1269 = vmatpush1.bf16.xpose.msra.mxu0 0
      %1270 = vmatprep.subr.bf16.mxu0 0
      %1271 = vmatpush1.bf16.xpose.msra.mxu0 0
      %1272 = vmatprep.subr.bf16.mxu0 0
      %1273 = vmatpush1.bf16.xpose.msra.mxu0 0
      %1274 = vmatprep.mubr.bf16.mxu0 0
      %1275 = vmatmul.mubr.bf16.gmra.mrb[0].mxu0 %v1237
      %v1276 = vpop.f32.mrb[0].mxu0
      %v1277 = vadd.f32 0.0, %v1276
      %v1278 = vpop.f32.mrb[0].mxu0
      %v1279 = vpop.f32.mrb[0].mxu0
      %v1280 = vadd.f32 0.0, %v1279
      %v1281 = vpop.f32.mrb[0].mxu0
      %1282 = vdwg.mxu0
      %v1284 = vsel %vm1235, %v1220, 0
      %v1287 = vsel %vm1235, %v1228, 0
      %1289 = vmatprep.subr.bf16.mxu0 0
      %1290 = vmatpush1.bf16.xpose.msra.mxu0 %v1287
      %1291 = vmatprep.subr.bf16.mxu0 0
      %1292 = vmatpush1.bf16.xpose.msra.mxu0 0
      %1293 = vmatprep.subr.bf16.mxu0 0
      %1294 = vmatpush1.bf16.xpose.msra.mxu0 0
      %1295 = vmatprep.subr.bf16.mxu0 0
      %1296 = vmatpush1.bf16.xpose.msra.mxu0 0
      %1297 = vmatprep.subr.bf16.mxu0 0
      %1298 = vmatpush1.bf16.xpose.msra.mxu0 0
      %1299 = vmatprep.subr.bf16.mxu0 0
      %1300 = vmatpush1.bf16.xpose.msra.mxu0 0
      %1301 = vmatprep.subr.bf16.mxu0 0
      %1302 = vmatpush1.bf16.xpose.msra.mxu0 0
      %1303 = vmatprep.subr.bf16.mxu0 0
      %1304 = vmatpush1.bf16.xpose.msra.mxu0 0
      %1305 = vmatprep.subr.bf16.mxu0 0
      %1306 = vmatpush1.bf16.xpose.msra.mxu0 0
      %1307 = vmatprep.subr.bf16.mxu0 0
      %1308 = vmatpush1.bf16.xpose.msra.mxu0 0
      %1309 = vmatprep.subr.bf16.mxu0 0
      %1310 = vmatpush1.bf16.xpose.msra.mxu0 0
      %1311 = vmatprep.subr.bf16.mxu0 0
      %1312 = vmatpush1.bf16.xpose.msra.mxu0 0
      %1313 = vmatprep.subr.bf16.mxu0 0
      %1314 = vmatpush1.bf16.xpose.msra.mxu0 0
      %1315 = vmatprep.subr.bf16.mxu0 0
      %1316 = vmatpush1.bf16.xpose.msra.mxu0 0
      %1317 = vmatprep.subr.bf16.mxu0 0
      %1318 = vmatpush1.bf16.xpose.msra.mxu0 0
      %1319 = vmatprep.subr.bf16.mxu0 0
      %1320 = vmatpush1.bf16.xpose.msra.mxu0 0
      %1321 = vmatprep.mubr.bf16.mxu0 0
      %1322 = vmatmul.mubr.bf16.gmra.mrb[0].mxu0 %v1284
      %v1323 = vpop.f32.mrb[0].mxu0
      %v1324 = vadd.f32 0.0, %v1323
      %v1325 = vpop.f32.mrb[0].mxu0
      %v1326 = vpop.f32.mrb[0].mxu0
      %v1327 = vadd.f32 0.0, %v1326
      %v1328 = vpop.f32.mrb[0].mxu0
      %1329 = vdwg.mxu0
      %v1331 = vsel %vm1235, %v1221, 0
      %v1334 = vsel %vm1235, %v1229, 0
      %1336 = vmatprep.subr.bf16.mxu0 0
      %1337 = vmatpush1.bf16.xpose.msra.mxu0 %v1334
      %1338 = vmatprep.subr.bf16.mxu0 0
      %1339 = vmatpush1.bf16.xpose.msra.mxu0 0
      %1340 = vmatprep.subr.bf16.mxu0 0
      %1341 = vmatpush1.bf16.xpose.msra.mxu0 0
      %1342 = vmatprep.subr.bf16.mxu0 0
      %1343 = vmatpush1.bf16.xpose.msra.mxu0 0
      %1344 = vmatprep.subr.bf16.mxu0 0
      %1345 = vmatpush1.bf16.xpose.msra.mxu0 0
      %1346 = vmatprep.subr.bf16.mxu0 0
      %1347 = vmatpush1.bf16.xpose.msra.mxu0 0
      %1348 = vmatprep.subr.bf16.mxu0 0
      %1349 = vmatpush1.bf16.xpose.msra.mxu0 0
      %1350 = vmatprep.subr.bf16.mxu0 0
      %1351 = vmatpush1.bf16.xpose.msra.mxu0 0
      %1352 = vmatprep.subr.bf16.mxu0 0
      %1353 = vmatpush1.bf16.xpose.msra.mxu0 0
      %1354 = vmatprep.subr.bf16.mxu0 0
      %1355 = vmatpush1.bf16.xpose.msra.mxu0 0
      %1356 = vmatprep.subr.bf16.mxu0 0
      %1357 = vmatpush1.bf16.xpose.msra.mxu0 0
      %1358 = vmatprep.subr.bf16.mxu0 0
      %1359 = vmatpush1.bf16.xpose.msra.mxu0 0
      %1360 = vmatprep.subr.bf16.mxu0 0
      %1361 = vmatpush1.bf16.xpose.msra.mxu0 0
      %1362 = vmatprep.subr.bf16.mxu0 0
      %1363 = vmatpush1.bf16.xpose.msra.mxu0 0
      %1364 = vmatprep.subr.bf16.mxu0 0
      %1365 = vmatpush1.bf16.xpose.msra.mxu0 0
      %1366 = vmatprep.subr.bf16.mxu0 0
      %1367 = vmatpush1.bf16.xpose.msra.mxu0 0
      %1368 = vmatprep.mubr.bf16.mxu0 0
      %1369 = vmatmul.mubr.bf16.gmra.mrb[0].mxu0 %v1331
      %v1370 = vpop.f32.mrb[0].mxu0
      %v1371 = vadd.f32 0.0, %v1370
      %v1372 = vpop.f32.mrb[0].mxu0
      %v1373 = vpop.f32.mrb[0].mxu0
      %v1374 = vadd.f32 0.0, %v1373
      %v1375 = vpop.f32.mrb[0].mxu0
      %1376 = vdwg.mxu0
      %v1378 = vsel %vm1235, %v1222, 0
      %v1381 = vsel %vm1235, %v1230, 0
      %1383 = vmatprep.subr.bf16.mxu0 0
      %1384 = vmatpush1.bf16.xpose.msra.mxu0 %v1381
      %1385 = vmatprep.subr.bf16.mxu0 0
      %1386 = vmatpush1.bf16.xpose.msra.mxu0 0
      %1387 = vmatprep.subr.bf16.mxu0 0
      %1388 = vmatpush1.bf16.xpose.msra.mxu0 0
      %1389 = vmatprep.subr.bf16.mxu0 0
      %1390 = vmatpush1.bf16.xpose.msra.mxu0 0
      %1391 = vmatprep.subr.bf16.mxu0 0
      %1392 = vmatpush1.bf16.xpose.msra.mxu0 0
      %1393 = vmatprep.subr.bf16.mxu0 0
      %1394 = vmatpush1.bf16.xpose.msra.mxu0 0
      %1395 = vmatprep.subr.bf16.mxu0 0
      %1396 = vmatpush1.bf16.xpose.msra.mxu0 0
      %1397 = vmatprep.subr.bf16.mxu0 0
      %1398 = vmatpush1.bf16.xpose.msra.mxu0 0
      %1399 = vmatprep.subr.bf16.mxu0 0
      %1400 = vmatpush1.bf16.xpose.msra.mxu0 0
      %1401 = vmatprep.subr.bf16.mxu0 0
      %1402 = vmatpush1.bf16.xpose.msra.mxu0 0
      %1403 = vmatprep.subr.bf16.mxu0 0
      %1404 = vmatpush1.bf16.xpose.msra.mxu0 0
      %1405 = vmatprep.subr.bf16.mxu0 0
      %1406 = vmatpush1.bf16.xpose.msra.mxu0 0
      %1407 = vmatprep.subr.bf16.mxu0 0
      %1408 = vmatpush1.bf16.xpose.msra.mxu0 0
      %1409 = vmatprep.subr.bf16.mxu0 0
      %1410 = vmatpush1.bf16.xpose.msra.mxu0 0
      %1411 = vmatprep.subr.bf16.mxu0 0
      %1412 = vmatpush1.bf16.xpose.msra.mxu0 0
      %1413 = vmatprep.subr.bf16.mxu0 0
      %1414 = vmatpush1.bf16.xpose.msra.mxu0 0
      %1415 = vmatprep.mubr.bf16.mxu0 0
      %1416 = vmatmul.mubr.bf16.gmra.mrb[0].mxu0 %v1378
      %v1417 = vpop.f32.mrb[0].mxu0
      %v1418 = vadd.f32 0.0, %v1417
      %v1419 = vpop.f32.mrb[0].mxu0
      %v1420 = vpop.f32.mrb[0].mxu0
      %v1421 = vadd.f32 0.0, %v1420
      %v1422 = vpop.f32.mrb[0].mxu0
      %1423 = vdwg.mxu0
      %v1425 = vsel %vm1235, %v1223, 0
      %v1428 = vsel %vm1235, %v1231, 0
      %1430 = vmatprep.subr.bf16.mxu0 0
      %1431 = vmatpush1.bf16.xpose.msra.mxu0 %v1428
      %1432 = vmatprep.subr.bf16.mxu0 0
      %1433 = vmatpush1.bf16.xpose.msra.mxu0 0
      %1434 = vmatprep.subr.bf16.mxu0 0
      %1435 = vmatpush1.bf16.xpose.msra.mxu0 0
      %1436 = vmatprep.subr.bf16.mxu0 0
      %1437 = vmatpush1.bf16.xpose.msra.mxu0 0
      %1438 = vmatprep.subr.bf16.mxu0 0
      %1439 = vmatpush1.bf16.xpose.msra.mxu0 0
      %1440 = vmatprep.subr.bf16.mxu0 0
      %1441 = vmatpush1.bf16.xpose.msra.mxu0 0
      %1442 = vmatprep.subr.bf16.mxu0 0
      %1443 = vmatpush1.bf16.xpose.msra.mxu0 0
      %1444 = vmatprep.subr.bf16.mxu0 0
      %1445 = vmatpush1.bf16.xpose.msra.mxu0 0
      %1446 = vmatprep.subr.bf16.mxu0 0
      %1447 = vmatpush1.bf16.xpose.msra.mxu0 0
      %1448 = vmatprep.subr.bf16.mxu0 0
      %1449 = vmatpush1.bf16.xpose.msra.mxu0 0
      %1450 = vmatprep.subr.bf16.mxu0 0
      %1451 = vmatpush1.bf16.xpose.msra.mxu0 0
      %1452 = vmatprep.subr.bf16.mxu0 0
      %1453 = vmatpush1.bf16.xpose.msra.mxu0 0
      %1454 = vmatprep.subr.bf16.mxu0 0
      %1455 = vmatpush1.bf16.xpose.msra.mxu0 0
      %1456 = vmatprep.subr.bf16.mxu0 0
      %1457 = vmatpush1.bf16.xpose.msra.mxu0 0
      %1458 = vmatprep.subr.bf16.mxu0 0
      %1459 = vmatpush1.bf16.xpose.msra.mxu0 0
      %1460 = vmatprep.subr.bf16.mxu0 0
      %1461 = vmatpush1.bf16.xpose.msra.mxu0 0
      %1462 = vmatprep.mubr.bf16.mxu0 0
      %1463 = vmatmul.mubr.bf16.gmra.mrb[0].mxu0 %v1425
      %v1464 = vpop.f32.mrb[0].mxu0
      %v1465 = vadd.f32 0.0, %v1464
      %v1466 = vpop.f32.mrb[0].mxu0
      %v1467 = vpop.f32.mrb[0].mxu0
      %v1468 = vadd.f32 0.0, %v1467
      %v1469 = vpop.f32.mrb[0].mxu0
      %1470 = vdwg.mxu0
      %v1472 = vsel %vm1235, %v1224, 0
      %v1475 = vsel %vm1235, %v1232, 0
      %1477 = vmatprep.subr.bf16.mxu0 0
      %1478 = vmatpush1.bf16.xpose.msra.mxu0 %v1475
      %1479 = vmatprep.subr.bf16.mxu0 0
      %1480 = vmatpush1.bf16.xpose.msra.mxu0 0
      %1481 = vmatprep.subr.bf16.mxu0 0
      %1482 = vmatpush1.bf16.xpose.msra.mxu0 0
      %1483 = vmatprep.subr.bf16.mxu0 0
      %1484 = vmatpush1.bf16.xpose.msra.mxu0 0
      %1485 = vmatprep.subr.bf16.mxu0 0
      %1486 = vmatpush1.bf16.xpose.msra.mxu0 0
      %1487 = vmatprep.subr.bf16.mxu0 0
      %1488 = vmatpush1.bf16.xpose.msra.mxu0 0
      %1489 = vmatprep.subr.bf16.mxu0 0
      %1490 = vmatpush1.bf16.xpose.msra.mxu0 0
      %1491 = vmatprep.subr.bf16.mxu0 0
      %1492 = vmatpush1.bf16.xpose.msra.mxu0 0
      %1493 = vmatprep.subr.bf16.mxu0 0
      %1494 = vmatpush1.bf16.xpose.msra.mxu0 0
      %1495 = vmatprep.subr.bf16.mxu0 0
      %1496 = vmatpush1.bf16.xpose.msra.mxu0 0
      %1497 = vmatprep.subr.bf16.mxu0 0
      %1498 = vmatpush1.bf16.xpose.msra.mxu0 0
      %1499 = vmatprep.subr.bf16.mxu0 0
      %1500 = vmatpush1.bf16.xpose.msra.mxu0 0
      %1501 = vmatprep.subr.bf16.mxu0 0
      %1502 = vmatpush1.bf16.xpose.msra.mxu0 0
      %1503 = vmatprep.subr.bf16.mxu0 0
      %1504 = vmatpush1.bf16.xpose.msra.mxu0 0
      %1505 = vmatprep.subr.bf16.mxu0 0
      %1506 = vmatpush1.bf16.xpose.msra.mxu0 0
      %1507 = vmatprep.subr.bf16.mxu0 0
      %1508 = vmatpush1.bf16.xpose.msra.mxu0 0
      %1509 = vmatprep.mubr.bf16.mxu0 0
      %1510 = vmatmul.mubr.bf16.gmra.mrb[0].mxu0 %v1472
      %v1511 = vpop.f32.mrb[0].mxu0
      %v1512 = vadd.f32 0.0, %v1511
      %v1513 = vpop.f32.mrb[0].mxu0
      %v1514 = vpop.f32.mrb[0].mxu0
      %v1515 = vadd.f32 0.0, %v1514
      %v1516 = vpop.f32.mrb[0].mxu0
      %1517 = vdwg.mxu0
      %v1519 = vsel %vm1235, %v1225, 0
      %v1522 = vsel %vm1235, %v1233, 0
      %1524 = vmatprep.subr.bf16.mxu0 0
      %1525 = vmatpush1.bf16.xpose.msra.mxu0 %v1522
      %1526 = vmatprep.subr.bf16.mxu0 0
      %1527 = vmatpush1.bf16.xpose.msra.mxu0 0
      %1528 = vmatprep.subr.bf16.mxu0 0
      %1529 = vmatpush1.bf16.xpose.msra.mxu0 0
      %1530 = vmatprep.subr.bf16.mxu0 0
      %1531 = vmatpush1.bf16.xpose.msra.mxu0 0
      %1532 = vmatprep.subr.bf16.mxu0 0
      %1533 = vmatpush1.bf16.xpose.msra.mxu0 0
      %1534 = vmatprep.subr.bf16.mxu0 0
      %1535 = vmatpush1.bf16.xpose.msra.mxu0 0
      %1536 = vmatprep.subr.bf16.mxu0 0
      %1537 = vmatpush1.bf16.xpose.msra.mxu0 0
      %1538 = vmatprep.subr.bf16.mxu0 0
      %1539 = vmatpush1.bf16.xpose.msra.mxu0 0
      %1540 = vmatprep.subr.bf16.mxu0 0
      %1541 = vmatpush1.bf16.xpose.msra.mxu0 0
      %1542 = vmatprep.subr.bf16.mxu0 0
      %1543 = vmatpush1.bf16.xpose.msra.mxu0 0
      %1544 = vmatprep.subr.bf16.mxu0 0
      %1545 = vmatpush1.bf16.xpose.msra.mxu0 0
      %1546 = vmatprep.subr.bf16.mxu0 0
      %1547 = vmatpush1.bf16.xpose.msra.mxu0 0
      %1548 = vmatprep.subr.bf16.mxu0 0
      %1549 = vmatpush1.bf16.xpose.msra.mxu0 0
      %1550 = vmatprep.subr.bf16.mxu0 0
      %1551 = vmatpush1.bf16.xpose.msra.mxu0 0
      %1552 = vmatprep.subr.bf16.mxu0 0
      %1553 = vmatpush1.bf16.xpose.msra.mxu0 0
      %1554 = vmatprep.subr.bf16.mxu0 0
      %1555 = vmatpush1.bf16.xpose.msra.mxu0 0
      %1556 = vmatprep.mubr.bf16.mxu0 0
      %1557 = vmatmul.mubr.bf16.gmra.mrb[0].mxu0 %v1519
      %v1558 = vpop.f32.mrb[0].mxu0
      %v1559 = vadd.f32 0.0, %v1558
      %v1560 = vpop.f32.mrb[0].mxu0
      %v1561 = vpop.f32.mrb[0].mxu0
      %v1562 = vadd.f32 0.0, %v1561
      %v1563 = vpop.f32.mrb[0].mxu0
      %1564 = vdwg.mxu0
      %v1566 = vsel %vm1235, %v1226, 0
      %v1569 = vsel %vm1235, %v1234, 0
      %1571 = vmatprep.subr.bf16.mxu0 0
      %1572 = vmatpush1.bf16.xpose.msra.mxu0 %v1569
      %1573 = vmatprep.subr.bf16.mxu0 0
      %1574 = vmatpush1.bf16.xpose.msra.mxu0 0
      %1575 = vmatprep.subr.bf16.mxu0 0
      %1576 = vmatpush1.bf16.xpose.msra.mxu0 0
      %1577 = vmatprep.subr.bf16.mxu0 0
      %1578 = vmatpush1.bf16.xpose.msra.mxu0 0
      %1579 = vmatprep.subr.bf16.mxu0 0
      %1580 = vmatpush1.bf16.xpose.msra.mxu0 0
      %1581 = vmatprep.subr.bf16.mxu0 0
      %1582 = vmatpush1.bf16.xpose.msra.mxu0 0
      %1583 = vmatprep.subr.bf16.mxu0 0
      %1584 = vmatpush1.bf16.xpose.msra.mxu0 0
      %1585 = vmatprep.subr.bf16.mxu0 0
      %1586 = vmatpush1.bf16.xpose.msra.mxu0 0
      %1587 = vmatprep.subr.bf16.mxu0 0
      %1588 = vmatpush1.bf16.xpose.msra.mxu0 0
      %1589 = vmatprep.subr.bf16.mxu0 0
      %1590 = vmatpush1.bf16.xpose.msra.mxu0 0
      %1591 = vmatprep.subr.bf16.mxu0 0
      %1592 = vmatpush1.bf16.xpose.msra.mxu0 0
      %1593 = vmatprep.subr.bf16.mxu0 0
      %1594 = vmatpush1.bf16.xpose.msra.mxu0 0
      %1595 = vmatprep.subr.bf16.mxu0 0
      %1596 = vmatpush1.bf16.xpose.msra.mxu0 0
      %1597 = vmatprep.subr.bf16.mxu0 0
      %1598 = vmatpush1.bf16.xpose.msra.mxu0 0
      %1599 = vmatprep.subr.bf16.mxu0 0
      %1600 = vmatpush1.bf16.xpose.msra.mxu0 0
      %1601 = vmatprep.subr.bf16.mxu0 0
      %1602 = vmatpush1.bf16.xpose.msra.mxu0 0
      %1603 = vmatprep.mubr.bf16.mxu0 0
      %1604 = vmatmul.mubr.bf16.gmra.mrb[0].mxu0 %v1566
      %v1605 = vpop.f32.mrb[0].mxu0
      %v1606 = vadd.f32 0.0, %v1605
      %v1607 = vpop.f32.mrb[0].mxu0
      %v1608 = vpop.f32.mrb[0].mxu0
      %v1609 = vadd.f32 0.0, %v1608
      %v1610 = vpop.f32.mrb[0].mxu0
      %1611 = vdwg.mxu0
      %vm1612 = vcmask 130048
      %v1613 = vsel %vm1612, %v1277, -inf
      %1614 = vmax.xlane.f32.xlu0 %v1613
      %v1615 = vpop.xlane.xlu0 %1614
      %v1616 = vsel %vm1612, %v1280, -inf
      %1617 = vmax.xlane.f32.xlu0 %v1616
      %v1618 = vpop.xlane.xlu0 %1617
      %v1619 = vsel %vm1612, %v1324, -inf
      %1620 = vmax.xlane.f32.xlu0 %v1619
      %v1621 = vpop.xlane.xlu0 %1620
      %v1622 = vsel %vm1612, %v1327, -inf
      %1623 = vmax.xlane.f32.xlu0 %v1622
      %v1624 = vpop.xlane.xlu0 %1623
      %v1625 = vsel %vm1612, %v1371, -inf
      %1626 = vmax.xlane.f32.xlu0 %v1625
      %v1627 = vpop.xlane.xlu0 %1626
      %v1628 = vsel %vm1612, %v1374, -inf
      %1629 = vmax.xlane.f32.xlu0 %v1628
      %v1630 = vpop.xlane.xlu0 %1629
      %v1631 = vsel %vm1612, %v1418, -inf
      %1632 = vmax.xlane.f32.xlu0 %v1631
      %v1633 = vpop.xlane.xlu0 %1632
      %v1634 = vsel %vm1612, %v1421, -inf
      %1635 = vmax.xlane.f32.xlu0 %v1634
      %v1636 = vpop.xlane.xlu0 %1635
      %v1637 = vsel %vm1612, %v1465, -inf
      %1638 = vmax.xlane.f32.xlu0 %v1637
      %v1639 = vpop.xlane.xlu0 %1638
      %v1640 = vsel %vm1612, %v1468, -inf
      %1641 = vmax.xlane.f32.xlu0 %v1640
      %v1642 = vpop.xlane.xlu0 %1641
      %v1643 = vsel %vm1612, %v1512, -inf
      %1644 = vmax.xlane.f32.xlu0 %v1643
      %v1645 = vpop.xlane.xlu0 %1644
      %v1646 = vsel %vm1612, %v1515, -inf
      %1647 = vmax.xlane.f32.xlu0 %v1646
      %v1648 = vpop.xlane.xlu0 %1647
      %v1649 = vsel %vm1612, %v1559, -inf
      %1650 = vmax.xlane.f32.xlu0 %v1649
      %v1651 = vpop.xlane.xlu0 %1650
      %v1652 = vsel %vm1612, %v1562, -inf
      %1653 = vmax.xlane.f32.xlu0 %v1652
      %v1654 = vpop.xlane.xlu0 %1653
      %v1655 = vsel %vm1612, %v1606, -inf
      %1656 = vmax.xlane.f32.xlu0 %v1655
      %v1657 = vpop.xlane.xlu0 %1656
      %v1658 = vsel %vm1612, %v1609, -inf
      %1659 = vmax.xlane.f32.xlu0 %v1658
      %v1660 = vpop.xlane.xlu0 %1659
      %v1661 = vsub.f32 %v1277, %v1615
      %v1662 = vsub.f32 %v1280, %v1618
      %v1663 = vsub.f32 %v1324, %v1621
      %v1664 = vsub.f32 %v1327, %v1624
      %v1665 = vsub.f32 %v1371, %v1627
      %v1666 = vsub.f32 %v1374, %v1630
      %v1667 = vsub.f32 %v1418, %v1633
      %v1668 = vsub.f32 %v1421, %v1636
      %v1669 = vsub.f32 %v1465, %v1639
      %v1670 = vsub.f32 %v1468, %v1642
      %v1671 = vsub.f32 %v1512, %v1645
      %v1672 = vsub.f32 %v1515, %v1648
      %v1673 = vsub.f32 %v1559, %v1651
      %v1674 = vsub.f32 %v1562, %v1654
      %v1675 = vsub.f32 %v1606, %v1657
      %v1676 = vsub.f32 %v1609, %v1660
      %v1677 = vmul.f32 %v1661, 1.442695
      %v1678 = vpow.pop %v1677
      %v1679 = vmul.f32 %v1662, 1.442695
      %v1680 = vpow.pop %v1679
      %v1681 = vmul.f32 %v1663, 1.442695
      %v1682 = vpow.pop %v1681
      %v1683 = vmul.f32 %v1664, 1.442695
      %v1684 = vpow.pop %v1683
      %v1685 = vmul.f32 %v1665, 1.442695
      %v1686 = vpow.pop %v1685
      %v1687 = vmul.f32 %v1666, 1.442695
      %v1688 = vpow.pop %v1687
      %v1689 = vmul.f32 %v1667, 1.442695
      %v1690 = vpow.pop %v1689
      %v1691 = vmul.f32 %v1668, 1.442695
      %v1692 = vpow.pop %v1691
      %v1693 = vmul.f32 %v1669, 1.442695
      %v1694 = vpow.pop %v1693
      %v1695 = vmul.f32 %v1670, 1.442695
      %v1696 = vpow.pop %v1695
      %v1697 = vmul.f32 %v1671, 1.442695
      %v1698 = vpow.pop %v1697
      %v1699 = vmul.f32 %v1672, 1.442695
      %v1700 = vpow.pop %v1699
      %v1701 = vmul.f32 %v1673, 1.442695
      %v1702 = vpow.pop %v1701
      %v1703 = vmul.f32 %v1674, 1.442695
      %v1704 = vpow.pop %v1703
      %v1705 = vmul.f32 %v1675, 1.442695
      %v1706 = vpow.pop %v1705
      %v1707 = vmul.f32 %v1676, 1.442695
      %v1708 = vpow.pop %v1707
      %v1709 = vsel %vm1612, %v1678, 0.0
      %1710 = vadd.xlane.f32.xlu0 %v1709
      %v1711 = vpop.xlane.xlu0 %1710
      %v1712 = vsel %vm1612, %v1680, 0.0
      %1713 = vadd.xlane.f32.xlu0 %v1712
      %v1714 = vpop.xlane.xlu0 %1713
      %v1715 = vsel %vm1612, %v1682, 0.0
      %1716 = vadd.xlane.f32.xlu0 %v1715
      %v1717 = vpop.xlane.xlu0 %1716
      %v1718 = vsel %vm1612, %v1684, 0.0
      %1719 = vadd.xlane.f32.xlu0 %v1718
      %v1720 = vpop.xlane.xlu0 %1719
      %v1721 = vsel %vm1612, %v1686, 0.0
      %1722 = vadd.xlane.f32.xlu0 %v1721
      %v1723 = vpop.xlane.xlu0 %1722
      %v1724 = vsel %vm1612, %v1688, 0.0
      %1725 = vadd.xlane.f32.xlu0 %v1724
      %v1726 = vpop.xlane.xlu0 %1725
      %v1727 = vsel %vm1612, %v1690, 0.0
      %1728 = vadd.xlane.f32.xlu0 %v1727
      %v1729 = vpop.xlane.xlu0 %1728
      %v1730 = vsel %vm1612, %v1692, 0.0
      %1731 = vadd.xlane.f32.xlu0 %v1730
      %v1732 = vpop.xlane.xlu0 %1731
      %v1733 = vsel %vm1612, %v1694, 0.0
      %1734 = vadd.xlane.f32.xlu0 %v1733
      %v1735 = vpop.xlane.xlu0 %1734
      %v1736 = vsel %vm1612, %v1696, 0.0
      %1737 = vadd.xlane.f32.xlu0 %v1736
      %v1738 = vpop.xlane.xlu0 %1737
      %v1739 = vsel %vm1612, %v1698, 0.0
      %1740 = vadd.xlane.f32.xlu0 %v1739
      %v1741 = vpop.xlane.xlu0 %1740
      %v1742 = vsel %vm1612, %v1700, 0.0
      %1743 = vadd.xlane.f32.xlu0 %v1742
      %v1744 = vpop.xlane.xlu0 %1743
      %v1745 = vsel %vm1612, %v1702, 0.0
      %1746 = vadd.xlane.f32.xlu0 %v1745
      %v1747 = vpop.xlane.xlu0 %1746
      %v1748 = vsel %vm1612, %v1704, 0.0
      %1749 = vadd.xlane.f32.xlu0 %v1748
      %v1750 = vpop.xlane.xlu0 %1749
      %v1751 = vsel %vm1612, %v1706, 0.0
      %1752 = vadd.xlane.f32.xlu0 %v1751
      %v1753 = vpop.xlane.xlu0 %1752
      %v1754 = vsel %vm1612, %v1708, 0.0
      %1755 = vadd.xlane.f32.xlu0 %v1754
      %v1756 = vpop.xlane.xlu0 %1755
      %v1757 = vrcp.pop %v1711
      %v1758 = vrcp.pop %v1714
      %v1759 = vrcp.pop %v1717
      %v1760 = vrcp.pop %v1720
      %v1761 = vrcp.pop %v1723
      %v1762 = vrcp.pop %v1726
      %v1763 = vrcp.pop %v1729
      %v1764 = vrcp.pop %v1732
      %v1765 = vrcp.pop %v1735
      %v1766 = vrcp.pop %v1738
      %v1767 = vrcp.pop %v1741
      %v1768 = vrcp.pop %v1744
      %v1769 = vrcp.pop %v1747
      %v1770 = vrcp.pop %v1750
      %v1771 = vrcp.pop %v1753
      %v1772 = vrcp.pop %v1756
      %v1773 = vpack.c.bf16 %v1680, %v1678
      %v1774 = vpack.c.bf16 %v1684, %v1682
      %v1775 = vpack.c.bf16 %v1688, %v1686
      %v1776 = vpack.c.bf16 %v1692, %v1690
      %v1777 = vpack.c.bf16 %v1696, %v1694
      %v1778 = vpack.c.bf16 %v1700, %v1698
      %v1779 = vpack.c.bf16 %v1704, %v1702
      %v1780 = vpack.c.bf16 %v1708, %v1706
      %v1781 = vpack.c.bf16 %v1160, %v1157
      %v1782 = vpack.c.bf16 %v1168, %v1165
      %v1783 = vpack.c.bf16 %v1176, %v1173
      %v1784 = vpack.c.bf16 %v1184, %v1181
      %v1785 = vpack.c.bf16 %v1192, %v1189
      %v1786 = vpack.c.bf16 %v1200, %v1197
      %v1787 = vpack.c.bf16 %v1208, %v1205
      %v1788 = vpack.c.bf16 %v1216, %v1213
      %v1790 = vsel %vm1612, %v1773, 0
      %1792 = vmatprep.subr.bf16.mxu0 0
      %1793 = vmatpush1.bf16.msra.mxu0 %v1781
      %1794 = vmatprep.subr.bf16.mxu0 0
      %1795 = vmatpush1.bf16.msra.mxu0 0
      %1796 = vmatprep.subr.bf16.mxu0 0
      %1797 = vmatpush1.bf16.msra.mxu0 0
      %1798 = vmatprep.subr.bf16.mxu0 0
      %1799 = vmatpush1.bf16.msra.mxu0 0
      %1800 = vmatprep.subr.bf16.mxu0 0
      %1801 = vmatpush1.bf16.msra.mxu0 0
      %1802 = vmatprep.subr.bf16.mxu0 0
      %1803 = vmatpush1.bf16.msra.mxu0 0
      %1804 = vmatprep.subr.bf16.mxu0 0
      %1805 = vmatpush1.bf16.msra.mxu0 0
      %1806 = vmatprep.subr.bf16.mxu0 0
      %1807 = vmatpush1.bf16.msra.mxu0 0
      %1808 = vmatprep.subr.bf16.mxu0 0
      %1809 = vmatpush1.bf16.msra.mxu0 0
      %1810 = vmatprep.subr.bf16.mxu0 0
      %1811 = vmatpush1.bf16.msra.mxu0 0
      %1812 = vmatprep.subr.bf16.mxu0 0
      %1813 = vmatpush1.bf16.msra.mxu0 0
      %1814 = vmatprep.subr.bf16.mxu0 0
      %1815 = vmatpush1.bf16.msra.mxu0 0
      %1816 = vmatprep.subr.bf16.mxu0 0
      %1817 = vmatpush1.bf16.msra.mxu0 0
      %1818 = vmatprep.subr.bf16.mxu0 0
      %1819 = vmatpush1.bf16.msra.mxu0 0
      %1820 = vmatprep.subr.bf16.mxu0 0
      %1821 = vmatpush1.bf16.msra.mxu0 0
      %1822 = vmatprep.subr.bf16.mxu0 0
      %1823 = vmatpush1.bf16.msra.mxu0 0
      %1824 = vmatprep.mubr.bf16.mxu0 0
      %1825 = vmatmul.mubr.bf16.gmra.mrb[0].mxu0 %v1790
      %v1826 = vpop.f32.mrb[0].mxu0
      %v1827 = vadd.f32 0.0, %v1826
      %v1828 = vpop.f32.mrb[0].mxu0
      %v1829 = vpop.f32.mrb[0].mxu0
      %v1830 = vadd.f32 0.0, %v1829
      %v1831 = vpop.f32.mrb[0].mxu0
      %1832 = vdwg.mxu0
      %v1834 = vsel %vm1612, %v1774, 0
      %1836 = vmatprep.subr.bf16.mxu0 0
      %1837 = vmatpush1.bf16.msra.mxu0 %v1782
      %1838 = vmatprep.subr.bf16.mxu0 0
      %1839 = vmatpush1.bf16.msra.mxu0 0
      %1840 = vmatprep.subr.bf16.mxu0 0
      %1841 = vmatpush1.bf16.msra.mxu0 0
      %1842 = vmatprep.subr.bf16.mxu0 0
      %1843 = vmatpush1.bf16.msra.mxu0 0
      %1844 = vmatprep.subr.bf16.mxu0 0
      %1845 = vmatpush1.bf16.msra.mxu0 0
      %1846 = vmatprep.subr.bf16.mxu0 0
      %1847 = vmatpush1.bf16.msra.mxu0 0
      %1848 = vmatprep.subr.bf16.mxu0 0
      %1849 = vmatpush1.bf16.msra.mxu0 0
      %1850 = vmatprep.subr.bf16.mxu0 0
      %1851 = vmatpush1.bf16.msra.mxu0 0
      %1852 = vmatprep.subr.bf16.mxu0 0
      %1853 = vmatpush1.bf16.msra.mxu0 0
      %1854 = vmatprep.subr.bf16.mxu0 0
      %1855 = vmatpush1.bf16.msra.mxu0 0
      %1856 = vmatprep.subr.bf16.mxu0 0
      %1857 = vmatpush1.bf16.msra.mxu0 0
      %1858 = vmatprep.subr.bf16.mxu0 0
      %1859 = vmatpush1.bf16.msra.mxu0 0
      %1860 = vmatprep.subr.bf16.mxu0 0
      %1861 = vmatpush1.bf16.msra.mxu0 0
      %1862 = vmatprep.subr.bf16.mxu0 0
      %1863 = vmatpush1.bf16.msra.mxu0 0
      %1864 = vmatprep.subr.bf16.mxu0 0
      %1865 = vmatpush1.bf16.msra.mxu0 0
      %1866 = vmatprep.subr.bf16.mxu0 0
      %1867 = vmatpush1.bf16.msra.mxu0 0
      %1868 = vmatprep.mubr.bf16.mxu0 0
      %1869 = vmatmul.mubr.bf16.gmra.mrb[0].mxu0 %v1834
      %v1870 = vpop.f32.mrb[0].mxu0
      %v1871 = vadd.f32 0.0, %v1870
      %v1872 = vpop.f32.mrb[0].mxu0
      %v1873 = vpop.f32.mrb[0].mxu0
      %v1874 = vadd.f32 0.0, %v1873
      %v1875 = vpop.f32.mrb[0].mxu0
      %1876 = vdwg.mxu0
      %v1878 = vsel %vm1612, %v1775, 0
      %1880 = vmatprep.subr.bf16.mxu0 0
      %1881 = vmatpush1.bf16.msra.mxu0 %v1783
      %1882 = vmatprep.subr.bf16.mxu0 0
      %1883 = vmatpush1.bf16.msra.mxu0 0
      %1884 = vmatprep.subr.bf16.mxu0 0
      %1885 = vmatpush1.bf16.msra.mxu0 0
      %1886 = vmatprep.subr.bf16.mxu0 0
      %1887 = vmatpush1.bf16.msra.mxu0 0
      %1888 = vmatprep.subr.bf16.mxu0 0
      %1889 = vmatpush1.bf16.msra.mxu0 0
      %1890 = vmatprep.subr.bf16.mxu0 0
      %1891 = vmatpush1.bf16.msra.mxu0 0
      %1892 = vmatprep.subr.bf16.mxu0 0
      %1893 = vmatpush1.bf16.msra.mxu0 0
      %1894 = vmatprep.subr.bf16.mxu0 0
      %1895 = vmatpush1.bf16.msra.mxu0 0
      %1896 = vmatprep.subr.bf16.mxu0 0
      %1897 = vmatpush1.bf16.msra.mxu0 0
      %1898 = vmatprep.subr.bf16.mxu0 0
      %1899 = vmatpush1.bf16.msra.mxu0 0
      %1900 = vmatprep.subr.bf16.mxu0 0
      %1901 = vmatpush1.bf16.msra.mxu0 0
      %1902 = vmatprep.subr.bf16.mxu0 0
      %1903 = vmatpush1.bf16.msra.mxu0 0
      %1904 = vmatprep.subr.bf16.mxu0 0
      %1905 = vmatpush1.bf16.msra.mxu0 0
      %1906 = vmatprep.subr.bf16.mxu0 0
      %1907 = vmatpush1.bf16.msra.mxu0 0
      %1908 = vmatprep.subr.bf16.mxu0 0
      %1909 = vmatpush1.bf16.msra.mxu0 0
      %1910 = vmatprep.subr.bf16.mxu0 0
      %1911 = vmatpush1.bf16.msra.mxu0 0
      %1912 = vmatprep.mubr.bf16.mxu0 0
      %1913 = vmatmul.mubr.bf16.gmra.mrb[0].mxu0 %v1878
      %v1914 = vpop.f32.mrb[0].mxu0
      %v1915 = vadd.f32 0.0, %v1914
      %v1916 = vpop.f32.mrb[0].mxu0
      %v1917 = vpop.f32.mrb[0].mxu0
      %v1918 = vadd.f32 0.0, %v1917
      %v1919 = vpop.f32.mrb[0].mxu0
      %1920 = vdwg.mxu0
      %v1922 = vsel %vm1612, %v1776, 0
      %1924 = vmatprep.subr.bf16.mxu0 0
      %1925 = vmatpush1.bf16.msra.mxu0 %v1784
      %1926 = vmatprep.subr.bf16.mxu0 0
      %1927 = vmatpush1.bf16.msra.mxu0 0
      %1928 = vmatprep.subr.bf16.mxu0 0
      %1929 = vmatpush1.bf16.msra.mxu0 0
      %1930 = vmatprep.subr.bf16.mxu0 0
      %1931 = vmatpush1.bf16.msra.mxu0 0
      %1932 = vmatprep.subr.bf16.mxu0 0
      %1933 = vmatpush1.bf16.msra.mxu0 0
      %1934 = vmatprep.subr.bf16.mxu0 0
      %1935 = vmatpush1.bf16.msra.mxu0 0
      %1936 = vmatprep.subr.bf16.mxu0 0
      %1937 = vmatpush1.bf16.msra.mxu0 0
      %1938 = vmatprep.subr.bf16.mxu0 0
      %1939 = vmatpush1.bf16.msra.mxu0 0
      %1940 = vmatprep.subr.bf16.mxu0 0
      %1941 = vmatpush1.bf16.msra.mxu0 0
      %1942 = vmatprep.subr.bf16.mxu0 0
      %1943 = vmatpush1.bf16.msra.mxu0 0
      %1944 = vmatprep.subr.bf16.mxu0 0
      %1945 = vmatpush1.bf16.msra.mxu0 0
      %1946 = vmatprep.subr.bf16.mxu0 0
      %1947 = vmatpush1.bf16.msra.mxu0 0
      %1948 = vmatprep.subr.bf16.mxu0 0
      %1949 = vmatpush1.bf16.msra.mxu0 0
      %1950 = vmatprep.subr.bf16.mxu0 0
      %1951 = vmatpush1.bf16.msra.mxu0 0
      %1952 = vmatprep.subr.bf16.mxu0 0
      %1953 = vmatpush1.bf16.msra.mxu0 0
      %1954 = vmatprep.subr.bf16.mxu0 0
      %1955 = vmatpush1.bf16.msra.mxu0 0
      %1956 = vmatprep.mubr.bf16.mxu0 0
      %1957 = vmatmul.mubr.bf16.gmra.mrb[0].mxu0 %v1922
      %v1958 = vpop.f32.mrb[0].mxu0
      %v1959 = vadd.f32 0.0, %v1958
      %v1960 = vpop.f32.mrb[0].mxu0
      %v1961 = vpop.f32.mrb[0].mxu0
      %v1962 = vadd.f32 0.0, %v1961
      %v1963 = vpop.f32.mrb[0].mxu0
      %1964 = vdwg.mxu0
      %v1966 = vsel %vm1612, %v1777, 0
      %1968 = vmatprep.subr.bf16.mxu0 0
      %1969 = vmatpush1.bf16.msra.mxu0 %v1785
      %1970 = vmatprep.subr.bf16.mxu0 0
      %1971 = vmatpush1.bf16.msra.mxu0 0
      %1972 = vmatprep.subr.bf16.mxu0 0
      %1973 = vmatpush1.bf16.msra.mxu0 0
      %1974 = vmatprep.subr.bf16.mxu0 0
      %1975 = vmatpush1.bf16.msra.mxu0 0
      %1976 = vmatprep.subr.bf16.mxu0 0
      %1977 = vmatpush1.bf16.msra.mxu0 0
      %1978 = vmatprep.subr.bf16.mxu0 0
      %1979 = vmatpush1.bf16.msra.mxu0 0
      %1980 = vmatprep.subr.bf16.mxu0 0
      %1981 = vmatpush1.bf16.msra.mxu0 0
      %1982 = vmatprep.subr.bf16.mxu0 0
      %1983 = vmatpush1.bf16.msra.mxu0 0
      %1984 = vmatprep.subr.bf16.mxu0 0
      %1985 = vmatpush1.bf16.msra.mxu0 0
      %1986 = vmatprep.subr.bf16.mxu0 0
      %1987 = vmatpush1.bf16.msra.mxu0 0
      %1988 = vmatprep.subr.bf16.mxu0 0
      %1989 = vmatpush1.bf16.msra.mxu0 0
      %1990 = vmatprep.subr.bf16.mxu0 0
      %1991 = vmatpush1.bf16.msra.mxu0 0
      %1992 = vmatprep.subr.bf16.mxu0 0
      %1993 = vmatpush1.bf16.msra.mxu0 0
      %1994 = vmatprep.subr.bf16.mxu0 0
      %1995 = vmatpush1.bf16.msra.mxu0 0
      %1996 = vmatprep.subr.bf16.mxu0 0
      %1997 = vmatpush1.bf16.msra.mxu0 0
      %1998 = vmatprep.subr.bf16.mxu0 0
      %1999 = vmatpush1.bf16.msra.mxu0 0
      %2000 = vmatprep.mubr.bf16.mxu0 0
      %2001 = vmatmul.mubr.bf16.gmra.mrb[0].mxu0 %v1966
      %v2002 = vpop.f32.mrb[0].mxu0
      %v2003 = vadd.f32 0.0, %v2002
      %v2004 = vpop.f32.mrb[0].mxu0
      %v2005 = vpop.f32.mrb[0].mxu0
      %v2006 = vadd.f32 0.0, %v2005
      %v2007 = vpop.f32.mrb[0].mxu0
      %2008 = vdwg.mxu0
      %v2010 = vsel %vm1612, %v1778, 0
      %2012 = vmatprep.subr.bf16.mxu0 0
      %2013 = vmatpush1.bf16.msra.mxu0 %v1786
      %2014 = vmatprep.subr.bf16.mxu0 0
      %2015 = vmatpush1.bf16.msra.mxu0 0
      %2016 = vmatprep.subr.bf16.mxu0 0
      %2017 = vmatpush1.bf16.msra.mxu0 0
      %2018 = vmatprep.subr.bf16.mxu0 0
      %2019 = vmatpush1.bf16.msra.mxu0 0
      %2020 = vmatprep.subr.bf16.mxu0 0
      %2021 = vmatpush1.bf16.msra.mxu0 0
      %2022 = vmatprep.subr.bf16.mxu0 0
      %2023 = vmatpush1.bf16.msra.mxu0 0
      %2024 = vmatprep.subr.bf16.mxu0 0
      %2025 = vmatpush1.bf16.msra.mxu0 0
      %2026 = vmatprep.subr.bf16.mxu0 0
      %2027 = vmatpush1.bf16.msra.mxu0 0
      %2028 = vmatprep.subr.bf16.mxu0 0
      %2029 = vmatpush1.bf16.msra.mxu0 0
      %2030 = vmatprep.subr.bf16.mxu0 0
      %2031 = vmatpush1.bf16.msra.mxu0 0
      %2032 = vmatprep.subr.bf16.mxu0 0
      %2033 = vmatpush1.bf16.msra.mxu0 0
      %2034 = vmatprep.subr.bf16.mxu0 0
      %2035 = vmatpush1.bf16.msra.mxu0 0
      %2036 = vmatprep.subr.bf16.mxu0 0
      %2037 = vmatpush1.bf16.msra.mxu0 0
      %2038 = vmatprep.subr.bf16.mxu0 0
      %2039 = vmatpush1.bf16.msra.mxu0 0
      %2040 = vmatprep.subr.bf16.mxu0 0
      %2041 = vmatpush1.bf16.msra.mxu0 0
      %2042 = vmatprep.subr.bf16.mxu0 0
      %2043 = vmatpush1.bf16.msra.mxu0 0
      %2044 = vmatprep.mubr.bf16.mxu0 0
      %2045 = vmatmul.mubr.bf16.gmra.mrb[0].mxu0 %v2010
      %v2046 = vpop.f32.mrb[0].mxu0
      %v2047 = vadd.f32 0.0, %v2046
      %v2048 = vpop.f32.mrb[0].mxu0
      %v2049 = vpop.f32.mrb[0].mxu0
      %v2050 = vadd.f32 0.0, %v2049
      %v2051 = vpop.f32.mrb[0].mxu0
      %2052 = vdwg.mxu0
      %v2054 = vsel %vm1612, %v1779, 0
      %2056 = vmatprep.subr.bf16.mxu0 0
      %2057 = vmatpush1.bf16.msra.mxu0 %v1787
      %2058 = vmatprep.subr.bf16.mxu0 0
      %2059 = vmatpush1.bf16.msra.mxu0 0
      %2060 = vmatprep.subr.bf16.mxu0 0
      %2061 = vmatpush1.bf16.msra.mxu0 0
      %2062 = vmatprep.subr.bf16.mxu0 0
      %2063 = vmatpush1.bf16.msra.mxu0 0
      %2064 = vmatprep.subr.bf16.mxu0 0
      %2065 = vmatpush1.bf16.msra.mxu0 0
      %2066 = vmatprep.subr.bf16.mxu0 0
      %2067 = vmatpush1.bf16.msra.mxu0 0
      %2068 = vmatprep.subr.bf16.mxu0 0
      %2069 = vmatpush1.bf16.msra.mxu0 0
      %2070 = vmatprep.subr.bf16.mxu0 0
      %2071 = vmatpush1.bf16.msra.mxu0 0
      %2072 = vmatprep.subr.bf16.mxu0 0
      %2073 = vmatpush1.bf16.msra.mxu0 0
      %2074 = vmatprep.subr.bf16.mxu0 0
      %2075 = vmatpush1.bf16.msra.mxu0 0
      %2076 = vmatprep.subr.bf16.mxu0 0
      %2077 = vmatpush1.bf16.msra.mxu0 0
      %2078 = vmatprep.subr.bf16.mxu0 0
      %2079 = vmatpush1.bf16.msra.mxu0 0
      %2080 = vmatprep.subr.bf16.mxu0 0
      %2081 = vmatpush1.bf16.msra.mxu0 0
      %2082 = vmatprep.subr.bf16.mxu0 0
      %2083 = vmatpush1.bf16.msra.mxu0 0
      %2084 = vmatprep.subr.bf16.mxu0 0
      %2085 = vmatpush1.bf16.msra.mxu0 0
      %2086 = vmatprep.subr.bf16.mxu0 0
      %2087 = vmatpush1.bf16.msra.mxu0 0
      %2088 = vmatprep.mubr.bf16.mxu0 0
      %2089 = vmatmul.mubr.bf16.gmra.mrb[0].mxu0 %v2054
      %v2090 = vpop.f32.mrb[0].mxu0
      %v2091 = vadd.f32 0.0, %v2090
      %v2092 = vpop.f32.mrb[0].mxu0
      %v2093 = vpop.f32.mrb[0].mxu0
      %v2094 = vadd.f32 0.0, %v2093
      %v2095 = vpop.f32.mrb[0].mxu0
      %2096 = vdwg.mxu0
      %v2098 = vsel %vm1612, %v1780, 0
      %2100 = vmatprep.subr.bf16.mxu0 0
      %2101 = vmatpush1.bf16.msra.mxu0 %v1788
      %2102 = vmatprep.subr.bf16.mxu0 0
      %2103 = vmatpush1.bf16.msra.mxu0 0
      %2104 = vmatprep.subr.bf16.mxu0 0
      %2105 = vmatpush1.bf16.msra.mxu0 0
      %2106 = vmatprep.subr.bf16.mxu0 0
      %2107 = vmatpush1.bf16.msra.mxu0 0
      %2108 = vmatprep.subr.bf16.mxu0 0
      %2109 = vmatpush1.bf16.msra.mxu0 0
      %2110 = vmatprep.subr.bf16.mxu0 0
      %2111 = vmatpush1.bf16.msra.mxu0 0
      %2112 = vmatprep.subr.bf16.mxu0 0
      %2113 = vmatpush1.bf16.msra.mxu0 0
      %2114 = vmatprep.subr.bf16.mxu0 0
      %2115 = vmatpush1.bf16.msra.mxu0 0
      %2116 = vmatprep.subr.bf16.mxu0 0
      %2117 = vmatpush1.bf16.msra.mxu0 0
      %2118 = vmatprep.subr.bf16.mxu0 0
      %2119 = vmatpush1.bf16.msra.mxu0 0
      %2120 = vmatprep.subr.bf16.mxu0 0
      %2121 = vmatpush1.bf16.msra.mxu0 0
      %2122 = vmatprep.subr.bf16.mxu0 0
      %2123 = vmatpush1.bf16.msra.mxu0 0
      %2124 = vmatprep.subr.bf16.mxu0 0
      %2125 = vmatpush1.bf16.msra.mxu0 0
      %2126 = vmatprep.subr.bf16.mxu0 0
      %2127 = vmatpush1.bf16.msra.mxu0 0
      %2128 = vmatprep.subr.bf16.mxu0 0
      %2129 = vmatpush1.bf16.msra.mxu0 0
      %2130 = vmatprep.subr.bf16.mxu0 0
      %2131 = vmatpush1.bf16.msra.mxu0 0
      %2132 = vmatprep.mubr.bf16.mxu0 0
      %2133 = vmatmul.mubr.bf16.gmra.mrb[0].mxu0 %v2098
      %v2134 = vpop.f32.mrb[0].mxu0
      %v2135 = vadd.f32 0.0, %v2134
      %v2136 = vpop.f32.mrb[0].mxu0
      %v2137 = vpop.f32.mrb[0].mxu0
      %v2138 = vadd.f32 0.0, %v2137
      %v2139 = vpop.f32.mrb[0].mxu0
      %2140 = vdwg.mxu0
      %v2141 = vmul.f32 %v1827, %v1757
      %v2142 = vmul.f32 %v1830, %v1758
      %v2143 = vmul.f32 %v1871, %v1759
      %v2144 = vmul.f32 %v1874, %v1760
      %v2145 = vmul.f32 %v1915, %v1761
      %v2146 = vmul.f32 %v1918, %v1762
      %v2147 = vmul.f32 %v1959, %v1763
      %v2148 = vmul.f32 %v1962, %v1764
      %v2149 = vmul.f32 %v2003, %v1765
      %v2150 = vmul.f32 %v2006, %v1766
      %v2151 = vmul.f32 %v2047, %v1767
      %v2152 = vmul.f32 %v2050, %v1768
      %v2153 = vmul.f32 %v2091, %v1769
      %v2154 = vmul.f32 %v2094, %v1770
      %v2155 = vmul.f32 %v2135, %v1771
      %v2156 = vmul.f32 %v2138, %v1772
      %v2157 = vpack.c.bf16 %v2142, %v2141
      %v2158 = vpack.c.bf16 %v2144, %v2143
      %v2159 = vpack.c.bf16 %v2146, %v2145
      %v2160 = vpack.c.bf16 %v2148, %v2147
      %v2161 = vpack.c.bf16 %v2150, %v2149
      %v2162 = vpack.c.bf16 %v2152, %v2151
      %v2163 = vpack.c.bf16 %v2154, %v2153
      %v2164 = vpack.c.bf16 %v2156, %v2155
      %v2165 = vld [vmem:[%s5] sm:$0xf]
      %s2166 = scalar_lea.vmem %s3, 16
      %v2167 = vld [vmem:[%s2166] sm:$0xf]
      %v2168 = vld [vmem:[%s2166 + $0x4] sm:$0xf]
      %v2169 = vld [vmem:[%s2166 + $0x8] sm:$0xf]
      %v2170 = vld [vmem:[%s2166 + $0xc] sm:$0xf]
      %v2171 = vld [vmem:[%s4 + $0x1] sm:$0x1]
      %v2172 = vlaneseq
      %v2173 = vshrl.u32 %v2172, 7
      %v2174 = vsub.s32 0, %v2173
      %v2175 = vrot.slane %v2171, %v2174
      %v2180 = vunpack.c.l.b16 %v2167
      %v2181 = vunpack.c.l.b16 %v2168
      %v2182 = vunpack.c.l.b16 %v2169
      %v2183 = vunpack.c.l.b16 %v2170
      %v2184 = vpack.c.b16 %v2181, %v2180
      %v2185 = vpack.c.b16 %v2183, %v2182
      %2188 = vmatprep.subr.bf16.mxu0 0
      %2189 = vmatpush1.bf16.msra.mxu0 %v2184
      %2190 = vmatprep.subr.bf16.mxu0 0
      %2191 = vmatpush1.bf16.msra.mxu0 %v2185
      %2192 = vmatprep.subr.bf16.mxu0 0
      %2193 = vmatpush1.bf16.msra.mxu0 0
      %2194 = vmatprep.subr.bf16.mxu0 0
      %2195 = vmatpush1.bf16.msra.mxu0 0
      %2196 = vmatprep.subr.bf16.mxu0 0
      %2197 = vmatpush1.bf16.msra.mxu0 0
      %2198 = vmatprep.subr.bf16.mxu0 0
      %2199 = vmatpush1.bf16.msra.mxu0 0
      %2200 = vmatprep.subr.bf16.mxu0 0
      %2201 = vmatpush1.bf16.msra.mxu0 0
      %2202 = vmatprep.subr.bf16.mxu0 0
      %2203 = vmatpush1.bf16.msra.mxu0 0
      %2204 = vmatprep.subr.bf16.mxu0 0
      %2205 = vmatpush1.bf16.msra.mxu0 0
      %2206 = vmatprep.subr.bf16.mxu0 0
      %2207 = vmatpush1.bf16.msra.mxu0 0
      %2208 = vmatprep.subr.bf16.mxu0 0
      %2209 = vmatpush1.bf16.msra.mxu0 0
      %2210 = vmatprep.subr.bf16.mxu0 0
      %2211 = vmatpush1.bf16.msra.mxu0 0
      %2212 = vmatprep.subr.bf16.mxu0 0
      %2213 = vmatpush1.bf16.msra.mxu0 0
      %2214 = vmatprep.subr.bf16.mxu0 0
      %2215 = vmatpush1.bf16.msra.mxu0 0
      %2216 = vmatprep.subr.bf16.mxu0 0
      %2217 = vmatpush1.bf16.msra.mxu0 0
      %2218 = vmatprep.subr.bf16.mxu0 0
      %2219 = vmatpush1.bf16.msra.mxu0 0
      %2220 = vmatprep.mubr.bf16.mxu0 0
      %2221 = vmatmul.mubr.bf16.gmra.mrb[0].mxu0 %v861
      %v2222 = vpop.f32.mrb[0].mxu0
      %v2223 = vadd.f32 %v2175, %v2222
      %v2224 = vpop.f32.mrb[0].mxu0
      %v2225 = vpop.f32.mrb[0].mxu0
      %v2226 = vadd.f32 %v2175, %v2225
      %v2227 = vpop.f32.mrb[0].mxu0
      %2228 = vmatprep.mubr.bf16.mxu0 0
      %2229 = vmatmul.mubr.bf16.gmra.mrb[0].mxu0 %v864
      %v2230 = vpop.f32.mrb[0].mxu0
      %v2231 = vadd.f32 %v2175, %v2230
      %v2232 = vpop.f32.mrb[0].mxu0
      %v2233 = vpop.f32.mrb[0].mxu0
      %v2234 = vadd.f32 %v2175, %v2233
      %v2235 = vpop.f32.mrb[0].mxu0
      %2236 = vmatprep.mubr.bf16.mxu0 0
      %2237 = vmatmul.mubr.bf16.gmra.mrb[0].mxu0 %v867
      %v2238 = vpop.f32.mrb[0].mxu0
      %v2239 = vadd.f32 %v2175, %v2238
      %v2240 = vpop.f32.mrb[0].mxu0
      %v2241 = vpop.f32.mrb[0].mxu0
      %v2242 = vadd.f32 %v2175, %v2241
      %v2243 = vpop.f32.mrb[0].mxu0
      %2244 = vmatprep.mubr.bf16.mxu0 0
      %2245 = vmatmul.mubr.bf16.gmra.mrb[0].mxu0 %v870
      %v2246 = vpop.f32.mrb[0].mxu0
      %v2247 = vadd.f32 %v2175, %v2246
      %v2248 = vpop.f32.mrb[0].mxu0
      %v2249 = vpop.f32.mrb[0].mxu0
      %v2250 = vadd.f32 %v2175, %v2249
      %v2251 = vpop.f32.mrb[0].mxu0
      %2252 = vmatprep.mubr.bf16.mxu0 0
      %2253 = vmatmul.mubr.bf16.gmra.mrb[0].mxu0 %v873
      %v2254 = vpop.f32.mrb[0].mxu0
      %v2255 = vadd.f32 %v2175, %v2254
      %v2256 = vpop.f32.mrb[0].mxu0
      %v2257 = vpop.f32.mrb[0].mxu0
      %v2258 = vadd.f32 %v2175, %v2257
      %v2259 = vpop.f32.mrb[0].mxu0
      %2260 = vmatprep.mubr.bf16.mxu0 0
      %2261 = vmatmul.mubr.bf16.gmra.mrb[0].mxu0 %v876
      %v2262 = vpop.f32.mrb[0].mxu0
      %v2263 = vadd.f32 %v2175, %v2262
      %v2264 = vpop.f32.mrb[0].mxu0
      %v2265 = vpop.f32.mrb[0].mxu0
      %v2266 = vadd.f32 %v2175, %v2265
      %v2267 = vpop.f32.mrb[0].mxu0
      %2268 = vmatprep.mubr.bf16.mxu0 0
      %2269 = vmatmul.mubr.bf16.gmra.mrb[0].mxu0 %v879
      %v2270 = vpop.f32.mrb[0].mxu0
      %v2271 = vadd.f32 %v2175, %v2270
      %v2272 = vpop.f32.mrb[0].mxu0
      %v2273 = vpop.f32.mrb[0].mxu0
      %v2274 = vadd.f32 %v2175, %v2273
      %v2275 = vpop.f32.mrb[0].mxu0
      %2276 = vmatprep.mubr.bf16.mxu0 0
      %2277 = vmatmul.mubr.bf16.gmra.mrb[0].mxu0 %v882
      %v2278 = vpop.f32.mrb[0].mxu0
      %v2279 = vadd.f32 %v2175, %v2278
      %v2280 = vpop.f32.mrb[0].mxu0
      %v2281 = vpop.f32.mrb[0].mxu0
      %v2282 = vadd.f32 %v2175, %v2281
      %v2283 = vpop.f32.mrb[0].mxu0
      %2284 = vdwg.mxu0
      %s2285 = scalar_lea.vmem %s3, 80
      %v2286 = vld [vmem:[%s2285] sm:$0xf]
      %v2287 = vld [vmem:[%s2285 + $0x4] sm:$0xf]
      %v2288 = vld [vmem:[%s2285 + $0x8] sm:$0xf]
      %v2289 = vld [vmem:[%s2285 + $0xc] sm:$0xf]
      %v2290 = vld [vmem:[%s4 + $0x5] sm:$0x1]
      %v2291 = vlaneseq
      %v2292 = vshrl.u32 %v2291, 7
      %v2293 = vsub.s32 0, %v2292
      %v2294 = vrot.slane %v2290, %v2293
      %v2299 = vunpack.c.l.b16 %v2286
      %v2300 = vunpack.c.l.b16 %v2287
      %v2301 = vunpack.c.l.b16 %v2288
      %v2302 = vunpack.c.l.b16 %v2289
      %v2303 = vpack.c.b16 %v2300, %v2299
      %v2304 = vpack.c.b16 %v2302, %v2301
      %2307 = vmatprep.subr.bf16.mxu0 0
      %2308 = vmatpush1.bf16.msra.mxu0 %v2303
      %2309 = vmatprep.subr.bf16.mxu0 0
      %2310 = vmatpush1.bf16.msra.mxu0 %v2304
      %2311 = vmatprep.subr.bf16.mxu0 0
      %2312 = vmatpush1.bf16.msra.mxu0 0
      %2313 = vmatprep.subr.bf16.mxu0 0
      %2314 = vmatpush1.bf16.msra.mxu0 0
      %2315 = vmatprep.subr.bf16.mxu0 0
      %2316 = vmatpush1.bf16.msra.mxu0 0
      %2317 = vmatprep.subr.bf16.mxu0 0
      %2318 = vmatpush1.bf16.msra.mxu0 0
      %2319 = vmatprep.subr.bf16.mxu0 0
      %2320 = vmatpush1.bf16.msra.mxu0 0
      %2321 = vmatprep.subr.bf16.mxu0 0
      %2322 = vmatpush1.bf16.msra.mxu0 0
      %2323 = vmatprep.subr.bf16.mxu0 0
      %2324 = vmatpush1.bf16.msra.mxu0 0
      %2325 = vmatprep.subr.bf16.mxu0 0
      %2326 = vmatpush1.bf16.msra.mxu0 0
      %2327 = vmatprep.subr.bf16.mxu0 0
      %2328 = vmatpush1.bf16.msra.mxu0 0
      %2329 = vmatprep.subr.bf16.mxu0 0
      %2330 = vmatpush1.bf16.msra.mxu0 0
      %2331 = vmatprep.subr.bf16.mxu0 0
      %2332 = vmatpush1.bf16.msra.mxu0 0
      %2333 = vmatprep.subr.bf16.mxu0 0
      %2334 = vmatpush1.bf16.msra.mxu0 0
      %2335 = vmatprep.subr.bf16.mxu0 0
      %2336 = vmatpush1.bf16.msra.mxu0 0
      %2337 = vmatprep.subr.bf16.mxu0 0
      %2338 = vmatpush1.bf16.msra.mxu0 0
      %2339 = vmatprep.mubr.bf16.mxu0 0
      %2340 = vmatmul.mubr.bf16.gmra.mrb[0].mxu0 %v861
      %v2341 = vpop.f32.mrb[0].mxu0
      %v2342 = vadd.f32 %v2294, %v2341
      %v2343 = vpop.f32.mrb[0].mxu0
      %v2344 = vpop.f32.mrb[0].mxu0
      %v2345 = vadd.f32 %v2294, %v2344
      %v2346 = vpop.f32.mrb[0].mxu0
      %2347 = vmatprep.mubr.bf16.mxu0 0
      %2348 = vmatmul.mubr.bf16.gmra.mrb[0].mxu0 %v864
      %v2349 = vpop.f32.mrb[0].mxu0
      %v2350 = vadd.f32 %v2294, %v2349
      %v2351 = vpop.f32.mrb[0].mxu0
      %v2352 = vpop.f32.mrb[0].mxu0
      %v2353 = vadd.f32 %v2294, %v2352
      %v2354 = vpop.f32.mrb[0].mxu0
      %2355 = vmatprep.mubr.bf16.mxu0 0
      %2356 = vmatmul.mubr.bf16.gmra.mrb[0].mxu0 %v867
      %v2357 = vpop.f32.mrb[0].mxu0
      %v2358 = vadd.f32 %v2294, %v2357
      %v2359 = vpop.f32.mrb[0].mxu0
      %v2360 = vpop.f32.mrb[0].mxu0
      %v2361 = vadd.f32 %v2294, %v2360
      %v2362 = vpop.f32.mrb[0].mxu0
      %2363 = vmatprep.mubr.bf16.mxu0 0
      %2364 = vmatmul.mubr.bf16.gmra.mrb[0].mxu0 %v870
      %v2365 = vpop.f32.mrb[0].mxu0
      %v2366 = vadd.f32 %v2294, %v2365
      %v2367 = vpop.f32.mrb[0].mxu0
      %v2368 = vpop.f32.mrb[0].mxu0
      %v2369 = vadd.f32 %v2294, %v2368
      %v2370 = vpop.f32.mrb[0].mxu0
      %2371 = vmatprep.mubr.bf16.mxu0 0
      %2372 = vmatmul.mubr.bf16.gmra.mrb[0].mxu0 %v873
      %v2373 = vpop.f32.mrb[0].mxu0
      %v2374 = vadd.f32 %v2294, %v2373
      %v2375 = vpop.f32.mrb[0].mxu0
      %v2376 = vpop.f32.mrb[0].mxu0
      %v2377 = vadd.f32 %v2294, %v2376
      %v2378 = vpop.f32.mrb[0].mxu0
      %2379 = vmatprep.mubr.bf16.mxu0 0
      %2380 = vmatmul.mubr.bf16.gmra.mrb[0].mxu0 %v876
      %v2381 = vpop.f32.mrb[0].mxu0
      %v2382 = vadd.f32 %v2294, %v2381
      %v2383 = vpop.f32.mrb[0].mxu0
      %v2384 = vpop.f32.mrb[0].mxu0
      %v2385 = vadd.f32 %v2294, %v2384
      %v2386 = vpop.f32.mrb[0].mxu0
      %2387 = vmatprep.mubr.bf16.mxu0 0
      %2388 = vmatmul.mubr.bf16.gmra.mrb[0].mxu0 %v879
      %v2389 = vpop.f32.mrb[0].mxu0
      %v2390 = vadd.f32 %v2294, %v2389
      %v2391 = vpop.f32.mrb[0].mxu0
      %v2392 = vpop.f32.mrb[0].mxu0
      %v2393 = vadd.f32 %v2294, %v2392
      %v2394 = vpop.f32.mrb[0].mxu0
      %2395 = vmatprep.mubr.bf16.mxu0 0
      %2396 = vmatmul.mubr.bf16.gmra.mrb[0].mxu0 %v882
      %v2397 = vpop.f32.mrb[0].mxu0
      %v2398 = vadd.f32 %v2294, %v2397
      %v2399 = vpop.f32.mrb[0].mxu0
      %v2400 = vpop.f32.mrb[0].mxu0
      %v2401 = vadd.f32 %v2294, %v2400
      %v2402 = vpop.f32.mrb[0].mxu0
      %2403 = vdwg.mxu0
      %s2404 = scalar_lea.vmem %s3, 144
      %v2405 = vld [vmem:[%s2404] sm:$0xf]
      %v2406 = vld [vmem:[%s2404 + $0x4] sm:$0xf]
      %v2407 = vld [vmem:[%s2404 + $0x8] sm:$0xf]
      %v2408 = vld [vmem:[%s2404 + $0xc] sm:$0xf]
      %v2409 = vld [vmem:[%s4 + $0x9] sm:$0x1]
      %v2410 = vlaneseq
      %v2411 = vshrl.u32 %v2410, 7
      %v2412 = vsub.s32 0, %v2411
      %v2413 = vrot.slane %v2409, %v2412
      %v2418 = vunpack.c.l.b16 %v2405
      %v2419 = vunpack.c.l.b16 %v2406
      %v2420 = vunpack.c.l.b16 %v2407
      %v2421 = vunpack.c.l.b16 %v2408
      %v2422 = vpack.c.b16 %v2419, %v2418
      %v2423 = vpack.c.b16 %v2421, %v2420
      %2426 = vmatprep.subr.bf16.mxu0 0
      %2427 = vmatpush1.bf16.msra.mxu0 %v2422
      %2428 = vmatprep.subr.bf16.mxu0 0
      %2429 = vmatpush1.bf16.msra.mxu0 %v2423
      %2430 = vmatprep.subr.bf16.mxu0 0
      %2431 = vmatpush1.bf16.msra.mxu0 0
      %2432 = vmatprep.subr.bf16.mxu0 0
      %2433 = vmatpush1.bf16.msra.mxu0 0
      %2434 = vmatprep.subr.bf16.mxu0 0
      %2435 = vmatpush1.bf16.msra.mxu0 0
      %2436 = vmatprep.subr.bf16.mxu0 0
      %2437 = vmatpush1.bf16.msra.mxu0 0
      %2438 = vmatprep.subr.bf16.mxu0 0
      %2439 = vmatpush1.bf16.msra.mxu0 0
      %2440 = vmatprep.subr.bf16.mxu0 0
      %2441 = vmatpush1.bf16.msra.mxu0 0
      %2442 = vmatprep.subr.bf16.mxu0 0
      %2443 = vmatpush1.bf16.msra.mxu0 0
      %2444 = vmatprep.subr.bf16.mxu0 0
      %2445 = vmatpush1.bf16.msra.mxu0 0
      %2446 = vmatprep.subr.bf16.mxu0 0
      %2447 = vmatpush1.bf16.msra.mxu0 0
      %2448 = vmatprep.subr.bf16.mxu0 0
      %2449 = vmatpush1.bf16.msra.mxu0 0
      %2450 = vmatprep.subr.bf16.mxu0 0
      %2451 = vmatpush1.bf16.msra.mxu0 0
      %2452 = vmatprep.subr.bf16.mxu0 0
      %2453 = vmatpush1.bf16.msra.mxu0 0
      %2454 = vmatprep.subr.bf16.mxu0 0
      %2455 = vmatpush1.bf16.msra.mxu0 0
      %2456 = vmatprep.subr.bf16.mxu0 0
      %2457 = vmatpush1.bf16.msra.mxu0 0
      %2458 = vmatprep.mubr.bf16.mxu0 0
      %2459 = vmatmul.mubr.bf16.gmra.mrb[0].mxu0 %v861
      %v2460 = vpop.f32.mrb[0].mxu0
      %v2461 = vadd.f32 %v2413, %v2460
      %v2462 = vpop.f32.mrb[0].mxu0
      %v2463 = vpop.f32.mrb[0].mxu0
      %v2464 = vadd.f32 %v2413, %v2463
      %v2465 = vpop.f32.mrb[0].mxu0
      %2466 = vmatprep.mubr.bf16.mxu0 0
      %2467 = vmatmul.mubr.bf16.gmra.mrb[0].mxu0 %v864
      %v2468 = vpop.f32.mrb[0].mxu0
      %v2469 = vadd.f32 %v2413, %v2468
      %v2470 = vpop.f32.mrb[0].mxu0
      %v2471 = vpop.f32.mrb[0].mxu0
      %v2472 = vadd.f32 %v2413, %v2471
      %v2473 = vpop.f32.mrb[0].mxu0
      %2474 = vmatprep.mubr.bf16.mxu0 0
      %2475 = vmatmul.mubr.bf16.gmra.mrb[0].mxu0 %v867
      %v2476 = vpop.f32.mrb[0].mxu0
      %v2477 = vadd.f32 %v2413, %v2476
      %v2478 = vpop.f32.mrb[0].mxu0
      %v2479 = vpop.f32.mrb[0].mxu0
      %v2480 = vadd.f32 %v2413, %v2479
      %v2481 = vpop.f32.mrb[0].mxu0
      %2482 = vmatprep.mubr.bf16.mxu0 0
      %2483 = vmatmul.mubr.bf16.gmra.mrb[0].mxu0 %v870
      %v2484 = vpop.f32.mrb[0].mxu0
      %v2485 = vadd.f32 %v2413, %v2484
      %v2486 = vpop.f32.mrb[0].mxu0
      %v2487 = vpop.f32.mrb[0].mxu0
      %v2488 = vadd.f32 %v2413, %v2487
      %v2489 = vpop.f32.mrb[0].mxu0
      %2490 = vmatprep.mubr.bf16.mxu0 0
      %2491 = vmatmul.mubr.bf16.gmra.mrb[0].mxu0 %v873
      %v2492 = vpop.f32.mrb[0].mxu0
      %v2493 = vadd.f32 %v2413, %v2492
      %v2494 = vpop.f32.mrb[0].mxu0
      %v2495 = vpop.f32.mrb[0].mxu0
      %v2496 = vadd.f32 %v2413, %v2495
      %v2497 = vpop.f32.mrb[0].mxu0
      %2498 = vmatprep.mubr.bf16.mxu0 0
      %2499 = vmatmul.mubr.bf16.gmra.mrb[0].mxu0 %v876
      %v2500 = vpop.f32.mrb[0].mxu0
      %v2501 = vadd.f32 %v2413, %v2500
      %v2502 = vpop.f32.mrb[0].mxu0
      %v2503 = vpop.f32.mrb[0].mxu0
      %v2504 = vadd.f32 %v2413, %v2503
      %v2505 = vpop.f32.mrb[0].mxu0
      %2506 = vmatprep.mubr.bf16.mxu0 0
      %2507 = vmatmul.mubr.bf16.gmra.mrb[0].mxu0 %v879
      %v2508 = vpop.f32.mrb[0].mxu0
      %v2509 = vadd.f32 %v2413, %v2508
      %v2510 = vpop.f32.mrb[0].mxu0
      %v2511 = vpop.f32.mrb[0].mxu0
      %v2512 = vadd.f32 %v2413, %v2511
      %v2513 = vpop.f32.mrb[0].mxu0
      %2514 = vmatprep.mubr.bf16.mxu0 0
      %2515 = vmatmul.mubr.bf16.gmra.mrb[0].mxu0 %v882
      %v2516 = vpop.f32.mrb[0].mxu0
      %v2517 = vadd.f32 %v2413, %v2516
      %v2518 = vpop.f32.mrb[0].mxu0
      %v2519 = vpop.f32.mrb[0].mxu0
      %v2520 = vadd.f32 %v2413, %v2519
      %v2521 = vpop.f32.mrb[0].mxu0
      %2522 = vdwg.mxu0
      %v2523 = vpack.c.bf16 %v2226, %v2223
      %v2524 = vpack.c.bf16 %v2234, %v2231
      %v2525 = vpack.c.bf16 %v2242, %v2239
      %v2526 = vpack.c.bf16 %v2250, %v2247
      %v2527 = vpack.c.bf16 %v2258, %v2255
      %v2528 = vpack.c.bf16 %v2266, %v2263
      %v2529 = vpack.c.bf16 %v2274, %v2271
      %v2530 = vpack.c.bf16 %v2282, %v2279
      %v2531 = vpack.c.bf16 %v2345, %v2342
      %v2532 = vpack.c.bf16 %v2353, %v2350
      %v2533 = vpack.c.bf16 %v2361, %v2358
      %v2534 = vpack.c.bf16 %v2369, %v2366
      %v2535 = vpack.c.bf16 %v2377, %v2374
      %v2536 = vpack.c.bf16 %v2385, %v2382
      %v2537 = vpack.c.bf16 %v2393, %v2390
      %v2538 = vpack.c.bf16 %v2401, %v2398
      %v2540 = vsel %vm1235, %v2523, 0
      %v2543 = vsel %vm1235, %v2531, 0
      %2545 = vmatprep.subr.bf16.mxu0 0
      %2546 = vmatpush1.bf16.xpose.msra.mxu0 %v2543
      %2547 = vmatprep.subr.bf16.mxu0 0
      %2548 = vmatpush1.bf16.xpose.msra.mxu0 0
      %2549 = vmatprep.subr.bf16.mxu0 0
      %2550 = vmatpush1.bf16.xpose.msra.mxu0 0
      %2551 = vmatprep.subr.bf16.mxu0 0
      %2552 = vmatpush1.bf16.xpose.msra.mxu0 0
      %2553 = vmatprep.subr.bf16.mxu0 0
      %2554 = vmatpush1.bf16.xpose.msra.mxu0 0
      %2555 = vmatprep.subr.bf16.mxu0 0
      %2556 = vmatpush1.bf16.xpose.msra.mxu0 0
      %2557 = vmatprep.subr.bf16.mxu0 0
      %2558 = vmatpush1.bf16.xpose.msra.mxu0 0
      %2559 = vmatprep.subr.bf16.mxu0 0
      %2560 = vmatpush1.bf16.xpose.msra.mxu0 0
      %2561 = vmatprep.subr.bf16.mxu0 0
      %2562 = vmatpush1.bf16.xpose.msra.mxu0 0
      %2563 = vmatprep.subr.bf16.mxu0 0
      %2564 = vmatpush1.bf16.xpose.msra.mxu0 0
      %2565 = vmatprep.subr.bf16.mxu0 0
      %2566 = vmatpush1.bf16.xpose.msra.mxu0 0
      %2567 = vmatprep.subr.bf16.mxu0 0
      %2568 = vmatpush1.bf16.xpose.msra.mxu0 0
      %2569 = vmatprep.subr.bf16.mxu0 0
      %2570 = vmatpush1.bf16.xpose.msra.mxu0 0
      %2571 = vmatprep.subr.bf16.mxu0 0
      %2572 = vmatpush1.bf16.xpose.msra.mxu0 0
      %2573 = vmatprep.subr.bf16.mxu0 0
      %2574 = vmatpush1.bf16.xpose.msra.mxu0 0
      %2575 = vmatprep.subr.bf16.mxu0 0
      %2576 = vmatpush1.bf16.xpose.msra.mxu0 0
      %2577 = vmatprep.mubr.bf16.mxu0 0
      %2578 = vmatmul.mubr.bf16.gmra.mrb[0].mxu0 %v2540
      %v2579 = vpop.f32.mrb[0].mxu0
      %v2580 = vadd.f32 0.0, %v2579
      %v2581 = vpop.f32.mrb[0].mxu0
      %v2582 = vpop.f32.mrb[0].mxu0
      %v2583 = vadd.f32 0.0, %v2582
      %v2584 = vpop.f32.mrb[0].mxu0
      %2585 = vdwg.mxu0
      %v2587 = vsel %vm1235, %v2524, 0
      %v2590 = vsel %vm1235, %v2532, 0
      %2592 = vmatprep.subr.bf16.mxu0 0
      %2593 = vmatpush1.bf16.xpose.msra.mxu0 %v2590
      %2594 = vmatprep.subr.bf16.mxu0 0
      %2595 = vmatpush1.bf16.xpose.msra.mxu0 0
      %2596 = vmatprep.subr.bf16.mxu0 0
      %2597 = vmatpush1.bf16.xpose.msra.mxu0 0
      %2598 = vmatprep.subr.bf16.mxu0 0
      %2599 = vmatpush1.bf16.xpose.msra.mxu0 0
      %2600 = vmatprep.subr.bf16.mxu0 0
      %2601 = vmatpush1.bf16.xpose.msra.mxu0 0
      %2602 = vmatprep.subr.bf16.mxu0 0
      %2603 = vmatpush1.bf16.xpose.msra.mxu0 0
      %2604 = vmatprep.subr.bf16.mxu0 0
      %2605 = vmatpush1.bf16.xpose.msra.mxu0 0
      %2606 = vmatprep.subr.bf16.mxu0 0
      %2607 = vmatpush1.bf16.xpose.msra.mxu0 0
      %2608 = vmatprep.subr.bf16.mxu0 0
      %2609 = vmatpush1.bf16.xpose.msra.mxu0 0
      %2610 = vmatprep.subr.bf16.mxu0 0
      %2611 = vmatpush1.bf16.xpose.msra.mxu0 0
      %2612 = vmatprep.subr.bf16.mxu0 0
      %2613 = vmatpush1.bf16.xpose.msra.mxu0 0
      %2614 = vmatprep.subr.bf16.mxu0 0
      %2615 = vmatpush1.bf16.xpose.msra.mxu0 0
      %2616 = vmatprep.subr.bf16.mxu0 0
      %2617 = vmatpush1.bf16.xpose.msra.mxu0 0
      %2618 = vmatprep.subr.bf16.mxu0 0
      %2619 = vmatpush1.bf16.xpose.msra.mxu0 0
      %2620 = vmatprep.subr.bf16.mxu0 0
      %2621 = vmatpush1.bf16.xpose.msra.mxu0 0
      %2622 = vmatprep.subr.bf16.mxu0 0
      %2623 = vmatpush1.bf16.xpose.msra.mxu0 0
      %2624 = vmatprep.mubr.bf16.mxu0 0
      %2625 = vmatmul.mubr.bf16.gmra.mrb[0].mxu0 %v2587
      %v2626 = vpop.f32.mrb[0].mxu0
      %v2627 = vadd.f32 0.0, %v2626
      %v2628 = vpop.f32.mrb[0].mxu0
      %v2629 = vpop.f32.mrb[0].mxu0
      %v2630 = vadd.f32 0.0, %v2629
      %v2631 = vpop.f32.mrb[0].mxu0
      %2632 = vdwg.mxu0
      %v2634 = vsel %vm1235, %v2525, 0
      %v2637 = vsel %vm1235, %v2533, 0
      %2639 = vmatprep.subr.bf16.mxu0 0
      %2640 = vmatpush1.bf16.xpose.msra.mxu0 %v2637
      %2641 = vmatprep.subr.bf16.mxu0 0
      %2642 = vmatpush1.bf16.xpose.msra.mxu0 0
      %2643 = vmatprep.subr.bf16.mxu0 0
      %2644 = vmatpush1.bf16.xpose.msra.mxu0 0
      %2645 = vmatprep.subr.bf16.mxu0 0
      %2646 = vmatpush1.bf16.xpose.msra.mxu0 0
      %2647 = vmatprep.subr.bf16.mxu0 0
      %2648 = vmatpush1.bf16.xpose.msra.mxu0 0
      %2649 = vmatprep.subr.bf16.mxu0 0
      %2650 = vmatpush1.bf16.xpose.msra.mxu0 0
      %2651 = vmatprep.subr.bf16.mxu0 0
      %2652 = vmatpush1.bf16.xpose.msra.mxu0 0
      %2653 = vmatprep.subr.bf16.mxu0 0
      %2654 = vmatpush1.bf16.xpose.msra.mxu0 0
      %2655 = vmatprep.subr.bf16.mxu0 0
      %2656 = vmatpush1.bf16.xpose.msra.mxu0 0
      %2657 = vmatprep.subr.bf16.mxu0 0
      %2658 = vmatpush1.bf16.xpose.msra.mxu0 0
      %2659 = vmatprep.subr.bf16.mxu0 0
      %2660 = vmatpush1.bf16.xpose.msra.mxu0 0
      %2661 = vmatprep.subr.bf16.mxu0 0
      %2662 = vmatpush1.bf16.xpose.msra.mxu0 0
      %2663 = vmatprep.subr.bf16.mxu0 0
      %2664 = vmatpush1.bf16.xpose.msra.mxu0 0
      %2665 = vmatprep.subr.bf16.mxu0 0
      %2666 = vmatpush1.bf16.xpose.msra.mxu0 0
      %2667 = vmatprep.subr.bf16.mxu0 0
      %2668 = vmatpush1.bf16.xpose.msra.mxu0 0
      %2669 = vmatprep.subr.bf16.mxu0 0
      %2670 = vmatpush1.bf16.xpose.msra.mxu0 0
      %2671 = vmatprep.mubr.bf16.mxu0 0
      %2672 = vmatmul.mubr.bf16.gmra.mrb[0].mxu0 %v2634
      %v2673 = vpop.f32.mrb[0].mxu0
      %v2674 = vadd.f32 0.0, %v2673
      %v2675 = vpop.f32.mrb[0].mxu0
      %v2676 = vpop.f32.mrb[0].mxu0
      %v2677 = vadd.f32 0.0, %v2676
      %v2678 = vpop.f32.mrb[0].mxu0
      %2679 = vdwg.mxu0
      %v2681 = vsel %vm1235, %v2526, 0
      %v2684 = vsel %vm1235, %v2534, 0
      %2686 = vmatprep.subr.bf16.mxu0 0
      %2687 = vmatpush1.bf16.xpose.msra.mxu0 %v2684
      %2688 = vmatprep.subr.bf16.mxu0 0
      %2689 = vmatpush1.bf16.xpose.msra.mxu0 0
      %2690 = vmatprep.subr.bf16.mxu0 0
      %2691 = vmatpush1.bf16.xpose.msra.mxu0 0
      %2692 = vmatprep.subr.bf16.mxu0 0
      %2693 = vmatpush1.bf16.xpose.msra.mxu0 0
      %2694 = vmatprep.subr.bf16.mxu0 0
      %2695 = vmatpush1.bf16.xpose.msra.mxu0 0
      %2696 = vmatprep.subr.bf16.mxu0 0
      %2697 = vmatpush1.bf16.xpose.msra.mxu0 0
      %2698 = vmatprep.subr.bf16.mxu0 0
      %2699 = vmatpush1.bf16.xpose.msra.mxu0 0
      %2700 = vmatprep.subr.bf16.mxu0 0
      %2701 = vmatpush1.bf16.xpose.msra.mxu0 0
      %2702 = vmatprep.subr.bf16.mxu0 0
      %2703 = vmatpush1.bf16.xpose.msra.mxu0 0
      %2704 = vmatprep.subr.bf16.mxu0 0
      %2705 = vmatpush1.bf16.xpose.msra.mxu0 0
      %2706 = vmatprep.subr.bf16.mxu0 0
      %2707 = vmatpush1.bf16.xpose.msra.mxu0 0
      %2708 = vmatprep.subr.bf16.mxu0 0
      %2709 = vmatpush1.bf16.xpose.msra.mxu0 0
      %2710 = vmatprep.subr.bf16.mxu0 0
      %2711 = vmatpush1.bf16.xpose.msra.mxu0 0
      %2712 = vmatprep.subr.bf16.mxu0 0
      %2713 = vmatpush1.bf16.xpose.msra.mxu0 0
      %2714 = vmatprep.subr.bf16.mxu0 0
      %2715 = vmatpush1.bf16.xpose.msra.mxu0 0
      %2716 = vmatprep.subr.bf16.mxu0 0
      %2717 = vmatpush1.bf16.xpose.msra.mxu0 0
      %2718 = vmatprep.mubr.bf16.mxu0 0
      %2719 = vmatmul.mubr.bf16.gmra.mrb[0].mxu0 %v2681
      %v2720 = vpop.f32.mrb[0].mxu0
      %v2721 = vadd.f32 0.0, %v2720
      %v2722 = vpop.f32.mrb[0].mxu0
      %v2723 = vpop.f32.mrb[0].mxu0
      %v2724 = vadd.f32 0.0, %v2723
      %v2725 = vpop.f32.mrb[0].mxu0
      %2726 = vdwg.mxu0
      %v2728 = vsel %vm1235, %v2527, 0
      %v2731 = vsel %vm1235, %v2535, 0
      %2733 = vmatprep.subr.bf16.mxu0 0
      %2734 = vmatpush1.bf16.xpose.msra.mxu0 %v2731
      %2735 = vmatprep.subr.bf16.mxu0 0
      %2736 = vmatpush1.bf16.xpose.msra.mxu0 0
      %2737 = vmatprep.subr.bf16.mxu0 0
      %2738 = vmatpush1.bf16.xpose.msra.mxu0 0
      %2739 = vmatprep.subr.bf16.mxu0 0
      %2740 = vmatpush1.bf16.xpose.msra.mxu0 0
      %2741 = vmatprep.subr.bf16.mxu0 0
      %2742 = vmatpush1.bf16.xpose.msra.mxu0 0
      %2743 = vmatprep.subr.bf16.mxu0 0
      %2744 = vmatpush1.bf16.xpose.msra.mxu0 0
      %2745 = vmatprep.subr.bf16.mxu0 0
      %2746 = vmatpush1.bf16.xpose.msra.mxu0 0
      %2747 = vmatprep.subr.bf16.mxu0 0
      %2748 = vmatpush1.bf16.xpose.msra.mxu0 0
      %2749 = vmatprep.subr.bf16.mxu0 0
      %2750 = vmatpush1.bf16.xpose.msra.mxu0 0
      %2751 = vmatprep.subr.bf16.mxu0 0
      %2752 = vmatpush1.bf16.xpose.msra.mxu0 0
      %2753 = vmatprep.subr.bf16.mxu0 0
      %2754 = vmatpush1.bf16.xpose.msra.mxu0 0
      %2755 = vmatprep.subr.bf16.mxu0 0
      %2756 = vmatpush1.bf16.xpose.msra.mxu0 0
      %2757 = vmatprep.subr.bf16.mxu0 0
      %2758 = vmatpush1.bf16.xpose.msra.mxu0 0
      %2759 = vmatprep.subr.bf16.mxu0 0
      %2760 = vmatpush1.bf16.xpose.msra.mxu0 0
      %2761 = vmatprep.subr.bf16.mxu0 0
      %2762 = vmatpush1.bf16.xpose.msra.mxu0 0
      %2763 = vmatprep.subr.bf16.mxu0 0
      %2764 = vmatpush1.bf16.xpose.msra.mxu0 0
      %2765 = vmatprep.mubr.bf16.mxu0 0
      %2766 = vmatmul.mubr.bf16.gmra.mrb[0].mxu0 %v2728
      %v2767 = vpop.f32.mrb[0].mxu0
      %v2768 = vadd.f32 0.0, %v2767
      %v2769 = vpop.f32.mrb[0].mxu0
      %v2770 = vpop.f32.mrb[0].mxu0
      %v2771 = vadd.f32 0.0, %v2770
      %v2772 = vpop.f32.mrb[0].mxu0
      %2773 = vdwg.mxu0
      %v2775 = vsel %vm1235, %v2528, 0
      %v2778 = vsel %vm1235, %v2536, 0
      %2780 = vmatprep.subr.bf16.mxu0 0
      %2781 = vmatpush1.bf16.xpose.msra.mxu0 %v2778
      %2782 = vmatprep.subr.bf16.mxu0 0
      %2783 = vmatpush1.bf16.xpose.msra.mxu0 0
      %2784 = vmatprep.subr.bf16.mxu0 0
      %2785 = vmatpush1.bf16.xpose.msra.mxu0 0
      %2786 = vmatprep.subr.bf16.mxu0 0
      %2787 = vmatpush1.bf16.xpose.msra.mxu0 0
      %2788 = vmatprep.subr.bf16.mxu0 0
      %2789 = vmatpush1.bf16.xpose.msra.mxu0 0
      %2790 = vmatprep.subr.bf16.mxu0 0
      %2791 = vmatpush1.bf16.xpose.msra.mxu0 0
      %2792 = vmatprep.subr.bf16.mxu0 0
      %2793 = vmatpush1.bf16.xpose.msra.mxu0 0
      %2794 = vmatprep.subr.bf16.mxu0 0
      %2795 = vmatpush1.bf16.xpose.msra.mxu0 0
      %2796 = vmatprep.subr.bf16.mxu0 0
      %2797 = vmatpush1.bf16.xpose.msra.mxu0 0
      %2798 = vmatprep.subr.bf16.mxu0 0
      %2799 = vmatpush1.bf16.xpose.msra.mxu0 0
      %2800 = vmatprep.subr.bf16.mxu0 0
      %2801 = vmatpush1.bf16.xpose.msra.mxu0 0
      %2802 = vmatprep.subr.bf16.mxu0 0
      %2803 = vmatpush1.bf16.xpose.msra.mxu0 0
      %2804 = vmatprep.subr.bf16.mxu0 0
      %2805 = vmatpush1.bf16.xpose.msra.mxu0 0
      %2806 = vmatprep.subr.bf16.mxu0 0
      %2807 = vmatpush1.bf16.xpose.msra.mxu0 0
      %2808 = vmatprep.subr.bf16.mxu0 0
      %2809 = vmatpush1.bf16.xpose.msra.mxu0 0
      %2810 = vmatprep.subr.bf16.mxu0 0
      %2811 = vmatpush1.bf16.xpose.msra.mxu0 0
      %2812 = vmatprep.mubr.bf16.mxu0 0
      %2813 = vmatmul.mubr.bf16.gmra.mrb[0].mxu0 %v2775
      %v2814 = vpop.f32.mrb[0].mxu0
      %v2815 = vadd.f32 0.0, %v2814
      %v2816 = vpop.f32.mrb[0].mxu0
      %v2817 = vpop.f32.mrb[0].mxu0
      %v2818 = vadd.f32 0.0, %v2817
      %v2819 = vpop.f32.mrb[0].mxu0
      %2820 = vdwg.mxu0
      %v2822 = vsel %vm1235, %v2529, 0
      %v2825 = vsel %vm1235, %v2537, 0
      %2827 = vmatprep.subr.bf16.mxu0 0
      %2828 = vmatpush1.bf16.xpose.msra.mxu0 %v2825
      %2829 = vmatprep.subr.bf16.mxu0 0
      %2830 = vmatpush1.bf16.xpose.msra.mxu0 0
      %2831 = vmatprep.subr.bf16.mxu0 0
      %2832 = vmatpush1.bf16.xpose.msra.mxu0 0
      %2833 = vmatprep.subr.bf16.mxu0 0
      %2834 = vmatpush1.bf16.xpose.msra.mxu0 0
      %2835 = vmatprep.subr.bf16.mxu0 0
      %2836 = vmatpush1.bf16.xpose.msra.mxu0 0
      %2837 = vmatprep.subr.bf16.mxu0 0
      %2838 = vmatpush1.bf16.xpose.msra.mxu0 0
      %2839 = vmatprep.subr.bf16.mxu0 0
      %2840 = vmatpush1.bf16.xpose.msra.mxu0 0
      %2841 = vmatprep.subr.bf16.mxu0 0
      %2842 = vmatpush1.bf16.xpose.msra.mxu0 0
      %2843 = vmatprep.subr.bf16.mxu0 0
      %2844 = vmatpush1.bf16.xpose.msra.mxu0 0
      %2845 = vmatprep.subr.bf16.mxu0 0
      %2846 = vmatpush1.bf16.xpose.msra.mxu0 0
      %2847 = vmatprep.subr.bf16.mxu0 0
      %2848 = vmatpush1.bf16.xpose.msra.mxu0 0
      %2849 = vmatprep.subr.bf16.mxu0 0
      %2850 = vmatpush1.bf16.xpose.msra.mxu0 0
      %2851 = vmatprep.subr.bf16.mxu0 0
      %2852 = vmatpush1.bf16.xpose.msra.mxu0 0
      %2853 = vmatprep.subr.bf16.mxu0 0
      %2854 = vmatpush1.bf16.xpose.msra.mxu0 0
      %2855 = vmatprep.subr.bf16.mxu0 0
      %2856 = vmatpush1.bf16.xpose.msra.mxu0 0
      %2857 = vmatprep.subr.bf16.mxu0 0
      %2858 = vmatpush1.bf16.xpose.msra.mxu0 0
      %2859 = vmatprep.mubr.bf16.mxu0 0
      %2860 = vmatmul.mubr.bf16.gmra.mrb[0].mxu0 %v2822
      %v2861 = vpop.f32.mrb[0].mxu0
      %v2862 = vadd.f32 0.0, %v2861
      %v2863 = vpop.f32.mrb[0].mxu0
      %v2864 = vpop.f32.mrb[0].mxu0
      %v2865 = vadd.f32 0.0, %v2864
      %v2866 = vpop.f32.mrb[0].mxu0
      %2867 = vdwg.mxu0
      %v2869 = vsel %vm1235, %v2530, 0
      %v2872 = vsel %vm1235, %v2538, 0
      %2874 = vmatprep.subr.bf16.mxu0 0
      %2875 = vmatpush1.bf16.xpose.msra.mxu0 %v2872
      %2876 = vmatprep.subr.bf16.mxu0 0
      %2877 = vmatpush1.bf16.xpose.msra.mxu0 0
      %2878 = vmatprep.subr.bf16.mxu0 0
      %2879 = vmatpush1.bf16.xpose.msra.mxu0 0
      %2880 = vmatprep.subr.bf16.mxu0 0
      %2881 = vmatpush1.bf16.xpose.msra.mxu0 0
      %2882 = vmatprep.subr.bf16.mxu0 0
      %2883 = vmatpush1.bf16.xpose.msra.mxu0 0
      %2884 = vmatprep.subr.bf16.mxu0 0
      %2885 = vmatpush1.bf16.xpose.msra.mxu0 0
      %2886 = vmatprep.subr.bf16.mxu0 0
      %2887 = vmatpush1.bf16.xpose.msra.mxu0 0
      %2888 = vmatprep.subr.bf16.mxu0 0
      %2889 = vmatpush1.bf16.xpose.msra.mxu0 0
      %2890 = vmatprep.subr.bf16.mxu0 0
      %2891 = vmatpush1.bf16.xpose.msra.mxu0 0
      %2892 = vmatprep.subr.bf16.mxu0 0
      %2893 = vmatpush1.bf16.xpose.msra.mxu0 0
      %2894 = vmatprep.subr.bf16.mxu0 0
      %2895 = vmatpush1.bf16.xpose.msra.mxu0 0
      %2896 = vmatprep.subr.bf16.mxu0 0
      %2897 = vmatpush1.bf16.xpose.msra.mxu0 0
      %2898 = vmatprep.subr.bf16.mxu0 0
      %2899 = vmatpush1.bf16.xpose.msra.mxu0 0
      %2900 = vmatprep.subr.bf16.mxu0 0
      %2901 = vmatpush1.bf16.xpose.msra.mxu0 0
      %2902 = vmatprep.subr.bf16.mxu0 0
      %2903 = vmatpush1.bf16.xpose.msra.mxu0 0
      %2904 = vmatprep.subr.bf16.mxu0 0
      %2905 = vmatpush1.bf16.xpose.msra.mxu0 0
      %2906 = vmatprep.mubr.bf16.mxu0 0
      %2907 = vmatmul.mubr.bf16.gmra.mrb[0].mxu0 %v2869
      %v2908 = vpop.f32.mrb[0].mxu0
      %v2909 = vadd.f32 0.0, %v2908
      %v2910 = vpop.f32.mrb[0].mxu0
      %v2911 = vpop.f32.mrb[0].mxu0
      %v2912 = vadd.f32 0.0, %v2911
      %v2913 = vpop.f32.mrb[0].mxu0
      %2914 = vdwg.mxu0
      %v2915 = vsel %vm1612, %v2580, -inf
      %2916 = vmax.xlane.f32.xlu0 %v2915
      %v2917 = vpop.xlane.xlu0 %2916
      %v2918 = vsel %vm1612, %v2583, -inf
      %2919 = vmax.xlane.f32.xlu0 %v2918
      %v2920 = vpop.xlane.xlu0 %2919
      %v2921 = vsel %vm1612, %v2627, -inf
      %2922 = vmax.xlane.f32.xlu0 %v2921
      %v2923 = vpop.xlane.xlu0 %2922
      %v2924 = vsel %vm1612, %v2630, -inf
      %2925 = vmax.xlane.f32.xlu0 %v2924
      %v2926 = vpop.xlane.xlu0 %2925
      %v2927 = vsel %vm1612, %v2674, -inf
      %2928 = vmax.xlane.f32.xlu0 %v2927
      %v2929 = vpop.xlane.xlu0 %2928
      %v2930 = vsel %vm1612, %v2677, -inf
      %2931 = vmax.xlane.f32.xlu0 %v2930
      %v2932 = vpop.xlane.xlu0 %2931
      %v2933 = vsel %vm1612, %v2721, -inf
      %2934 = vmax.xlane.f32.xlu0 %v2933
      %v2935 = vpop.xlane.xlu0 %2934
      %v2936 = vsel %vm1612, %v2724, -inf
      %2937 = vmax.xlane.f32.xlu0 %v2936
      %v2938 = vpop.xlane.xlu0 %2937
      %v2939 = vsel %vm1612, %v2768, -inf
      %2940 = vmax.xlane.f32.xlu0 %v2939
      %v2941 = vpop.xlane.xlu0 %2940
      %v2942 = vsel %vm1612, %v2771, -inf
      %2943 = vmax.xlane.f32.xlu0 %v2942
      %v2944 = vpop.xlane.xlu0 %2943
      %v2945 = vsel %vm1612, %v2815, -inf
      %2946 = vmax.xlane.f32.xlu0 %v2945
      %v2947 = vpop.xlane.xlu0 %2946
      %v2948 = vsel %vm1612, %v2818, -inf
      %2949 = vmax.xlane.f32.xlu0 %v2948
      %v2950 = vpop.xlane.xlu0 %2949
      %v2951 = vsel %vm1612, %v2862, -inf
      %2952 = vmax.xlane.f32.xlu0 %v2951
      %v2953 = vpop.xlane.xlu0 %2952
      %v2954 = vsel %vm1612, %v2865, -inf
      %2955 = vmax.xlane.f32.xlu0 %v2954
      %v2956 = vpop.xlane.xlu0 %2955
      %v2957 = vsel %vm1612, %v2909, -inf
      %2958 = vmax.xlane.f32.xlu0 %v2957
      %v2959 = vpop.xlane.xlu0 %2958
      %v2960 = vsel %vm1612, %v2912, -inf
      %2961 = vmax.xlane.f32.xlu0 %v2960
      %v2962 = vpop.xlane.xlu0 %2961
      %v2963 = vsub.f32 %v2580, %v2917
      %v2964 = vsub.f32 %v2583, %v2920
      %v2965 = vsub.f32 %v2627, %v2923
      %v2966 = vsub.f32 %v2630, %v2926
      %v2967 = vsub.f32 %v2674, %v2929
      %v2968 = vsub.f32 %v2677, %v2932
      %v2969 = vsub.f32 %v2721, %v2935
      %v2970 = vsub.f32 %v2724, %v2938
      %v2971 = vsub.f32 %v2768, %v2941
      %v2972 = vsub.f32 %v2771, %v2944
      %v2973 = vsub.f32 %v2815, %v2947
      %v2974 = vsub.f32 %v2818, %v2950
      %v2975 = vsub.f32 %v2862, %v2953
      %v2976 = vsub.f32 %v2865, %v2956
      %v2977 = vsub.f32 %v2909, %v2959
      %v2978 = vsub.f32 %v2912, %v2962
      %v2979 = vmul.f32 %v2963, 1.442695
      %v2980 = vpow.pop %v2979
      %v2981 = vmul.f32 %v2964, 1.442695
      %v2982 = vpow.pop %v2981
      %v2983 = vmul.f32 %v2965, 1.442695
      %v2984 = vpow.pop %v2983
      %v2985 = vmul.f32 %v2966, 1.442695
      %v2986 = vpow.pop %v2985
      %v2987 = vmul.f32 %v2967, 1.442695
      %v2988 = vpow.pop %v2987
      %v2989 = vmul.f32 %v2968, 1.442695
      %v2990 = vpow.pop %v2989
      %v2991 = vmul.f32 %v2969, 1.442695
      %v2992 = vpow.pop %v2991
      %v2993 = vmul.f32 %v2970, 1.442695
      %v2994 = vpow.pop %v2993
      %v2995 = vmul.f32 %v2971, 1.442695
      %v2996 = vpow.pop %v2995
      %v2997 = vmul.f32 %v2972, 1.442695
      %v2998 = vpow.pop %v2997
      %v2999 = vmul.f32 %v2973, 1.442695
      %v3000 = vpow.pop %v2999
      %v3001 = vmul.f32 %v2974, 1.442695
      %v3002 = vpow.pop %v3001
      %v3003 = vmul.f32 %v2975, 1.442695
      %v3004 = vpow.pop %v3003
      %v3005 = vmul.f32 %v2976, 1.442695
      %v3006 = vpow.pop %v3005
      %v3007 = vmul.f32 %v2977, 1.442695
      %v3008 = vpow.pop %v3007
      %v3009 = vmul.f32 %v2978, 1.442695
      %v3010 = vpow.pop %v3009
      %v3011 = vsel %vm1612, %v2980, 0.0
      %3012 = vadd.xlane.f32.xlu0 %v3011
      %v3013 = vpop.xlane.xlu0 %3012
      %v3014 = vsel %vm1612, %v2982, 0.0
      %3015 = vadd.xlane.f32.xlu0 %v3014
      %v3016 = vpop.xlane.xlu0 %3015
      %v3017 = vsel %vm1612, %v2984, 0.0
      %3018 = vadd.xlane.f32.xlu0 %v3017
      %v3019 = vpop.xlane.xlu0 %3018
      %v3020 = vsel %vm1612, %v2986, 0.0
      %3021 = vadd.xlane.f32.xlu0 %v3020
      %v3022 = vpop.xlane.xlu0 %3021
      %v3023 = vsel %vm1612, %v2988, 0.0
      %3024 = vadd.xlane.f32.xlu0 %v3023
      %v3025 = vpop.xlane.xlu0 %3024
      %v3026 = vsel %vm1612, %v2990, 0.0
      %3027 = vadd.xlane.f32.xlu0 %v3026
      %v3028 = vpop.xlane.xlu0 %3027
      %v3029 = vsel %vm1612, %v2992, 0.0
      %3030 = vadd.xlane.f32.xlu0 %v3029
      %v3031 = vpop.xlane.xlu0 %3030
      %v3032 = vsel %vm1612, %v2994, 0.0
      %3033 = vadd.xlane.f32.xlu0 %v3032
      %v3034 = vpop.xlane.xlu0 %3033
      %v3035 = vsel %vm1612, %v2996, 0.0
      %3036 = vadd.xlane.f32.xlu0 %v3035
      %v3037 = vpop.xlane.xlu0 %3036
      %v3038 = vsel %vm1612, %v2998, 0.0
      %3039 = vadd.xlane.f32.xlu0 %v3038
      %v3040 = vpop.xlane.xlu0 %3039
      %v3041 = vsel %vm1612, %v3000, 0.0
      %3042 = vadd.xlane.f32.xlu0 %v3041
      %v3043 = vpop.xlane.xlu0 %3042
      %v3044 = vsel %vm1612, %v3002, 0.0
      %3045 = vadd.xlane.f32.xlu0 %v3044
      %v3046 = vpop.xlane.xlu0 %3045
      %v3047 = vsel %vm1612, %v3004, 0.0
      %3048 = vadd.xlane.f32.xlu0 %v3047
      %v3049 = vpop.xlane.xlu0 %3048
      %v3050 = vsel %vm1612, %v3006, 0.0
      %3051 = vadd.xlane.f32.xlu0 %v3050
      %v3052 = vpop.xlane.xlu0 %3051
      %v3053 = vsel %vm1612, %v3008, 0.0
      %3054 = vadd.xlane.f32.xlu0 %v3053
      %v3055 = vpop.xlane.xlu0 %3054
      %v3056 = vsel %vm1612, %v3010, 0.0
      %3057 = vadd.xlane.f32.xlu0 %v3056
      %v3058 = vpop.xlane.xlu0 %3057
      %v3059 = vrcp.pop %v3013
      %v3060 = vrcp.pop %v3016
      %v3061 = vrcp.pop %v3019
      %v3062 = vrcp.pop %v3022
      %v3063 = vrcp.pop %v3025
      %v3064 = vrcp.pop %v3028
      %v3065 = vrcp.pop %v3031
      %v3066 = vrcp.pop %v3034
      %v3067 = vrcp.pop %v3037
      %v3068 = vrcp.pop %v3040
      %v3069 = vrcp.pop %v3043
      %v3070 = vrcp.pop %v3046
      %v3071 = vrcp.pop %v3049
      %v3072 = vrcp.pop %v3052
      %v3073 = vrcp.pop %v3055
      %v3074 = vrcp.pop %v3058
      %v3075 = vpack.c.bf16 %v2982, %v2980
      %v3076 = vpack.c.bf16 %v2986, %v2984
      %v3077 = vpack.c.bf16 %v2990, %v2988
      %v3078 = vpack.c.bf16 %v2994, %v2992
      %v3079 = vpack.c.bf16 %v2998, %v2996
      %v3080 = vpack.c.bf16 %v3002, %v3000
      %v3081 = vpack.c.bf16 %v3006, %v3004
      %v3082 = vpack.c.bf16 %v3010, %v3008
      %v3083 = vpack.c.bf16 %v2464, %v2461
      %v3084 = vpack.c.bf16 %v2472, %v2469
      %v3085 = vpack.c.bf16 %v2480, %v2477
      %v3086 = vpack.c.bf16 %v2488, %v2485
      %v3087 = vpack.c.bf16 %v2496, %v2493
      %v3088 = vpack.c.bf16 %v2504, %v2501
      %v3089 = vpack.c.bf16 %v2512, %v2509
      %v3090 = vpack.c.bf16 %v2520, %v2517
      %v3092 = vsel %vm1612, %v3075, 0
      %3094 = vmatprep.subr.bf16.mxu0 0
      %3095 = vmatpush1.bf16.msra.mxu0 %v3083
      %3096 = vmatprep.subr.bf16.mxu0 0
      %3097 = vmatpush1.bf16.msra.mxu0 0
      %3098 = vmatprep.subr.bf16.mxu0 0
      %3099 = vmatpush1.bf16.msra.mxu0 0
      %3100 = vmatprep.subr.bf16.mxu0 0
      %3101 = vmatpush1.bf16.msra.mxu0 0
      %3102 = vmatprep.subr.bf16.mxu0 0
      %3103 = vmatpush1.bf16.msra.mxu0 0
      %3104 = vmatprep.subr.bf16.mxu0 0
      %3105 = vmatpush1.bf16.msra.mxu0 0
      %3106 = vmatprep.subr.bf16.mxu0 0
      %3107 = vmatpush1.bf16.msra.mxu0 0
      %3108 = vmatprep.subr.bf16.mxu0 0
      %3109 = vmatpush1.bf16.msra.mxu0 0
      %3110 = vmatprep.subr.bf16.mxu0 0
      %3111 = vmatpush1.bf16.msra.mxu0 0
      %3112 = vmatprep.subr.bf16.mxu0 0
      %3113 = vmatpush1.bf16.msra.mxu0 0
      %3114 = vmatprep.subr.bf16.mxu0 0
      %3115 = vmatpush1.bf16.msra.mxu0 0
      %3116 = vmatprep.subr.bf16.mxu0 0
      %3117 = vmatpush1.bf16.msra.mxu0 0
      %3118 = vmatprep.subr.bf16.mxu0 0
      %3119 = vmatpush1.bf16.msra.mxu0 0
      %3120 = vmatprep.subr.bf16.mxu0 0
      %3121 = vmatpush1.bf16.msra.mxu0 0
      %3122 = vmatprep.subr.bf16.mxu0 0
      %3123 = vmatpush1.bf16.msra.mxu0 0
      %3124 = vmatprep.subr.bf16.mxu0 0
      %3125 = vmatpush1.bf16.msra.mxu0 0
      %3126 = vmatprep.mubr.bf16.mxu0 0
      %3127 = vmatmul.mubr.bf16.gmra.mrb[0].mxu0 %v3092
      %v3128 = vpop.f32.mrb[0].mxu0
      %v3129 = vadd.f32 0.0, %v3128
      %v3130 = vpop.f32.mrb[0].mxu0
      %v3131 = vpop.f32.mrb[0].mxu0
      %v3132 = vadd.f32 0.0, %v3131
      %v3133 = vpop.f32.mrb[0].mxu0
      %3134 = vdwg.mxu0
      %v3136 = vsel %vm1612, %v3076, 0
      %3138 = vmatprep.subr.bf16.mxu0 0
      %3139 = vmatpush1.bf16.msra.mxu0 %v3084
      %3140 = vmatprep.subr.bf16.mxu0 0
      %3141 = vmatpush1.bf16.msra.mxu0 0
      %3142 = vmatprep.subr.bf16.mxu0 0
      %3143 = vmatpush1.bf16.msra.mxu0 0
      %3144 = vmatprep.subr.bf16.mxu0 0
      %3145 = vmatpush1.bf16.msra.mxu0 0
      %3146 = vmatprep.subr.bf16.mxu0 0
      %3147 = vmatpush1.bf16.msra.mxu0 0
      %3148 = vmatprep.subr.bf16.mxu0 0
      %3149 = vmatpush1.bf16.msra.mxu0 0
      %3150 = vmatprep.subr.bf16.mxu0 0
      %3151 = vmatpush1.bf16.msra.mxu0 0
      %3152 = vmatprep.subr.bf16.mxu0 0
      %3153 = vmatpush1.bf16.msra.mxu0 0
      %3154 = vmatprep.subr.bf16.mxu0 0
      %3155 = vmatpush1.bf16.msra.mxu0 0
      %3156 = vmatprep.subr.bf16.mxu0 0
      %3157 = vmatpush1.bf16.msra.mxu0 0
      %3158 = vmatprep.subr.bf16.mxu0 0
      %3159 = vmatpush1.bf16.msra.mxu0 0
      %3160 = vmatprep.subr.bf16.mxu0 0
      %3161 = vmatpush1.bf16.msra.mxu0 0
      %3162 = vmatprep.subr.bf16.mxu0 0
      %3163 = vmatpush1.bf16.msra.mxu0 0
      %3164 = vmatprep.subr.bf16.mxu0 0
      %3165 = vmatpush1.bf16.msra.mxu0 0
      %3166 = vmatprep.subr.bf16.mxu0 0
      %3167 = vmatpush1.bf16.msra.mxu0 0
      %3168 = vmatprep.subr.bf16.mxu0 0
      %3169 = vmatpush1.bf16.msra.mxu0 0
      %3170 = vmatprep.mubr.bf16.mxu0 0
      %3171 = vmatmul.mubr.bf16.gmra.mrb[0].mxu0 %v3136
      %v3172 = vpop.f32.mrb[0].mxu0
      %v3173 = vadd.f32 0.0, %v3172
      %v3174 = vpop.f32.mrb[0].mxu0
      %v3175 = vpop.f32.mrb[0].mxu0
      %v3176 = vadd.f32 0.0, %v3175
      %v3177 = vpop.f32.mrb[0].mxu0
      %3178 = vdwg.mxu0
      %v3180 = vsel %vm1612, %v3077, 0
      %3182 = vmatprep.subr.bf16.mxu0 0
      %3183 = vmatpush1.bf16.msra.mxu0 %v3085
      %3184 = vmatprep.subr.bf16.mxu0 0
      %3185 = vmatpush1.bf16.msra.mxu0 0
      %3186 = vmatprep.subr.bf16.mxu0 0
      %3187 = vmatpush1.bf16.msra.mxu0 0
      %3188 = vmatprep.subr.bf16.mxu0 0
      %3189 = vmatpush1.bf16.msra.mxu0 0
      %3190 = vmatprep.subr.bf16.mxu0 0
      %3191 = vmatpush1.bf16.msra.mxu0 0
      %3192 = vmatprep.subr.bf16.mxu0 0
      %3193 = vmatpush1.bf16.msra.mxu0 0
      %3194 = vmatprep.subr.bf16.mxu0 0
      %3195 = vmatpush1.bf16.msra.mxu0 0
      %3196 = vmatprep.subr.bf16.mxu0 0
      %3197 = vmatpush1.bf16.msra.mxu0 0
      %3198 = vmatprep.subr.bf16.mxu0 0
      %3199 = vmatpush1.bf16.msra.mxu0 0
      %3200 = vmatprep.subr.bf16.mxu0 0
      %3201 = vmatpush1.bf16.msra.mxu0 0
      %3202 = vmatprep.subr.bf16.mxu0 0
      %3203 = vmatpush1.bf16.msra.mxu0 0
      %3204 = vmatprep.subr.bf16.mxu0 0
      %3205 = vmatpush1.bf16.msra.mxu0 0
      %3206 = vmatprep.subr.bf16.mxu0 0
      %3207 = vmatpush1.bf16.msra.mxu0 0
      %3208 = vmatprep.subr.bf16.mxu0 0
      %3209 = vmatpush1.bf16.msra.mxu0 0
      %3210 = vmatprep.subr.bf16.mxu0 0
      %3211 = vmatpush1.bf16.msra.mxu0 0
      %3212 = vmatprep.subr.bf16.mxu0 0
      %3213 = vmatpush1.bf16.msra.mxu0 0
      %3214 = vmatprep.mubr.bf16.mxu0 0
      %3215 = vmatmul.mubr.bf16.gmra.mrb[0].mxu0 %v3180
      %v3216 = vpop.f32.mrb[0].mxu0
      %v3217 = vadd.f32 0.0, %v3216
      %v3218 = vpop.f32.mrb[0].mxu0
      %v3219 = vpop.f32.mrb[0].mxu0
      %v3220 = vadd.f32 0.0, %v3219
      %v3221 = vpop.f32.mrb[0].mxu0
      %3222 = vdwg.mxu0
      %v3224 = vsel %vm1612, %v3078, 0
      %3226 = vmatprep.subr.bf16.mxu0 0
      %3227 = vmatpush1.bf16.msra.mxu0 %v3086
      %3228 = vmatprep.subr.bf16.mxu0 0
      %3229 = vmatpush1.bf16.msra.mxu0 0
      %3230 = vmatprep.subr.bf16.mxu0 0
      %3231 = vmatpush1.bf16.msra.mxu0 0
      %3232 = vmatprep.subr.bf16.mxu0 0
      %3233 = vmatpush1.bf16.msra.mxu0 0
      %3234 = vmatprep.subr.bf16.mxu0 0
      %3235 = vmatpush1.bf16.msra.mxu0 0
      %3236 = vmatprep.subr.bf16.mxu0 0
      %3237 = vmatpush1.bf16.msra.mxu0 0
      %3238 = vmatprep.subr.bf16.mxu0 0
      %3239 = vmatpush1.bf16.msra.mxu0 0
      %3240 = vmatprep.subr.bf16.mxu0 0
      %3241 = vmatpush1.bf16.msra.mxu0 0
      %3242 = vmatprep.subr.bf16.mxu0 0
      %3243 = vmatpush1.bf16.msra.mxu0 0
      %3244 = vmatprep.subr.bf16.mxu0 0
      %3245 = vmatpush1.bf16.msra.mxu0 0
      %3246 = vmatprep.subr.bf16.mxu0 0
      %3247 = vmatpush1.bf16.msra.mxu0 0
      %3248 = vmatprep.subr.bf16.mxu0 0
      %3249 = vmatpush1.bf16.msra.mxu0 0
      %3250 = vmatprep.subr.bf16.mxu0 0
      %3251 = vmatpush1.bf16.msra.mxu0 0
      %3252 = vmatprep.subr.bf16.mxu0 0
      %3253 = vmatpush1.bf16.msra.mxu0 0
      %3254 = vmatprep.subr.bf16.mxu0 0
      %3255 = vmatpush1.bf16.msra.mxu0 0
      %3256 = vmatprep.subr.bf16.mxu0 0
      %3257 = vmatpush1.bf16.msra.mxu0 0
      %3258 = vmatprep.mubr.bf16.mxu0 0
      %3259 = vmatmul.mubr.bf16.gmra.mrb[0].mxu0 %v3224
      %v3260 = vpop.f32.mrb[0].mxu0
      %v3261 = vadd.f32 0.0, %v3260
      %v3262 = vpop.f32.mrb[0].mxu0
      %v3263 = vpop.f32.mrb[0].mxu0
      %v3264 = vadd.f32 0.0, %v3263
      %v3265 = vpop.f32.mrb[0].mxu0
      %3266 = vdwg.mxu0
      %v3268 = vsel %vm1612, %v3079, 0
      %3270 = vmatprep.subr.bf16.mxu0 0
      %3271 = vmatpush1.bf16.msra.mxu0 %v3087
      %3272 = vmatprep.subr.bf16.mxu0 0
      %3273 = vmatpush1.bf16.msra.mxu0 0
      %3274 = vmatprep.subr.bf16.mxu0 0
      %3275 = vmatpush1.bf16.msra.mxu0 0
      %3276 = vmatprep.subr.bf16.mxu0 0
      %3277 = vmatpush1.bf16.msra.mxu0 0
      %3278 = vmatprep.subr.bf16.mxu0 0
      %3279 = vmatpush1.bf16.msra.mxu0 0
      %3280 = vmatprep.subr.bf16.mxu0 0
      %3281 = vmatpush1.bf16.msra.mxu0 0
      %3282 = vmatprep.subr.bf16.mxu0 0
      %3283 = vmatpush1.bf16.msra.mxu0 0
      %3284 = vmatprep.subr.bf16.mxu0 0
      %3285 = vmatpush1.bf16.msra.mxu0 0
      %3286 = vmatprep.subr.bf16.mxu0 0
      %3287 = vmatpush1.bf16.msra.mxu0 0
      %3288 = vmatprep.subr.bf16.mxu0 0
      %3289 = vmatpush1.bf16.msra.mxu0 0
      %3290 = vmatprep.subr.bf16.mxu0 0
      %3291 = vmatpush1.bf16.msra.mxu0 0
      %3292 = vmatprep.subr.bf16.mxu0 0
      %3293 = vmatpush1.bf16.msra.mxu0 0
      %3294 = vmatprep.subr.bf16.mxu0 0
      %3295 = vmatpush1.bf16.msra.mxu0 0
      %3296 = vmatprep.subr.bf16.mxu0 0
      %3297 = vmatpush1.bf16.msra.mxu0 0
      %3298 = vmatprep.subr.bf16.mxu0 0
      %3299 = vmatpush1.bf16.msra.mxu0 0
      %3300 = vmatprep.subr.bf16.mxu0 0
      %3301 = vmatpush1.bf16.msra.mxu0 0
      %3302 = vmatprep.mubr.bf16.mxu0 0
      %3303 = vmatmul.mubr.bf16.gmra.mrb[0].mxu0 %v3268
      %v3304 = vpop.f32.mrb[0].mxu0
      %v3305 = vadd.f32 0.0, %v3304
      %v3306 = vpop.f32.mrb[0].mxu0
      %v3307 = vpop.f32.mrb[0].mxu0
      %v3308 = vadd.f32 0.0, %v3307
      %v3309 = vpop.f32.mrb[0].mxu0
      %3310 = vdwg.mxu0
      %v3312 = vsel %vm1612, %v3080, 0
      %3314 = vmatprep.subr.bf16.mxu0 0
      %3315 = vmatpush1.bf16.msra.mxu0 %v3088
      %3316 = vmatprep.subr.bf16.mxu0 0
      %3317 = vmatpush1.bf16.msra.mxu0 0
      %3318 = vmatprep.subr.bf16.mxu0 0
      %3319 = vmatpush1.bf16.msra.mxu0 0
      %3320 = vmatprep.subr.bf16.mxu0 0
      %3321 = vmatpush1.bf16.msra.mxu0 0
      %3322 = vmatprep.subr.bf16.mxu0 0
      %3323 = vmatpush1.bf16.msra.mxu0 0
      %3324 = vmatprep.subr.bf16.mxu0 0
      %3325 = vmatpush1.bf16.msra.mxu0 0
      %3326 = vmatprep.subr.bf16.mxu0 0
      %3327 = vmatpush1.bf16.msra.mxu0 0
      %3328 = vmatprep.subr.bf16.mxu0 0
      %3329 = vmatpush1.bf16.msra.mxu0 0
      %3330 = vmatprep.subr.bf16.mxu0 0
      %3331 = vmatpush1.bf16.msra.mxu0 0
      %3332 = vmatprep.subr.bf16.mxu0 0
      %3333 = vmatpush1.bf16.msra.mxu0 0
      %3334 = vmatprep.subr.bf16.mxu0 0
      %3335 = vmatpush1.bf16.msra.mxu0 0
      %3336 = vmatprep.subr.bf16.mxu0 0
      %3337 = vmatpush1.bf16.msra.mxu0 0
      %3338 = vmatprep.subr.bf16.mxu0 0
      %3339 = vmatpush1.bf16.msra.mxu0 0
      %3340 = vmatprep.subr.bf16.mxu0 0
      %3341 = vmatpush1.bf16.msra.mxu0 0
      %3342 = vmatprep.subr.bf16.mxu0 0
      %3343 = vmatpush1.bf16.msra.mxu0 0
      %3344 = vmatprep.subr.bf16.mxu0 0
      %3345 = vmatpush1.bf16.msra.mxu0 0
      %3346 = vmatprep.mubr.bf16.mxu0 0
      %3347 = vmatmul.mubr.bf16.gmra.mrb[0].mxu0 %v3312
      %v3348 = vpop.f32.mrb[0].mxu0
      %v3349 = vadd.f32 0.0, %v3348
      %v3350 = vpop.f32.mrb[0].mxu0
      %v3351 = vpop.f32.mrb[0].mxu0
      %v3352 = vadd.f32 0.0, %v3351
      %v3353 = vpop.f32.mrb[0].mxu0
      %3354 = vdwg.mxu0
      %v3356 = vsel %vm1612, %v3081, 0
      %3358 = vmatprep.subr.bf16.mxu0 0
      %3359 = vmatpush1.bf16.msra.mxu0 %v3089
      %3360 = vmatprep.subr.bf16.mxu0 0
      %3361 = vmatpush1.bf16.msra.mxu0 0
      %3362 = vmatprep.subr.bf16.mxu0 0
      %3363 = vmatpush1.bf16.msra.mxu0 0
      %3364 = vmatprep.subr.bf16.mxu0 0
      %3365 = vmatpush1.bf16.msra.mxu0 0
      %3366 = vmatprep.subr.bf16.mxu0 0
      %3367 = vmatpush1.bf16.msra.mxu0 0
      %3368 = vmatprep.subr.bf16.mxu0 0
      %3369 = vmatpush1.bf16.msra.mxu0 0
      %3370 = vmatprep.subr.bf16.mxu0 0
      %3371 = vmatpush1.bf16.msra.mxu0 0
      %3372 = vmatprep.subr.bf16.mxu0 0
      %3373 = vmatpush1.bf16.msra.mxu0 0
      %3374 = vmatprep.subr.bf16.mxu0 0
      %3375 = vmatpush1.bf16.msra.mxu0 0
      %3376 = vmatprep.subr.bf16.mxu0 0
      %3377 = vmatpush1.bf16.msra.mxu0 0
      %3378 = vmatprep.subr.bf16.mxu0 0
      %3379 = vmatpush1.bf16.msra.mxu0 0
      %3380 = vmatprep.subr.bf16.mxu0 0
      %3381 = vmatpush1.bf16.msra.mxu0 0
      %3382 = vmatprep.subr.bf16.mxu0 0
      %3383 = vmatpush1.bf16.msra.mxu0 0
      %3384 = vmatprep.subr.bf16.mxu0 0
      %3385 = vmatpush1.bf16.msra.mxu0 0
      %3386 = vmatprep.subr.bf16.mxu0 0
      %3387 = vmatpush1.bf16.msra.mxu0 0
      %3388 = vmatprep.subr.bf16.mxu0 0
      %3389 = vmatpush1.bf16.msra.mxu0 0
      %3390 = vmatprep.mubr.bf16.mxu0 0
      %3391 = vmatmul.mubr.bf16.gmra.mrb[0].mxu0 %v3356
      %v3392 = vpop.f32.mrb[0].mxu0
      %v3393 = vadd.f32 0.0, %v3392
      %v3394 = vpop.f32.mrb[0].mxu0
      %v3395 = vpop.f32.mrb[0].mxu0
      %v3396 = vadd.f32 0.0, %v3395
      %v3397 = vpop.f32.mrb[0].mxu0
      %3398 = vdwg.mxu0
      %v3400 = vsel %vm1612, %v3082, 0
      %3402 = vmatprep.subr.bf16.mxu0 0
      %3403 = vmatpush1.bf16.msra.mxu0 %v3090
      %3404 = vmatprep.subr.bf16.mxu0 0
      %3405 = vmatpush1.bf16.msra.mxu0 0
      %3406 = vmatprep.subr.bf16.mxu0 0
      %3407 = vmatpush1.bf16.msra.mxu0 0
      %3408 = vmatprep.subr.bf16.mxu0 0
      %3409 = vmatpush1.bf16.msra.mxu0 0
      %3410 = vmatprep.subr.bf16.mxu0 0
      %3411 = vmatpush1.bf16.msra.mxu0 0
      %3412 = vmatprep.subr.bf16.mxu0 0
      %3413 = vmatpush1.bf16.msra.mxu0 0
      %3414 = vmatprep.subr.bf16.mxu0 0
      %3415 = vmatpush1.bf16.msra.mxu0 0
      %3416 = vmatprep.subr.bf16.mxu0 0
      %3417 = vmatpush1.bf16.msra.mxu0 0
      %3418 = vmatprep.subr.bf16.mxu0 0
      %3419 = vmatpush1.bf16.msra.mxu0 0
      %3420 = vmatprep.subr.bf16.mxu0 0
      %3421 = vmatpush1.bf16.msra.mxu0 0
      %3422 = vmatprep.subr.bf16.mxu0 0
      %3423 = vmatpush1.bf16.msra.mxu0 0
      %3424 = vmatprep.subr.bf16.mxu0 0
      %3425 = vmatpush1.bf16.msra.mxu0 0
      %3426 = vmatprep.subr.bf16.mxu0 0
      %3427 = vmatpush1.bf16.msra.mxu0 0
      %3428 = vmatprep.subr.bf16.mxu0 0
      %3429 = vmatpush1.bf16.msra.mxu0 0
      %3430 = vmatprep.subr.bf16.mxu0 0
      %3431 = vmatpush1.bf16.msra.mxu0 0
      %3432 = vmatprep.subr.bf16.mxu0 0
      %3433 = vmatpush1.bf16.msra.mxu0 0
      %3434 = vmatprep.mubr.bf16.mxu0 0
      %3435 = vmatmul.mubr.bf16.gmra.mrb[0].mxu0 %v3400
      %v3436 = vpop.f32.mrb[0].mxu0
      %v3437 = vadd.f32 0.0, %v3436
      %v3438 = vpop.f32.mrb[0].mxu0
      %v3439 = vpop.f32.mrb[0].mxu0
      %v3440 = vadd.f32 0.0, %v3439
      %v3441 = vpop.f32.mrb[0].mxu0
      %3442 = vdwg.mxu0
      %v3443 = vmul.f32 %v3129, %v3059
      %v3444 = vmul.f32 %v3132, %v3060
      %v3445 = vmul.f32 %v3173, %v3061
      %v3446 = vmul.f32 %v3176, %v3062
      %v3447 = vmul.f32 %v3217, %v3063
      %v3448 = vmul.f32 %v3220, %v3064
      %v3449 = vmul.f32 %v3261, %v3065
      %v3450 = vmul.f32 %v3264, %v3066
      %v3451 = vmul.f32 %v3305, %v3067
      %v3452 = vmul.f32 %v3308, %v3068
      %v3453 = vmul.f32 %v3349, %v3069
      %v3454 = vmul.f32 %v3352, %v3070
      %v3455 = vmul.f32 %v3393, %v3071
      %v3456 = vmul.f32 %v3396, %v3072
      %v3457 = vmul.f32 %v3437, %v3073
      %v3458 = vmul.f32 %v3440, %v3074
      %v3459 = vpack.c.bf16 %v3444, %v3443
      %v3460 = vpack.c.bf16 %v3446, %v3445
      %v3461 = vpack.c.bf16 %v3448, %v3447
      %v3462 = vpack.c.bf16 %v3450, %v3449
      %v3463 = vpack.c.bf16 %v3452, %v3451
      %v3464 = vpack.c.bf16 %v3454, %v3453
      %v3465 = vpack.c.bf16 %v3456, %v3455
      %v3466 = vpack.c.bf16 %v3458, %v3457
      %s3467 = scalar_lea.vmem %s5, 4
      %v3468 = vld [vmem:[%s3467] sm:$0xf]
      %v3470 = vsel %vm1235, %v3459, 0
      %v3473 = vsel %vm1235, %v3460, 0
      %v3476 = vsel %vm1235, %v3461, 0
      %v3479 = vsel %vm1235, %v3462, 0
      %v3482 = vsel %vm1235, %v3463, 0
      %v3485 = vsel %vm1235, %v3464, 0
      %v3488 = vsel %vm1235, %v3465, 0
      %v3491 = vsel %vm1235, %v3466, 0
      %vm3493 = vcmask 1043456
      %v3495 = vsel %vm3493, %v3468, 0
      %3497 = vmatprep.subr.bf16.mxu0 0
      %3498 = vmatpush1.bf16.msra.mxu0 %v3495
      %3499 = vmatprep.subr.bf16.mxu0 0
      %3500 = vmatpush1.bf16.msra.mxu0 0
      %3501 = vmatprep.subr.bf16.mxu0 0
      %3502 = vmatpush1.bf16.msra.mxu0 0
      %3503 = vmatprep.subr.bf16.mxu0 0
      %3504 = vmatpush1.bf16.msra.mxu0 0
      %3505 = vmatprep.subr.bf16.mxu0 0
      %3506 = vmatpush1.bf16.msra.mxu0 0
      %3507 = vmatprep.subr.bf16.mxu0 0
      %3508 = vmatpush1.bf16.msra.mxu0 0
      %3509 = vmatprep.subr.bf16.mxu0 0
      %3510 = vmatpush1.bf16.msra.mxu0 0
      %3511 = vmatprep.subr.bf16.mxu0 0
      %3512 = vmatpush1.bf16.msra.mxu0 0
      %3513 = vmatprep.subr.bf16.mxu0 0
      %3514 = vmatpush1.bf16.msra.mxu0 0
      %3515 = vmatprep.subr.bf16.mxu0 0
      %3516 = vmatpush1.bf16.msra.mxu0 0
      %3517 = vmatprep.subr.bf16.mxu0 0
      %3518 = vmatpush1.bf16.msra.mxu0 0
      %3519 = vmatprep.subr.bf16.mxu0 0
      %3520 = vmatpush1.bf16.msra.mxu0 0
      %3521 = vmatprep.subr.bf16.mxu0 0
      %3522 = vmatpush1.bf16.msra.mxu0 0
      %3523 = vmatprep.subr.bf16.mxu0 0
      %3524 = vmatpush1.bf16.msra.mxu0 0
      %3525 = vmatprep.subr.bf16.mxu0 0
      %3526 = vmatpush1.bf16.msra.mxu0 0
      %3527 = vmatprep.subr.bf16.mxu0 0
      %3528 = vmatpush1.bf16.msra.mxu0 0
      %3529 = vmatprep.mubr.bf16.mxu0 0
      %3530 = vmatmul.mubr.bf16.gmra.mrb[0].mxu0 %v3470
      %v3531 = vpop.f32.mrb[0].mxu0
      %v3532 = vadd.f32 0.0, %v3531
      %v3533 = vpop.f32.mrb[0].mxu0
      %v3534 = vpop.f32.mrb[0].mxu0
      %v3535 = vadd.f32 0.0, %v3534
      %v3536 = vpop.f32.mrb[0].mxu0
      %3537 = vmatprep.mubr.bf16.mxu0 0
      %3538 = vmatmul.mubr.bf16.gmra.mrb[0].mxu0 %v3473
      %v3539 = vpop.f32.mrb[0].mxu0
      %v3540 = vadd.f32 0.0, %v3539
      %v3541 = vpop.f32.mrb[0].mxu0
      %v3542 = vpop.f32.mrb[0].mxu0
      %v3543 = vadd.f32 0.0, %v3542
      %v3544 = vpop.f32.mrb[0].mxu0
      %3545 = vmatprep.mubr.bf16.mxu0 0
      %3546 = vmatmul.mubr.bf16.gmra.mrb[0].mxu0 %v3476
      %v3547 = vpop.f32.mrb[0].mxu0
      %v3548 = vadd.f32 0.0, %v3547
      %v3549 = vpop.f32.mrb[0].mxu0
      %v3550 = vpop.f32.mrb[0].mxu0
      %v3551 = vadd.f32 0.0, %v3550
      %v3552 = vpop.f32.mrb[0].mxu0
      %3553 = vmatprep.mubr.bf16.mxu0 0
      %3554 = vmatmul.mubr.bf16.gmra.mrb[0].mxu0 %v3479
      %v3555 = vpop.f32.mrb[0].mxu0
      %v3556 = vadd.f32 0.0, %v3555
      %v3557 = vpop.f32.mrb[0].mxu0
      %v3558 = vpop.f32.mrb[0].mxu0
      %v3559 = vadd.f32 0.0, %v3558
      %v3560 = vpop.f32.mrb[0].mxu0
      %3561 = vmatprep.mubr.bf16.mxu0 0
      %3562 = vmatmul.mubr.bf16.gmra.mrb[0].mxu0 %v3482
      %v3563 = vpop.f32.mrb[0].mxu0
      %v3564 = vadd.f32 0.0, %v3563
      %v3565 = vpop.f32.mrb[0].mxu0
      %v3566 = vpop.f32.mrb[0].mxu0
      %v3567 = vadd.f32 0.0, %v3566
      %v3568 = vpop.f32.mrb[0].mxu0
      %3569 = vmatprep.mubr.bf16.mxu0 0
      %3570 = vmatmul.mubr.bf16.gmra.mrb[0].mxu0 %v3485
      %v3571 = vpop.f32.mrb[0].mxu0
      %v3572 = vadd.f32 0.0, %v3571
      %v3573 = vpop.f32.mrb[0].mxu0
      %v3574 = vpop.f32.mrb[0].mxu0
      %v3575 = vadd.f32 0.0, %v3574
      %v3576 = vpop.f32.mrb[0].mxu0
      %3577 = vmatprep.mubr.bf16.mxu0 0
      %3578 = vmatmul.mubr.bf16.gmra.mrb[0].mxu0 %v3488
      %v3579 = vpop.f32.mrb[0].mxu0
      %v3580 = vadd.f32 0.0, %v3579
      %v3581 = vpop.f32.mrb[0].mxu0
      %v3582 = vpop.f32.mrb[0].mxu0
      %v3583 = vadd.f32 0.0, %v3582
      %v3584 = vpop.f32.mrb[0].mxu0
      %3585 = vmatprep.mubr.bf16.mxu0 0
      %3586 = vmatmul.mubr.bf16.gmra.mrb[0].mxu0 %v3491
      %v3587 = vpop.f32.mrb[0].mxu0
      %v3588 = vadd.f32 0.0, %v3587
      %v3589 = vpop.f32.mrb[0].mxu0
      %v3590 = vpop.f32.mrb[0].mxu0
      %v3591 = vadd.f32 0.0, %v3590
      %v3592 = vpop.f32.mrb[0].mxu0
      %3593 = vdwg.mxu0
      %v3595 = vsel %vm1235, %v2157, 0
      %v3598 = vsel %vm1235, %v2158, 0
      %v3601 = vsel %vm1235, %v2159, 0
      %v3604 = vsel %vm1235, %v2160, 0
      %v3607 = vsel %vm1235, %v2161, 0
      %v3610 = vsel %vm1235, %v2162, 0
      %v3613 = vsel %vm1235, %v2163, 0
      %v3616 = vsel %vm1235, %v2164, 0
      %v3619 = vsel %vm3493, %v2165, 0
      %3621 = vmatprep.subr.bf16.mxu0 0
      %3622 = vmatpush1.bf16.msra.mxu0 %v3619
      %3623 = vmatprep.subr.bf16.mxu0 0
      %3624 = vmatpush1.bf16.msra.mxu0 0
      %3625 = vmatprep.subr.bf16.mxu0 0
      %3626 = vmatpush1.bf16.msra.mxu0 0
      %3627 = vmatprep.subr.bf16.mxu0 0
      %3628 = vmatpush1.bf16.msra.mxu0 0
      %3629 = vmatprep.subr.bf16.mxu0 0
      %3630 = vmatpush1.bf16.msra.mxu0 0
      %3631 = vmatprep.subr.bf16.mxu0 0
      %3632 = vmatpush1.bf16.msra.mxu0 0
      %3633 = vmatprep.subr.bf16.mxu0 0
      %3634 = vmatpush1.bf16.msra.mxu0 0
      %3635 = vmatprep.subr.bf16.mxu0 0
      %3636 = vmatpush1.bf16.msra.mxu0 0
      %3637 = vmatprep.subr.bf16.mxu0 0
      %3638 = vmatpush1.bf16.msra.mxu0 0
      %3639 = vmatprep.subr.bf16.mxu0 0
      %3640 = vmatpush1.bf16.msra.mxu0 0
      %3641 = vmatprep.subr.bf16.mxu0 0
      %3642 = vmatpush1.bf16.msra.mxu0 0
      %3643 = vmatprep.subr.bf16.mxu0 0
      %3644 = vmatpush1.bf16.msra.mxu0 0
      %3645 = vmatprep.subr.bf16.mxu0 0
      %3646 = vmatpush1.bf16.msra.mxu0 0
      %3647 = vmatprep.subr.bf16.mxu0 0
      %3648 = vmatpush1.bf16.msra.mxu0 0
      %3649 = vmatprep.subr.bf16.mxu0 0
      %3650 = vmatpush1.bf16.msra.mxu0 0
      %3651 = vmatprep.subr.bf16.mxu0 0
      %3652 = vmatpush1.bf16.msra.mxu0 0
      %3653 = vmatprep.mubr.bf16.mxu0 0
      %3654 = vmatmul.mubr.bf16.gmra.mrb[0].mxu0 %v3595
      %v3655 = vpop.f32.mrb[0].mxu0
      %v3656 = vadd.f32 %v3532, %v3655
      %v3657 = vpop.f32.mrb[0].mxu0
      %v3658 = vpop.f32.mrb[0].mxu0
      %v3659 = vadd.f32 %v3535, %v3658
      %v3660 = vpop.f32.mrb[0].mxu0
      %3661 = vmatprep.mubr.bf16.mxu0 0
      %3662 = vmatmul.mubr.bf16.gmra.mrb[0].mxu0 %v3598
      %v3663 = vpop.f32.mrb[0].mxu0
      %v3664 = vadd.f32 %v3540, %v3663
      %v3665 = vpop.f32.mrb[0].mxu0
      %v3666 = vpop.f32.mrb[0].mxu0
      %v3667 = vadd.f32 %v3543, %v3666
      %v3668 = vpop.f32.mrb[0].mxu0
      %3669 = vmatprep.mubr.bf16.mxu0 0
      %3670 = vmatmul.mubr.bf16.gmra.mrb[0].mxu0 %v3601
      %v3671 = vpop.f32.mrb[0].mxu0
      %v3672 = vadd.f32 %v3548, %v3671
      %v3673 = vpop.f32.mrb[0].mxu0
      %v3674 = vpop.f32.mrb[0].mxu0
      %v3675 = vadd.f32 %v3551, %v3674
      %v3676 = vpop.f32.mrb[0].mxu0
      %3677 = vmatprep.mubr.bf16.mxu0 0
      %3678 = vmatmul.mubr.bf16.gmra.mrb[0].mxu0 %v3604
      %v3679 = vpop.f32.mrb[0].mxu0
      %v3680 = vadd.f32 %v3556, %v3679
      %v3681 = vpop.f32.mrb[0].mxu0
      %v3682 = vpop.f32.mrb[0].mxu0
      %v3683 = vadd.f32 %v3559, %v3682
      %v3684 = vpop.f32.mrb[0].mxu0
      %3685 = vmatprep.mubr.bf16.mxu0 0
      %3686 = vmatmul.mubr.bf16.gmra.mrb[0].mxu0 %v3607
      %v3687 = vpop.f32.mrb[0].mxu0
      %v3688 = vadd.f32 %v3564, %v3687
      %v3689 = vpop.f32.mrb[0].mxu0
      %v3690 = vpop.f32.mrb[0].mxu0
      %v3691 = vadd.f32 %v3567, %v3690
      %v3692 = vpop.f32.mrb[0].mxu0
      %3693 = vmatprep.mubr.bf16.mxu0 0
      %3694 = vmatmul.mubr.bf16.gmra.mrb[0].mxu0 %v3610
      %v3695 = vpop.f32.mrb[0].mxu0
      %v3696 = vadd.f32 %v3572, %v3695
      %v3697 = vpop.f32.mrb[0].mxu0
      %v3698 = vpop.f32.mrb[0].mxu0
      %v3699 = vadd.f32 %v3575, %v3698
      %v3700 = vpop.f32.mrb[0].mxu0
      %3701 = vmatprep.mubr.bf16.mxu0 0
      %3702 = vmatmul.mubr.bf16.gmra.mrb[0].mxu0 %v3613
      %v3703 = vpop.f32.mrb[0].mxu0
      %v3704 = vadd.f32 %v3580, %v3703
      %v3705 = vpop.f32.mrb[0].mxu0
      %v3706 = vpop.f32.mrb[0].mxu0
      %v3707 = vadd.f32 %v3583, %v3706
      %v3708 = vpop.f32.mrb[0].mxu0
      %3709 = vmatprep.mubr.bf16.mxu0 0
      %3710 = vmatmul.mubr.bf16.gmra.mrb[0].mxu0 %v3616
      %v3711 = vpop.f32.mrb[0].mxu0
      %v3712 = vadd.f32 %v3588, %v3711
      %v3713 = vpop.f32.mrb[0].mxu0
      %v3714 = vpop.f32.mrb[0].mxu0
      %v3715 = vadd.f32 %v3591, %v3714
      %v3716 = vpop.f32.mrb[0].mxu0
      %3717 = vdwg.mxu0
      %s3718 = scalar_lea.vmem %s3, 32
      %v3719 = vld [vmem:[%s3718] sm:$0xf]
      %v3720 = vld [vmem:[%s3718 + $0x4] sm:$0xf]
      %v3721 = vld [vmem:[%s3718 + $0x8] sm:$0xf]
      %v3722 = vld [vmem:[%s3718 + $0xc] sm:$0xf]
      %v3723 = vld [vmem:[%s4 + $0x2] sm:$0x1]
      %v3724 = vlaneseq
      %v3725 = vshrl.u32 %v3724, 7
      %v3726 = vsub.s32 0, %v3725
      %v3727 = vrot.slane %v3723, %v3726
      %v3732 = vunpack.c.l.b16 %v3719
      %v3733 = vunpack.c.l.b16 %v3720
      %v3734 = vunpack.c.l.b16 %v3721
      %v3735 = vunpack.c.l.b16 %v3722
      %v3736 = vpack.c.b16 %v3733, %v3732
      %v3737 = vpack.c.b16 %v3735, %v3734
      %3740 = vmatprep.subr.bf16.mxu0 0
      %3741 = vmatpush1.bf16.msra.mxu0 %v3736
      %3742 = vmatprep.subr.bf16.mxu0 0
      %3743 = vmatpush1.bf16.msra.mxu0 %v3737
      %3744 = vmatprep.subr.bf16.mxu0 0
      %3745 = vmatpush1.bf16.msra.mxu0 0
      %3746 = vmatprep.subr.bf16.mxu0 0
      %3747 = vmatpush1.bf16.msra.mxu0 0
      %3748 = vmatprep.subr.bf16.mxu0 0
      %3749 = vmatpush1.bf16.msra.mxu0 0
      %3750 = vmatprep.subr.bf16.mxu0 0
      %3751 = vmatpush1.bf16.msra.mxu0 0
      %3752 = vmatprep.subr.bf16.mxu0 0
      %3753 = vmatpush1.bf16.msra.mxu0 0
      %3754 = vmatprep.subr.bf16.mxu0 0
      %3755 = vmatpush1.bf16.msra.mxu0 0
      %3756 = vmatprep.subr.bf16.mxu0 0
      %3757 = vmatpush1.bf16.msra.mxu0 0
      %3758 = vmatprep.subr.bf16.mxu0 0
      %3759 = vmatpush1.bf16.msra.mxu0 0
      %3760 = vmatprep.subr.bf16.mxu0 0
      %3761 = vmatpush1.bf16.msra.mxu0 0
      %3762 = vmatprep.subr.bf16.mxu0 0
      %3763 = vmatpush1.bf16.msra.mxu0 0
      %3764 = vmatprep.subr.bf16.mxu0 0
      %3765 = vmatpush1.bf16.msra.mxu0 0
      %3766 = vmatprep.subr.bf16.mxu0 0
      %3767 = vmatpush1.bf16.msra.mxu0 0
      %3768 = vmatprep.subr.bf16.mxu0 0
      %3769 = vmatpush1.bf16.msra.mxu0 0
      %3770 = vmatprep.subr.bf16.mxu0 0
      %3771 = vmatpush1.bf16.msra.mxu0 0
      %3772 = vmatprep.mubr.bf16.mxu0 0
      %3773 = vmatmul.mubr.bf16.gmra.mrb[0].mxu0 %v861
      %v3774 = vpop.f32.mrb[0].mxu0
      %v3775 = vadd.f32 %v3727, %v3774
      %v3776 = vpop.f32.mrb[0].mxu0
      %v3777 = vpop.f32.mrb[0].mxu0
      %v3778 = vadd.f32 %v3727, %v3777
      %v3779 = vpop.f32.mrb[0].mxu0
      %3780 = vmatprep.mubr.bf16.mxu0 0
      %3781 = vmatmul.mubr.bf16.gmra.mrb[0].mxu0 %v864
      %v3782 = vpop.f32.mrb[0].mxu0
      %v3783 = vadd.f32 %v3727, %v3782
      %v3784 = vpop.f32.mrb[0].mxu0
      %v3785 = vpop.f32.mrb[0].mxu0
      %v3786 = vadd.f32 %v3727, %v3785
      %v3787 = vpop.f32.mrb[0].mxu0
      %3788 = vmatprep.mubr.bf16.mxu0 0
      %3789 = vmatmul.mubr.bf16.gmra.mrb[0].mxu0 %v867
      %v3790 = vpop.f32.mrb[0].mxu0
      %v3791 = vadd.f32 %v3727, %v3790
      %v3792 = vpop.f32.mrb[0].mxu0
      %v3793 = vpop.f32.mrb[0].mxu0
      %v3794 = vadd.f32 %v3727, %v3793
      %v3795 = vpop.f32.mrb[0].mxu0
      %3796 = vmatprep.mubr.bf16.mxu0 0
      %3797 = vmatmul.mubr.bf16.gmra.mrb[0].mxu0 %v870
      %v3798 = vpop.f32.mrb[0].mxu0
      %v3799 = vadd.f32 %v3727, %v3798
      %v3800 = vpop.f32.mrb[0].mxu0
      %v3801 = vpop.f32.mrb[0].mxu0
      %v3802 = vadd.f32 %v3727, %v3801
      %v3803 = vpop.f32.mrb[0].mxu0
      %3804 = vmatprep.mubr.bf16.mxu0 0
      %3805 = vmatmul.mubr.bf16.gmra.mrb[0].mxu0 %v873
      %v3806 = vpop.f32.mrb[0].mxu0
      %v3807 = vadd.f32 %v3727, %v3806
      %v3808 = vpop.f32.mrb[0].mxu0
      %v3809 = vpop.f32.mrb[0].mxu0
      %v3810 = vadd.f32 %v3727, %v3809
      %v3811 = vpop.f32.mrb[0].mxu0
      %3812 = vmatprep.mubr.bf16.mxu0 0
      %3813 = vmatmul.mubr.bf16.gmra.mrb[0].mxu0 %v876
      %v3814 = vpop.f32.mrb[0].mxu0
      %v3815 = vadd.f32 %v3727, %v3814
      %v3816 = vpop.f32.mrb[0].mxu0
      %v3817 = vpop.f32.mrb[0].mxu0
      %v3818 = vadd.f32 %v3727, %v3817
      %v3819 = vpop.f32.mrb[0].mxu0
      %3820 = vmatprep.mubr.bf16.mxu0 0
      %3821 = vmatmul.mubr.bf16.gmra.mrb[0].mxu0 %v879
      %v3822 = vpop.f32.mrb[0].mxu0
      %v3823 = vadd.f32 %v3727, %v3822
      %v3824 = vpop.f32.mrb[0].mxu0
      %v3825 = vpop.f32.mrb[0].mxu0
      %v3826 = vadd.f32 %v3727, %v3825
      %v3827 = vpop.f32.mrb[0].mxu0
      %3828 = vmatprep.mubr.bf16.mxu0 0
      %3829 = vmatmul.mubr.bf16.gmra.mrb[0].mxu0 %v882
      %v3830 = vpop.f32.mrb[0].mxu0
      %v3831 = vadd.f32 %v3727, %v3830
      %v3832 = vpop.f32.mrb[0].mxu0
      %v3833 = vpop.f32.mrb[0].mxu0
      %v3834 = vadd.f32 %v3727, %v3833
      %v3835 = vpop.f32.mrb[0].mxu0
      %3836 = vdwg.mxu0
      %s3837 = scalar_lea.vmem %s3, 96
      %v3838 = vld [vmem:[%s3837] sm:$0xf]
      %v3839 = vld [vmem:[%s3837 + $0x4] sm:$0xf]
      %v3840 = vld [vmem:[%s3837 + $0x8] sm:$0xf]
      %v3841 = vld [vmem:[%s3837 + $0xc] sm:$0xf]
      %v3842 = vld [vmem:[%s4 + $0x6] sm:$0x1]
      %v3843 = vlaneseq
      %v3844 = vshrl.u32 %v3843, 7
      %v3845 = vsub.s32 0, %v3844
      %v3846 = vrot.slane %v3842, %v3845
      %v3851 = vunpack.c.l.b16 %v3838
      %v3852 = vunpack.c.l.b16 %v3839
      %v3853 = vunpack.c.l.b16 %v3840
      %v3854 = vunpack.c.l.b16 %v3841
      %v3855 = vpack.c.b16 %v3852, %v3851
      %v3856 = vpack.c.b16 %v3854, %v3853
      %3859 = vmatprep.subr.bf16.mxu0 0
      %3860 = vmatpush1.bf16.msra.mxu0 %v3855
      %3861 = vmatprep.subr.bf16.mxu0 0
      %3862 = vmatpush1.bf16.msra.mxu0 %v3856
      %3863 = vmatprep.subr.bf16.mxu0 0
      %3864 = vmatpush1.bf16.msra.mxu0 0
      %3865 = vmatprep.subr.bf16.mxu0 0
      %3866 = vmatpush1.bf16.msra.mxu0 0
      %3867 = vmatprep.subr.bf16.mxu0 0
      %3868 = vmatpush1.bf16.msra.mxu0 0
      %3869 = vmatprep.subr.bf16.mxu0 0
      %3870 = vmatpush1.bf16.msra.mxu0 0
      %3871 = vmatprep.subr.bf16.mxu0 0
      %3872 = vmatpush1.bf16.msra.mxu0 0
      %3873 = vmatprep.subr.bf16.mxu0 0
      %3874 = vmatpush1.bf16.msra.mxu0 0
      %3875 = vmatprep.subr.bf16.mxu0 0
      %3876 = vmatpush1.bf16.msra.mxu0 0
      %3877 = vmatprep.subr.bf16.mxu0 0
      %3878 = vmatpush1.bf16.msra.mxu0 0
      %3879 = vmatprep.subr.bf16.mxu0 0
      %3880 = vmatpush1.bf16.msra.mxu0 0
      %3881 = vmatprep.subr.bf16.mxu0 0
      %3882 = vmatpush1.bf16.msra.mxu0 0
      %3883 = vmatprep.subr.bf16.mxu0 0
      %3884 = vmatpush1.bf16.msra.mxu0 0
      %3885 = vmatprep.subr.bf16.mxu0 0
      %3886 = vmatpush1.bf16.msra.mxu0 0
      %3887 = vmatprep.subr.bf16.mxu0 0
      %3888 = vmatpush1.bf16.msra.mxu0 0
      %3889 = vmatprep.subr.bf16.mxu0 0
      %3890 = vmatpush1.bf16.msra.mxu0 0
      %3891 = vmatprep.mubr.bf16.mxu0 0
      %3892 = vmatmul.mubr.bf16.gmra.mrb[0].mxu0 %v861
      %v3893 = vpop.f32.mrb[0].mxu0
      %v3894 = vadd.f32 %v3846, %v3893
      %v3895 = vpop.f32.mrb[0].mxu0
      %v3896 = vpop.f32.mrb[0].mxu0
      %v3897 = vadd.f32 %v3846, %v3896
      %v3898 = vpop.f32.mrb[0].mxu0
      %3899 = vmatprep.mubr.bf16.mxu0 0
      %3900 = vmatmul.mubr.bf16.gmra.mrb[0].mxu0 %v864
      %v3901 = vpop.f32.mrb[0].mxu0
      %v3902 = vadd.f32 %v3846, %v3901
      %v3903 = vpop.f32.mrb[0].mxu0
      %v3904 = vpop.f32.mrb[0].mxu0
      %v3905 = vadd.f32 %v3846, %v3904
      %v3906 = vpop.f32.mrb[0].mxu0
      %3907 = vmatprep.mubr.bf16.mxu0 0
      %3908 = vmatmul.mubr.bf16.gmra.mrb[0].mxu0 %v867
      %v3909 = vpop.f32.mrb[0].mxu0
      %v3910 = vadd.f32 %v3846, %v3909
      %v3911 = vpop.f32.mrb[0].mxu0
      %v3912 = vpop.f32.mrb[0].mxu0
      %v3913 = vadd.f32 %v3846, %v3912
      %v3914 = vpop.f32.mrb[0].mxu0
      %3915 = vmatprep.mubr.bf16.mxu0 0
      %3916 = vmatmul.mubr.bf16.gmra.mrb[0].mxu0 %v870
      %v3917 = vpop.f32.mrb[0].mxu0
      %v3918 = vadd.f32 %v3846, %v3917
      %v3919 = vpop.f32.mrb[0].mxu0
      %v3920 = vpop.f32.mrb[0].mxu0
      %v3921 = vadd.f32 %v3846, %v3920
      %v3922 = vpop.f32.mrb[0].mxu0
      %3923 = vmatprep.mubr.bf16.mxu0 0
      %3924 = vmatmul.mubr.bf16.gmra.mrb[0].mxu0 %v873
      %v3925 = vpop.f32.mrb[0].mxu0
      %v3926 = vadd.f32 %v3846, %v3925
      %v3927 = vpop.f32.mrb[0].mxu0
      %v3928 = vpop.f32.mrb[0].mxu0
      %v3929 = vadd.f32 %v3846, %v3928
      %v3930 = vpop.f32.mrb[0].mxu0
      %3931 = vmatprep.mubr.bf16.mxu0 0
      %3932 = vmatmul.mubr.bf16.gmra.mrb[0].mxu0 %v876
      %v3933 = vpop.f32.mrb[0].mxu0
      %v3934 = vadd.f32 %v3846, %v3933
      %v3935 = vpop.f32.mrb[0].mxu0
      %v3936 = vpop.f32.mrb[0].mxu0
      %v3937 = vadd.f32 %v3846, %v3936
      %v3938 = vpop.f32.mrb[0].mxu0
      %3939 = vmatprep.mubr.bf16.mxu0 0
      %3940 = vmatmul.mubr.bf16.gmra.mrb[0].mxu0 %v879
      %v3941 = vpop.f32.mrb[0].mxu0
      %v3942 = vadd.f32 %v3846, %v3941
      %v3943 = vpop.f32.mrb[0].mxu0
      %v3944 = vpop.f32.mrb[0].mxu0
      %v3945 = vadd.f32 %v3846, %v3944
      %v3946 = vpop.f32.mrb[0].mxu0
      %3947 = vmatprep.mubr.bf16.mxu0 0
      %3948 = vmatmul.mubr.bf16.gmra.mrb[0].mxu0 %v882
      %v3949 = vpop.f32.mrb[0].mxu0
      %v3950 = vadd.f32 %v3846, %v3949
      %v3951 = vpop.f32.mrb[0].mxu0
      %v3952 = vpop.f32.mrb[0].mxu0
      %v3953 = vadd.f32 %v3846, %v3952
      %v3954 = vpop.f32.mrb[0].mxu0
      %3955 = vdwg.mxu0
      %s3956 = scalar_lea.vmem %s3, 160
      %v3957 = vld [vmem:[%s3956] sm:$0xf]
      %v3958 = vld [vmem:[%s3956 + $0x4] sm:$0xf]
      %v3959 = vld [vmem:[%s3956 + $0x8] sm:$0xf]
      %v3960 = vld [vmem:[%s3956 + $0xc] sm:$0xf]
      %v3961 = vld [vmem:[%s4 + $0xa] sm:$0x1]
      %v3962 = vlaneseq
      %v3963 = vshrl.u32 %v3962, 7
      %v3964 = vsub.s32 0, %v3963
      %v3965 = vrot.slane %v3961, %v3964
      %v3970 = vunpack.c.l.b16 %v3957
      %v3971 = vunpack.c.l.b16 %v3958
      %v3972 = vunpack.c.l.b16 %v3959
      %v3973 = vunpack.c.l.b16 %v3960
      %v3974 = vpack.c.b16 %v3971, %v3970
      %v3975 = vpack.c.b16 %v3973, %v3972
      %3978 = vmatprep.subr.bf16.mxu0 0
      %3979 = vmatpush1.bf16.msra.mxu0 %v3974
      %3980 = vmatprep.subr.bf16.mxu0 0
      %3981 = vmatpush1.bf16.msra.mxu0 %v3975
      %3982 = vmatprep.subr.bf16.mxu0 0
      %3983 = vmatpush1.bf16.msra.mxu0 0
      %3984 = vmatprep.subr.bf16.mxu0 0
      %3985 = vmatpush1.bf16.msra.mxu0 0
      %3986 = vmatprep.subr.bf16.mxu0 0
      %3987 = vmatpush1.bf16.msra.mxu0 0
      %3988 = vmatprep.subr.bf16.mxu0 0
      %3989 = vmatpush1.bf16.msra.mxu0 0
      %3990 = vmatprep.subr.bf16.mxu0 0
      %3991 = vmatpush1.bf16.msra.mxu0 0
      %3992 = vmatprep.subr.bf16.mxu0 0
      %3993 = vmatpush1.bf16.msra.mxu0 0
      %3994 = vmatprep.subr.bf16.mxu0 0
      %3995 = vmatpush1.bf16.msra.mxu0 0
      %3996 = vmatprep.subr.bf16.mxu0 0
      %3997 = vmatpush1.bf16.msra.mxu0 0
      %3998 = vmatprep.subr.bf16.mxu0 0
      %3999 = vmatpush1.bf16.msra.mxu0 0
      %4000 = vmatprep.subr.bf16.mxu0 0
      %4001 = vmatpush1.bf16.msra.mxu0 0
      %4002 = vmatprep.subr.bf16.mxu0 0
      %4003 = vmatpush1.bf16.msra.mxu0 0
      %4004 = vmatprep.subr.bf16.mxu0 0
      %4005 = vmatpush1.bf16.msra.mxu0 0
      %4006 = vmatprep.subr.bf16.mxu0 0
      %4007 = vmatpush1.bf16.msra.mxu0 0
      %4008 = vmatprep.subr.bf16.mxu0 0
      %4009 = vmatpush1.bf16.msra.mxu0 0
      %4010 = vmatprep.mubr.bf16.mxu0 0
      %4011 = vmatmul.mubr.bf16.gmra.mrb[0].mxu0 %v861
      %v4012 = vpop.f32.mrb[0].mxu0
      %v4013 = vadd.f32 %v3965, %v4012
      %v4014 = vpop.f32.mrb[0].mxu0
      %v4015 = vpop.f32.mrb[0].mxu0
      %v4016 = vadd.f32 %v3965, %v4015
      %v4017 = vpop.f32.mrb[0].mxu0
      %4018 = vmatprep.mubr.bf16.mxu0 0
      %4019 = vmatmul.mubr.bf16.gmra.mrb[0].mxu0 %v864
      %v4020 = vpop.f32.mrb[0].mxu0
      %v4021 = vadd.f32 %v3965, %v4020
      %v4022 = vpop.f32.mrb[0].mxu0
      %v4023 = vpop.f32.mrb[0].mxu0
      %v4024 = vadd.f32 %v3965, %v4023
      %v4025 = vpop.f32.mrb[0].mxu0
      %4026 = vmatprep.mubr.bf16.mxu0 0
      %4027 = vmatmul.mubr.bf16.gmra.mrb[0].mxu0 %v867
      %v4028 = vpop.f32.mrb[0].mxu0
      %v4029 = vadd.f32 %v3965, %v4028
      %v4030 = vpop.f32.mrb[0].mxu0
      %v4031 = vpop.f32.mrb[0].mxu0
      %v4032 = vadd.f32 %v3965, %v4031
      %v4033 = vpop.f32.mrb[0].mxu0
      %4034 = vmatprep.mubr.bf16.mxu0 0
      %4035 = vmatmul.mubr.bf16.gmra.mrb[0].mxu0 %v870
      %v4036 = vpop.f32.mrb[0].mxu0
      %v4037 = vadd.f32 %v3965, %v4036
      %v4038 = vpop.f32.mrb[0].mxu0
      %v4039 = vpop.f32.mrb[0].mxu0
      %v4040 = vadd.f32 %v3965, %v4039
      %v4041 = vpop.f32.mrb[0].mxu0
      %4042 = vmatprep.mubr.bf16.mxu0 0
      %4043 = vmatmul.mubr.bf16.gmra.mrb[0].mxu0 %v873
      %v4044 = vpop.f32.mrb[0].mxu0
      %v4045 = vadd.f32 %v3965, %v4044
      %v4046 = vpop.f32.mrb[0].mxu0
      %v4047 = vpop.f32.mrb[0].mxu0
      %v4048 = vadd.f32 %v3965, %v4047
      %v4049 = vpop.f32.mrb[0].mxu0
      %4050 = vmatprep.mubr.bf16.mxu0 0
      %4051 = vmatmul.mubr.bf16.gmra.mrb[0].mxu0 %v876
      %v4052 = vpop.f32.mrb[0].mxu0
      %v4053 = vadd.f32 %v3965, %v4052
      %v4054 = vpop.f32.mrb[0].mxu0
      %v4055 = vpop.f32.mrb[0].mxu0
      %v4056 = vadd.f32 %v3965, %v4055
      %v4057 = vpop.f32.mrb[0].mxu0
      %4058 = vmatprep.mubr.bf16.mxu0 0
      %4059 = vmatmul.mubr.bf16.gmra.mrb[0].mxu0 %v879
      %v4060 = vpop.f32.mrb[0].mxu0
      %v4061 = vadd.f32 %v3965, %v4060
      %v4062 = vpop.f32.mrb[0].mxu0
      %v4063 = vpop.f32.mrb[0].mxu0
      %v4064 = vadd.f32 %v3965, %v4063
      %v4065 = vpop.f32.mrb[0].mxu0
      %4066 = vmatprep.mubr.bf16.mxu0 0
      %4067 = vmatmul.mubr.bf16.gmra.mrb[0].mxu0 %v882
      %v4068 = vpop.f32.mrb[0].mxu0
      %v4069 = vadd.f32 %v3965, %v4068
      %v4070 = vpop.f32.mrb[0].mxu0
      %v4071 = vpop.f32.mrb[0].mxu0
      %v4072 = vadd.f32 %v3965, %v4071
      %v4073 = vpop.f32.mrb[0].mxu0
      %4074 = vdwg.mxu0
      %v4075 = vpack.c.bf16 %v3778, %v3775
      %v4076 = vpack.c.bf16 %v3786, %v3783
      %v4077 = vpack.c.bf16 %v3794, %v3791
      %v4078 = vpack.c.bf16 %v3802, %v3799
      %v4079 = vpack.c.bf16 %v3810, %v3807
      %v4080 = vpack.c.bf16 %v3818, %v3815
      %v4081 = vpack.c.bf16 %v3826, %v3823
      %v4082 = vpack.c.bf16 %v3834, %v3831
      %v4083 = vpack.c.bf16 %v3897, %v3894
      %v4084 = vpack.c.bf16 %v3905, %v3902
      %v4085 = vpack.c.bf16 %v3913, %v3910
      %v4086 = vpack.c.bf16 %v3921, %v3918
      %v4087 = vpack.c.bf16 %v3929, %v3926
      %v4088 = vpack.c.bf16 %v3937, %v3934
      %v4089 = vpack.c.bf16 %v3945, %v3942
      %v4090 = vpack.c.bf16 %v3953, %v3950
      %v4092 = vsel %vm1235, %v4075, 0
      %v4095 = vsel %vm1235, %v4083, 0
      %4097 = vmatprep.subr.bf16.mxu0 0
      %4098 = vmatpush1.bf16.xpose.msra.mxu0 %v4095
      %4099 = vmatprep.subr.bf16.mxu0 0
      %4100 = vmatpush1.bf16.xpose.msra.mxu0 0
      %4101 = vmatprep.subr.bf16.mxu0 0
      %4102 = vmatpush1.bf16.xpose.msra.mxu0 0
      %4103 = vmatprep.subr.bf16.mxu0 0
      %4104 = vmatpush1.bf16.xpose.msra.mxu0 0
      %4105 = vmatprep.subr.bf16.mxu0 0
      %4106 = vmatpush1.bf16.xpose.msra.mxu0 0
      %4107 = vmatprep.subr.bf16.mxu0 0
      %4108 = vmatpush1.bf16.xpose.msra.mxu0 0
      %4109 = vmatprep.subr.bf16.mxu0 0
      %4110 = vmatpush1.bf16.xpose.msra.mxu0 0
      %4111 = vmatprep.subr.bf16.mxu0 0
      %4112 = vmatpush1.bf16.xpose.msra.mxu0 0
      %4113 = vmatprep.subr.bf16.mxu0 0
      %4114 = vmatpush1.bf16.xpose.msra.mxu0 0
      %4115 = vmatprep.subr.bf16.mxu0 0
      %4116 = vmatpush1.bf16.xpose.msra.mxu0 0
      %4117 = vmatprep.subr.bf16.mxu0 0
      %4118 = vmatpush1.bf16.xpose.msra.mxu0 0
      %4119 = vmatprep.subr.bf16.mxu0 0
      %4120 = vmatpush1.bf16.xpose.msra.mxu0 0
      %4121 = vmatprep.subr.bf16.mxu0 0
      %4122 = vmatpush1.bf16.xpose.msra.mxu0 0
      %4123 = vmatprep.subr.bf16.mxu0 0
      %4124 = vmatpush1.bf16.xpose.msra.mxu0 0
      %4125 = vmatprep.subr.bf16.mxu0 0
      %4126 = vmatpush1.bf16.xpose.msra.mxu0 0
      %4127 = vmatprep.subr.bf16.mxu0 0
      %4128 = vmatpush1.bf16.xpose.msra.mxu0 0
      %4129 = vmatprep.mubr.bf16.mxu0 0
      %4130 = vmatmul.mubr.bf16.gmra.mrb[0].mxu0 %v4092
      %v4131 = vpop.f32.mrb[0].mxu0
      %v4132 = vadd.f32 0.0, %v4131
      %v4133 = vpop.f32.mrb[0].mxu0
      %v4134 = vpop.f32.mrb[0].mxu0
      %v4135 = vadd.f32 0.0, %v4134
      %v4136 = vpop.f32.mrb[0].mxu0
      %4137 = vdwg.mxu0
      %v4139 = vsel %vm1235, %v4076, 0
      %v4142 = vsel %vm1235, %v4084, 0
      %4144 = vmatprep.subr.bf16.mxu0 0
      %4145 = vmatpush1.bf16.xpose.msra.mxu0 %v4142
      %4146 = vmatprep.subr.bf16.mxu0 0
      %4147 = vmatpush1.bf16.xpose.msra.mxu0 0
      %4148 = vmatprep.subr.bf16.mxu0 0
      %4149 = vmatpush1.bf16.xpose.msra.mxu0 0
      %4150 = vmatprep.subr.bf16.mxu0 0
      %4151 = vmatpush1.bf16.xpose.msra.mxu0 0
      %4152 = vmatprep.subr.bf16.mxu0 0
      %4153 = vmatpush1.bf16.xpose.msra.mxu0 0
      %4154 = vmatprep.subr.bf16.mxu0 0
      %4155 = vmatpush1.bf16.xpose.msra.mxu0 0
      %4156 = vmatprep.subr.bf16.mxu0 0
      %4157 = vmatpush1.bf16.xpose.msra.mxu0 0
      %4158 = vmatprep.subr.bf16.mxu0 0
      %4159 = vmatpush1.bf16.xpose.msra.mxu0 0
      %4160 = vmatprep.subr.bf16.mxu0 0
      %4161 = vmatpush1.bf16.xpose.msra.mxu0 0
      %4162 = vmatprep.subr.bf16.mxu0 0
      %4163 = vmatpush1.bf16.xpose.msra.mxu0 0
      %4164 = vmatprep.subr.bf16.mxu0 0
      %4165 = vmatpush1.bf16.xpose.msra.mxu0 0
      %4166 = vmatprep.subr.bf16.mxu0 0
      %4167 = vmatpush1.bf16.xpose.msra.mxu0 0
      %4168 = vmatprep.subr.bf16.mxu0 0
      %4169 = vmatpush1.bf16.xpose.msra.mxu0 0
      %4170 = vmatprep.subr.bf16.mxu0 0
      %4171 = vmatpush1.bf16.xpose.msra.mxu0 0
      %4172 = vmatprep.subr.bf16.mxu0 0
      %4173 = vmatpush1.bf16.xpose.msra.mxu0 0
      %4174 = vmatprep.subr.bf16.mxu0 0
      %4175 = vmatpush1.bf16.xpose.msra.mxu0 0
      %4176 = vmatprep.mubr.bf16.mxu0 0
      %4177 = vmatmul.mubr.bf16.gmra.mrb[0].mxu0 %v4139
      %v4178 = vpop.f32.mrb[0].mxu0
      %v4179 = vadd.f32 0.0, %v4178
      %v4180 = vpop.f32.mrb[0].mxu0
      %v4181 = vpop.f32.mrb[0].mxu0
      %v4182 = vadd.f32 0.0, %v4181
      %v4183 = vpop.f32.mrb[0].mxu0
      %4184 = vdwg.mxu0
      %v4186 = vsel %vm1235, %v4077, 0
      %v4189 = vsel %vm1235, %v4085, 0
      %4191 = vmatprep.subr.bf16.mxu0 0
      %4192 = vmatpush1.bf16.xpose.msra.mxu0 %v4189
      %4193 = vmatprep.subr.bf16.mxu0 0
      %4194 = vmatpush1.bf16.xpose.msra.mxu0 0
      %4195 = vmatprep.subr.bf16.mxu0 0
      %4196 = vmatpush1.bf16.xpose.msra.mxu0 0
      %4197 = vmatprep.subr.bf16.mxu0 0
      %4198 = vmatpush1.bf16.xpose.msra.mxu0 0
      %4199 = vmatprep.subr.bf16.mxu0 0
      %4200 = vmatpush1.bf16.xpose.msra.mxu0 0
      %4201 = vmatprep.subr.bf16.mxu0 0
      %4202 = vmatpush1.bf16.xpose.msra.mxu0 0
      %4203 = vmatprep.subr.bf16.mxu0 0
      %4204 = vmatpush1.bf16.xpose.msra.mxu0 0
      %4205 = vmatprep.subr.bf16.mxu0 0
      %4206 = vmatpush1.bf16.xpose.msra.mxu0 0
      %4207 = vmatprep.subr.bf16.mxu0 0
      %4208 = vmatpush1.bf16.xpose.msra.mxu0 0
      %4209 = vmatprep.subr.bf16.mxu0 0
      %4210 = vmatpush1.bf16.xpose.msra.mxu0 0
      %4211 = vmatprep.subr.bf16.mxu0 0
      %4212 = vmatpush1.bf16.xpose.msra.mxu0 0
      %4213 = vmatprep.subr.bf16.mxu0 0
      %4214 = vmatpush1.bf16.xpose.msra.mxu0 0
      %4215 = vmatprep.subr.bf16.mxu0 0
      %4216 = vmatpush1.bf16.xpose.msra.mxu0 0
      %4217 = vmatprep.subr.bf16.mxu0 0
      %4218 = vmatpush1.bf16.xpose.msra.mxu0 0
      %4219 = vmatprep.subr.bf16.mxu0 0
      %4220 = vmatpush1.bf16.xpose.msra.mxu0 0
      %4221 = vmatprep.subr.bf16.mxu0 0
      %4222 = vmatpush1.bf16.xpose.msra.mxu0 0
      %4223 = vmatprep.mubr.bf16.mxu0 0
      %4224 = vmatmul.mubr.bf16.gmra.mrb[0].mxu0 %v4186
      %v4225 = vpop.f32.mrb[0].mxu0
      %v4226 = vadd.f32 0.0, %v4225
      %v4227 = vpop.f32.mrb[0].mxu0
      %v4228 = vpop.f32.mrb[0].mxu0
      %v4229 = vadd.f32 0.0, %v4228
      %v4230 = vpop.f32.mrb[0].mxu0
      %4231 = vdwg.mxu0
      %v4233 = vsel %vm1235, %v4078, 0
      %v4236 = vsel %vm1235, %v4086, 0
      %4238 = vmatprep.subr.bf16.mxu0 0
      %4239 = vmatpush1.bf16.xpose.msra.mxu0 %v4236
      %4240 = vmatprep.subr.bf16.mxu0 0
      %4241 = vmatpush1.bf16.xpose.msra.mxu0 0
      %4242 = vmatprep.subr.bf16.mxu0 0
      %4243 = vmatpush1.bf16.xpose.msra.mxu0 0
      %4244 = vmatprep.subr.bf16.mxu0 0
      %4245 = vmatpush1.bf16.xpose.msra.mxu0 0
      %4246 = vmatprep.subr.bf16.mxu0 0
      %4247 = vmatpush1.bf16.xpose.msra.mxu0 0
      %4248 = vmatprep.subr.bf16.mxu0 0
      %4249 = vmatpush1.bf16.xpose.msra.mxu0 0
      %4250 = vmatprep.subr.bf16.mxu0 0
      %4251 = vmatpush1.bf16.xpose.msra.mxu0 0
      %4252 = vmatprep.subr.bf16.mxu0 0
      %4253 = vmatpush1.bf16.xpose.msra.mxu0 0
      %4254 = vmatprep.subr.bf16.mxu0 0
      %4255 = vmatpush1.bf16.xpose.msra.mxu0 0
      %4256 = vmatprep.subr.bf16.mxu0 0
      %4257 = vmatpush1.bf16.xpose.msra.mxu0 0
      %4258 = vmatprep.subr.bf16.mxu0 0
      %4259 = vmatpush1.bf16.xpose.msra.mxu0 0
      %4260 = vmatprep.subr.bf16.mxu0 0
      %4261 = vmatpush1.bf16.xpose.msra.mxu0 0
      %4262 = vmatprep.subr.bf16.mxu0 0
      %4263 = vmatpush1.bf16.xpose.msra.mxu0 0
      %4264 = vmatprep.subr.bf16.mxu0 0
      %4265 = vmatpush1.bf16.xpose.msra.mxu0 0
      %4266 = vmatprep.subr.bf16.mxu0 0
      %4267 = vmatpush1.bf16.xpose.msra.mxu0 0
      %4268 = vmatprep.subr.bf16.mxu0 0
      %4269 = vmatpush1.bf16.xpose.msra.mxu0 0
      %4270 = vmatprep.mubr.bf16.mxu0 0
      %4271 = vmatmul.mubr.bf16.gmra.mrb[0].mxu0 %v4233
      %v4272 = vpop.f32.mrb[0].mxu0
      %v4273 = vadd.f32 0.0, %v4272
      %v4274 = vpop.f32.mrb[0].mxu0
      %v4275 = vpop.f32.mrb[0].mxu0
      %v4276 = vadd.f32 0.0, %v4275
      %v4277 = vpop.f32.mrb[0].mxu0
      %4278 = vdwg.mxu0
      %v4280 = vsel %vm1235, %v4079, 0
      %v4283 = vsel %vm1235, %v4087, 0
      %4285 = vmatprep.subr.bf16.mxu0 0
      %4286 = vmatpush1.bf16.xpose.msra.mxu0 %v4283
      %4287 = vmatprep.subr.bf16.mxu0 0
      %4288 = vmatpush1.bf16.xpose.msra.mxu0 0
      %4289 = vmatprep.subr.bf16.mxu0 0
      %4290 = vmatpush1.bf16.xpose.msra.mxu0 0
      %4291 = vmatprep.subr.bf16.mxu0 0
      %4292 = vmatpush1.bf16.xpose.msra.mxu0 0
      %4293 = vmatprep.subr.bf16.mxu0 0
      %4294 = vmatpush1.bf16.xpose.msra.mxu0 0
      %4295 = vmatprep.subr.bf16.mxu0 0
      %4296 = vmatpush1.bf16.xpose.msra.mxu0 0
      %4297 = vmatprep.subr.bf16.mxu0 0
      %4298 = vmatpush1.bf16.xpose.msra.mxu0 0
      %4299 = vmatprep.subr.bf16.mxu0 0
      %4300 = vmatpush1.bf16.xpose.msra.mxu0 0
      %4301 = vmatprep.subr.bf16.mxu0 0
      %4302 = vmatpush1.bf16.xpose.msra.mxu0 0
      %4303 = vmatprep.subr.bf16.mxu0 0
      %4304 = vmatpush1.bf16.xpose.msra.mxu0 0
      %4305 = vmatprep.subr.bf16.mxu0 0
      %4306 = vmatpush1.bf16.xpose.msra.mxu0 0
      %4307 = vmatprep.subr.bf16.mxu0 0
      %4308 = vmatpush1.bf16.xpose.msra.mxu0 0
      %4309 = vmatprep.subr.bf16.mxu0 0
      %4310 = vmatpush1.bf16.xpose.msra.mxu0 0
      %4311 = vmatprep.subr.bf16.mxu0 0
      %4312 = vmatpush1.bf16.xpose.msra.mxu0 0
      %4313 = vmatprep.subr.bf16.mxu0 0
      %4314 = vmatpush1.bf16.xpose.msra.mxu0 0
      %4315 = vmatprep.subr.bf16.mxu0 0
      %4316 = vmatpush1.bf16.xpose.msra.mxu0 0
      %4317 = vmatprep.mubr.bf16.mxu0 0
      %4318 = vmatmul.mubr.bf16.gmra.mrb[0].mxu0 %v4280
      %v4319 = vpop.f32.mrb[0].mxu0
      %v4320 = vadd.f32 0.0, %v4319
      %v4321 = vpop.f32.mrb[0].mxu0
      %v4322 = vpop.f32.mrb[0].mxu0
      %v4323 = vadd.f32 0.0, %v4322
      %v4324 = vpop.f32.mrb[0].mxu0
      %4325 = vdwg.mxu0
      %v4327 = vsel %vm1235, %v4080, 0
      %v4330 = vsel %vm1235, %v4088, 0
      %4332 = vmatprep.subr.bf16.mxu0 0
      %4333 = vmatpush1.bf16.xpose.msra.mxu0 %v4330
      %4334 = vmatprep.subr.bf16.mxu0 0
      %4335 = vmatpush1.bf16.xpose.msra.mxu0 0
      %4336 = vmatprep.subr.bf16.mxu0 0
      %4337 = vmatpush1.bf16.xpose.msra.mxu0 0
      %4338 = vmatprep.subr.bf16.mxu0 0
      %4339 = vmatpush1.bf16.xpose.msra.mxu0 0
      %4340 = vmatprep.subr.bf16.mxu0 0
      %4341 = vmatpush1.bf16.xpose.msra.mxu0 0
      %4342 = vmatprep.subr.bf16.mxu0 0
      %4343 = vmatpush1.bf16.xpose.msra.mxu0 0
      %4344 = vmatprep.subr.bf16.mxu0 0
      %4345 = vmatpush1.bf16.xpose.msra.mxu0 0
      %4346 = vmatprep.subr.bf16.mxu0 0
      %4347 = vmatpush1.bf16.xpose.msra.mxu0 0
      %4348 = vmatprep.subr.bf16.mxu0 0
      %4349 = vmatpush1.bf16.xpose.msra.mxu0 0
      %4350 = vmatprep.subr.bf16.mxu0 0
      %4351 = vmatpush1.bf16.xpose.msra.mxu0 0
      %4352 = vmatprep.subr.bf16.mxu0 0
      %4353 = vmatpush1.bf16.xpose.msra.mxu0 0
      %4354 = vmatprep.subr.bf16.mxu0 0
      %4355 = vmatpush1.bf16.xpose.msra.mxu0 0
      %4356 = vmatprep.subr.bf16.mxu0 0
      %4357 = vmatpush1.bf16.xpose.msra.mxu0 0
      %4358 = vmatprep.subr.bf16.mxu0 0
      %4359 = vmatpush1.bf16.xpose.msra.mxu0 0
      %4360 = vmatprep.subr.bf16.mxu0 0
      %4361 = vmatpush1.bf16.xpose.msra.mxu0 0
      %4362 = vmatprep.subr.bf16.mxu0 0
      %4363 = vmatpush1.bf16.xpose.msra.mxu0 0
      %4364 = vmatprep.mubr.bf16.mxu0 0
      %4365 = vmatmul.mubr.bf16.gmra.mrb[0].mxu0 %v4327
      %v4366 = vpop.f32.mrb[0].mxu0
      %v4367 = vadd.f32 0.0, %v4366
      %v4368 = vpop.f32.mrb[0].mxu0
      %v4369 = vpop.f32.mrb[0].mxu0
      %v4370 = vadd.f32 0.0, %v4369
      %v4371 = vpop.f32.mrb[0].mxu0
      %4372 = vdwg.mxu0
      %v4374 = vsel %vm1235, %v4081, 0
      %v4377 = vsel %vm1235, %v4089, 0
      %4379 = vmatprep.subr.bf16.mxu0 0
      %4380 = vmatpush1.bf16.xpose.msra.mxu0 %v4377
      %4381 = vmatprep.subr.bf16.mxu0 0
      %4382 = vmatpush1.bf16.xpose.msra.mxu0 0
      %4383 = vmatprep.subr.bf16.mxu0 0
      %4384 = vmatpush1.bf16.xpose.msra.mxu0 0
      %4385 = vmatprep.subr.bf16.mxu0 0
      %4386 = vmatpush1.bf16.xpose.msra.mxu0 0
      %4387 = vmatprep.subr.bf16.mxu0 0
      %4388 = vmatpush1.bf16.xpose.msra.mxu0 0
      %4389 = vmatprep.subr.bf16.mxu0 0
      %4390 = vmatpush1.bf16.xpose.msra.mxu0 0
      %4391 = vmatprep.subr.bf16.mxu0 0
      %4392 = vmatpush1.bf16.xpose.msra.mxu0 0
      %4393 = vmatprep.subr.bf16.mxu0 0
      %4394 = vmatpush1.bf16.xpose.msra.mxu0 0
      %4395 = vmatprep.subr.bf16.mxu0 0
      %4396 = vmatpush1.bf16.xpose.msra.mxu0 0
      %4397 = vmatprep.subr.bf16.mxu0 0
      %4398 = vmatpush1.bf16.xpose.msra.mxu0 0
      %4399 = vmatprep.subr.bf16.mxu0 0
      %4400 = vmatpush1.bf16.xpose.msra.mxu0 0
      %4401 = vmatprep.subr.bf16.mxu0 0
      %4402 = vmatpush1.bf16.xpose.msra.mxu0 0
      %4403 = vmatprep.subr.bf16.mxu0 0
      %4404 = vmatpush1.bf16.xpose.msra.mxu0 0
      %4405 = vmatprep.subr.bf16.mxu0 0
      %4406 = vmatpush1.bf16.xpose.msra.mxu0 0
      %4407 = vmatprep.subr.bf16.mxu0 0
      %4408 = vmatpush1.bf16.xpose.msra.mxu0 0
      %4409 = vmatprep.subr.bf16.mxu0 0
      %4410 = vmatpush1.bf16.xpose.msra.mxu0 0
      %4411 = vmatprep.mubr.bf16.mxu0 0
      %4412 = vmatmul.mubr.bf16.gmra.mrb[0].mxu0 %v4374
      %v4413 = vpop.f32.mrb[0].mxu0
      %v4414 = vadd.f32 0.0, %v4413
      %v4415 = vpop.f32.mrb[0].mxu0
      %v4416 = vpop.f32.mrb[0].mxu0
      %v4417 = vadd.f32 0.0, %v4416
      %v4418 = vpop.f32.mrb[0].mxu0
      %4419 = vdwg.mxu0
      %v4421 = vsel %vm1235, %v4082, 0
      %v4424 = vsel %vm1235, %v4090, 0
      %4426 = vmatprep.subr.bf16.mxu0 0
      %4427 = vmatpush1.bf16.xpose.msra.mxu0 %v4424
      %4428 = vmatprep.subr.bf16.mxu0 0
      %4429 = vmatpush1.bf16.xpose.msra.mxu0 0
      %4430 = vmatprep.subr.bf16.mxu0 0
      %4431 = vmatpush1.bf16.xpose.msra.mxu0 0
      %4432 = vmatprep.subr.bf16.mxu0 0
      %4433 = vmatpush1.bf16.xpose.msra.mxu0 0
      %4434 = vmatprep.subr.bf16.mxu0 0
      %4435 = vmatpush1.bf16.xpose.msra.mxu0 0
      %4436 = vmatprep.subr.bf16.mxu0 0
      %4437 = vmatpush1.bf16.xpose.msra.mxu0 0
      %4438 = vmatprep.subr.bf16.mxu0 0
      %4439 = vmatpush1.bf16.xpose.msra.mxu0 0
      %4440 = vmatprep.subr.bf16.mxu0 0
      %4441 = vmatpush1.bf16.xpose.msra.mxu0 0
      %4442 = vmatprep.subr.bf16.mxu0 0
      %4443 = vmatpush1.bf16.xpose.msra.mxu0 0
      %4444 = vmatprep.subr.bf16.mxu0 0
      %4445 = vmatpush1.bf16.xpose.msra.mxu0 0
      %4446 = vmatprep.subr.bf16.mxu0 0
      %4447 = vmatpush1.bf16.xpose.msra.mxu0 0
      %4448 = vmatprep.subr.bf16.mxu0 0
      %4449 = vmatpush1.bf16.xpose.msra.mxu0 0
      %4450 = vmatprep.subr.bf16.mxu0 0
      %4451 = vmatpush1.bf16.xpose.msra.mxu0 0
      %4452 = vmatprep.subr.bf16.mxu0 0
      %4453 = vmatpush1.bf16.xpose.msra.mxu0 0
      %4454 = vmatprep.subr.bf16.mxu0 0
      %4455 = vmatpush1.bf16.xpose.msra.mxu0 0
      %4456 = vmatprep.subr.bf16.mxu0 0
      %4457 = vmatpush1.bf16.xpose.msra.mxu0 0
      %4458 = vmatprep.mubr.bf16.mxu0 0
      %4459 = vmatmul.mubr.bf16.gmra.mrb[0].mxu0 %v4421
      %v4460 = vpop.f32.mrb[0].mxu0
      %v4461 = vadd.f32 0.0, %v4460
      %v4462 = vpop.f32.mrb[0].mxu0
      %v4463 = vpop.f32.mrb[0].mxu0
      %v4464 = vadd.f32 0.0, %v4463
      %v4465 = vpop.f32.mrb[0].mxu0
      %4466 = vdwg.mxu0
      %v4467 = vsel %vm1612, %v4132, -inf
      %4468 = vmax.xlane.f32.xlu0 %v4467
      %v4469 = vpop.xlane.xlu0 %4468
      %v4470 = vsel %vm1612, %v4135, -inf
      %4471 = vmax.xlane.f32.xlu0 %v4470
      %v4472 = vpop.xlane.xlu0 %4471
      %v4473 = vsel %vm1612, %v4179, -inf
      %4474 = vmax.xlane.f32.xlu0 %v4473
      %v4475 = vpop.xlane.xlu0 %4474
      %v4476 = vsel %vm1612, %v4182, -inf
      %4477 = vmax.xlane.f32.xlu0 %v4476
      %v4478 = vpop.xlane.xlu0 %4477
      %v4479 = vsel %vm1612, %v4226, -inf
      %4480 = vmax.xlane.f32.xlu0 %v4479
      %v4481 = vpop.xlane.xlu0 %4480
      %v4482 = vsel %vm1612, %v4229, -inf
      %4483 = vmax.xlane.f32.xlu0 %v4482
      %v4484 = vpop.xlane.xlu0 %4483
      %v4485 = vsel %vm1612, %v4273, -inf
      %4486 = vmax.xlane.f32.xlu0 %v4485
      %v4487 = vpop.xlane.xlu0 %4486
      %v4488 = vsel %vm1612, %v4276, -inf
      %4489 = vmax.xlane.f32.xlu0 %v4488
      %v4490 = vpop.xlane.xlu0 %4489
      %v4491 = vsel %vm1612, %v4320, -inf
      %4492 = vmax.xlane.f32.xlu0 %v4491
      %v4493 = vpop.xlane.xlu0 %4492
      %v4494 = vsel %vm1612, %v4323, -inf
      %4495 = vmax.xlane.f32.xlu0 %v4494
      %v4496 = vpop.xlane.xlu0 %4495
      %v4497 = vsel %vm1612, %v4367, -inf
      %4498 = vmax.xlane.f32.xlu0 %v4497
      %v4499 = vpop.xlane.xlu0 %4498
      %v4500 = vsel %vm1612, %v4370, -inf
      %4501 = vmax.xlane.f32.xlu0 %v4500
      %v4502 = vpop.xlane.xlu0 %4501
      %v4503 = vsel %vm1612, %v4414, -inf
      %4504 = vmax.xlane.f32.xlu0 %v4503
      %v4505 = vpop.xlane.xlu0 %4504
      %v4506 = vsel %vm1612, %v4417, -inf
      %4507 = vmax.xlane.f32.xlu0 %v4506
      %v4508 = vpop.xlane.xlu0 %4507
      %v4509 = vsel %vm1612, %v4461, -inf
      %4510 = vmax.xlane.f32.xlu0 %v4509
      %v4511 = vpop.xlane.xlu0 %4510
      %v4512 = vsel %vm1612, %v4464, -inf
      %4513 = vmax.xlane.f32.xlu0 %v4512
      %v4514 = vpop.xlane.xlu0 %4513
      %v4515 = vsub.f32 %v4132, %v4469
      %v4516 = vsub.f32 %v4135, %v4472
      %v4517 = vsub.f32 %v4179, %v4475
      %v4518 = vsub.f32 %v4182, %v4478
      %v4519 = vsub.f32 %v4226, %v4481
      %v4520 = vsub.f32 %v4229, %v4484
      %v4521 = vsub.f32 %v4273, %v4487
      %v4522 = vsub.f32 %v4276, %v4490
      %v4523 = vsub.f32 %v4320, %v4493
      %v4524 = vsub.f32 %v4323, %v4496
      %v4525 = vsub.f32 %v4367, %v4499
      %v4526 = vsub.f32 %v4370, %v4502
      %v4527 = vsub.f32 %v4414, %v4505
      %v4528 = vsub.f32 %v4417, %v4508
      %v4529 = vsub.f32 %v4461, %v4511
      %v4530 = vsub.f32 %v4464, %v4514
      %v4531 = vmul.f32 %v4515, 1.442695
      %v4532 = vpow.pop %v4531
      %v4533 = vmul.f32 %v4516, 1.442695
      %v4534 = vpow.pop %v4533
      %v4535 = vmul.f32 %v4517, 1.442695
      %v4536 = vpow.pop %v4535
      %v4537 = vmul.f32 %v4518, 1.442695
      %v4538 = vpow.pop %v4537
      %v4539 = vmul.f32 %v4519, 1.442695
      %v4540 = vpow.pop %v4539
      %v4541 = vmul.f32 %v4520, 1.442695
      %v4542 = vpow.pop %v4541
      %v4543 = vmul.f32 %v4521, 1.442695
      %v4544 = vpow.pop %v4543
      %v4545 = vmul.f32 %v4522, 1.442695
      %v4546 = vpow.pop %v4545
      %v4547 = vmul.f32 %v4523, 1.442695
      %v4548 = vpow.pop %v4547
      %v4549 = vmul.f32 %v4524, 1.442695
      %v4550 = vpow.pop %v4549
      %v4551 = vmul.f32 %v4525, 1.442695
      %v4552 = vpow.pop %v4551
      %v4553 = vmul.f32 %v4526, 1.442695
      %v4554 = vpow.pop %v4553
      %v4555 = vmul.f32 %v4527, 1.442695
      %v4556 = vpow.pop %v4555
      %v4557 = vmul.f32 %v4528, 1.442695
      %v4558 = vpow.pop %v4557
      %v4559 = vmul.f32 %v4529, 1.442695
      %v4560 = vpow.pop %v4559
      %v4561 = vmul.f32 %v4530, 1.442695
      %v4562 = vpow.pop %v4561
      %v4563 = vsel %vm1612, %v4532, 0.0
      %4564 = vadd.xlane.f32.xlu0 %v4563
      %v4565 = vpop.xlane.xlu0 %4564
      %v4566 = vsel %vm1612, %v4534, 0.0
      %4567 = vadd.xlane.f32.xlu0 %v4566
      %v4568 = vpop.xlane.xlu0 %4567
      %v4569 = vsel %vm1612, %v4536, 0.0
      %4570 = vadd.xlane.f32.xlu0 %v4569
      %v4571 = vpop.xlane.xlu0 %4570
      %v4572 = vsel %vm1612, %v4538, 0.0
      %4573 = vadd.xlane.f32.xlu0 %v4572
      %v4574 = vpop.xlane.xlu0 %4573
      %v4575 = vsel %vm1612, %v4540, 0.0
      %4576 = vadd.xlane.f32.xlu0 %v4575
      %v4577 = vpop.xlane.xlu0 %4576
      %v4578 = vsel %vm1612, %v4542, 0.0
      %4579 = vadd.xlane.f32.xlu0 %v4578
      %v4580 = vpop.xlane.xlu0 %4579
      %v4581 = vsel %vm1612, %v4544, 0.0
      %4582 = vadd.xlane.f32.xlu0 %v4581
      %v4583 = vpop.xlane.xlu0 %4582
      %v4584 = vsel %vm1612, %v4546, 0.0
      %4585 = vadd.xlane.f32.xlu0 %v4584
      %v4586 = vpop.xlane.xlu0 %4585
      %v4587 = vsel %vm1612, %v4548, 0.0
      %4588 = vadd.xlane.f32.xlu0 %v4587
      %v4589 = vpop.xlane.xlu0 %4588
      %v4590 = vsel %vm1612, %v4550, 0.0
      %4591 = vadd.xlane.f32.xlu0 %v4590
      %v4592 = vpop.xlane.xlu0 %4591
      %v4593 = vsel %vm1612, %v4552, 0.0
      %4594 = vadd.xlane.f32.xlu0 %v4593
      %v4595 = vpop.xlane.xlu0 %4594
      %v4596 = vsel %vm1612, %v4554, 0.0
      %4597 = vadd.xlane.f32.xlu0 %v4596
      %v4598 = vpop.xlane.xlu0 %4597
      %v4599 = vsel %vm1612, %v4556, 0.0
      %4600 = vadd.xlane.f32.xlu0 %v4599
      %v4601 = vpop.xlane.xlu0 %4600
      %v4602 = vsel %vm1612, %v4558, 0.0
      %4603 = vadd.xlane.f32.xlu0 %v4602
      %v4604 = vpop.xlane.xlu0 %4603
      %v4605 = vsel %vm1612, %v4560, 0.0
      %4606 = vadd.xlane.f32.xlu0 %v4605
      %v4607 = vpop.xlane.xlu0 %4606
      %v4608 = vsel %vm1612, %v4562, 0.0
      %4609 = vadd.xlane.f32.xlu0 %v4608
      %v4610 = vpop.xlane.xlu0 %4609
      %v4611 = vrcp.pop %v4565
      %v4612 = vrcp.pop %v4568
      %v4613 = vrcp.pop %v4571
      %v4614 = vrcp.pop %v4574
      %v4615 = vrcp.pop %v4577
      %v4616 = vrcp.pop %v4580
      %v4617 = vrcp.pop %v4583
      %v4618 = vrcp.pop %v4586
      %v4619 = vrcp.pop %v4589
      %v4620 = vrcp.pop %v4592
      %v4621 = vrcp.pop %v4595
      %v4622 = vrcp.pop %v4598
      %v4623 = vrcp.pop %v4601
      %v4624 = vrcp.pop %v4604
      %v4625 = vrcp.pop %v4607
      %v4626 = vrcp.pop %v4610
      %v4627 = vpack.c.bf16 %v4534, %v4532
      %v4628 = vpack.c.bf16 %v4538, %v4536
      %v4629 = vpack.c.bf16 %v4542, %v4540
      %v4630 = vpack.c.bf16 %v4546, %v4544
      %v4631 = vpack.c.bf16 %v4550, %v4548
      %v4632 = vpack.c.bf16 %v4554, %v4552
      %v4633 = vpack.c.bf16 %v4558, %v4556
      %v4634 = vpack.c.bf16 %v4562, %v4560
      %v4635 = vpack.c.bf16 %v4016, %v4013
      %v4636 = vpack.c.bf16 %v4024, %v4021
      %v4637 = vpack.c.bf16 %v4032, %v4029
      %v4638 = vpack.c.bf16 %v4040, %v4037
      %v4639 = vpack.c.bf16 %v4048, %v4045
      %v4640 = vpack.c.bf16 %v4056, %v4053
      %v4641 = vpack.c.bf16 %v4064, %v4061
      %v4642 = vpack.c.bf16 %v4072, %v4069
      %v4644 = vsel %vm1612, %v4627, 0
      %4646 = vmatprep.subr.bf16.mxu0 0
      %4647 = vmatpush1.bf16.msra.mxu0 %v4635
      %4648 = vmatprep.subr.bf16.mxu0 0
      %4649 = vmatpush1.bf16.msra.mxu0 0
      %4650 = vmatprep.subr.bf16.mxu0 0
      %4651 = vmatpush1.bf16.msra.mxu0 0
      %4652 = vmatprep.subr.bf16.mxu0 0
      %4653 = vmatpush1.bf16.msra.mxu0 0
      %4654 = vmatprep.subr.bf16.mxu0 0
      %4655 = vmatpush1.bf16.msra.mxu0 0
      %4656 = vmatprep.subr.bf16.mxu0 0
      %4657 = vmatpush1.bf16.msra.mxu0 0
      %4658 = vmatprep.subr.bf16.mxu0 0
      %4659 = vmatpush1.bf16.msra.mxu0 0
      %4660 = vmatprep.subr.bf16.mxu0 0
      %4661 = vmatpush1.bf16.msra.mxu0 0
      %4662 = vmatprep.subr.bf16.mxu0 0
      %4663 = vmatpush1.bf16.msra.mxu0 0
      %4664 = vmatprep.subr.bf16.mxu0 0
      %4665 = vmatpush1.bf16.msra.mxu0 0
      %4666 = vmatprep.subr.bf16.mxu0 0
      %4667 = vmatpush1.bf16.msra.mxu0 0
      %4668 = vmatprep.subr.bf16.mxu0 0
      %4669 = vmatpush1.bf16.msra.mxu0 0
      %4670 = vmatprep.subr.bf16.mxu0 0
      %4671 = vmatpush1.bf16.msra.mxu0 0
      %4672 = vmatprep.subr.bf16.mxu0 0
      %4673 = vmatpush1.bf16.msra.mxu0 0
      %4674 = vmatprep.subr.bf16.mxu0 0
      %4675 = vmatpush1.bf16.msra.mxu0 0
      %4676 = vmatprep.subr.bf16.mxu0 0
      %4677 = vmatpush1.bf16.msra.mxu0 0
      %4678 = vmatprep.mubr.bf16.mxu0 0
      %4679 = vmatmul.mubr.bf16.gmra.mrb[0].mxu0 %v4644
      %v4680 = vpop.f32.mrb[0].mxu0
      %v4681 = vadd.f32 0.0, %v4680
      %v4682 = vpop.f32.mrb[0].mxu0
      %v4683 = vpop.f32.mrb[0].mxu0
      %v4684 = vadd.f32 0.0, %v4683
      %v4685 = vpop.f32.mrb[0].mxu0
      %4686 = vdwg.mxu0
      %v4688 = vsel %vm1612, %v4628, 0
      %4690 = vmatprep.subr.bf16.mxu0 0
      %4691 = vmatpush1.bf16.msra.mxu0 %v4636
      %4692 = vmatprep.subr.bf16.mxu0 0
      %4693 = vmatpush1.bf16.msra.mxu0 0
      %4694 = vmatprep.subr.bf16.mxu0 0
      %4695 = vmatpush1.bf16.msra.mxu0 0
      %4696 = vmatprep.subr.bf16.mxu0 0
      %4697 = vmatpush1.bf16.msra.mxu0 0
      %4698 = vmatprep.subr.bf16.mxu0 0
      %4699 = vmatpush1.bf16.msra.mxu0 0
      %4700 = vmatprep.subr.bf16.mxu0 0
      %4701 = vmatpush1.bf16.msra.mxu0 0
      %4702 = vmatprep.subr.bf16.mxu0 0
      %4703 = vmatpush1.bf16.msra.mxu0 0
      %4704 = vmatprep.subr.bf16.mxu0 0
      %4705 = vmatpush1.bf16.msra.mxu0 0
      %4706 = vmatprep.subr.bf16.mxu0 0
      %4707 = vmatpush1.bf16.msra.mxu0 0
      %4708 = vmatprep.subr.bf16.mxu0 0
      %4709 = vmatpush1.bf16.msra.mxu0 0
      %4710 = vmatprep.subr.bf16.mxu0 0
      %4711 = vmatpush1.bf16.msra.mxu0 0
      %4712 = vmatprep.subr.bf16.mxu0 0
      %4713 = vmatpush1.bf16.msra.mxu0 0
      %4714 = vmatprep.subr.bf16.mxu0 0
      %4715 = vmatpush1.bf16.msra.mxu0 0
      %4716 = vmatprep.subr.bf16.mxu0 0
      %4717 = vmatpush1.bf16.msra.mxu0 0
      %4718 = vmatprep.subr.bf16.mxu0 0
      %4719 = vmatpush1.bf16.msra.mxu0 0
      %4720 = vmatprep.subr.bf16.mxu0 0
      %4721 = vmatpush1.bf16.msra.mxu0 0
      %4722 = vmatprep.mubr.bf16.mxu0 0
      %4723 = vmatmul.mubr.bf16.gmra.mrb[0].mxu0 %v4688
      %v4724 = vpop.f32.mrb[0].mxu0
      %v4725 = vadd.f32 0.0, %v4724
      %v4726 = vpop.f32.mrb[0].mxu0
      %v4727 = vpop.f32.mrb[0].mxu0
      %v4728 = vadd.f32 0.0, %v4727
      %v4729 = vpop.f32.mrb[0].mxu0
      %4730 = vdwg.mxu0
      %v4732 = vsel %vm1612, %v4629, 0
      %4734 = vmatprep.subr.bf16.mxu0 0
      %4735 = vmatpush1.bf16.msra.mxu0 %v4637
      %4736 = vmatprep.subr.bf16.mxu0 0
      %4737 = vmatpush1.bf16.msra.mxu0 0
      %4738 = vmatprep.subr.bf16.mxu0 0
      %4739 = vmatpush1.bf16.msra.mxu0 0
      %4740 = vmatprep.subr.bf16.mxu0 0
      %4741 = vmatpush1.bf16.msra.mxu0 0
      %4742 = vmatprep.subr.bf16.mxu0 0
      %4743 = vmatpush1.bf16.msra.mxu0 0
      %4744 = vmatprep.subr.bf16.mxu0 0
      %4745 = vmatpush1.bf16.msra.mxu0 0
      %4746 = vmatprep.subr.bf16.mxu0 0
      %4747 = vmatpush1.bf16.msra.mxu0 0
      %4748 = vmatprep.subr.bf16.mxu0 0
      %4749 = vmatpush1.bf16.msra.mxu0 0
      %4750 = vmatprep.subr.bf16.mxu0 0
      %4751 = vmatpush1.bf16.msra.mxu0 0
      %4752 = vmatprep.subr.bf16.mxu0 0
      %4753 = vmatpush1.bf16.msra.mxu0 0
      %4754 = vmatprep.subr.bf16.mxu0 0
      %4755 = vmatpush1.bf16.msra.mxu0 0
      %4756 = vmatprep.subr.bf16.mxu0 0
      %4757 = vmatpush1.bf16.msra.mxu0 0
      %4758 = vmatprep.subr.bf16.mxu0 0
      %4759 = vmatpush1.bf16.msra.mxu0 0
      %4760 = vmatprep.subr.bf16.mxu0 0
      %4761 = vmatpush1.bf16.msra.mxu0 0
      %4762 = vmatprep.subr.bf16.mxu0 0
      %4763 = vmatpush1.bf16.msra.mxu0 0
      %4764 = vmatprep.subr.bf16.mxu0 0
      %4765 = vmatpush1.bf16.msra.mxu0 0
      %4766 = vmatprep.mubr.bf16.mxu0 0
      %4767 = vmatmul.mubr.bf16.gmra.mrb[0].mxu0 %v4732
      %v4768 = vpop.f32.mrb[0].mxu0
      %v4769 = vadd.f32 0.0, %v4768
      %v4770 = vpop.f32.mrb[0].mxu0
      %v4771 = vpop.f32.mrb[0].mxu0
      %v4772 = vadd.f32 0.0, %v4771
      %v4773 = vpop.f32.mrb[0].mxu0
      %4774 = vdwg.mxu0
      %v4776 = vsel %vm1612, %v4630, 0
      %4778 = vmatprep.subr.bf16.mxu0 0
      %4779 = vmatpush1.bf16.msra.mxu0 %v4638
      %4780 = vmatprep.subr.bf16.mxu0 0
      %4781 = vmatpush1.bf16.msra.mxu0 0
      %4782 = vmatprep.subr.bf16.mxu0 0
      %4783 = vmatpush1.bf16.msra.mxu0 0
      %4784 = vmatprep.subr.bf16.mxu0 0
      %4785 = vmatpush1.bf16.msra.mxu0 0
      %4786 = vmatprep.subr.bf16.mxu0 0
      %4787 = vmatpush1.bf16.msra.mxu0 0
      %4788 = vmatprep.subr.bf16.mxu0 0
      %4789 = vmatpush1.bf16.msra.mxu0 0
      %4790 = vmatprep.subr.bf16.mxu0 0
      %4791 = vmatpush1.bf16.msra.mxu0 0
      %4792 = vmatprep.subr.bf16.mxu0 0
      %4793 = vmatpush1.bf16.msra.mxu0 0
      %4794 = vmatprep.subr.bf16.mxu0 0
      %4795 = vmatpush1.bf16.msra.mxu0 0
      %4796 = vmatprep.subr.bf16.mxu0 0
      %4797 = vmatpush1.bf16.msra.mxu0 0
      %4798 = vmatprep.subr.bf16.mxu0 0
      %4799 = vmatpush1.bf16.msra.mxu0 0
      %4800 = vmatprep.subr.bf16.mxu0 0
      %4801 = vmatpush1.bf16.msra.mxu0 0
      %4802 = vmatprep.subr.bf16.mxu0 0
      %4803 = vmatpush1.bf16.msra.mxu0 0
      %4804 = vmatprep.subr.bf16.mxu0 0
      %4805 = vmatpush1.bf16.msra.mxu0 0
      %4806 = vmatprep.subr.bf16.mxu0 0
      %4807 = vmatpush1.bf16.msra.mxu0 0
      %4808 = vmatprep.subr.bf16.mxu0 0
      %4809 = vmatpush1.bf16.msra.mxu0 0
      %4810 = vmatprep.mubr.bf16.mxu0 0
      %4811 = vmatmul.mubr.bf16.gmra.mrb[0].mxu0 %v4776
      %v4812 = vpop.f32.mrb[0].mxu0
      %v4813 = vadd.f32 0.0, %v4812
      %v4814 = vpop.f32.mrb[0].mxu0
      %v4815 = vpop.f32.mrb[0].mxu0
      %v4816 = vadd.f32 0.0, %v4815
      %v4817 = vpop.f32.mrb[0].mxu0
      %4818 = vdwg.mxu0
      %v4820 = vsel %vm1612, %v4631, 0
      %4822 = vmatprep.subr.bf16.mxu0 0
      %4823 = vmatpush1.bf16.msra.mxu0 %v4639
      %4824 = vmatprep.subr.bf16.mxu0 0
      %4825 = vmatpush1.bf16.msra.mxu0 0
      %4826 = vmatprep.subr.bf16.mxu0 0
      %4827 = vmatpush1.bf16.msra.mxu0 0
      %4828 = vmatprep.subr.bf16.mxu0 0
      %4829 = vmatpush1.bf16.msra.mxu0 0
      %4830 = vmatprep.subr.bf16.mxu0 0
      %4831 = vmatpush1.bf16.msra.mxu0 0
      %4832 = vmatprep.subr.bf16.mxu0 0
      %4833 = vmatpush1.bf16.msra.mxu0 0
      %4834 = vmatprep.subr.bf16.mxu0 0
      %4835 = vmatpush1.bf16.msra.mxu0 0
      %4836 = vmatprep.subr.bf16.mxu0 0
      %4837 = vmatpush1.bf16.msra.mxu0 0
      %4838 = vmatprep.subr.bf16.mxu0 0
      %4839 = vmatpush1.bf16.msra.mxu0 0
      %4840 = vmatprep.subr.bf16.mxu0 0
      %4841 = vmatpush1.bf16.msra.mxu0 0
      %4842 = vmatprep.subr.bf16.mxu0 0
      %4843 = vmatpush1.bf16.msra.mxu0 0
      %4844 = vmatprep.subr.bf16.mxu0 0
      %4845 = vmatpush1.bf16.msra.mxu0 0
      %4846 = vmatprep.subr.bf16.mxu0 0
      %4847 = vmatpush1.bf16.msra.mxu0 0
      %4848 = vmatprep.subr.bf16.mxu0 0
      %4849 = vmatpush1.bf16.msra.mxu0 0
      %4850 = vmatprep.subr.bf16.mxu0 0
      %4851 = vmatpush1.bf16.msra.mxu0 0
      %4852 = vmatprep.subr.bf16.mxu0 0
      %4853 = vmatpush1.bf16.msra.mxu0 0
      %4854 = vmatprep.mubr.bf16.mxu0 0
      %4855 = vmatmul.mubr.bf16.gmra.mrb[0].mxu0 %v4820
      %v4856 = vpop.f32.mrb[0].mxu0
      %v4857 = vadd.f32 0.0, %v4856
      %v4858 = vpop.f32.mrb[0].mxu0
      %v4859 = vpop.f32.mrb[0].mxu0
      %v4860 = vadd.f32 0.0, %v4859
      %v4861 = vpop.f32.mrb[0].mxu0
      %4862 = vdwg.mxu0
      %v4864 = vsel %vm1612, %v4632, 0
      %4866 = vmatprep.subr.bf16.mxu0 0
      %4867 = vmatpush1.bf16.msra.mxu0 %v4640
      %4868 = vmatprep.subr.bf16.mxu0 0
      %4869 = vmatpush1.bf16.msra.mxu0 0
      %4870 = vmatprep.subr.bf16.mxu0 0
      %4871 = vmatpush1.bf16.msra.mxu0 0
      %4872 = vmatprep.subr.bf16.mxu0 0
      %4873 = vmatpush1.bf16.msra.mxu0 0
      %4874 = vmatprep.subr.bf16.mxu0 0
      %4875 = vmatpush1.bf16.msra.mxu0 0
      %4876 = vmatprep.subr.bf16.mxu0 0
      %4877 = vmatpush1.bf16.msra.mxu0 0
      %4878 = vmatprep.subr.bf16.mxu0 0
      %4879 = vmatpush1.bf16.msra.mxu0 0
      %4880 = vmatprep.subr.bf16.mxu0 0
      %4881 = vmatpush1.bf16.msra.mxu0 0
      %4882 = vmatprep.subr.bf16.mxu0 0
      %4883 = vmatpush1.bf16.msra.mxu0 0
      %4884 = vmatprep.subr.bf16.mxu0 0
      %4885 = vmatpush1.bf16.msra.mxu0 0
      %4886 = vmatprep.subr.bf16.mxu0 0
      %4887 = vmatpush1.bf16.msra.mxu0 0
      %4888 = vmatprep.subr.bf16.mxu0 0
      %4889 = vmatpush1.bf16.msra.mxu0 0
      %4890 = vmatprep.subr.bf16.mxu0 0
      %4891 = vmatpush1.bf16.msra.mxu0 0
      %4892 = vmatprep.subr.bf16.mxu0 0
      %4893 = vmatpush1.bf16.msra.mxu0 0
      %4894 = vmatprep.subr.bf16.mxu0 0
      %4895 = vmatpush1.bf16.msra.mxu0 0
      %4896 = vmatprep.subr.bf16.mxu0 0
      %4897 = vmatpush1.bf16.msra.mxu0 0
      %4898 = vmatprep.mubr.bf16.mxu0 0
      %4899 = vmatmul.mubr.bf16.gmra.mrb[0].mxu0 %v4864
      %v4900 = vpop.f32.mrb[0].mxu0
      %v4901 = vadd.f32 0.0, %v4900
      %v4902 = vpop.f32.mrb[0].mxu0
      %v4903 = vpop.f32.mrb[0].mxu0
      %v4904 = vadd.f32 0.0, %v4903
      %v4905 = vpop.f32.mrb[0].mxu0
      %4906 = vdwg.mxu0
      %v4908 = vsel %vm1612, %v4633, 0
      %4910 = vmatprep.subr.bf16.mxu0 0
      %4911 = vmatpush1.bf16.msra.mxu0 %v4641
      %4912 = vmatprep.subr.bf16.mxu0 0
      %4913 = vmatpush1.bf16.msra.mxu0 0
      %4914 = vmatprep.subr.bf16.mxu0 0
      %4915 = vmatpush1.bf16.msra.mxu0 0
      %4916 = vmatprep.subr.bf16.mxu0 0
      %4917 = vmatpush1.bf16.msra.mxu0 0
      %4918 = vmatprep.subr.bf16.mxu0 0
      %4919 = vmatpush1.bf16.msra.mxu0 0
      %4920 = vmatprep.subr.bf16.mxu0 0
      %4921 = vmatpush1.bf16.msra.mxu0 0
      %4922 = vmatprep.subr.bf16.mxu0 0
      %4923 = vmatpush1.bf16.msra.mxu0 0
      %4924 = vmatprep.subr.bf16.mxu0 0
      %4925 = vmatpush1.bf16.msra.mxu0 0
      %4926 = vmatprep.subr.bf16.mxu0 0
      %4927 = vmatpush1.bf16.msra.mxu0 0
      %4928 = vmatprep.subr.bf16.mxu0 0
      %4929 = vmatpush1.bf16.msra.mxu0 0
      %4930 = vmatprep.subr.bf16.mxu0 0
      %4931 = vmatpush1.bf16.msra.mxu0 0
      %4932 = vmatprep.subr.bf16.mxu0 0
      %4933 = vmatpush1.bf16.msra.mxu0 0
      %4934 = vmatprep.subr.bf16.mxu0 0
      %4935 = vmatpush1.bf16.msra.mxu0 0
      %4936 = vmatprep.subr.bf16.mxu0 0
      %4937 = vmatpush1.bf16.msra.mxu0 0
      %4938 = vmatprep.subr.bf16.mxu0 0
      %4939 = vmatpush1.bf16.msra.mxu0 0
      %4940 = vmatprep.subr.bf16.mxu0 0
      %4941 = vmatpush1.bf16.msra.mxu0 0
      %4942 = vmatprep.mubr.bf16.mxu0 0
      %4943 = vmatmul.mubr.bf16.gmra.mrb[0].mxu0 %v4908
      %v4944 = vpop.f32.mrb[0].mxu0
      %v4945 = vadd.f32 0.0, %v4944
      %v4946 = vpop.f32.mrb[0].mxu0
      %v4947 = vpop.f32.mrb[0].mxu0
      %v4948 = vadd.f32 0.0, %v4947
      %v4949 = vpop.f32.mrb[0].mxu0
      %4950 = vdwg.mxu0
      %v4952 = vsel %vm1612, %v4634, 0
      %4954 = vmatprep.subr.bf16.mxu0 0
      %4955 = vmatpush1.bf16.msra.mxu0 %v4642
      %4956 = vmatprep.subr.bf16.mxu0 0
      %4957 = vmatpush1.bf16.msra.mxu0 0
      %4958 = vmatprep.subr.bf16.mxu0 0
      %4959 = vmatpush1.bf16.msra.mxu0 0
      %4960 = vmatprep.subr.bf16.mxu0 0
      %4961 = vmatpush1.bf16.msra.mxu0 0
      %4962 = vmatprep.subr.bf16.mxu0 0
      %4963 = vmatpush1.bf16.msra.mxu0 0
      %4964 = vmatprep.subr.bf16.mxu0 0
      %4965 = vmatpush1.bf16.msra.mxu0 0
      %4966 = vmatprep.subr.bf16.mxu0 0
      %4967 = vmatpush1.bf16.msra.mxu0 0
      %4968 = vmatprep.subr.bf16.mxu0 0
      %4969 = vmatpush1.bf16.msra.mxu0 0
      %4970 = vmatprep.subr.bf16.mxu0 0
      %4971 = vmatpush1.bf16.msra.mxu0 0
      %4972 = vmatprep.subr.bf16.mxu0 0
      %4973 = vmatpush1.bf16.msra.mxu0 0
      %4974 = vmatprep.subr.bf16.mxu0 0
      %4975 = vmatpush1.bf16.msra.mxu0 0
      %4976 = vmatprep.subr.bf16.mxu0 0
      %4977 = vmatpush1.bf16.msra.mxu0 0
      %4978 = vmatprep.subr.bf16.mxu0 0
      %4979 = vmatpush1.bf16.msra.mxu0 0
      %4980 = vmatprep.subr.bf16.mxu0 0
      %4981 = vmatpush1.bf16.msra.mxu0 0
      %4982 = vmatprep.subr.bf16.mxu0 0
      %4983 = vmatpush1.bf16.msra.mxu0 0
      %4984 = vmatprep.subr.bf16.mxu0 0
      %4985 = vmatpush1.bf16.msra.mxu0 0
      %4986 = vmatprep.mubr.bf16.mxu0 0
      %4987 = vmatmul.mubr.bf16.gmra.mrb[0].mxu0 %v4952
      %v4988 = vpop.f32.mrb[0].mxu0
      %v4989 = vadd.f32 0.0, %v4988
      %v4990 = vpop.f32.mrb[0].mxu0
      %v4991 = vpop.f32.mrb[0].mxu0
      %v4992 = vadd.f32 0.0, %v4991
      %v4993 = vpop.f32.mrb[0].mxu0
      %4994 = vdwg.mxu0
      %v4995 = vmul.f32 %v4681, %v4611
      %v4996 = vmul.f32 %v4684, %v4612
      %v4997 = vmul.f32 %v4725, %v4613
      %v4998 = vmul.f32 %v4728, %v4614
      %v4999 = vmul.f32 %v4769, %v4615
      %v5000 = vmul.f32 %v4772, %v4616
      %v5001 = vmul.f32 %v4813, %v4617
      %v5002 = vmul.f32 %v4816, %v4618
      %v5003 = vmul.f32 %v4857, %v4619
      %v5004 = vmul.f32 %v4860, %v4620
      %v5005 = vmul.f32 %v4901, %v4621
      %v5006 = vmul.f32 %v4904, %v4622
      %v5007 = vmul.f32 %v4945, %v4623
      %v5008 = vmul.f32 %v4948, %v4624
      %v5009 = vmul.f32 %v4989, %v4625
      %v5010 = vmul.f32 %v4992, %v4626
      %v5011 = vpack.c.bf16 %v4996, %v4995
      %v5012 = vpack.c.bf16 %v4998, %v4997
      %v5013 = vpack.c.bf16 %v5000, %v4999
      %v5014 = vpack.c.bf16 %v5002, %v5001
      %v5015 = vpack.c.bf16 %v5004, %v5003
      %v5016 = vpack.c.bf16 %v5006, %v5005
      %v5017 = vpack.c.bf16 %v5008, %v5007
      %v5018 = vpack.c.bf16 %v5010, %v5009
      %s5019 = scalar_lea.vmem %s5, 8
      %v5020 = vld [vmem:[%s5019] sm:$0xf]
      %v5022 = vsel %vm1235, %v5011, 0
      %v5025 = vsel %vm1235, %v5012, 0
      %v5028 = vsel %vm1235, %v5013, 0
      %v5031 = vsel %vm1235, %v5014, 0
      %v5034 = vsel %vm1235, %v5015, 0
      %v5037 = vsel %vm1235, %v5016, 0
      %v5040 = vsel %vm1235, %v5017, 0
      %v5043 = vsel %vm1235, %v5018, 0
      %v5046 = vsel %vm3493, %v5020, 0
      %5048 = vmatprep.subr.bf16.mxu0 0
      %5049 = vmatpush1.bf16.msra.mxu0 %v5046
      %5050 = vmatprep.subr.bf16.mxu0 0
      %5051 = vmatpush1.bf16.msra.mxu0 0
      %5052 = vmatprep.subr.bf16.mxu0 0
      %5053 = vmatpush1.bf16.msra.mxu0 0
      %5054 = vmatprep.subr.bf16.mxu0 0
      %5055 = vmatpush1.bf16.msra.mxu0 0
      %5056 = vmatprep.subr.bf16.mxu0 0
      %5057 = vmatpush1.bf16.msra.mxu0 0
      %5058 = vmatprep.subr.bf16.mxu0 0
      %5059 = vmatpush1.bf16.msra.mxu0 0
      %5060 = vmatprep.subr.bf16.mxu0 0
      %5061 = vmatpush1.bf16.msra.mxu0 0
      %5062 = vmatprep.subr.bf16.mxu0 0
      %5063 = vmatpush1.bf16.msra.mxu0 0
      %5064 = vmatprep.subr.bf16.mxu0 0
      %5065 = vmatpush1.bf16.msra.mxu0 0
      %5066 = vmatprep.subr.bf16.mxu0 0
      %5067 = vmatpush1.bf16.msra.mxu0 0
      %5068 = vmatprep.subr.bf16.mxu0 0
      %5069 = vmatpush1.bf16.msra.mxu0 0
      %5070 = vmatprep.subr.bf16.mxu0 0
      %5071 = vmatpush1.bf16.msra.mxu0 0
      %5072 = vmatprep.subr.bf16.mxu0 0
      %5073 = vmatpush1.bf16.msra.mxu0 0
      %5074 = vmatprep.subr.bf16.mxu0 0
      %5075 = vmatpush1.bf16.msra.mxu0 0
      %5076 = vmatprep.subr.bf16.mxu0 0
      %5077 = vmatpush1.bf16.msra.mxu0 0
      %5078 = vmatprep.subr.bf16.mxu0 0
      %5079 = vmatpush1.bf16.msra.mxu0 0
      %5080 = vmatprep.mubr.bf16.mxu0 0
      %5081 = vmatmul.mubr.bf16.gmra.mrb[0].mxu0 %v5022
      %v5082 = vpop.f32.mrb[0].mxu0
      %v5083 = vadd.f32 0.0, %v5082
      %v5084 = vpop.f32.mrb[0].mxu0
      %v5085 = vpop.f32.mrb[0].mxu0
      %v5086 = vadd.f32 0.0, %v5085
      %v5087 = vpop.f32.mrb[0].mxu0
      %5088 = vmatprep.mubr.bf16.mxu0 0
      %5089 = vmatmul.mubr.bf16.gmra.mrb[0].mxu0 %v5025
      %v5090 = vpop.f32.mrb[0].mxu0
      %v5091 = vadd.f32 0.0, %v5090
      %v5092 = vpop.f32.mrb[0].mxu0
      %v5093 = vpop.f32.mrb[0].mxu0
      %v5094 = vadd.f32 0.0, %v5093
      %v5095 = vpop.f32.mrb[0].mxu0
      %5096 = vmatprep.mubr.bf16.mxu0 0
      %5097 = vmatmul.mubr.bf16.gmra.mrb[0].mxu0 %v5028
      %v5098 = vpop.f32.mrb[0].mxu0
      %v5099 = vadd.f32 0.0, %v5098
      %v5100 = vpop.f32.mrb[0].mxu0
      %v5101 = vpop.f32.mrb[0].mxu0
      %v5102 = vadd.f32 0.0, %v5101
      %v5103 = vpop.f32.mrb[0].mxu0
      %5104 = vmatprep.mubr.bf16.mxu0 0
      %5105 = vmatmul.mubr.bf16.gmra.mrb[0].mxu0 %v5031
      %v5106 = vpop.f32.mrb[0].mxu0
      %v5107 = vadd.f32 0.0, %v5106
      %v5108 = vpop.f32.mrb[0].mxu0
      %v5109 = vpop.f32.mrb[0].mxu0
      %v5110 = vadd.f32 0.0, %v5109
      %v5111 = vpop.f32.mrb[0].mxu0
      %5112 = vmatprep.mubr.bf16.mxu0 0
      %5113 = vmatmul.mubr.bf16.gmra.mrb[0].mxu0 %v5034
      %v5114 = vpop.f32.mrb[0].mxu0
      %v5115 = vadd.f32 0.0, %v5114
      %v5116 = vpop.f32.mrb[0].mxu0
      %v5117 = vpop.f32.mrb[0].mxu0
      %v5118 = vadd.f32 0.0, %v5117
      %v5119 = vpop.f32.mrb[0].mxu0
      %5120 = vmatprep.mubr.bf16.mxu0 0
      %5121 = vmatmul.mubr.bf16.gmra.mrb[0].mxu0 %v5037
      %v5122 = vpop.f32.mrb[0].mxu0
      %v5123 = vadd.f32 0.0, %v5122
      %v5124 = vpop.f32.mrb[0].mxu0
      %v5125 = vpop.f32.mrb[0].mxu0
      %v5126 = vadd.f32 0.0, %v5125
      %v5127 = vpop.f32.mrb[0].mxu0
      %5128 = vmatprep.mubr.bf16.mxu0 0
      %5129 = vmatmul.mubr.bf16.gmra.mrb[0].mxu0 %v5040
      %v5130 = vpop.f32.mrb[0].mxu0
      %v5131 = vadd.f32 0.0, %v5130
      %v5132 = vpop.f32.mrb[0].mxu0
      %v5133 = vpop.f32.mrb[0].mxu0
      %v5134 = vadd.f32 0.0, %v5133
      %v5135 = vpop.f32.mrb[0].mxu0
      %5136 = vmatprep.mubr.bf16.mxu0 0
      %5137 = vmatmul.mubr.bf16.gmra.mrb[0].mxu0 %v5043
      %v5138 = vpop.f32.mrb[0].mxu0
      %v5139 = vadd.f32 0.0, %v5138
      %v5140 = vpop.f32.mrb[0].mxu0
      %v5141 = vpop.f32.mrb[0].mxu0
      %v5142 = vadd.f32 0.0, %v5141
      %v5143 = vpop.f32.mrb[0].mxu0
      %5144 = vdwg.mxu0
      %v5145 = vadd.f32 %v3656, %v5083
      %v5146 = vadd.f32 %v3659, %v5086
      %v5147 = vadd.f32 %v3664, %v5091
      %v5148 = vadd.f32 %v3667, %v5094
      %v5149 = vadd.f32 %v3672, %v5099
      %v5150 = vadd.f32 %v3675, %v5102
      %v5151 = vadd.f32 %v3680, %v5107
      %v5152 = vadd.f32 %v3683, %v5110
      %v5153 = vadd.f32 %v3688, %v5115
      %v5154 = vadd.f32 %v3691, %v5118
      %v5155 = vadd.f32 %v3696, %v5123
      %v5156 = vadd.f32 %v3699, %v5126
      %v5157 = vadd.f32 %v3704, %v5131
      %v5158 = vadd.f32 %v3707, %v5134
      %v5159 = vadd.f32 %v3712, %v5139
      %v5160 = vadd.f32 %v3715, %v5142
      %s5161 = scalar_lea.vmem %s3, 48
      %v5162 = vld [vmem:[%s5161] sm:$0xf]
      %v5163 = vld [vmem:[%s5161 + $0x4] sm:$0xf]
      %v5164 = vld [vmem:[%s5161 + $0x8] sm:$0xf]
      %v5165 = vld [vmem:[%s5161 + $0xc] sm:$0xf]
      %v5166 = vld [vmem:[%s4 + $0x3] sm:$0x1]
      %v5167 = vlaneseq
      %v5168 = vshrl.u32 %v5167, 7
      %v5169 = vsub.s32 0, %v5168
      %v5170 = vrot.slane %v5166, %v5169
      %v5175 = vunpack.c.l.b16 %v5162
      %v5176 = vunpack.c.l.b16 %v5163
      %v5177 = vunpack.c.l.b16 %v5164
      %v5178 = vunpack.c.l.b16 %v5165
      %v5179 = vpack.c.b16 %v5176, %v5175
      %v5180 = vpack.c.b16 %v5178, %v5177
      %5183 = vmatprep.subr.bf16.mxu0 0
      %5184 = vmatpush1.bf16.msra.mxu0 %v5179
      %5185 = vmatprep.subr.bf16.mxu0 0
      %5186 = vmatpush1.bf16.msra.mxu0 %v5180
      %5187 = vmatprep.subr.bf16.mxu0 0
      %5188 = vmatpush1.bf16.msra.mxu0 0
      %5189 = vmatprep.subr.bf16.mxu0 0
      %5190 = vmatpush1.bf16.msra.mxu0 0
      %5191 = vmatprep.subr.bf16.mxu0 0
      %5192 = vmatpush1.bf16.msra.mxu0 0
      %5193 = vmatprep.subr.bf16.mxu0 0
      %5194 = vmatpush1.bf16.msra.mxu0 0
      %5195 = vmatprep.subr.bf16.mxu0 0
      %5196 = vmatpush1.bf16.msra.mxu0 0
      %5197 = vmatprep.subr.bf16.mxu0 0
      %5198 = vmatpush1.bf16.msra.mxu0 0
      %5199 = vmatprep.subr.bf16.mxu0 0
      %5200 = vmatpush1.bf16.msra.mxu0 0
      %5201 = vmatprep.subr.bf16.mxu0 0
      %5202 = vmatpush1.bf16.msra.mxu0 0
      %5203 = vmatprep.subr.bf16.mxu0 0
      %5204 = vmatpush1.bf16.msra.mxu0 0
      %5205 = vmatprep.subr.bf16.mxu0 0
      %5206 = vmatpush1.bf16.msra.mxu0 0
      %5207 = vmatprep.subr.bf16.mxu0 0
      %5208 = vmatpush1.bf16.msra.mxu0 0
      %5209 = vmatprep.subr.bf16.mxu0 0
      %5210 = vmatpush1.bf16.msra.mxu0 0
      %5211 = vmatprep.subr.bf16.mxu0 0
      %5212 = vmatpush1.bf16.msra.mxu0 0
      %5213 = vmatprep.subr.bf16.mxu0 0
      %5214 = vmatpush1.bf16.msra.mxu0 0
      %5215 = vmatprep.mubr.bf16.mxu0 0
      %5216 = vmatmul.mubr.bf16.gmra.mrb[0].mxu0 %v861
      %v5217 = vpop.f32.mrb[0].mxu0
      %v5218 = vadd.f32 %v5170, %v5217
      %v5219 = vpop.f32.mrb[0].mxu0
      %v5220 = vpop.f32.mrb[0].mxu0
      %v5221 = vadd.f32 %v5170, %v5220
      %v5222 = vpop.f32.mrb[0].mxu0
      %5223 = vmatprep.mubr.bf16.mxu0 0
      %5224 = vmatmul.mubr.bf16.gmra.mrb[0].mxu0 %v864
      %v5225 = vpop.f32.mrb[0].mxu0
      %v5226 = vadd.f32 %v5170, %v5225
      %v5227 = vpop.f32.mrb[0].mxu0
      %v5228 = vpop.f32.mrb[0].mxu0
      %v5229 = vadd.f32 %v5170, %v5228
      %v5230 = vpop.f32.mrb[0].mxu0
      %5231 = vmatprep.mubr.bf16.mxu0 0
      %5232 = vmatmul.mubr.bf16.gmra.mrb[0].mxu0 %v867
      %v5233 = vpop.f32.mrb[0].mxu0
      %v5234 = vadd.f32 %v5170, %v5233
      %v5235 = vpop.f32.mrb[0].mxu0
      %v5236 = vpop.f32.mrb[0].mxu0
      %v5237 = vadd.f32 %v5170, %v5236
      %v5238 = vpop.f32.mrb[0].mxu0
      %5239 = vmatprep.mubr.bf16.mxu0 0
      %5240 = vmatmul.mubr.bf16.gmra.mrb[0].mxu0 %v870
      %v5241 = vpop.f32.mrb[0].mxu0
      %v5242 = vadd.f32 %v5170, %v5241
      %v5243 = vpop.f32.mrb[0].mxu0
      %v5244 = vpop.f32.mrb[0].mxu0
      %v5245 = vadd.f32 %v5170, %v5244
      %v5246 = vpop.f32.mrb[0].mxu0
      %5247 = vmatprep.mubr.bf16.mxu0 0
      %5248 = vmatmul.mubr.bf16.gmra.mrb[0].mxu0 %v873
      %v5249 = vpop.f32.mrb[0].mxu0
      %v5250 = vadd.f32 %v5170, %v5249
      %v5251 = vpop.f32.mrb[0].mxu0
      %v5252 = vpop.f32.mrb[0].mxu0
      %v5253 = vadd.f32 %v5170, %v5252
      %v5254 = vpop.f32.mrb[0].mxu0
      %5255 = vmatprep.mubr.bf16.mxu0 0
      %5256 = vmatmul.mubr.bf16.gmra.mrb[0].mxu0 %v876
      %v5257 = vpop.f32.mrb[0].mxu0
      %v5258 = vadd.f32 %v5170, %v5257
      %v5259 = vpop.f32.mrb[0].mxu0
      %v5260 = vpop.f32.mrb[0].mxu0
      %v5261 = vadd.f32 %v5170, %v5260
      %v5262 = vpop.f32.mrb[0].mxu0
      %5263 = vmatprep.mubr.bf16.mxu0 0
      %5264 = vmatmul.mubr.bf16.gmra.mrb[0].mxu0 %v879
      %v5265 = vpop.f32.mrb[0].mxu0
      %v5266 = vadd.f32 %v5170, %v5265
      %v5267 = vpop.f32.mrb[0].mxu0
      %v5268 = vpop.f32.mrb[0].mxu0
      %v5269 = vadd.f32 %v5170, %v5268
      %v5270 = vpop.f32.mrb[0].mxu0
      %5271 = vmatprep.mubr.bf16.mxu0 0
      %5272 = vmatmul.mubr.bf16.gmra.mrb[0].mxu0 %v882
      %v5273 = vpop.f32.mrb[0].mxu0
      %v5274 = vadd.f32 %v5170, %v5273
      %v5275 = vpop.f32.mrb[0].mxu0
      %v5276 = vpop.f32.mrb[0].mxu0
      %v5277 = vadd.f32 %v5170, %v5276
      %v5278 = vpop.f32.mrb[0].mxu0
      %5279 = vdwg.mxu0
      %s5280 = scalar_lea.vmem %s3, 112
      %v5281 = vld [vmem:[%s5280] sm:$0xf]
      %v5282 = vld [vmem:[%s5280 + $0x4] sm:$0xf]
      %v5283 = vld [vmem:[%s5280 + $0x8] sm:$0xf]
      %v5284 = vld [vmem:[%s5280 + $0xc] sm:$0xf]
      %v5285 = vld [vmem:[%s4 + $0x7] sm:$0x1]
      %v5286 = vlaneseq
      %v5287 = vshrl.u32 %v5286, 7
      %v5288 = vsub.s32 0, %v5287
      %v5289 = vrot.slane %v5285, %v5288
      %v5294 = vunpack.c.l.b16 %v5281
      %v5295 = vunpack.c.l.b16 %v5282
      %v5296 = vunpack.c.l.b16 %v5283
      %v5297 = vunpack.c.l.b16 %v5284
      %v5298 = vpack.c.b16 %v5295, %v5294
      %v5299 = vpack.c.b16 %v5297, %v5296
      %5302 = vmatprep.subr.bf16.mxu0 0
      %5303 = vmatpush1.bf16.msra.mxu0 %v5298
      %5304 = vmatprep.subr.bf16.mxu0 0
      %5305 = vmatpush1.bf16.msra.mxu0 %v5299
      %5306 = vmatprep.subr.bf16.mxu0 0
      %5307 = vmatpush1.bf16.msra.mxu0 0
      %5308 = vmatprep.subr.bf16.mxu0 0
      %5309 = vmatpush1.bf16.msra.mxu0 0
      %5310 = vmatprep.subr.bf16.mxu0 0
      %5311 = vmatpush1.bf16.msra.mxu0 0
      %5312 = vmatprep.subr.bf16.mxu0 0
      %5313 = vmatpush1.bf16.msra.mxu0 0
      %5314 = vmatprep.subr.bf16.mxu0 0
      %5315 = vmatpush1.bf16.msra.mxu0 0
      %5316 = vmatprep.subr.bf16.mxu0 0
      %5317 = vmatpush1.bf16.msra.mxu0 0
      %5318 = vmatprep.subr.bf16.mxu0 0
      %5319 = vmatpush1.bf16.msra.mxu0 0
      %5320 = vmatprep.subr.bf16.mxu0 0
      %5321 = vmatpush1.bf16.msra.mxu0 0
      %5322 = vmatprep.subr.bf16.mxu0 0
      %5323 = vmatpush1.bf16.msra.mxu0 0
      %5324 = vmatprep.subr.bf16.mxu0 0
      %5325 = vmatpush1.bf16.msra.mxu0 0
      %5326 = vmatprep.subr.bf16.mxu0 0
      %5327 = vmatpush1.bf16.msra.mxu0 0
      %5328 = vmatprep.subr.bf16.mxu0 0
      %5329 = vmatpush1.bf16.msra.mxu0 0
      %5330 = vmatprep.subr.bf16.mxu0 0
      %5331 = vmatpush1.bf16.msra.mxu0 0
      %5332 = vmatprep.subr.bf16.mxu0 0
      %5333 = vmatpush1.bf16.msra.mxu0 0
      %5334 = vmatprep.mubr.bf16.mxu0 0
      %5335 = vmatmul.mubr.bf16.gmra.mrb[0].mxu0 %v861
      %v5336 = vpop.f32.mrb[0].mxu0
      %v5337 = vadd.f32 %v5289, %v5336
      %v5338 = vpop.f32.mrb[0].mxu0
      %v5339 = vpop.f32.mrb[0].mxu0
      %v5340 = vadd.f32 %v5289, %v5339
      %v5341 = vpop.f32.mrb[0].mxu0
      %5342 = vmatprep.mubr.bf16.mxu0 0
      %5343 = vmatmul.mubr.bf16.gmra.mrb[0].mxu0 %v864
      %v5344 = vpop.f32.mrb[0].mxu0
      %v5345 = vadd.f32 %v5289, %v5344
      %v5346 = vpop.f32.mrb[0].mxu0
      %v5347 = vpop.f32.mrb[0].mxu0
      %v5348 = vadd.f32 %v5289, %v5347
      %v5349 = vpop.f32.mrb[0].mxu0
      %5350 = vmatprep.mubr.bf16.mxu0 0
      %5351 = vmatmul.mubr.bf16.gmra.mrb[0].mxu0 %v867
      %v5352 = vpop.f32.mrb[0].mxu0
      %v5353 = vadd.f32 %v5289, %v5352
      %v5354 = vpop.f32.mrb[0].mxu0
      %v5355 = vpop.f32.mrb[0].mxu0
      %v5356 = vadd.f32 %v5289, %v5355
      %v5357 = vpop.f32.mrb[0].mxu0
      %5358 = vmatprep.mubr.bf16.mxu0 0
      %5359 = vmatmul.mubr.bf16.gmra.mrb[0].mxu0 %v870
      %v5360 = vpop.f32.mrb[0].mxu0
      %v5361 = vadd.f32 %v5289, %v5360
      %v5362 = vpop.f32.mrb[0].mxu0
      %v5363 = vpop.f32.mrb[0].mxu0
      %v5364 = vadd.f32 %v5289, %v5363
      %v5365 = vpop.f32.mrb[0].mxu0
      %5366 = vmatprep.mubr.bf16.mxu0 0
      %5367 = vmatmul.mubr.bf16.gmra.mrb[0].mxu0 %v873
      %v5368 = vpop.f32.mrb[0].mxu0
      %v5369 = vadd.f32 %v5289, %v5368
      %v5370 = vpop.f32.mrb[0].mxu0
      %v5371 = vpop.f32.mrb[0].mxu0
      %v5372 = vadd.f32 %v5289, %v5371
      %v5373 = vpop.f32.mrb[0].mxu0
      %5374 = vmatprep.mubr.bf16.mxu0 0
      %5375 = vmatmul.mubr.bf16.gmra.mrb[0].mxu0 %v876
      %v5376 = vpop.f32.mrb[0].mxu0
      %v5377 = vadd.f32 %v5289, %v5376
      %v5378 = vpop.f32.mrb[0].mxu0
      %v5379 = vpop.f32.mrb[0].mxu0
      %v5380 = vadd.f32 %v5289, %v5379
      %v5381 = vpop.f32.mrb[0].mxu0
      %5382 = vmatprep.mubr.bf16.mxu0 0
      %5383 = vmatmul.mubr.bf16.gmra.mrb[0].mxu0 %v879
      %v5384 = vpop.f32.mrb[0].mxu0
      %v5385 = vadd.f32 %v5289, %v5384
      %v5386 = vpop.f32.mrb[0].mxu0
      %v5387 = vpop.f32.mrb[0].mxu0
      %v5388 = vadd.f32 %v5289, %v5387
      %v5389 = vpop.f32.mrb[0].mxu0
      %5390 = vmatprep.mubr.bf16.mxu0 0
      %5391 = vmatmul.mubr.bf16.gmra.mrb[0].mxu0 %v882
      %v5392 = vpop.f32.mrb[0].mxu0
      %v5393 = vadd.f32 %v5289, %v5392
      %v5394 = vpop.f32.mrb[0].mxu0
      %v5395 = vpop.f32.mrb[0].mxu0
      %v5396 = vadd.f32 %v5289, %v5395
      %v5397 = vpop.f32.mrb[0].mxu0
      %5398 = vdwg.mxu0
      %s5399 = scalar_lea.vmem %s3, 176
      %v5400 = vld [vmem:[%s5399] sm:$0xf]
      %v5401 = vld [vmem:[%s5399 + $0x4] sm:$0xf]
      %v5402 = vld [vmem:[%s5399 + $0x8] sm:$0xf]
      %v5403 = vld [vmem:[%s5399 + $0xc] sm:$0xf]
      %v5404 = vld [vmem:[%s4 + $0xb] sm:$0x1]
      %v5405 = vlaneseq
      %v5406 = vshrl.u32 %v5405, 7
      %v5407 = vsub.s32 0, %v5406
      %v5408 = vrot.slane %v5404, %v5407
      %v5413 = vunpack.c.l.b16 %v5400
      %v5414 = vunpack.c.l.b16 %v5401
      %v5415 = vunpack.c.l.b16 %v5402
      %v5416 = vunpack.c.l.b16 %v5403
      %v5417 = vpack.c.b16 %v5414, %v5413
      %v5418 = vpack.c.b16 %v5416, %v5415
      %5421 = vmatprep.subr.bf16.mxu0 0
      %5422 = vmatpush1.bf16.msra.mxu0 %v5417
      %5423 = vmatprep.subr.bf16.mxu0 0
      %5424 = vmatpush1.bf16.msra.mxu0 %v5418
      %5425 = vmatprep.subr.bf16.mxu0 0
      %5426 = vmatpush1.bf16.msra.mxu0 0
      %5427 = vmatprep.subr.bf16.mxu0 0
      %5428 = vmatpush1.bf16.msra.mxu0 0
      %5429 = vmatprep.subr.bf16.mxu0 0
      %5430 = vmatpush1.bf16.msra.mxu0 0
      %5431 = vmatprep.subr.bf16.mxu0 0
      %5432 = vmatpush1.bf16.msra.mxu0 0
      %5433 = vmatprep.subr.bf16.mxu0 0
      %5434 = vmatpush1.bf16.msra.mxu0 0
      %5435 = vmatprep.subr.bf16.mxu0 0
      %5436 = vmatpush1.bf16.msra.mxu0 0
      %5437 = vmatprep.subr.bf16.mxu0 0
      %5438 = vmatpush1.bf16.msra.mxu0 0
      %5439 = vmatprep.subr.bf16.mxu0 0
      %5440 = vmatpush1.bf16.msra.mxu0 0
      %5441 = vmatprep.subr.bf16.mxu0 0
      %5442 = vmatpush1.bf16.msra.mxu0 0
      %5443 = vmatprep.subr.bf16.mxu0 0
      %5444 = vmatpush1.bf16.msra.mxu0 0
      %5445 = vmatprep.subr.bf16.mxu0 0
      %5446 = vmatpush1.bf16.msra.mxu0 0
      %5447 = vmatprep.subr.bf16.mxu0 0
      %5448 = vmatpush1.bf16.msra.mxu0 0
      %5449 = vmatprep.subr.bf16.mxu0 0
      %5450 = vmatpush1.bf16.msra.mxu0 0
      %5451 = vmatprep.subr.bf16.mxu0 0
      %5452 = vmatpush1.bf16.msra.mxu0 0
      %5453 = vmatprep.mubr.bf16.mxu0 0
      %5454 = vmatmul.mubr.bf16.gmra.mrb[0].mxu0 %v861
      %v5455 = vpop.f32.mrb[0].mxu0
      %v5456 = vadd.f32 %v5408, %v5455
      %v5457 = vpop.f32.mrb[0].mxu0
      %v5458 = vpop.f32.mrb[0].mxu0
      %v5459 = vadd.f32 %v5408, %v5458
      %v5460 = vpop.f32.mrb[0].mxu0
      %5461 = vmatprep.mubr.bf16.mxu0 0
      %5462 = vmatmul.mubr.bf16.gmra.mrb[0].mxu0 %v864
      %v5463 = vpop.f32.mrb[0].mxu0
      %v5464 = vadd.f32 %v5408, %v5463
      %v5465 = vpop.f32.mrb[0].mxu0
      %v5466 = vpop.f32.mrb[0].mxu0
      %v5467 = vadd.f32 %v5408, %v5466
      %v5468 = vpop.f32.mrb[0].mxu0
      %5469 = vmatprep.mubr.bf16.mxu0 0
      %5470 = vmatmul.mubr.bf16.gmra.mrb[0].mxu0 %v867
      %v5471 = vpop.f32.mrb[0].mxu0
      %v5472 = vadd.f32 %v5408, %v5471
      %v5473 = vpop.f32.mrb[0].mxu0
      %v5474 = vpop.f32.mrb[0].mxu0
      %v5475 = vadd.f32 %v5408, %v5474
      %v5476 = vpop.f32.mrb[0].mxu0
      %5477 = vmatprep.mubr.bf16.mxu0 0
      %5478 = vmatmul.mubr.bf16.gmra.mrb[0].mxu0 %v870
      %v5479 = vpop.f32.mrb[0].mxu0
      %v5480 = vadd.f32 %v5408, %v5479
      %v5481 = vpop.f32.mrb[0].mxu0
      %v5482 = vpop.f32.mrb[0].mxu0
      %v5483 = vadd.f32 %v5408, %v5482
      %v5484 = vpop.f32.mrb[0].mxu0
      %5485 = vmatprep.mubr.bf16.mxu0 0
      %5486 = vmatmul.mubr.bf16.gmra.mrb[0].mxu0 %v873
      %v5487 = vpop.f32.mrb[0].mxu0
      %v5488 = vadd.f32 %v5408, %v5487
      %v5489 = vpop.f32.mrb[0].mxu0
      %v5490 = vpop.f32.mrb[0].mxu0
      %v5491 = vadd.f32 %v5408, %v5490
      %v5492 = vpop.f32.mrb[0].mxu0
      %5493 = vmatprep.mubr.bf16.mxu0 0
      %5494 = vmatmul.mubr.bf16.gmra.mrb[0].mxu0 %v876
      %v5495 = vpop.f32.mrb[0].mxu0
      %v5496 = vadd.f32 %v5408, %v5495
      %v5497 = vpop.f32.mrb[0].mxu0
      %v5498 = vpop.f32.mrb[0].mxu0
      %v5499 = vadd.f32 %v5408, %v5498
      %v5500 = vpop.f32.mrb[0].mxu0
      %5501 = vmatprep.mubr.bf16.mxu0 0
      %5502 = vmatmul.mubr.bf16.gmra.mrb[0].mxu0 %v879
      %v5503 = vpop.f32.mrb[0].mxu0
      %v5504 = vadd.f32 %v5408, %v5503
      %v5505 = vpop.f32.mrb[0].mxu0
      %v5506 = vpop.f32.mrb[0].mxu0
      %v5507 = vadd.f32 %v5408, %v5506
      %v5508 = vpop.f32.mrb[0].mxu0
      %5509 = vmatprep.mubr.bf16.mxu0 0
      %5510 = vmatmul.mubr.bf16.gmra.mrb[0].mxu0 %v882
      %v5511 = vpop.f32.mrb[0].mxu0
      %v5512 = vadd.f32 %v5408, %v5511
      %v5513 = vpop.f32.mrb[0].mxu0
      %v5514 = vpop.f32.mrb[0].mxu0
      %v5515 = vadd.f32 %v5408, %v5514
      %v5516 = vpop.f32.mrb[0].mxu0
      %5517 = vdwg.mxu0
      %v5518 = vpack.c.bf16 %v5221, %v5218
      %v5519 = vpack.c.bf16 %v5229, %v5226
      %v5520 = vpack.c.bf16 %v5237, %v5234
      %v5521 = vpack.c.bf16 %v5245, %v5242
      %v5522 = vpack.c.bf16 %v5253, %v5250
      %v5523 = vpack.c.bf16 %v5261, %v5258
      %v5524 = vpack.c.bf16 %v5269, %v5266
      %v5525 = vpack.c.bf16 %v5277, %v5274
      %v5526 = vpack.c.bf16 %v5340, %v5337
      %v5527 = vpack.c.bf16 %v5348, %v5345
      %v5528 = vpack.c.bf16 %v5356, %v5353
      %v5529 = vpack.c.bf16 %v5364, %v5361
      %v5530 = vpack.c.bf16 %v5372, %v5369
      %v5531 = vpack.c.bf16 %v5380, %v5377
      %v5532 = vpack.c.bf16 %v5388, %v5385
      %v5533 = vpack.c.bf16 %v5396, %v5393
      %v5535 = vsel %vm1235, %v5518, 0
      %v5538 = vsel %vm1235, %v5526, 0
      %5540 = vmatprep.subr.bf16.mxu0 0
      %5541 = vmatpush1.bf16.xpose.msra.mxu0 %v5538
      %5542 = vmatprep.subr.bf16.mxu0 0
      %5543 = vmatpush1.bf16.xpose.msra.mxu0 0
      %5544 = vmatprep.subr.bf16.mxu0 0
      %5545 = vmatpush1.bf16.xpose.msra.mxu0 0
      %5546 = vmatprep.subr.bf16.mxu0 0
      %5547 = vmatpush1.bf16.xpose.msra.mxu0 0
      %5548 = vmatprep.subr.bf16.mxu0 0
      %5549 = vmatpush1.bf16.xpose.msra.mxu0 0
      %5550 = vmatprep.subr.bf16.mxu0 0
      %5551 = vmatpush1.bf16.xpose.msra.mxu0 0
      %5552 = vmatprep.subr.bf16.mxu0 0
      %5553 = vmatpush1.bf16.xpose.msra.mxu0 0
      %5554 = vmatprep.subr.bf16.mxu0 0
      %5555 = vmatpush1.bf16.xpose.msra.mxu0 0
      %5556 = vmatprep.subr.bf16.mxu0 0
      %5557 = vmatpush1.bf16.xpose.msra.mxu0 0
      %5558 = vmatprep.subr.bf16.mxu0 0
      %5559 = vmatpush1.bf16.xpose.msra.mxu0 0
      %5560 = vmatprep.subr.bf16.mxu0 0
      %5561 = vmatpush1.bf16.xpose.msra.mxu0 0
      %5562 = vmatprep.subr.bf16.mxu0 0
      %5563 = vmatpush1.bf16.xpose.msra.mxu0 0
      %5564 = vmatprep.subr.bf16.mxu0 0
      %5565 = vmatpush1.bf16.xpose.msra.mxu0 0
      %5566 = vmatprep.subr.bf16.mxu0 0
      %5567 = vmatpush1.bf16.xpose.msra.mxu0 0
      %5568 = vmatprep.subr.bf16.mxu0 0
      %5569 = vmatpush1.bf16.xpose.msra.mxu0 0
      %5570 = vmatprep.subr.bf16.mxu0 0
      %5571 = vmatpush1.bf16.xpose.msra.mxu0 0
      %5572 = vmatprep.mubr.bf16.mxu0 0
      %5573 = vmatmul.mubr.bf16.gmra.mrb[0].mxu0 %v5535
      %v5574 = vpop.f32.mrb[0].mxu0
      %v5575 = vadd.f32 0.0, %v5574
      %v5576 = vpop.f32.mrb[0].mxu0
      %v5577 = vpop.f32.mrb[0].mxu0
      %v5578 = vadd.f32 0.0, %v5577
      %v5579 = vpop.f32.mrb[0].mxu0
      %5580 = vdwg.mxu0
      %v5582 = vsel %vm1235, %v5519, 0
      %v5585 = vsel %vm1235, %v5527, 0
      %5587 = vmatprep.subr.bf16.mxu0 0
      %5588 = vmatpush1.bf16.xpose.msra.mxu0 %v5585
      %5589 = vmatprep.subr.bf16.mxu0 0
      %5590 = vmatpush1.bf16.xpose.msra.mxu0 0
      %5591 = vmatprep.subr.bf16.mxu0 0
      %5592 = vmatpush1.bf16.xpose.msra.mxu0 0
      %5593 = vmatprep.subr.bf16.mxu0 0
      %5594 = vmatpush1.bf16.xpose.msra.mxu0 0
      %5595 = vmatprep.subr.bf16.mxu0 0
      %5596 = vmatpush1.bf16.xpose.msra.mxu0 0
      %5597 = vmatprep.subr.bf16.mxu0 0
      %5598 = vmatpush1.bf16.xpose.msra.mxu0 0
      %5599 = vmatprep.subr.bf16.mxu0 0
      %5600 = vmatpush1.bf16.xpose.msra.mxu0 0
      %5601 = vmatprep.subr.bf16.mxu0 0
      %5602 = vmatpush1.bf16.xpose.msra.mxu0 0
      %5603 = vmatprep.subr.bf16.mxu0 0
      %5604 = vmatpush1.bf16.xpose.msra.mxu0 0
      %5605 = vmatprep.subr.bf16.mxu0 0
      %5606 = vmatpush1.bf16.xpose.msra.mxu0 0
      %5607 = vmatprep.subr.bf16.mxu0 0
      %5608 = vmatpush1.bf16.xpose.msra.mxu0 0
      %5609 = vmatprep.subr.bf16.mxu0 0
      %5610 = vmatpush1.bf16.xpose.msra.mxu0 0
      %5611 = vmatprep.subr.bf16.mxu0 0
      %5612 = vmatpush1.bf16.xpose.msra.mxu0 0
      %5613 = vmatprep.subr.bf16.mxu0 0
      %5614 = vmatpush1.bf16.xpose.msra.mxu0 0
      %5615 = vmatprep.subr.bf16.mxu0 0
      %5616 = vmatpush1.bf16.xpose.msra.mxu0 0
      %5617 = vmatprep.subr.bf16.mxu0 0
      %5618 = vmatpush1.bf16.xpose.msra.mxu0 0
      %5619 = vmatprep.mubr.bf16.mxu0 0
      %5620 = vmatmul.mubr.bf16.gmra.mrb[0].mxu0 %v5582
      %v5621 = vpop.f32.mrb[0].mxu0
      %v5622 = vadd.f32 0.0, %v5621
      %v5623 = vpop.f32.mrb[0].mxu0
      %v5624 = vpop.f32.mrb[0].mxu0
      %v5625 = vadd.f32 0.0, %v5624
      %v5626 = vpop.f32.mrb[0].mxu0
      %5627 = vdwg.mxu0
      %v5629 = vsel %vm1235, %v5520, 0
      %v5632 = vsel %vm1235, %v5528, 0
      %5634 = vmatprep.subr.bf16.mxu0 0
      %5635 = vmatpush1.bf16.xpose.msra.mxu0 %v5632
      %5636 = vmatprep.subr.bf16.mxu0 0
      %5637 = vmatpush1.bf16.xpose.msra.mxu0 0
      %5638 = vmatprep.subr.bf16.mxu0 0
      %5639 = vmatpush1.bf16.xpose.msra.mxu0 0
      %5640 = vmatprep.subr.bf16.mxu0 0
      %5641 = vmatpush1.bf16.xpose.msra.mxu0 0
      %5642 = vmatprep.subr.bf16.mxu0 0
      %5643 = vmatpush1.bf16.xpose.msra.mxu0 0
      %5644 = vmatprep.subr.bf16.mxu0 0
      %5645 = vmatpush1.bf16.xpose.msra.mxu0 0
      %5646 = vmatprep.subr.bf16.mxu0 0
      %5647 = vmatpush1.bf16.xpose.msra.mxu0 0
      %5648 = vmatprep.subr.bf16.mxu0 0
      %5649 = vmatpush1.bf16.xpose.msra.mxu0 0
      %5650 = vmatprep.subr.bf16.mxu0 0
      %5651 = vmatpush1.bf16.xpose.msra.mxu0 0
      %5652 = vmatprep.subr.bf16.mxu0 0
      %5653 = vmatpush1.bf16.xpose.msra.mxu0 0
      %5654 = vmatprep.subr.bf16.mxu0 0
      %5655 = vmatpush1.bf16.xpose.msra.mxu0 0
      %5656 = vmatprep.subr.bf16.mxu0 0
      %5657 = vmatpush1.bf16.xpose.msra.mxu0 0
      %5658 = vmatprep.subr.bf16.mxu0 0
      %5659 = vmatpush1.bf16.xpose.msra.mxu0 0
      %5660 = vmatprep.subr.bf16.mxu0 0
      %5661 = vmatpush1.bf16.xpose.msra.mxu0 0
      %5662 = vmatprep.subr.bf16.mxu0 0
      %5663 = vmatpush1.bf16.xpose.msra.mxu0 0
      %5664 = vmatprep.subr.bf16.mxu0 0
      %5665 = vmatpush1.bf16.xpose.msra.mxu0 0
      %5666 = vmatprep.mubr.bf16.mxu0 0
      %5667 = vmatmul.mubr.bf16.gmra.mrb[0].mxu0 %v5629
      %v5668 = vpop.f32.mrb[0].mxu0
      %v5669 = vadd.f32 0.0, %v5668
      %v5670 = vpop.f32.mrb[0].mxu0
      %v5671 = vpop.f32.mrb[0].mxu0
      %v5672 = vadd.f32 0.0, %v5671
      %v5673 = vpop.f32.mrb[0].mxu0
      %5674 = vdwg.mxu0
      %v5676 = vsel %vm1235, %v5521, 0
      %v5679 = vsel %vm1235, %v5529, 0
      %5681 = vmatprep.subr.bf16.mxu0 0
      %5682 = vmatpush1.bf16.xpose.msra.mxu0 %v5679
      %5683 = vmatprep.subr.bf16.mxu0 0
      %5684 = vmatpush1.bf16.xpose.msra.mxu0 0
      %5685 = vmatprep.subr.bf16.mxu0 0
      %5686 = vmatpush1.bf16.xpose.msra.mxu0 0
      %5687 = vmatprep.subr.bf16.mxu0 0
      %5688 = vmatpush1.bf16.xpose.msra.mxu0 0
      %5689 = vmatprep.subr.bf16.mxu0 0
      %5690 = vmatpush1.bf16.xpose.msra.mxu0 0
      %5691 = vmatprep.subr.bf16.mxu0 0
      %5692 = vmatpush1.bf16.xpose.msra.mxu0 0
      %5693 = vmatprep.subr.bf16.mxu0 0
      %5694 = vmatpush1.bf16.xpose.msra.mxu0 0
      %5695 = vmatprep.subr.bf16.mxu0 0
      %5696 = vmatpush1.bf16.xpose.msra.mxu0 0
      %5697 = vmatprep.subr.bf16.mxu0 0
      %5698 = vmatpush1.bf16.xpose.msra.mxu0 0
      %5699 = vmatprep.subr.bf16.mxu0 0
      %5700 = vmatpush1.bf16.xpose.msra.mxu0 0
      %5701 = vmatprep.subr.bf16.mxu0 0
      %5702 = vmatpush1.bf16.xpose.msra.mxu0 0
      %5703 = vmatprep.subr.bf16.mxu0 0
      %5704 = vmatpush1.bf16.xpose.msra.mxu0 0
      %5705 = vmatprep.subr.bf16.mxu0 0
      %5706 = vmatpush1.bf16.xpose.msra.mxu0 0
      %5707 = vmatprep.subr.bf16.mxu0 0
      %5708 = vmatpush1.bf16.xpose.msra.mxu0 0
      %5709 = vmatprep.subr.bf16.mxu0 0
      %5710 = vmatpush1.bf16.xpose.msra.mxu0 0
      %5711 = vmatprep.subr.bf16.mxu0 0
      %5712 = vmatpush1.bf16.xpose.msra.mxu0 0
      %5713 = vmatprep.mubr.bf16.mxu0 0
      %5714 = vmatmul.mubr.bf16.gmra.mrb[0].mxu0 %v5676
      %v5715 = vpop.f32.mrb[0].mxu0
      %v5716 = vadd.f32 0.0, %v5715
      %v5717 = vpop.f32.mrb[0].mxu0
      %v5718 = vpop.f32.mrb[0].mxu0
      %v5719 = vadd.f32 0.0, %v5718
      %v5720 = vpop.f32.mrb[0].mxu0
      %5721 = vdwg.mxu0
      %v5723 = vsel %vm1235, %v5522, 0
      %v5726 = vsel %vm1235, %v5530, 0
      %5728 = vmatprep.subr.bf16.mxu0 0
      %5729 = vmatpush1.bf16.xpose.msra.mxu0 %v5726
      %5730 = vmatprep.subr.bf16.mxu0 0
      %5731 = vmatpush1.bf16.xpose.msra.mxu0 0
      %5732 = vmatprep.subr.bf16.mxu0 0
      %5733 = vmatpush1.bf16.xpose.msra.mxu0 0
      %5734 = vmatprep.subr.bf16.mxu0 0
      %5735 = vmatpush1.bf16.xpose.msra.mxu0 0
      %5736 = vmatprep.subr.bf16.mxu0 0
      %5737 = vmatpush1.bf16.xpose.msra.mxu0 0
      %5738 = vmatprep.subr.bf16.mxu0 0
      %5739 = vmatpush1.bf16.xpose.msra.mxu0 0
      %5740 = vmatprep.subr.bf16.mxu0 0
      %5741 = vmatpush1.bf16.xpose.msra.mxu0 0
      %5742 = vmatprep.subr.bf16.mxu0 0
      %5743 = vmatpush1.bf16.xpose.msra.mxu0 0
      %5744 = vmatprep.subr.bf16.mxu0 0
      %5745 = vmatpush1.bf16.xpose.msra.mxu0 0
      %5746 = vmatprep.subr.bf16.mxu0 0
      %5747 = vmatpush1.bf16.xpose.msra.mxu0 0
      %5748 = vmatprep.subr.bf16.mxu0 0
      %5749 = vmatpush1.bf16.xpose.msra.mxu0 0
      %5750 = vmatprep.subr.bf16.mxu0 0
      %5751 = vmatpush1.bf16.xpose.msra.mxu0 0
      %5752 = vmatprep.subr.bf16.mxu0 0
      %5753 = vmatpush1.bf16.xpose.msra.mxu0 0
      %5754 = vmatprep.subr.bf16.mxu0 0
      %5755 = vmatpush1.bf16.xpose.msra.mxu0 0
      %5756 = vmatprep.subr.bf16.mxu0 0
      %5757 = vmatpush1.bf16.xpose.msra.mxu0 0
      %5758 = vmatprep.subr.bf16.mxu0 0
      %5759 = vmatpush1.bf16.xpose.msra.mxu0 0
      %5760 = vmatprep.mubr.bf16.mxu0 0
      %5761 = vmatmul.mubr.bf16.gmra.mrb[0].mxu0 %v5723
      %v5762 = vpop.f32.mrb[0].mxu0
      %v5763 = vadd.f32 0.0, %v5762
      %v5764 = vpop.f32.mrb[0].mxu0
      %v5765 = vpop.f32.mrb[0].mxu0
      %v5766 = vadd.f32 0.0, %v5765
      %v5767 = vpop.f32.mrb[0].mxu0
      %5768 = vdwg.mxu0
      %v5770 = vsel %vm1235, %v5523, 0
      %v5773 = vsel %vm1235, %v5531, 0
      %5775 = vmatprep.subr.bf16.mxu0 0
      %5776 = vmatpush1.bf16.xpose.msra.mxu0 %v5773
      %5777 = vmatprep.subr.bf16.mxu0 0
      %5778 = vmatpush1.bf16.xpose.msra.mxu0 0
      %5779 = vmatprep.subr.bf16.mxu0 0
      %5780 = vmatpush1.bf16.xpose.msra.mxu0 0
      %5781 = vmatprep.subr.bf16.mxu0 0
      %5782 = vmatpush1.bf16.xpose.msra.mxu0 0
      %5783 = vmatprep.subr.bf16.mxu0 0
      %5784 = vmatpush1.bf16.xpose.msra.mxu0 0
      %5785 = vmatprep.subr.bf16.mxu0 0
      %5786 = vmatpush1.bf16.xpose.msra.mxu0 0
      %5787 = vmatprep.subr.bf16.mxu0 0
      %5788 = vmatpush1.bf16.xpose.msra.mxu0 0
      %5789 = vmatprep.subr.bf16.mxu0 0
      %5790 = vmatpush1.bf16.xpose.msra.mxu0 0
      %5791 = vmatprep.subr.bf16.mxu0 0
      %5792 = vmatpush1.bf16.xpose.msra.mxu0 0
      %5793 = vmatprep.subr.bf16.mxu0 0
      %5794 = vmatpush1.bf16.xpose.msra.mxu0 0
      %5795 = vmatprep.subr.bf16.mxu0 0
      %5796 = vmatpush1.bf16.xpose.msra.mxu0 0
      %5797 = vmatprep.subr.bf16.mxu0 0
      %5798 = vmatpush1.bf16.xpose.msra.mxu0 0
      %5799 = vmatprep.subr.bf16.mxu0 0
      %5800 = vmatpush1.bf16.xpose.msra.mxu0 0
      %5801 = vmatprep.subr.bf16.mxu0 0
      %5802 = vmatpush1.bf16.xpose.msra.mxu0 0
      %5803 = vmatprep.subr.bf16.mxu0 0
      %5804 = vmatpush1.bf16.xpose.msra.mxu0 0
      %5805 = vmatprep.subr.bf16.mxu0 0
      %5806 = vmatpush1.bf16.xpose.msra.mxu0 0
      %5807 = vmatprep.mubr.bf16.mxu0 0
      %5808 = vmatmul.mubr.bf16.gmra.mrb[0].mxu0 %v5770
      %v5809 = vpop.f32.mrb[0].mxu0
      %v5810 = vadd.f32 0.0, %v5809
      %v5811 = vpop.f32.mrb[0].mxu0
      %v5812 = vpop.f32.mrb[0].mxu0
      %v5813 = vadd.f32 0.0, %v5812
      %v5814 = vpop.f32.mrb[0].mxu0
      %5815 = vdwg.mxu0
      %v5817 = vsel %vm1235, %v5524, 0
      %v5820 = vsel %vm1235, %v5532, 0
      %5822 = vmatprep.subr.bf16.mxu0 0
      %5823 = vmatpush1.bf16.xpose.msra.mxu0 %v5820
      %5824 = vmatprep.subr.bf16.mxu0 0
      %5825 = vmatpush1.bf16.xpose.msra.mxu0 0
      %5826 = vmatprep.subr.bf16.mxu0 0
      %5827 = vmatpush1.bf16.xpose.msra.mxu0 0
      %5828 = vmatprep.subr.bf16.mxu0 0
      %5829 = vmatpush1.bf16.xpose.msra.mxu0 0
      %5830 = vmatprep.subr.bf16.mxu0 0
      %5831 = vmatpush1.bf16.xpose.msra.mxu0 0
      %5832 = vmatprep.subr.bf16.mxu0 0
      %5833 = vmatpush1.bf16.xpose.msra.mxu0 0
      %5834 = vmatprep.subr.bf16.mxu0 0
      %5835 = vmatpush1.bf16.xpose.msra.mxu0 0
      %5836 = vmatprep.subr.bf16.mxu0 0
      %5837 = vmatpush1.bf16.xpose.msra.mxu0 0
      %5838 = vmatprep.subr.bf16.mxu0 0
      %5839 = vmatpush1.bf16.xpose.msra.mxu0 0
      %5840 = vmatprep.subr.bf16.mxu0 0
      %5841 = vmatpush1.bf16.xpose.msra.mxu0 0
      %5842 = vmatprep.subr.bf16.mxu0 0
      %5843 = vmatpush1.bf16.xpose.msra.mxu0 0
      %5844 = vmatprep.subr.bf16.mxu0 0
      %5845 = vmatpush1.bf16.xpose.msra.mxu0 0
      %5846 = vmatprep.subr.bf16.mxu0 0
      %5847 = vmatpush1.bf16.xpose.msra.mxu0 0
      %5848 = vmatprep.subr.bf16.mxu0 0
      %5849 = vmatpush1.bf16.xpose.msra.mxu0 0
      %5850 = vmatprep.subr.bf16.mxu0 0
      %5851 = vmatpush1.bf16.xpose.msra.mxu0 0
      %5852 = vmatprep.subr.bf16.mxu0 0
      %5853 = vmatpush1.bf16.xpose.msra.mxu0 0
      %5854 = vmatprep.mubr.bf16.mxu0 0
      %5855 = vmatmul.mubr.bf16.gmra.mrb[0].mxu0 %v5817
      %v5856 = vpop.f32.mrb[0].mxu0
      %v5857 = vadd.f32 0.0, %v5856
      %v5858 = vpop.f32.mrb[0].mxu0
      %v5859 = vpop.f32.mrb[0].mxu0
      %v5860 = vadd.f32 0.0, %v5859
      %v5861 = vpop.f32.mrb[0].mxu0
      %5862 = vdwg.mxu0
      %v5864 = vsel %vm1235, %v5525, 0
      %v5867 = vsel %vm1235, %v5533, 0
      %5869 = vmatprep.subr.bf16.mxu0 0
      %5870 = vmatpush1.bf16.xpose.msra.mxu0 %v5867
      %5871 = vmatprep.subr.bf16.mxu0 0
      %5872 = vmatpush1.bf16.xpose.msra.mxu0 0
      %5873 = vmatprep.subr.bf16.mxu0 0
      %5874 = vmatpush1.bf16.xpose.msra.mxu0 0
      %5875 = vmatprep.subr.bf16.mxu0 0
      %5876 = vmatpush1.bf16.xpose.msra.mxu0 0
      %5877 = vmatprep.subr.bf16.mxu0 0
      %5878 = vmatpush1.bf16.xpose.msra.mxu0 0
      %5879 = vmatprep.subr.bf16.mxu0 0
      %5880 = vmatpush1.bf16.xpose.msra.mxu0 0
      %5881 = vmatprep.subr.bf16.mxu0 0
      %5882 = vmatpush1.bf16.xpose.msra.mxu0 0
      %5883 = vmatprep.subr.bf16.mxu0 0
      %5884 = vmatpush1.bf16.xpose.msra.mxu0 0
      %5885 = vmatprep.subr.bf16.mxu0 0
      %5886 = vmatpush1.bf16.xpose.msra.mxu0 0
      %5887 = vmatprep.subr.bf16.mxu0 0
      %5888 = vmatpush1.bf16.xpose.msra.mxu0 0
      %5889 = vmatprep.subr.bf16.mxu0 0
      %5890 = vmatpush1.bf16.xpose.msra.mxu0 0
      %5891 = vmatprep.subr.bf16.mxu0 0
      %5892 = vmatpush1.bf16.xpose.msra.mxu0 0
      %5893 = vmatprep.subr.bf16.mxu0 0
      %5894 = vmatpush1.bf16.xpose.msra.mxu0 0
      %5895 = vmatprep.subr.bf16.mxu0 0
      %5896 = vmatpush1.bf16.xpose.msra.mxu0 0
      %5897 = vmatprep.subr.bf16.mxu0 0
      %5898 = vmatpush1.bf16.xpose.msra.mxu0 0
      %5899 = vmatprep.subr.bf16.mxu0 0
      %5900 = vmatpush1.bf16.xpose.msra.mxu0 0
      %5901 = vmatprep.mubr.bf16.mxu0 0
      %5902 = vmatmul.mubr.bf16.gmra.mrb[0].mxu0 %v5864
      %v5903 = vpop.f32.mrb[0].mxu0
      %v5904 = vadd.f32 0.0, %v5903
      %v5905 = vpop.f32.mrb[0].mxu0
      %v5906 = vpop.f32.mrb[0].mxu0
      %v5907 = vadd.f32 0.0, %v5906
      %v5908 = vpop.f32.mrb[0].mxu0
      %5909 = vdwg.mxu0
      %v5910 = vsel %vm1612, %v5575, -inf
      %5911 = vmax.xlane.f32.xlu0 %v5910
      %v5912 = vpop.xlane.xlu0 %5911
      %v5913 = vsel %vm1612, %v5578, -inf
      %5914 = vmax.xlane.f32.xlu0 %v5913
      %v5915 = vpop.xlane.xlu0 %5914
      %v5916 = vsel %vm1612, %v5622, -inf
      %5917 = vmax.xlane.f32.xlu0 %v5916
      %v5918 = vpop.xlane.xlu0 %5917
      %v5919 = vsel %vm1612, %v5625, -inf
      %5920 = vmax.xlane.f32.xlu0 %v5919
      %v5921 = vpop.xlane.xlu0 %5920
      %v5922 = vsel %vm1612, %v5669, -inf
      %5923 = vmax.xlane.f32.xlu0 %v5922
      %v5924 = vpop.xlane.xlu0 %5923
      %v5925 = vsel %vm1612, %v5672, -inf
      %5926 = vmax.xlane.f32.xlu0 %v5925
      %v5927 = vpop.xlane.xlu0 %5926
      %v5928 = vsel %vm1612, %v5716, -inf
      %5929 = vmax.xlane.f32.xlu0 %v5928
      %v5930 = vpop.xlane.xlu0 %5929
      %v5931 = vsel %vm1612, %v5719, -inf
      %5932 = vmax.xlane.f32.xlu0 %v5931
      %v5933 = vpop.xlane.xlu0 %5932
      %v5934 = vsel %vm1612, %v5763, -inf
      %5935 = vmax.xlane.f32.xlu0 %v5934
      %v5936 = vpop.xlane.xlu0 %5935
      %v5937 = vsel %vm1612, %v5766, -inf
      %5938 = vmax.xlane.f32.xlu0 %v5937
      %v5939 = vpop.xlane.xlu0 %5938
      %v5940 = vsel %vm1612, %v5810, -inf
      %5941 = vmax.xlane.f32.xlu0 %v5940
      %v5942 = vpop.xlane.xlu0 %5941
      %v5943 = vsel %vm1612, %v5813, -inf
      %5944 = vmax.xlane.f32.xlu0 %v5943
      %v5945 = vpop.xlane.xlu0 %5944
      %v5946 = vsel %vm1612, %v5857, -inf
      %5947 = vmax.xlane.f32.xlu0 %v5946
      %v5948 = vpop.xlane.xlu0 %5947
      %v5949 = vsel %vm1612, %v5860, -inf
      %5950 = vmax.xlane.f32.xlu0 %v5949
      %v5951 = vpop.xlane.xlu0 %5950
      %v5952 = vsel %vm1612, %v5904, -inf
      %5953 = vmax.xlane.f32.xlu0 %v5952
      %v5954 = vpop.xlane.xlu0 %5953
      %v5955 = vsel %vm1612, %v5907, -inf
      %5956 = vmax.xlane.f32.xlu0 %v5955
      %v5957 = vpop.xlane.xlu0 %5956
      %v5958 = vsub.f32 %v5575, %v5912
      %v5959 = vsub.f32 %v5578, %v5915
      %v5960 = vsub.f32 %v5622, %v5918
      %v5961 = vsub.f32 %v5625, %v5921
      %v5962 = vsub.f32 %v5669, %v5924
      %v5963 = vsub.f32 %v5672, %v5927
      %v5964 = vsub.f32 %v5716, %v5930
      %v5965 = vsub.f32 %v5719, %v5933
      %v5966 = vsub.f32 %v5763, %v5936
      %v5967 = vsub.f32 %v5766, %v5939
      %v5968 = vsub.f32 %v5810, %v5942
      %v5969 = vsub.f32 %v5813, %v5945
      %v5970 = vsub.f32 %v5857, %v5948
      %v5971 = vsub.f32 %v5860, %v5951
      %v5972 = vsub.f32 %v5904, %v5954
      %v5973 = vsub.f32 %v5907, %v5957
      %v5974 = vmul.f32 %v5958, 1.442695
      %v5975 = vpow.pop %v5974
      %v5976 = vmul.f32 %v5959, 1.442695
      %v5977 = vpow.pop %v5976
      %v5978 = vmul.f32 %v5960, 1.442695
      %v5979 = vpow.pop %v5978
      %v5980 = vmul.f32 %v5961, 1.442695
      %v5981 = vpow.pop %v5980
      %v5982 = vmul.f32 %v5962, 1.442695
      %v5983 = vpow.pop %v5982
      %v5984 = vmul.f32 %v5963, 1.442695
      %v5985 = vpow.pop %v5984
      %v5986 = vmul.f32 %v5964, 1.442695
      %v5987 = vpow.pop %v5986
      %v5988 = vmul.f32 %v5965, 1.442695
      %v5989 = vpow.pop %v5988
      %v5990 = vmul.f32 %v5966, 1.442695
      %v5991 = vpow.pop %v5990
      %v5992 = vmul.f32 %v5967, 1.442695
      %v5993 = vpow.pop %v5992
      %v5994 = vmul.f32 %v5968, 1.442695
      %v5995 = vpow.pop %v5994
      %v5996 = vmul.f32 %v5969, 1.442695
      %v5997 = vpow.pop %v5996
      %v5998 = vmul.f32 %v5970, 1.442695
      %v5999 = vpow.pop %v5998
      %v6000 = vmul.f32 %v5971, 1.442695
      %v6001 = vpow.pop %v6000
      %v6002 = vmul.f32 %v5972, 1.442695
      %v6003 = vpow.pop %v6002
      %v6004 = vmul.f32 %v5973, 1.442695
      %v6005 = vpow.pop %v6004
      %v6006 = vsel %vm1612, %v5975, 0.0
      %6007 = vadd.xlane.f32.xlu0 %v6006
      %v6008 = vpop.xlane.xlu0 %6007
      %v6009 = vsel %vm1612, %v5977, 0.0
      %6010 = vadd.xlane.f32.xlu0 %v6009
      %v6011 = vpop.xlane.xlu0 %6010
      %v6012 = vsel %vm1612, %v5979, 0.0
      %6013 = vadd.xlane.f32.xlu0 %v6012
      %v6014 = vpop.xlane.xlu0 %6013
      %v6015 = vsel %vm1612, %v5981, 0.0
      %6016 = vadd.xlane.f32.xlu0 %v6015
      %v6017 = vpop.xlane.xlu0 %6016
      %v6018 = vsel %vm1612, %v5983, 0.0
      %6019 = vadd.xlane.f32.xlu0 %v6018
      %v6020 = vpop.xlane.xlu0 %6019
      %v6021 = vsel %vm1612, %v5985, 0.0
      %6022 = vadd.xlane.f32.xlu0 %v6021
      %v6023 = vpop.xlane.xlu0 %6022
      %v6024 = vsel %vm1612, %v5987, 0.0
      %6025 = vadd.xlane.f32.xlu0 %v6024
      %v6026 = vpop.xlane.xlu0 %6025
      %v6027 = vsel %vm1612, %v5989, 0.0
      %6028 = vadd.xlane.f32.xlu0 %v6027
      %v6029 = vpop.xlane.xlu0 %6028
      %v6030 = vsel %vm1612, %v5991, 0.0
      %6031 = vadd.xlane.f32.xlu0 %v6030
      %v6032 = vpop.xlane.xlu0 %6031
      %v6033 = vsel %vm1612, %v5993, 0.0
      %6034 = vadd.xlane.f32.xlu0 %v6033
      %v6035 = vpop.xlane.xlu0 %6034
      %v6036 = vsel %vm1612, %v5995, 0.0
      %6037 = vadd.xlane.f32.xlu0 %v6036
      %v6038 = vpop.xlane.xlu0 %6037
      %v6039 = vsel %vm1612, %v5997, 0.0
      %6040 = vadd.xlane.f32.xlu0 %v6039
      %v6041 = vpop.xlane.xlu0 %6040
      %v6042 = vsel %vm1612, %v5999, 0.0
      %6043 = vadd.xlane.f32.xlu0 %v6042
      %v6044 = vpop.xlane.xlu0 %6043
      %v6045 = vsel %vm1612, %v6001, 0.0
      %6046 = vadd.xlane.f32.xlu0 %v6045
      %v6047 = vpop.xlane.xlu0 %6046
      %v6048 = vsel %vm1612, %v6003, 0.0
      %6049 = vadd.xlane.f32.xlu0 %v6048
      %v6050 = vpop.xlane.xlu0 %6049
      %v6051 = vsel %vm1612, %v6005, 0.0
      %6052 = vadd.xlane.f32.xlu0 %v6051
      %v6053 = vpop.xlane.xlu0 %6052
      %v6054 = vrcp.pop %v6008
      %v6055 = vrcp.pop %v6011
      %v6056 = vrcp.pop %v6014
      %v6057 = vrcp.pop %v6017
      %v6058 = vrcp.pop %v6020
      %v6059 = vrcp.pop %v6023
      %v6060 = vrcp.pop %v6026
      %v6061 = vrcp.pop %v6029
      %v6062 = vrcp.pop %v6032
      %v6063 = vrcp.pop %v6035
      %v6064 = vrcp.pop %v6038
      %v6065 = vrcp.pop %v6041
      %v6066 = vrcp.pop %v6044
      %v6067 = vrcp.pop %v6047
      %v6068 = vrcp.pop %v6050
      %v6069 = vrcp.pop %v6053
      %v6070 = vpack.c.bf16 %v5977, %v5975
      %v6071 = vpack.c.bf16 %v5981, %v5979
      %v6072 = vpack.c.bf16 %v5985, %v5983
      %v6073 = vpack.c.bf16 %v5989, %v5987
      %v6074 = vpack.c.bf16 %v5993, %v5991
      %v6075 = vpack.c.bf16 %v5997, %v5995
      %v6076 = vpack.c.bf16 %v6001, %v5999
      %v6077 = vpack.c.bf16 %v6005, %v6003
      %v6078 = vpack.c.bf16 %v5459, %v5456
      %v6079 = vpack.c.bf16 %v5467, %v5464
      %v6080 = vpack.c.bf16 %v5475, %v5472
      %v6081 = vpack.c.bf16 %v5483, %v5480
      %v6082 = vpack.c.bf16 %v5491, %v5488
      %v6083 = vpack.c.bf16 %v5499, %v5496
      %v6084 = vpack.c.bf16 %v5507, %v5504
      %v6085 = vpack.c.bf16 %v5515, %v5512
      %v6087 = vsel %vm1612, %v6070, 0
      %6089 = vmatprep.subr.bf16.mxu0 0
      %6090 = vmatpush1.bf16.msra.mxu0 %v6078
      %6091 = vmatprep.subr.bf16.mxu0 0
      %6092 = vmatpush1.bf16.msra.mxu0 0
      %6093 = vmatprep.subr.bf16.mxu0 0
      %6094 = vmatpush1.bf16.msra.mxu0 0
      %6095 = vmatprep.subr.bf16.mxu0 0
      %6096 = vmatpush1.bf16.msra.mxu0 0
      %6097 = vmatprep.subr.bf16.mxu0 0
      %6098 = vmatpush1.bf16.msra.mxu0 0
      %6099 = vmatprep.subr.bf16.mxu0 0
      %6100 = vmatpush1.bf16.msra.mxu0 0
      %6101 = vmatprep.subr.bf16.mxu0 0
      %6102 = vmatpush1.bf16.msra.mxu0 0
      %6103 = vmatprep.subr.bf16.mxu0 0
      %6104 = vmatpush1.bf16.msra.mxu0 0
      %6105 = vmatprep.subr.bf16.mxu0 0
      %6106 = vmatpush1.bf16.msra.mxu0 0
      %6107 = vmatprep.subr.bf16.mxu0 0
      %6108 = vmatpush1.bf16.msra.mxu0 0
      %6109 = vmatprep.subr.bf16.mxu0 0
      %6110 = vmatpush1.bf16.msra.mxu0 0
      %6111 = vmatprep.subr.bf16.mxu0 0
      %6112 = vmatpush1.bf16.msra.mxu0 0
      %6113 = vmatprep.subr.bf16.mxu0 0
      %6114 = vmatpush1.bf16.msra.mxu0 0
      %6115 = vmatprep.subr.bf16.mxu0 0
      %6116 = vmatpush1.bf16.msra.mxu0 0
      %6117 = vmatprep.subr.bf16.mxu0 0
      %6118 = vmatpush1.bf16.msra.mxu0 0
      %6119 = vmatprep.subr.bf16.mxu0 0
      %6120 = vmatpush1.bf16.msra.mxu0 0
      %6121 = vmatprep.mubr.bf16.mxu0 0
      %6122 = vmatmul.mubr.bf16.gmra.mrb[0].mxu0 %v6087
      %v6123 = vpop.f32.mrb[0].mxu0
      %v6124 = vadd.f32 0.0, %v6123
      %v6125 = vpop.f32.mrb[0].mxu0
      %v6126 = vpop.f32.mrb[0].mxu0
      %v6127 = vadd.f32 0.0, %v6126
      %v6128 = vpop.f32.mrb[0].mxu0
      %6129 = vdwg.mxu0
      %v6131 = vsel %vm1612, %v6071, 0
      %6133 = vmatprep.subr.bf16.mxu0 0
      %6134 = vmatpush1.bf16.msra.mxu0 %v6079
      %6135 = vmatprep.subr.bf16.mxu0 0
      %6136 = vmatpush1.bf16.msra.mxu0 0
      %6137 = vmatprep.subr.bf16.mxu0 0
      %6138 = vmatpush1.bf16.msra.mxu0 0
      %6139 = vmatprep.subr.bf16.mxu0 0
      %6140 = vmatpush1.bf16.msra.mxu0 0
      %6141 = vmatprep.subr.bf16.mxu0 0
      %6142 = vmatpush1.bf16.msra.mxu0 0
      %6143 = vmatprep.subr.bf16.mxu0 0
      %6144 = vmatpush1.bf16.msra.mxu0 0
      %6145 = vmatprep.subr.bf16.mxu0 0
      %6146 = vmatpush1.bf16.msra.mxu0 0
      %6147 = vmatprep.subr.bf16.mxu0 0
      %6148 = vmatpush1.bf16.msra.mxu0 0
      %6149 = vmatprep.subr.bf16.mxu0 0
      %6150 = vmatpush1.bf16.msra.mxu0 0
      %6151 = vmatprep.subr.bf16.mxu0 0
      %6152 = vmatpush1.bf16.msra.mxu0 0
      %6153 = vmatprep.subr.bf16.mxu0 0
      %6154 = vmatpush1.bf16.msra.mxu0 0
      %6155 = vmatprep.subr.bf16.mxu0 0
      %6156 = vmatpush1.bf16.msra.mxu0 0
      %6157 = vmatprep.subr.bf16.mxu0 0
      %6158 = vmatpush1.bf16.msra.mxu0 0
      %6159 = vmatprep.subr.bf16.mxu0 0
      %6160 = vmatpush1.bf16.msra.mxu0 0
      %6161 = vmatprep.subr.bf16.mxu0 0
      %6162 = vmatpush1.bf16.msra.mxu0 0
      %6163 = vmatprep.subr.bf16.mxu0 0
      %6164 = vmatpush1.bf16.msra.mxu0 0
      %6165 = vmatprep.mubr.bf16.mxu0 0
      %6166 = vmatmul.mubr.bf16.gmra.mrb[0].mxu0 %v6131
      %v6167 = vpop.f32.mrb[0].mxu0
      %v6168 = vadd.f32 0.0, %v6167
      %v6169 = vpop.f32.mrb[0].mxu0
      %v6170 = vpop.f32.mrb[0].mxu0
      %v6171 = vadd.f32 0.0, %v6170
      %v6172 = vpop.f32.mrb[0].mxu0
      %6173 = vdwg.mxu0
      %v6175 = vsel %vm1612, %v6072, 0
      %6177 = vmatprep.subr.bf16.mxu0 0
      %6178 = vmatpush1.bf16.msra.mxu0 %v6080
      %6179 = vmatprep.subr.bf16.mxu0 0
      %6180 = vmatpush1.bf16.msra.mxu0 0
      %6181 = vmatprep.subr.bf16.mxu0 0
      %6182 = vmatpush1.bf16.msra.mxu0 0
      %6183 = vmatprep.subr.bf16.mxu0 0
      %6184 = vmatpush1.bf16.msra.mxu0 0
      %6185 = vmatprep.subr.bf16.mxu0 0
      %6186 = vmatpush1.bf16.msra.mxu0 0
      %6187 = vmatprep.subr.bf16.mxu0 0
      %6188 = vmatpush1.bf16.msra.mxu0 0
      %6189 = vmatprep.subr.bf16.mxu0 0
      %6190 = vmatpush1.bf16.msra.mxu0 0
      %6191 = vmatprep.subr.bf16.mxu0 0
      %6192 = vmatpush1.bf16.msra.mxu0 0
      %6193 = vmatprep.subr.bf16.mxu0 0
      %6194 = vmatpush1.bf16.msra.mxu0 0
      %6195 = vmatprep.subr.bf16.mxu0 0
      %6196 = vmatpush1.bf16.msra.mxu0 0
      %6197 = vmatprep.subr.bf16.mxu0 0
      %6198 = vmatpush1.bf16.msra.mxu0 0
      %6199 = vmatprep.subr.bf16.mxu0 0
      %6200 = vmatpush1.bf16.msra.mxu0 0
      %6201 = vmatprep.subr.bf16.mxu0 0
      %6202 = vmatpush1.bf16.msra.mxu0 0
      %6203 = vmatprep.subr.bf16.mxu0 0
      %6204 = vmatpush1.bf16.msra.mxu0 0
      %6205 = vmatprep.subr.bf16.mxu0 0
      %6206 = vmatpush1.bf16.msra.mxu0 0
      %6207 = vmatprep.subr.bf16.mxu0 0
      %6208 = vmatpush1.bf16.msra.mxu0 0
      %6209 = vmatprep.mubr.bf16.mxu0 0
      %6210 = vmatmul.mubr.bf16.gmra.mrb[0].mxu0 %v6175
      %v6211 = vpop.f32.mrb[0].mxu0
      %v6212 = vadd.f32 0.0, %v6211
      %v6213 = vpop.f32.mrb[0].mxu0
      %v6214 = vpop.f32.mrb[0].mxu0
      %v6215 = vadd.f32 0.0, %v6214
      %v6216 = vpop.f32.mrb[0].mxu0
      %6217 = vdwg.mxu0
      %v6219 = vsel %vm1612, %v6073, 0
      %6221 = vmatprep.subr.bf16.mxu0 0
      %6222 = vmatpush1.bf16.msra.mxu0 %v6081
      %6223 = vmatprep.subr.bf16.mxu0 0
      %6224 = vmatpush1.bf16.msra.mxu0 0
      %6225 = vmatprep.subr.bf16.mxu0 0
      %6226 = vmatpush1.bf16.msra.mxu0 0
      %6227 = vmatprep.subr.bf16.mxu0 0
      %6228 = vmatpush1.bf16.msra.mxu0 0
      %6229 = vmatprep.subr.bf16.mxu0 0
      %6230 = vmatpush1.bf16.msra.mxu0 0
      %6231 = vmatprep.subr.bf16.mxu0 0
      %6232 = vmatpush1.bf16.msra.mxu0 0
      %6233 = vmatprep.subr.bf16.mxu0 0
      %6234 = vmatpush1.bf16.msra.mxu0 0
      %6235 = vmatprep.subr.bf16.mxu0 0
      %6236 = vmatpush1.bf16.msra.mxu0 0
      %6237 = vmatprep.subr.bf16.mxu0 0
      %6238 = vmatpush1.bf16.msra.mxu0 0
      %6239 = vmatprep.subr.bf16.mxu0 0
      %6240 = vmatpush1.bf16.msra.mxu0 0
      %6241 = vmatprep.subr.bf16.mxu0 0
      %6242 = vmatpush1.bf16.msra.mxu0 0
      %6243 = vmatprep.subr.bf16.mxu0 0
      %6244 = vmatpush1.bf16.msra.mxu0 0
      %6245 = vmatprep.subr.bf16.mxu0 0
      %6246 = vmatpush1.bf16.msra.mxu0 0
      %6247 = vmatprep.subr.bf16.mxu0 0
      %6248 = vmatpush1.bf16.msra.mxu0 0
      %6249 = vmatprep.subr.bf16.mxu0 0
      %6250 = vmatpush1.bf16.msra.mxu0 0
      %6251 = vmatprep.subr.bf16.mxu0 0
      %6252 = vmatpush1.bf16.msra.mxu0 0
      %6253 = vmatprep.mubr.bf16.mxu0 0
      %6254 = vmatmul.mubr.bf16.gmra.mrb[0].mxu0 %v6219
      %v6255 = vpop.f32.mrb[0].mxu0
      %v6256 = vadd.f32 0.0, %v6255
      %v6257 = vpop.f32.mrb[0].mxu0
      %v6258 = vpop.f32.mrb[0].mxu0
      %v6259 = vadd.f32 0.0, %v6258
      %v6260 = vpop.f32.mrb[0].mxu0
      %6261 = vdwg.mxu0
      %v6263 = vsel %vm1612, %v6074, 0
      %6265 = vmatprep.subr.bf16.mxu0 0
      %6266 = vmatpush1.bf16.msra.mxu0 %v6082
      %6267 = vmatprep.subr.bf16.mxu0 0
      %6268 = vmatpush1.bf16.msra.mxu0 0
      %6269 = vmatprep.subr.bf16.mxu0 0
      %6270 = vmatpush1.bf16.msra.mxu0 0
      %6271 = vmatprep.subr.bf16.mxu0 0
      %6272 = vmatpush1.bf16.msra.mxu0 0
      %6273 = vmatprep.subr.bf16.mxu0 0
      %6274 = vmatpush1.bf16.msra.mxu0 0
      %6275 = vmatprep.subr.bf16.mxu0 0
      %6276 = vmatpush1.bf16.msra.mxu0 0
      %6277 = vmatprep.subr.bf16.mxu0 0
      %6278 = vmatpush1.bf16.msra.mxu0 0
      %6279 = vmatprep.subr.bf16.mxu0 0
      %6280 = vmatpush1.bf16.msra.mxu0 0
      %6281 = vmatprep.subr.bf16.mxu0 0
      %6282 = vmatpush1.bf16.msra.mxu0 0
      %6283 = vmatprep.subr.bf16.mxu0 0
      %6284 = vmatpush1.bf16.msra.mxu0 0
      %6285 = vmatprep.subr.bf16.mxu0 0
      %6286 = vmatpush1.bf16.msra.mxu0 0
      %6287 = vmatprep.subr.bf16.mxu0 0
      %6288 = vmatpush1.bf16.msra.mxu0 0
      %6289 = vmatprep.subr.bf16.mxu0 0
      %6290 = vmatpush1.bf16.msra.mxu0 0
      %6291 = vmatprep.subr.bf16.mxu0 0
      %6292 = vmatpush1.bf16.msra.mxu0 0
      %6293 = vmatprep.subr.bf16.mxu0 0
      %6294 = vmatpush1.bf16.msra.mxu0 0
      %6295 = vmatprep.subr.bf16.mxu0 0
      %6296 = vmatpush1.bf16.msra.mxu0 0
      %6297 = vmatprep.mubr.bf16.mxu0 0
      %6298 = vmatmul.mubr.bf16.gmra.mrb[0].mxu0 %v6263
      %v6299 = vpop.f32.mrb[0].mxu0
      %v6300 = vadd.f32 0.0, %v6299
      %v6301 = vpop.f32.mrb[0].mxu0
      %v6302 = vpop.f32.mrb[0].mxu0
      %v6303 = vadd.f32 0.0, %v6302
      %v6304 = vpop.f32.mrb[0].mxu0
      %6305 = vdwg.mxu0
      %v6307 = vsel %vm1612, %v6075, 0
      %6309 = vmatprep.subr.bf16.mxu0 0
      %6310 = vmatpush1.bf16.msra.mxu0 %v6083
      %6311 = vmatprep.subr.bf16.mxu0 0
      %6312 = vmatpush1.bf16.msra.mxu0 0
      %6313 = vmatprep.subr.bf16.mxu0 0
      %6314 = vmatpush1.bf16.msra.mxu0 0
      %6315 = vmatprep.subr.bf16.mxu0 0
      %6316 = vmatpush1.bf16.msra.mxu0 0
      %6317 = vmatprep.subr.bf16.mxu0 0
      %6318 = vmatpush1.bf16.msra.mxu0 0
      %6319 = vmatprep.subr.bf16.mxu0 0
      %6320 = vmatpush1.bf16.msra.mxu0 0
      %6321 = vmatprep.subr.bf16.mxu0 0
      %6322 = vmatpush1.bf16.msra.mxu0 0
      %6323 = vmatprep.subr.bf16.mxu0 0
      %6324 = vmatpush1.bf16.msra.mxu0 0
      %6325 = vmatprep.subr.bf16.mxu0 0
      %6326 = vmatpush1.bf16.msra.mxu0 0
      %6327 = vmatprep.subr.bf16.mxu0 0
      %6328 = vmatpush1.bf16.msra.mxu0 0
      %6329 = vmatprep.subr.bf16.mxu0 0
      %6330 = vmatpush1.bf16.msra.mxu0 0
      %6331 = vmatprep.subr.bf16.mxu0 0
      %6332 = vmatpush1.bf16.msra.mxu0 0
      %6333 = vmatprep.subr.bf16.mxu0 0
      %6334 = vmatpush1.bf16.msra.mxu0 0
      %6335 = vmatprep.subr.bf16.mxu0 0
      %6336 = vmatpush1.bf16.msra.mxu0 0
      %6337 = vmatprep.subr.bf16.mxu0 0
      %6338 = vmatpush1.bf16.msra.mxu0 0
      %6339 = vmatprep.subr.bf16.mxu0 0
      %6340 = vmatpush1.bf16.msra.mxu0 0
      %6341 = vmatprep.mubr.bf16.mxu0 0
      %6342 = vmatmul.mubr.bf16.gmra.mrb[0].mxu0 %v6307
      %v6343 = vpop.f32.mrb[0].mxu0
      %v6344 = vadd.f32 0.0, %v6343
      %v6345 = vpop.f32.mrb[0].mxu0
      %v6346 = vpop.f32.mrb[0].mxu0
      %v6347 = vadd.f32 0.0, %v6346
      %v6348 = vpop.f32.mrb[0].mxu0
      %6349 = vdwg.mxu0
      %v6351 = vsel %vm1612, %v6076, 0
      %6353 = vmatprep.subr.bf16.mxu0 0
      %6354 = vmatpush1.bf16.msra.mxu0 %v6084
      %6355 = vmatprep.subr.bf16.mxu0 0
      %6356 = vmatpush1.bf16.msra.mxu0 0
      %6357 = vmatprep.subr.bf16.mxu0 0
      %6358 = vmatpush1.bf16.msra.mxu0 0
      %6359 = vmatprep.subr.bf16.mxu0 0
      %6360 = vmatpush1.bf16.msra.mxu0 0
      %6361 = vmatprep.subr.bf16.mxu0 0
      %6362 = vmatpush1.bf16.msra.mxu0 0
      %6363 = vmatprep.subr.bf16.mxu0 0
      %6364 = vmatpush1.bf16.msra.mxu0 0
      %6365 = vmatprep.subr.bf16.mxu0 0
      %6366 = vmatpush1.bf16.msra.mxu0 0
      %6367 = vmatprep.subr.bf16.mxu0 0
      %6368 = vmatpush1.bf16.msra.mxu0 0
      %6369 = vmatprep.subr.bf16.mxu0 0
      %6370 = vmatpush1.bf16.msra.mxu0 0
      %6371 = vmatprep.subr.bf16.mxu0 0
      %6372 = vmatpush1.bf16.msra.mxu0 0
      %6373 = vmatprep.subr.bf16.mxu0 0
      %6374 = vmatpush1.bf16.msra.mxu0 0
      %6375 = vmatprep.subr.bf16.mxu0 0
      %6376 = vmatpush1.bf16.msra.mxu0 0
      %6377 = vmatprep.subr.bf16.mxu0 0
      %6378 = vmatpush1.bf16.msra.mxu0 0
      %6379 = vmatprep.subr.bf16.mxu0 0
      %6380 = vmatpush1.bf16.msra.mxu0 0
      %6381 = vmatprep.subr.bf16.mxu0 0
      %6382 = vmatpush1.bf16.msra.mxu0 0
      %6383 = vmatprep.subr.bf16.mxu0 0
      %6384 = vmatpush1.bf16.msra.mxu0 0
      %6385 = vmatprep.mubr.bf16.mxu0 0
      %6386 = vmatmul.mubr.bf16.gmra.mrb[0].mxu0 %v6351
      %v6387 = vpop.f32.mrb[0].mxu0
      %v6388 = vadd.f32 0.0, %v6387
      %v6389 = vpop.f32.mrb[0].mxu0
      %v6390 = vpop.f32.mrb[0].mxu0
      %v6391 = vadd.f32 0.0, %v6390
      %v6392 = vpop.f32.mrb[0].mxu0
      %6393 = vdwg.mxu0
      %v6395 = vsel %vm1612, %v6077, 0
      %6397 = vmatprep.subr.bf16.mxu0 0
      %6398 = vmatpush1.bf16.msra.mxu0 %v6085
      %6399 = vmatprep.subr.bf16.mxu0 0
      %6400 = vmatpush1.bf16.msra.mxu0 0
      %6401 = vmatprep.subr.bf16.mxu0 0
      %6402 = vmatpush1.bf16.msra.mxu0 0
      %6403 = vmatprep.subr.bf16.mxu0 0
      %6404 = vmatpush1.bf16.msra.mxu0 0
      %6405 = vmatprep.subr.bf16.mxu0 0
      %6406 = vmatpush1.bf16.msra.mxu0 0
      %6407 = vmatprep.subr.bf16.mxu0 0
      %6408 = vmatpush1.bf16.msra.mxu0 0
      %6409 = vmatprep.subr.bf16.mxu0 0
      %6410 = vmatpush1.bf16.msra.mxu0 0
      %6411 = vmatprep.subr.bf16.mxu0 0
      %6412 = vmatpush1.bf16.msra.mxu0 0
      %6413 = vmatprep.subr.bf16.mxu0 0
      %6414 = vmatpush1.bf16.msra.mxu0 0
      %6415 = vmatprep.subr.bf16.mxu0 0
      %6416 = vmatpush1.bf16.msra.mxu0 0
      %6417 = vmatprep.subr.bf16.mxu0 0
      %6418 = vmatpush1.bf16.msra.mxu0 0
      %6419 = vmatprep.subr.bf16.mxu0 0
      %6420 = vmatpush1.bf16.msra.mxu0 0
      %6421 = vmatprep.subr.bf16.mxu0 0
      %6422 = vmatpush1.bf16.msra.mxu0 0
      %6423 = vmatprep.subr.bf16.mxu0 0
      %6424 = vmatpush1.bf16.msra.mxu0 0
      %6425 = vmatprep.subr.bf16.mxu0 0
      %6426 = vmatpush1.bf16.msra.mxu0 0
      %6427 = vmatprep.subr.bf16.mxu0 0
      %6428 = vmatpush1.bf16.msra.mxu0 0
      %6429 = vmatprep.mubr.bf16.mxu0 0
      %6430 = vmatmul.mubr.bf16.gmra.mrb[0].mxu0 %v6395
      %v6431 = vpop.f32.mrb[0].mxu0
      %v6432 = vadd.f32 0.0, %v6431
      %v6433 = vpop.f32.mrb[0].mxu0
      %v6434 = vpop.f32.mrb[0].mxu0
      %v6435 = vadd.f32 0.0, %v6434
      %v6436 = vpop.f32.mrb[0].mxu0
      %6437 = vdwg.mxu0
      %v6438 = vmul.f32 %v6124, %v6054
      %v6439 = vmul.f32 %v6127, %v6055
      %v6440 = vmul.f32 %v6168, %v6056
      %v6441 = vmul.f32 %v6171, %v6057
      %v6442 = vmul.f32 %v6212, %v6058
      %v6443 = vmul.f32 %v6215, %v6059
      %v6444 = vmul.f32 %v6256, %v6060
      %v6445 = vmul.f32 %v6259, %v6061
      %v6446 = vmul.f32 %v6300, %v6062
      %v6447 = vmul.f32 %v6303, %v6063
      %v6448 = vmul.f32 %v6344, %v6064
      %v6449 = vmul.f32 %v6347, %v6065
      %v6450 = vmul.f32 %v6388, %v6066
      %v6451 = vmul.f32 %v6391, %v6067
      %v6452 = vmul.f32 %v6432, %v6068
      %v6453 = vmul.f32 %v6435, %v6069
      %v6454 = vpack.c.bf16 %v6439, %v6438
      %v6455 = vpack.c.bf16 %v6441, %v6440
      %v6456 = vpack.c.bf16 %v6443, %v6442
      %v6457 = vpack.c.bf16 %v6445, %v6444
      %v6458 = vpack.c.bf16 %v6447, %v6446
      %v6459 = vpack.c.bf16 %v6449, %v6448
      %v6460 = vpack.c.bf16 %v6451, %v6450
      %v6461 = vpack.c.bf16 %v6453, %v6452
      %s6462 = scalar_lea.vmem %s5, 12
      %v6463 = vld [vmem:[%s6462] sm:$0xf]
      %v6465 = vsel %vm1235, %v6454, 0
      %v6468 = vsel %vm1235, %v6455, 0
      %v6471 = vsel %vm1235, %v6456, 0
      %v6474 = vsel %vm1235, %v6457, 0
      %v6477 = vsel %vm1235, %v6458, 0
      %v6480 = vsel %vm1235, %v6459, 0
      %v6483 = vsel %vm1235, %v6460, 0
      %v6486 = vsel %vm1235, %v6461, 0
      %v6489 = vsel %vm3493, %v6463, 0
      %6491 = vmatprep.subr.bf16.mxu0 0
      %6492 = vmatpush1.bf16.msra.mxu0 %v6489
      %6493 = vmatprep.subr.bf16.mxu0 0
      %6494 = vmatpush1.bf16.msra.mxu0 0
      %6495 = vmatprep.subr.bf16.mxu0 0
      %6496 = vmatpush1.bf16.msra.mxu0 0
      %6497 = vmatprep.subr.bf16.mxu0 0
      %6498 = vmatpush1.bf16.msra.mxu0 0
      %6499 = vmatprep.subr.bf16.mxu0 0
      %6500 = vmatpush1.bf16.msra.mxu0 0
      %6501 = vmatprep.subr.bf16.mxu0 0
      %6502 = vmatpush1.bf16.msra.mxu0 0
      %6503 = vmatprep.subr.bf16.mxu0 0
      %6504 = vmatpush1.bf16.msra.mxu0 0
      %6505 = vmatprep.subr.bf16.mxu0 0
      %6506 = vmatpush1.bf16.msra.mxu0 0
      %6507 = vmatprep.subr.bf16.mxu0 0
      %6508 = vmatpush1.bf16.msra.mxu0 0
      %6509 = vmatprep.subr.bf16.mxu0 0
      %6510 = vmatpush1.bf16.msra.mxu0 0
      %6511 = vmatprep.subr.bf16.mxu0 0
      %6512 = vmatpush1.bf16.msra.mxu0 0
      %6513 = vmatprep.subr.bf16.mxu0 0
      %6514 = vmatpush1.bf16.msra.mxu0 0
      %6515 = vmatprep.subr.bf16.mxu0 0
      %6516 = vmatpush1.bf16.msra.mxu0 0
      %6517 = vmatprep.subr.bf16.mxu0 0
      %6518 = vmatpush1.bf16.msra.mxu0 0
      %6519 = vmatprep.subr.bf16.mxu0 0
      %6520 = vmatpush1.bf16.msra.mxu0 0
      %6521 = vmatprep.subr.bf16.mxu0 0
      %6522 = vmatpush1.bf16.msra.mxu0 0
      %6523 = vmatprep.mubr.bf16.mxu0 0
      %6524 = vmatmul.mubr.bf16.gmra.mrb[0].mxu0 %v6465
      %v6525 = vpop.f32.mrb[0].mxu0
      %v6526 = vadd.f32 0.0, %v6525
      %v6527 = vpop.f32.mrb[0].mxu0
      %v6528 = vpop.f32.mrb[0].mxu0
      %v6529 = vadd.f32 0.0, %v6528
      %v6530 = vpop.f32.mrb[0].mxu0
      %6531 = vmatprep.mubr.bf16.mxu0 0
      %6532 = vmatmul.mubr.bf16.gmra.mrb[0].mxu0 %v6468
      %v6533 = vpop.f32.mrb[0].mxu0
      %v6534 = vadd.f32 0.0, %v6533
      %v6535 = vpop.f32.mrb[0].mxu0
      %v6536 = vpop.f32.mrb[0].mxu0
      %v6537 = vadd.f32 0.0, %v6536
      %v6538 = vpop.f32.mrb[0].mxu0
      %6539 = vmatprep.mubr.bf16.mxu0 0
      %6540 = vmatmul.mubr.bf16.gmra.mrb[0].mxu0 %v6471
      %v6541 = vpop.f32.mrb[0].mxu0
      %v6542 = vadd.f32 0.0, %v6541
      %v6543 = vpop.f32.mrb[0].mxu0
      %v6544 = vpop.f32.mrb[0].mxu0
      %v6545 = vadd.f32 0.0, %v6544
      %v6546 = vpop.f32.mrb[0].mxu0
      %6547 = vmatprep.mubr.bf16.mxu0 0
      %6548 = vmatmul.mubr.bf16.gmra.mrb[0].mxu0 %v6474
      %v6549 = vpop.f32.mrb[0].mxu0
      %v6550 = vadd.f32 0.0, %v6549
      %v6551 = vpop.f32.mrb[0].mxu0
      %v6552 = vpop.f32.mrb[0].mxu0
      %v6553 = vadd.f32 0.0, %v6552
      %v6554 = vpop.f32.mrb[0].mxu0
      %6555 = vmatprep.mubr.bf16.mxu0 0
      %6556 = vmatmul.mubr.bf16.gmra.mrb[0].mxu0 %v6477
      %v6557 = vpop.f32.mrb[0].mxu0
      %v6558 = vadd.f32 0.0, %v6557
      %v6559 = vpop.f32.mrb[0].mxu0
      %v6560 = vpop.f32.mrb[0].mxu0
      %v6561 = vadd.f32 0.0, %v6560
      %v6562 = vpop.f32.mrb[0].mxu0
      %6563 = vmatprep.mubr.bf16.mxu0 0
      %6564 = vmatmul.mubr.bf16.gmra.mrb[0].mxu0 %v6480
      %v6565 = vpop.f32.mrb[0].mxu0
      %v6566 = vadd.f32 0.0, %v6565
      %v6567 = vpop.f32.mrb[0].mxu0
      %v6568 = vpop.f32.mrb[0].mxu0
      %v6569 = vadd.f32 0.0, %v6568
      %v6570 = vpop.f32.mrb[0].mxu0
      %6571 = vmatprep.mubr.bf16.mxu0 0
      %6572 = vmatmul.mubr.bf16.gmra.mrb[0].mxu0 %v6483
      %v6573 = vpop.f32.mrb[0].mxu0
      %v6574 = vadd.f32 0.0, %v6573
      %v6575 = vpop.f32.mrb[0].mxu0
      %v6576 = vpop.f32.mrb[0].mxu0
      %v6577 = vadd.f32 0.0, %v6576
      %v6578 = vpop.f32.mrb[0].mxu0
      %6579 = vmatprep.mubr.bf16.mxu0 0
      %6580 = vmatmul.mubr.bf16.gmra.mrb[0].mxu0 %v6486
      %v6581 = vpop.f32.mrb[0].mxu0
      %v6582 = vadd.f32 0.0, %v6581
      %v6583 = vpop.f32.mrb[0].mxu0
      %v6584 = vpop.f32.mrb[0].mxu0
      %v6585 = vadd.f32 0.0, %v6584
      %v6586 = vpop.f32.mrb[0].mxu0
      %6587 = vdwg.mxu0
      %v6588 = vadd.f32 %v5145, %v6526
      %v6589 = vadd.f32 %v5146, %v6529
      %v6590 = vadd.f32 %v5147, %v6534
      %v6591 = vadd.f32 %v5148, %v6537
      %v6592 = vadd.f32 %v5149, %v6542
      %v6593 = vadd.f32 %v5150, %v6545
      %v6594 = vadd.f32 %v5151, %v6550
      %v6595 = vadd.f32 %v5152, %v6553
      %v6596 = vadd.f32 %v5153, %v6558
      %v6597 = vadd.f32 %v5154, %v6561
      %v6598 = vadd.f32 %v5155, %v6566
      %v6599 = vadd.f32 %v5156, %v6569
      %v6600 = vadd.f32 %v5157, %v6574
      %v6601 = vadd.f32 %v5158, %v6577
      %v6602 = vadd.f32 %v5159, %v6582
      %v6603 = vadd.f32 %v5160, %v6585
      %v6604 = vld [vmem:[%s9 + $0x2] sm:$0x1]
      %v6605 = vlaneseq
      %v6606 = vshrl.u32 %v6605, 7
      %v6607 = vsub.s32 0, %v6606
      %v6608 = vrot.slane %v6604, %v6607
      %v6609 = vadd.f32 %v6588, %v6608
      %v6610 = vadd.f32 %v6589, %v6608
      %v6611 = vadd.f32 %v6590, %v6608
      %v6612 = vadd.f32 %v6591, %v6608
      %v6613 = vadd.f32 %v6592, %v6608
      %v6614 = vadd.f32 %v6593, %v6608
      %v6615 = vadd.f32 %v6594, %v6608
      %v6616 = vadd.f32 %v6595, %v6608
      %v6617 = vadd.f32 %v6596, %v6608
      %v6618 = vadd.f32 %v6597, %v6608
      %v6619 = vadd.f32 %v6598, %v6608
      %v6620 = vadd.f32 %v6599, %v6608
      %v6621 = vadd.f32 %v6600, %v6608
      %v6622 = vadd.f32 %v6601, %v6608
      %v6623 = vadd.f32 %v6602, %v6608
      %v6624 = vadd.f32 %v6603, %v6608
      %v6625 = vadd.f32 %v517, %v6609
      %v6626 = vadd.f32 %v520, %v6610
      %v6627 = vadd.f32 %v525, %v6611
      %v6628 = vadd.f32 %v528, %v6612
      %v6629 = vadd.f32 %v533, %v6613
      %v6630 = vadd.f32 %v536, %v6614
      %v6631 = vadd.f32 %v541, %v6615
      %v6632 = vadd.f32 %v544, %v6616
      %v6633 = vadd.f32 %v549, %v6617
      %v6634 = vadd.f32 %v552, %v6618
      %v6635 = vadd.f32 %v557, %v6619
      %v6636 = vadd.f32 %v560, %v6620
      %v6637 = vadd.f32 %v565, %v6621
      %v6638 = vadd.f32 %v568, %v6622
      %v6639 = vadd.f32 %v573, %v6623
      %v6640 = vadd.f32 %v576, %v6624
      %v6641 = vld [vmem:[%s9 + $0x3] sm:$0x1]
      %v6642 = vld [vmem:[%s9 + $0x4] sm:$0x1]
      %v6643 = vsel %vm581, %v6625, 0.0
      %6644 = vadd.xlane.f32.xlu0 %v6643
      %v6645 = vpop.xlane.xlu0 %6644
      %v6646 = vsel %vm581, %v6626, 0.0
      %6647 = vadd.xlane.f32.xlu0 %v6646
      %v6648 = vpop.xlane.xlu0 %6647
      %v6649 = vsel %vm581, %v6627, 0.0
      %6650 = vadd.xlane.f32.xlu0 %v6649
      %v6651 = vpop.xlane.xlu0 %6650
      %v6652 = vsel %vm581, %v6628, 0.0
      %6653 = vadd.xlane.f32.xlu0 %v6652
      %v6654 = vpop.xlane.xlu0 %6653
      %v6655 = vsel %vm581, %v6629, 0.0
      %6656 = vadd.xlane.f32.xlu0 %v6655
      %v6657 = vpop.xlane.xlu0 %6656
      %v6658 = vsel %vm581, %v6630, 0.0
      %6659 = vadd.xlane.f32.xlu0 %v6658
      %v6660 = vpop.xlane.xlu0 %6659
      %v6661 = vsel %vm581, %v6631, 0.0
      %6662 = vadd.xlane.f32.xlu0 %v6661
      %v6663 = vpop.xlane.xlu0 %6662
      %v6664 = vsel %vm581, %v6632, 0.0
      %6665 = vadd.xlane.f32.xlu0 %v6664
      %v6666 = vpop.xlane.xlu0 %6665
      %v6667 = vsel %vm581, %v6633, 0.0
      %6668 = vadd.xlane.f32.xlu0 %v6667
      %v6669 = vpop.xlane.xlu0 %6668
      %v6670 = vsel %vm581, %v6634, 0.0
      %6671 = vadd.xlane.f32.xlu0 %v6670
      %v6672 = vpop.xlane.xlu0 %6671
      %v6673 = vsel %vm581, %v6635, 0.0
      %6674 = vadd.xlane.f32.xlu0 %v6673
      %v6675 = vpop.xlane.xlu0 %6674
      %v6676 = vsel %vm581, %v6636, 0.0
      %6677 = vadd.xlane.f32.xlu0 %v6676
      %v6678 = vpop.xlane.xlu0 %6677
      %v6679 = vsel %vm581, %v6637, 0.0
      %6680 = vadd.xlane.f32.xlu0 %v6679
      %v6681 = vpop.xlane.xlu0 %6680
      %v6682 = vsel %vm581, %v6638, 0.0
      %6683 = vadd.xlane.f32.xlu0 %v6682
      %v6684 = vpop.xlane.xlu0 %6683
      %v6685 = vsel %vm581, %v6639, 0.0
      %6686 = vadd.xlane.f32.xlu0 %v6685
      %v6687 = vpop.xlane.xlu0 %6686
      %v6688 = vsel %vm581, %v6640, 0.0
      %6689 = vadd.xlane.f32.xlu0 %v6688
      %v6690 = vpop.xlane.xlu0 %6689
      %v6691 = vmul.f32 %v6645, %v630
      %v6692 = vmul.f32 %v6648, %v630
      %v6693 = vmul.f32 %v6651, %v630
      %v6694 = vmul.f32 %v6654, %v630
      %v6695 = vmul.f32 %v6657, %v630
      %v6696 = vmul.f32 %v6660, %v630
      %v6697 = vmul.f32 %v6663, %v630
      %v6698 = vmul.f32 %v6666, %v630
      %v6699 = vmul.f32 %v6669, %v630
      %v6700 = vmul.f32 %v6672, %v630
      %v6701 = vmul.f32 %v6675, %v630
      %v6702 = vmul.f32 %v6678, %v630
      %v6703 = vmul.f32 %v6681, %v630
      %v6704 = vmul.f32 %v6684, %v630
      %v6705 = vmul.f32 %v6687, %v630
      %v6706 = vmul.f32 %v6690, %v630
      %v6707 = vsub.f32 %v6625, %v6691
      %v6708 = vsub.f32 %v6626, %v6692
      %v6709 = vsub.f32 %v6627, %v6693
      %v6710 = vsub.f32 %v6628, %v6694
      %v6711 = vsub.f32 %v6629, %v6695
      %v6712 = vsub.f32 %v6630, %v6696
      %v6713 = vsub.f32 %v6631, %v6697
      %v6714 = vsub.f32 %v6632, %v6698
      %v6715 = vsub.f32 %v6633, %v6699
      %v6716 = vsub.f32 %v6634, %v6700
      %v6717 = vsub.f32 %v6635, %v6701
      %v6718 = vsub.f32 %v6636, %v6702
      %v6719 = vsub.f32 %v6637, %v6703
      %v6720 = vsub.f32 %v6638, %v6704
      %v6721 = vsub.f32 %v6639, %v6705
      %v6722 = vsub.f32 %v6640, %v6706
      %v6723 = vmul.f32 %v6707, %v6707
      %v6724 = vmul.f32 %v6708, %v6708
      %v6725 = vmul.f32 %v6709, %v6709
      %v6726 = vmul.f32 %v6710, %v6710
      %v6727 = vmul.f32 %v6711, %v6711
      %v6728 = vmul.f32 %v6712, %v6712
      %v6729 = vmul.f32 %v6713, %v6713
      %v6730 = vmul.f32 %v6714, %v6714
      %v6731 = vmul.f32 %v6715, %v6715
      %v6732 = vmul.f32 %v6716, %v6716
      %v6733 = vmul.f32 %v6717, %v6717
      %v6734 = vmul.f32 %v6718, %v6718
      %v6735 = vmul.f32 %v6719, %v6719
      %v6736 = vmul.f32 %v6720, %v6720
      %v6737 = vmul.f32 %v6721, %v6721
      %v6738 = vmul.f32 %v6722, %v6722
      %v6739 = vsel %vm581, %v6723, 0.0
      %6740 = vadd.xlane.f32.xlu0 %v6739
      %v6741 = vpop.xlane.xlu0 %6740
      %v6742 = vsel %vm581, %v6724, 0.0
      %6743 = vadd.xlane.f32.xlu0 %v6742
      %v6744 = vpop.xlane.xlu0 %6743
      %v6745 = vsel %vm581, %v6725, 0.0
      %6746 = vadd.xlane.f32.xlu0 %v6745
      %v6747 = vpop.xlane.xlu0 %6746
      %v6748 = vsel %vm581, %v6726, 0.0
      %6749 = vadd.xlane.f32.xlu0 %v6748
      %v6750 = vpop.xlane.xlu0 %6749
      %v6751 = vsel %vm581, %v6727, 0.0
      %6752 = vadd.xlane.f32.xlu0 %v6751
      %v6753 = vpop.xlane.xlu0 %6752
      %v6754 = vsel %vm581, %v6728, 0.0
      %6755 = vadd.xlane.f32.xlu0 %v6754
      %v6756 = vpop.xlane.xlu0 %6755
      %v6757 = vsel %vm581, %v6729, 0.0
      %6758 = vadd.xlane.f32.xlu0 %v6757
      %v6759 = vpop.xlane.xlu0 %6758
      %v6760 = vsel %vm581, %v6730, 0.0
      %6761 = vadd.xlane.f32.xlu0 %v6760
      %v6762 = vpop.xlane.xlu0 %6761
      %v6763 = vsel %vm581, %v6731, 0.0
      %6764 = vadd.xlane.f32.xlu0 %v6763
      %v6765 = vpop.xlane.xlu0 %6764
      %v6766 = vsel %vm581, %v6732, 0.0
      %6767 = vadd.xlane.f32.xlu0 %v6766
      %v6768 = vpop.xlane.xlu0 %6767
      %v6769 = vsel %vm581, %v6733, 0.0
      %6770 = vadd.xlane.f32.xlu0 %v6769
      %v6771 = vpop.xlane.xlu0 %6770
      %v6772 = vsel %vm581, %v6734, 0.0
      %6773 = vadd.xlane.f32.xlu0 %v6772
      %v6774 = vpop.xlane.xlu0 %6773
      %v6775 = vsel %vm581, %v6735, 0.0
      %6776 = vadd.xlane.f32.xlu0 %v6775
      %v6777 = vpop.xlane.xlu0 %6776
      %v6778 = vsel %vm581, %v6736, 0.0
      %6779 = vadd.xlane.f32.xlu0 %v6778
      %v6780 = vpop.xlane.xlu0 %6779
      %v6781 = vsel %vm581, %v6737, 0.0
      %6782 = vadd.xlane.f32.xlu0 %v6781
      %v6783 = vpop.xlane.xlu0 %6782
      %v6784 = vsel %vm581, %v6738, 0.0
      %6785 = vadd.xlane.f32.xlu0 %v6784
      %v6786 = vpop.xlane.xlu0 %6785
      %v6787 = vmul.f32 %v6741, %v630
      %v6788 = vmul.f32 %v6744, %v630
      %v6789 = vmul.f32 %v6747, %v630
      %v6790 = vmul.f32 %v6750, %v630
      %v6791 = vmul.f32 %v6753, %v630
      %v6792 = vmul.f32 %v6756, %v630
      %v6793 = vmul.f32 %v6759, %v630
      %v6794 = vmul.f32 %v6762, %v630
      %v6795 = vmul.f32 %v6765, %v630
      %v6796 = vmul.f32 %v6768, %v630
      %v6797 = vmul.f32 %v6771, %v630
      %v6798 = vmul.f32 %v6774, %v630
      %v6799 = vmul.f32 %v6777, %v630
      %v6800 = vmul.f32 %v6780, %v630
      %v6801 = vmul.f32 %v6783, %v630
      %v6802 = vmul.f32 %v6786, %v630
      %v6803 = vadd.f32 %v6787, 1e-06
      %v6804 = vadd.f32 %v6788, 1e-06
      %v6805 = vadd.f32 %v6789, 1e-06
      %v6806 = vadd.f32 %v6790, 1e-06
      %v6807 = vadd.f32 %v6791, 1e-06
      %v6808 = vadd.f32 %v6792, 1e-06
      %v6809 = vadd.f32 %v6793, 1e-06
      %v6810 = vadd.f32 %v6794, 1e-06
      %v6811 = vadd.f32 %v6795, 1e-06
      %v6812 = vadd.f32 %v6796, 1e-06
      %v6813 = vadd.f32 %v6797, 1e-06
      %v6814 = vadd.f32 %v6798, 1e-06
      %v6815 = vadd.f32 %v6799, 1e-06
      %v6816 = vadd.f32 %v6800, 1e-06
      %v6817 = vadd.f32 %v6801, 1e-06
      %v6818 = vadd.f32 %v6802, 1e-06
      %v6819 = vrsqrt.pop %v6803
      %v6820 = vrsqrt.pop %v6804
      %v6821 = vrsqrt.pop %v6805
      %v6822 = vrsqrt.pop %v6806
      %v6823 = vrsqrt.pop %v6807
      %v6824 = vrsqrt.pop %v6808
      %v6825 = vrsqrt.pop %v6809
      %v6826 = vrsqrt.pop %v6810
      %v6827 = vrsqrt.pop %v6811
      %v6828 = vrsqrt.pop %v6812
      %v6829 = vrsqrt.pop %v6813
      %v6830 = vrsqrt.pop %v6814
      %v6831 = vrsqrt.pop %v6815
      %v6832 = vrsqrt.pop %v6816
      %v6833 = vrsqrt.pop %v6817
      %v6834 = vrsqrt.pop %v6818
      %v6835 = vmul.f32 %v6707, %v6819
      %v6836 = vmul.f32 %v6708, %v6820
      %v6837 = vmul.f32 %v6709, %v6821
      %v6838 = vmul.f32 %v6710, %v6822
      %v6839 = vmul.f32 %v6711, %v6823
      %v6840 = vmul.f32 %v6712, %v6824
      %v6841 = vmul.f32 %v6713, %v6825
      %v6842 = vmul.f32 %v6714, %v6826
      %v6843 = vmul.f32 %v6715, %v6827
      %v6844 = vmul.f32 %v6716, %v6828
      %v6845 = vmul.f32 %v6717, %v6829
      %v6846 = vmul.f32 %v6718, %v6830
      %v6847 = vmul.f32 %v6719, %v6831
      %v6848 = vmul.f32 %v6720, %v6832
      %v6849 = vmul.f32 %v6721, %v6833
      %v6850 = vmul.f32 %v6722, %v6834
      %v6851 = vlaneseq
      %v6852 = vshrl.u32 %v6851, 7
      %v6853 = vsub.s32 0, %v6852
      %v6854 = vrot.slane %v6641, %v6853
      %v6855 = vmul.f32 %v6835, %v6854
      %v6856 = vmul.f32 %v6836, %v6854
      %v6857 = vmul.f32 %v6837, %v6854
      %v6858 = vmul.f32 %v6838, %v6854
      %v6859 = vmul.f32 %v6839, %v6854
      %v6860 = vmul.f32 %v6840, %v6854
      %v6861 = vmul.f32 %v6841, %v6854
      %v6862 = vmul.f32 %v6842, %v6854
      %v6863 = vmul.f32 %v6843, %v6854
      %v6864 = vmul.f32 %v6844, %v6854
      %v6865 = vmul.f32 %v6845, %v6854
      %v6866 = vmul.f32 %v6846, %v6854
      %v6867 = vmul.f32 %v6847, %v6854
      %v6868 = vmul.f32 %v6848, %v6854
      %v6869 = vmul.f32 %v6849, %v6854
      %v6870 = vmul.f32 %v6850, %v6854
      %v6871 = vlaneseq
      %v6872 = vshrl.u32 %v6871, 7
      %v6873 = vsub.s32 0, %v6872
      %v6874 = vrot.slane %v6642, %v6873
      %v6875 = vadd.f32 %v6855, %v6874
      %v6876 = vadd.f32 %v6856, %v6874
      %v6877 = vadd.f32 %v6857, %v6874
      %v6878 = vadd.f32 %v6858, %v6874
      %v6879 = vadd.f32 %v6859, %v6874
      %v6880 = vadd.f32 %v6860, %v6874
      %v6881 = vadd.f32 %v6861, %v6874
      %v6882 = vadd.f32 %v6862, %v6874
      %v6883 = vadd.f32 %v6863, %v6874
      %v6884 = vadd.f32 %v6864, %v6874
      %v6885 = vadd.f32 %v6865, %v6874
      %v6886 = vadd.f32 %v6866, %v6874
      %v6887 = vadd.f32 %v6867, %v6874
      %v6888 = vadd.f32 %v6868, %v6874
      %v6889 = vadd.f32 %v6869, %v6874
      %v6890 = vadd.f32 %v6870, %v6874
      %v6891 = vpack.c.bf16 %v6876, %v6875
      %v6892 = vpack.c.bf16 %v6878, %v6877
      %v6893 = vpack.c.bf16 %v6880, %v6879
      %v6894 = vpack.c.bf16 %v6882, %v6881
      %v6895 = vpack.c.bf16 %v6884, %v6883
      %v6896 = vpack.c.bf16 %v6886, %v6885
      %v6897 = vpack.c.bf16 %v6888, %v6887
      %v6898 = vpack.c.bf16 %v6890, %v6889
      %v6899 = vld [vmem:[%s6] sm:$0xf]
      %v6900 = vld [vmem:[%s6 + $0x4] sm:$0xf]
      %v6901 = vld [vmem:[%s6 + $0x8] sm:$0xf]
      %v6902 = vld [vmem:[%s6 + $0xc] sm:$0xf]
      %v6903 = vld [vmem:[%s9 + $0x5] sm:$0x1]
      %v6904 = vlaneseq
      %v6905 = vshrl.u32 %v6904, 7
      %v6906 = vsub.s32 0, %v6905
      %v6907 = vrot.slane %v6903, %v6906
      %v6912 = vunpack.c.l.b16 %v6899
      %v6913 = vunpack.c.l.b16 %v6900
      %v6914 = vunpack.c.l.b16 %v6901
      %v6915 = vunpack.c.l.b16 %v6902
      %v6916 = vpack.c.b16 %v6913, %v6912
      %v6917 = vpack.c.b16 %v6915, %v6914
      %v6921 = vsel %vm581, %v6891, 0
      %v6924 = vsel %vm581, %v6892, 0
      %v6927 = vsel %vm581, %v6893, 0
      %v6930 = vsel %vm581, %v6894, 0
      %v6933 = vsel %vm581, %v6895, 0
      %v6936 = vsel %vm581, %v6896, 0
      %v6939 = vsel %vm581, %v6897, 0
      %v6942 = vsel %vm581, %v6898, 0
      %6944 = vmatprep.subr.bf16.mxu0 0
      %6945 = vmatpush1.bf16.msra.mxu0 %v6916
      %6946 = vmatprep.subr.bf16.mxu0 0
      %6947 = vmatpush1.bf16.msra.mxu0 %v6917
      %6948 = vmatprep.subr.bf16.mxu0 0
      %6949 = vmatpush1.bf16.msra.mxu0 0
      %6950 = vmatprep.subr.bf16.mxu0 0
      %6951 = vmatpush1.bf16.msra.mxu0 0
      %6952 = vmatprep.subr.bf16.mxu0 0
      %6953 = vmatpush1.bf16.msra.mxu0 0
      %6954 = vmatprep.subr.bf16.mxu0 0
      %6955 = vmatpush1.bf16.msra.mxu0 0
      %6956 = vmatprep.subr.bf16.mxu0 0
      %6957 = vmatpush1.bf16.msra.mxu0 0
      %6958 = vmatprep.subr.bf16.mxu0 0
      %6959 = vmatpush1.bf16.msra.mxu0 0
      %6960 = vmatprep.subr.bf16.mxu0 0
      %6961 = vmatpush1.bf16.msra.mxu0 0
      %6962 = vmatprep.subr.bf16.mxu0 0
      %6963 = vmatpush1.bf16.msra.mxu0 0
      %6964 = vmatprep.subr.bf16.mxu0 0
      %6965 = vmatpush1.bf16.msra.mxu0 0
      %6966 = vmatprep.subr.bf16.mxu0 0
      %6967 = vmatpush1.bf16.msra.mxu0 0
      %6968 = vmatprep.subr.bf16.mxu0 0
      %6969 = vmatpush1.bf16.msra.mxu0 0
      %6970 = vmatprep.subr.bf16.mxu0 0
      %6971 = vmatpush1.bf16.msra.mxu0 0
      %6972 = vmatprep.subr.bf16.mxu0 0
      %6973 = vmatpush1.bf16.msra.mxu0 0
      %6974 = vmatprep.subr.bf16.mxu0 0
      %6975 = vmatpush1.bf16.msra.mxu0 0
      %6976 = vmatprep.mubr.bf16.mxu0 0
      %6977 = vmatmul.mubr.bf16.gmra.mrb[0].mxu0 %v6921
      %v6978 = vpop.f32.mrb[0].mxu0
      %v6979 = vadd.f32 %v6907, %v6978
      %v6980 = vpop.f32.mrb[0].mxu0
      %v6981 = vpop.f32.mrb[0].mxu0
      %v6982 = vadd.f32 %v6907, %v6981
      %v6983 = vpop.f32.mrb[0].mxu0
      %6984 = vmatprep.mubr.bf16.mxu0 0
      %6985 = vmatmul.mubr.bf16.gmra.mrb[0].mxu0 %v6924
      %v6986 = vpop.f32.mrb[0].mxu0
      %v6987 = vadd.f32 %v6907, %v6986
      %v6988 = vpop.f32.mrb[0].mxu0
      %v6989 = vpop.f32.mrb[0].mxu0
      %v6990 = vadd.f32 %v6907, %v6989
      %v6991 = vpop.f32.mrb[0].mxu0
      %6992 = vmatprep.mubr.bf16.mxu0 0
      %6993 = vmatmul.mubr.bf16.gmra.mrb[0].mxu0 %v6927
      %v6994 = vpop.f32.mrb[0].mxu0
      %v6995 = vadd.f32 %v6907, %v6994
      %v6996 = vpop.f32.mrb[0].mxu0
      %v6997 = vpop.f32.mrb[0].mxu0
      %v6998 = vadd.f32 %v6907, %v6997
      %v6999 = vpop.f32.mrb[0].mxu0
      %7000 = vmatprep.mubr.bf16.mxu0 0
      %7001 = vmatmul.mubr.bf16.gmra.mrb[0].mxu0 %v6930
      %v7002 = vpop.f32.mrb[0].mxu0
      %v7003 = vadd.f32 %v6907, %v7002
      %v7004 = vpop.f32.mrb[0].mxu0
      %v7005 = vpop.f32.mrb[0].mxu0
      %v7006 = vadd.f32 %v6907, %v7005
      %v7007 = vpop.f32.mrb[0].mxu0
      %7008 = vmatprep.mubr.bf16.mxu0 0
      %7009 = vmatmul.mubr.bf16.gmra.mrb[0].mxu0 %v6933
      %v7010 = vpop.f32.mrb[0].mxu0
      %v7011 = vadd.f32 %v6907, %v7010
      %v7012 = vpop.f32.mrb[0].mxu0
      %v7013 = vpop.f32.mrb[0].mxu0
      %v7014 = vadd.f32 %v6907, %v7013
      %v7015 = vpop.f32.mrb[0].mxu0
      %7016 = vmatprep.mubr.bf16.mxu0 0
      %7017 = vmatmul.mubr.bf16.gmra.mrb[0].mxu0 %v6936
      %v7018 = vpop.f32.mrb[0].mxu0
      %v7019 = vadd.f32 %v6907, %v7018
      %v7020 = vpop.f32.mrb[0].mxu0
      %v7021 = vpop.f32.mrb[0].mxu0
      %v7022 = vadd.f32 %v6907, %v7021
      %v7023 = vpop.f32.mrb[0].mxu0
      %7024 = vmatprep.mubr.bf16.mxu0 0
      %7025 = vmatmul.mubr.bf16.gmra.mrb[0].mxu0 %v6939
      %v7026 = vpop.f32.mrb[0].mxu0
      %v7027 = vadd.f32 %v6907, %v7026
      %v7028 = vpop.f32.mrb[0].mxu0
      %v7029 = vpop.f32.mrb[0].mxu0
      %v7030 = vadd.f32 %v6907, %v7029
      %v7031 = vpop.f32.mrb[0].mxu0
      %7032 = vmatprep.mubr.bf16.mxu0 0
      %7033 = vmatmul.mubr.bf16.gmra.mrb[0].mxu0 %v6942
      %v7034 = vpop.f32.mrb[0].mxu0
      %v7035 = vadd.f32 %v6907, %v7034
      %v7036 = vpop.f32.mrb[0].mxu0
      %v7037 = vpop.f32.mrb[0].mxu0
      %v7038 = vadd.f32 %v6907, %v7037
      %v7039 = vpop.f32.mrb[0].mxu0
      %7040 = vdwg.mxu0
      %v7041 = vmul.f32 %v6979, 0.5
      %v7042 = vmul.f32 %v6982, 0.5
      %v7043 = vmul.f32 %v6987, 0.5
      %v7044 = vmul.f32 %v6990, 0.5
      %v7045 = vmul.f32 %v6995, 0.5
      %v7046 = vmul.f32 %v6998, 0.5
      %v7047 = vmul.f32 %v7003, 0.5
      %v7048 = vmul.f32 %v7006, 0.5
      %v7049 = vmul.f32 %v7011, 0.5
      %v7050 = vmul.f32 %v7014, 0.5
      %v7051 = vmul.f32 %v7019, 0.5
      %v7052 = vmul.f32 %v7022, 0.5
      %v7053 = vmul.f32 %v7027, 0.5
      %v7054 = vmul.f32 %v7030, 0.5
      %v7055 = vmul.f32 %v7035, 0.5
      %v7056 = vmul.f32 %v7038, 0.5
      %v7057 = vmul.f32 %v6979, 0.70710677
      %v7058 = vmul.f32 %v6982, 0.70710677
      %v7059 = vmul.f32 %v6987, 0.70710677
      %v7060 = vmul.f32 %v6990, 0.70710677
      %v7061 = vmul.f32 %v6995, 0.70710677
      %v7062 = vmul.f32 %v6998, 0.70710677
      %v7063 = vmul.f32 %v7003, 0.70710677
      %v7064 = vmul.f32 %v7006, 0.70710677
      %v7065 = vmul.f32 %v7011, 0.70710677
      %v7066 = vmul.f32 %v7014, 0.70710677
      %v7067 = vmul.f32 %v7019, 0.70710677
      %v7068 = vmul.f32 %v7022, 0.70710677
      %v7069 = vmul.f32 %v7027, 0.70710677
      %v7070 = vmul.f32 %v7030, 0.70710677
      %v7071 = vmul.f32 %v7035, 0.70710677
      %v7072 = vmul.f32 %v7038, 0.70710677
      %vm7073 = vcmp.ge.f32.partialorder %v7057, 0.0
      %vm7074 = vcmp.ge.f32.partialorder %v7058, 0.0
      %vm7075 = vcmp.ge.f32.partialorder %v7059, 0.0
      %vm7076 = vcmp.ge.f32.partialorder %v7060, 0.0
      %vm7077 = vcmp.ge.f32.partialorder %v7061, 0.0
      %vm7078 = vcmp.ge.f32.partialorder %v7062, 0.0
      %vm7079 = vcmp.ge.f32.partialorder %v7063, 0.0
      %vm7080 = vcmp.ge.f32.partialorder %v7064, 0.0
      %vm7081 = vcmp.ge.f32.partialorder %v7065, 0.0
      %vm7082 = vcmp.ge.f32.partialorder %v7066, 0.0
      %vm7083 = vcmp.ge.f32.partialorder %v7067, 0.0
      %vm7084 = vcmp.ge.f32.partialorder %v7068, 0.0
      %vm7085 = vcmp.ge.f32.partialorder %v7069, 0.0
      %vm7086 = vcmp.ge.f32.partialorder %v7070, 0.0
      %vm7087 = vcmp.ge.f32.partialorder %v7071, 0.0
      %vm7088 = vcmp.ge.f32.partialorder %v7072, 0.0
      %v7089 = vsel %vm7073, 1.0, -1.0
      %v7090 = vsel %vm7074, 1.0, -1.0
      %v7091 = vsel %vm7075, 1.0, -1.0
      %v7092 = vsel %vm7076, 1.0, -1.0
      %v7093 = vsel %vm7077, 1.0, -1.0
      %v7094 = vsel %vm7078, 1.0, -1.0
      %v7095 = vsel %vm7079, 1.0, -1.0
      %v7096 = vsel %vm7080, 1.0, -1.0
      %v7097 = vsel %vm7081, 1.0, -1.0
      %v7098 = vsel %vm7082, 1.0, -1.0
      %v7099 = vsel %vm7083, 1.0, -1.0
      %v7100 = vsel %vm7084, 1.0, -1.0
      %v7101 = vsel %vm7085, 1.0, -1.0
      %v7102 = vsel %vm7086, 1.0, -1.0
      %v7103 = vsel %vm7087, 1.0, -1.0
      %v7104 = vsel %vm7088, 1.0, -1.0
      %v7105 = vmul.f32 %v7057, %v7089
      %v7106 = vmul.f32 %v7058, %v7090
      %v7107 = vmul.f32 %v7059, %v7091
      %v7108 = vmul.f32 %v7060, %v7092
      %v7109 = vmul.f32 %v7061, %v7093
      %v7110 = vmul.f32 %v7062, %v7094
      %v7111 = vmul.f32 %v7063, %v7095
      %v7112 = vmul.f32 %v7064, %v7096
      %v7113 = vmul.f32 %v7065, %v7097
      %v7114 = vmul.f32 %v7066, %v7098
      %v7115 = vmul.f32 %v7067, %v7099
      %v7116 = vmul.f32 %v7068, %v7100
      %v7117 = vmul.f32 %v7069, %v7101
      %v7118 = vmul.f32 %v7070, %v7102
      %v7119 = vmul.f32 %v7071, %v7103
      %v7120 = vmul.f32 %v7072, %v7104
      %v7121 = vmul.f32 %v7105, 0.3275911
      %v7122 = vmul.f32 %v7106, 0.3275911
      %v7123 = vmul.f32 %v7107, 0.3275911
      %v7124 = vmul.f32 %v7108, 0.3275911
      %v7125 = vmul.f32 %v7109, 0.3275911
      %v7126 = vmul.f32 %v7110, 0.3275911
      %v7127 = vmul.f32 %v7111, 0.3275911
      %v7128 = vmul.f32 %v7112, 0.3275911
      %v7129 = vmul.f32 %v7113, 0.3275911
      %v7130 = vmul.f32 %v7114, 0.3275911
      %v7131 = vmul.f32 %v7115, 0.3275911
      %v7132 = vmul.f32 %v7116, 0.3275911
      %v7133 = vmul.f32 %v7117, 0.3275911
      %v7134 = vmul.f32 %v7118, 0.3275911
      %v7135 = vmul.f32 %v7119, 0.3275911
      %v7136 = vmul.f32 %v7120, 0.3275911
      %v7137 = vadd.f32 %v7121, 1.0
      %v7138 = vadd.f32 %v7122, 1.0
      %v7139 = vadd.f32 %v7123, 1.0
      %v7140 = vadd.f32 %v7124, 1.0
      %v7141 = vadd.f32 %v7125, 1.0
      %v7142 = vadd.f32 %v7126, 1.0
      %v7143 = vadd.f32 %v7127, 1.0
      %v7144 = vadd.f32 %v7128, 1.0
      %v7145 = vadd.f32 %v7129, 1.0
      %v7146 = vadd.f32 %v7130, 1.0
      %v7147 = vadd.f32 %v7131, 1.0
      %v7148 = vadd.f32 %v7132, 1.0
      %v7149 = vadd.f32 %v7133, 1.0
      %v7150 = vadd.f32 %v7134, 1.0
      %v7151 = vadd.f32 %v7135, 1.0
      %v7152 = vadd.f32 %v7136, 1.0
      %v7153 = vrcp.pop %v7137
      %v7154 = vrcp.pop %v7138
      %v7155 = vrcp.pop %v7139
      %v7156 = vrcp.pop %v7140
      %v7157 = vrcp.pop %v7141
      %v7158 = vrcp.pop %v7142
      %v7159 = vrcp.pop %v7143
      %v7160 = vrcp.pop %v7144
      %v7161 = vrcp.pop %v7145
      %v7162 = vrcp.pop %v7146
      %v7163 = vrcp.pop %v7147
      %v7164 = vrcp.pop %v7148
      %v7165 = vrcp.pop %v7149
      %v7166 = vrcp.pop %v7150
      %v7167 = vrcp.pop %v7151
      %v7168 = vrcp.pop %v7152
      %v7169 = vmul.f32 %v7153, 1.0614054
      %v7170 = vmul.f32 %v7154, 1.0614054
      %v7171 = vmul.f32 %v7155, 1.0614054
      %v7172 = vmul.f32 %v7156, 1.0614054
      %v7173 = vmul.f32 %v7157, 1.0614054
      %v7174 = vmul.f32 %v7158, 1.0614054
      %v7175 = vmul.f32 %v7159, 1.0614054
      %v7176 = vmul.f32 %v7160, 1.0614054
      %v7177 = vmul.f32 %v7161, 1.0614054
      %v7178 = vmul.f32 %v7162, 1.0614054
      %v7179 = vmul.f32 %v7163, 1.0614054
      %v7180 = vmul.f32 %v7164, 1.0614054
      %v7181 = vmul.f32 %v7165, 1.0614054
      %v7182 = vmul.f32 %v7166, 1.0614054
      %v7183 = vmul.f32 %v7167, 1.0614054
      %v7184 = vmul.f32 %v7168, 1.0614054
      %v7185 = vadd.f32 %v7169, -1.4531521
      %v7186 = vadd.f32 %v7170, -1.4531521
      %v7187 = vadd.f32 %v7171, -1.4531521
      %v7188 = vadd.f32 %v7172, -1.4531521
      %v7189 = vadd.f32 %v7173, -1.4531521
      %v7190 = vadd.f32 %v7174, -1.4531521
      %v7191 = vadd.f32 %v7175, -1.4531521
      %v7192 = vadd.f32 %v7176, -1.4531521
      %v7193 = vadd.f32 %v7177, -1.4531521
      %v7194 = vadd.f32 %v7178, -1.4531521
      %v7195 = vadd.f32 %v7179, -1.4531521
      %v7196 = vadd.f32 %v7180, -1.4531521
      %v7197 = vadd.f32 %v7181, -1.4531521
      %v7198 = vadd.f32 %v7182, -1.4531521
      %v7199 = vadd.f32 %v7183, -1.4531521
      %v7200 = vadd.f32 %v7184, -1.4531521
      %v7201 = vmul.f32 %v7185, %v7153
      %v7202 = vmul.f32 %v7186, %v7154
      %v7203 = vmul.f32 %v7187, %v7155
      %v7204 = vmul.f32 %v7188, %v7156
      %v7205 = vmul.f32 %v7189, %v7157
      %v7206 = vmul.f32 %v7190, %v7158
      %v7207 = vmul.f32 %v7191, %v7159
      %v7208 = vmul.f32 %v7192, %v7160
      %v7209 = vmul.f32 %v7193, %v7161
      %v7210 = vmul.f32 %v7194, %v7162
      %v7211 = vmul.f32 %v7195, %v7163
      %v7212 = vmul.f32 %v7196, %v7164
      %v7213 = vmul.f32 %v7197, %v7165
      %v7214 = vmul.f32 %v7198, %v7166
      %v7215 = vmul.f32 %v7199, %v7167
      %v7216 = vmul.f32 %v7200, %v7168
      %v7217 = vadd.f32 %v7201, 1.4214138
      %v7218 = vadd.f32 %v7202, 1.4214138
      %v7219 = vadd.f32 %v7203, 1.4214138
      %v7220 = vadd.f32 %v7204, 1.4214138
      %v7221 = vadd.f32 %v7205, 1.4214138
      %v7222 = vadd.f32 %v7206, 1.4214138
      %v7223 = vadd.f32 %v7207, 1.4214138
      %v7224 = vadd.f32 %v7208, 1.4214138
      %v7225 = vadd.f32 %v7209, 1.4214138
      %v7226 = vadd.f32 %v7210, 1.4214138
      %v7227 = vadd.f32 %v7211, 1.4214138
      %v7228 = vadd.f32 %v7212, 1.4214138
      %v7229 = vadd.f32 %v7213, 1.4214138
      %v7230 = vadd.f32 %v7214, 1.4214138
      %v7231 = vadd.f32 %v7215, 1.4214138
      %v7232 = vadd.f32 %v7216, 1.4214138
      %v7233 = vmul.f32 %v7217, %v7153
      %v7234 = vmul.f32 %v7218, %v7154
      %v7235 = vmul.f32 %v7219, %v7155
      %v7236 = vmul.f32 %v7220, %v7156
      %v7237 = vmul.f32 %v7221, %v7157
      %v7238 = vmul.f32 %v7222, %v7158
      %v7239 = vmul.f32 %v7223, %v7159
      %v7240 = vmul.f32 %v7224, %v7160
      %v7241 = vmul.f32 %v7225, %v7161
      %v7242 = vmul.f32 %v7226, %v7162
      %v7243 = vmul.f32 %v7227, %v7163
      %v7244 = vmul.f32 %v7228, %v7164
      %v7245 = vmul.f32 %v7229, %v7165
      %v7246 = vmul.f32 %v7230, %v7166
      %v7247 = vmul.f32 %v7231, %v7167
      %v7248 = vmul.f32 %v7232, %v7168
      %v7249 = vadd.f32 %v7233, -0.28449672
      %v7250 = vadd.f32 %v7234, -0.28449672
      %v7251 = vadd.f32 %v7235, -0.28449672
      %v7252 = vadd.f32 %v7236, -0.28449672
      %v7253 = vadd.f32 %v7237, -0.28449672
      %v7254 = vadd.f32 %v7238, -0.28449672
      %v7255 = vadd.f32 %v7239, -0.28449672
      %v7256 = vadd.f32 %v7240, -0.28449672
      %v7257 = vadd.f32 %v7241, -0.28449672
      %v7258 = vadd.f32 %v7242, -0.28449672
      %v7259 = vadd.f32 %v7243, -0.28449672
      %v7260 = vadd.f32 %v7244, -0.28449672
      %v7261 = vadd.f32 %v7245, -0.28449672
      %v7262 = vadd.f32 %v7246, -0.28449672
      %v7263 = vadd.f32 %v7247, -0.28449672
      %v7264 = vadd.f32 %v7248, -0.28449672
      %v7265 = vmul.f32 %v7249, %v7153
      %v7266 = vmul.f32 %v7250, %v7154
      %v7267 = vmul.f32 %v7251, %v7155
      %v7268 = vmul.f32 %v7252, %v7156
      %v7269 = vmul.f32 %v7253, %v7157
      %v7270 = vmul.f32 %v7254, %v7158
      %v7271 = vmul.f32 %v7255, %v7159
      %v7272 = vmul.f32 %v7256, %v7160
      %v7273 = vmul.f32 %v7257, %v7161
      %v7274 = vmul.f32 %v7258, %v7162
      %v7275 = vmul.f32 %v7259, %v7163
      %v7276 = vmul.f32 %v7260, %v7164
      %v7277 = vmul.f32 %v7261, %v7165
      %v7278 = vmul.f32 %v7262, %v7166
      %v7279 = vmul.f32 %v7263, %v7167
      %v7280 = vmul.f32 %v7264, %v7168
      %v7281 = vadd.f32 %v7265, 0.2548296
      %v7282 = vadd.f32 %v7266, 0.2548296
      %v7283 = vadd.f32 %v7267, 0.2548296
      %v7284 = vadd.f32 %v7268, 0.2548296
      %v7285 = vadd.f32 %v7269, 0.2548296
      %v7286 = vadd.f32 %v7270, 0.2548296
      %v7287 = vadd.f32 %v7271, 0.2548296
      %v7288 = vadd.f32 %v7272, 0.2548296
      %v7289 = vadd.f32 %v7273, 0.2548296
      %v7290 = vadd.f32 %v7274, 0.2548296
      %v7291 = vadd.f32 %v7275, 0.2548296
      %v7292 = vadd.f32 %v7276, 0.2548296
      %v7293 = vadd.f32 %v7277, 0.2548296
      %v7294 = vadd.f32 %v7278, 0.2548296
      %v7295 = vadd.f32 %v7279, 0.2548296
      %v7296 = vadd.f32 %v7280, 0.2548296
      %v7297 = vmul.f32 %v7281, %v7153
      %v7298 = vmul.f32 %v7282, %v7154
      %v7299 = vmul.f32 %v7283, %v7155
      %v7300 = vmul.f32 %v7284, %v7156
      %v7301 = vmul.f32 %v7285, %v7157
      %v7302 = vmul.f32 %v7286, %v7158
      %v7303 = vmul.f32 %v7287, %v7159
      %v7304 = vmul.f32 %v7288, %v7160
      %v7305 = vmul.f32 %v7289, %v7161
      %v7306 = vmul.f32 %v7290, %v7162
      %v7307 = vmul.f32 %v7291, %v7163
      %v7308 = vmul.f32 %v7292, %v7164
      %v7309 = vmul.f32 %v7293, %v7165
      %v7310 = vmul.f32 %v7294, %v7166
      %v7311 = vmul.f32 %v7295, %v7167
      %v7312 = vmul.f32 %v7296, %v7168
      %v7313 = vsub.f32 0.0, %v7105
      %v7314 = vsub.f32 0.0, %v7106
      %v7315 = vsub.f32 0.0, %v7107
      %v7316 = vsub.f32 0.0, %v7108
      %v7317 = vsub.f32 0.0, %v7109
      %v7318 = vsub.f32 0.0, %v7110
      %v7319 = vsub.f32 0.0, %v7111
      %v7320 = vsub.f32 0.0, %v7112
      %v7321 = vsub.f32 0.0, %v7113
      %v7322 = vsub.f32 0.0, %v7114
      %v7323 = vsub.f32 0.0, %v7115
      %v7324 = vsub.f32 0.0, %v7116
      %v7325 = vsub.f32 0.0, %v7117
      %v7326 = vsub.f32 0.0, %v7118
      %v7327 = vsub.f32 0.0, %v7119
      %v7328 = vsub.f32 0.0, %v7120
      %v7329 = vmul.f32 %v7313, %v7105
      %v7330 = vmul.f32 %v7314, %v7106
      %v7331 = vmul.f32 %v7315, %v7107
      %v7332 = vmul.f32 %v7316, %v7108
      %v7333 = vmul.f32 %v7317, %v7109
      %v7334 = vmul.f32 %v7318, %v7110
      %v7335 = vmul.f32 %v7319, %v7111
      %v7336 = vmul.f32 %v7320, %v7112
      %v7337 = vmul.f32 %v7321, %v7113
      %v7338 = vmul.f32 %v7322, %v7114
      %v7339 = vmul.f32 %v7323, %v7115
      %v7340 = vmul.f32 %v7324, %v7116
      %v7341 = vmul.f32 %v7325, %v7117
      %v7342 = vmul.f32 %v7326, %v7118
      %v7343 = vmul.f32 %v7327, %v7119
      %v7344 = vmul.f32 %v7328, %v7120
      %v7345 = vmul.f32 %v7329, 1.442695
      %v7346 = vpow.pop %v7345
      %v7347 = vmul.f32 %v7330, 1.442695
      %v7348 = vpow.pop %v7347
      %v7349 = vmul.f32 %v7331, 1.442695
      %v7350 = vpow.pop %v7349
      %v7351 = vmul.f32 %v7332, 1.442695
      %v7352 = vpow.pop %v7351
      %v7353 = vmul.f32 %v7333, 1.442695
      %v7354 = vpow.pop %v7353
      %v7355 = vmul.f32 %v7334, 1.442695
      %v7356 = vpow.pop %v7355
      %v7357 = vmul.f32 %v7335, 1.442695
      %v7358 = vpow.pop %v7357
      %v7359 = vmul.f32 %v7336, 1.442695
      %v7360 = vpow.pop %v7359
      %v7361 = vmul.f32 %v7337, 1.442695
      %v7362 = vpow.pop %v7361
      %v7363 = vmul.f32 %v7338, 1.442695
      %v7364 = vpow.pop %v7363
      %v7365 = vmul.f32 %v7339, 1.442695
      %v7366 = vpow.pop %v7365
      %v7367 = vmul.f32 %v7340, 1.442695
      %v7368 = vpow.pop %v7367
      %v7369 = vmul.f32 %v7341, 1.442695
      %v7370 = vpow.pop %v7369
      %v7371 = vmul.f32 %v7342, 1.442695
      %v7372 = vpow.pop %v7371
      %v7373 = vmul.f32 %v7343, 1.442695
      %v7374 = vpow.pop %v7373
      %v7375 = vmul.f32 %v7344, 1.442695
      %v7376 = vpow.pop %v7375
      %v7377 = vmul.f32 %v7297, %v7346
      %v7378 = vmul.f32 %v7298, %v7348
      %v7379 = vmul.f32 %v7299, %v7350
      %v7380 = vmul.f32 %v7300, %v7352
      %v7381 = vmul.f32 %v7301, %v7354
      %v7382 = vmul.f32 %v7302, %v7356
      %v7383 = vmul.f32 %v7303, %v7358
      %v7384 = vmul.f32 %v7304, %v7360
      %v7385 = vmul.f32 %v7305, %v7362
      %v7386 = vmul.f32 %v7306, %v7364
      %v7387 = vmul.f32 %v7307, %v7366
      %v7388 = vmul.f32 %v7308, %v7368
      %v7389 = vmul.f32 %v7309, %v7370
      %v7390 = vmul.f32 %v7310, %v7372
      %v7391 = vmul.f32 %v7311, %v7374
      %v7392 = vmul.f32 %v7312, %v7376
      %v7393 = vsub.f32 1.0, %v7377
      %v7394 = vsub.f32 1.0, %v7378
      %v7395 = vsub.f32 1.0, %v7379
      %v7396 = vsub.f32 1.0, %v7380
      %v7397 = vsub.f32 1.0, %v7381
      %v7398 = vsub.f32 1.0, %v7382
      %v7399 = vsub.f32 1.0, %v7383
      %v7400 = vsub.f32 1.0, %v7384
      %v7401 = vsub.f32 1.0, %v7385
      %v7402 = vsub.f32 1.0, %v7386
      %v7403 = vsub.f32 1.0, %v7387
      %v7404 = vsub.f32 1.0, %v7388
      %v7405 = vsub.f32 1.0, %v7389
      %v7406 = vsub.f32 1.0, %v7390
      %v7407 = vsub.f32 1.0, %v7391
      %v7408 = vsub.f32 1.0, %v7392
      %v7409 = vmul.f32 %v7089, %v7393
      %v7410 = vmul.f32 %v7090, %v7394
      %v7411 = vmul.f32 %v7091, %v7395
      %v7412 = vmul.f32 %v7092, %v7396
      %v7413 = vmul.f32 %v7093, %v7397
      %v7414 = vmul.f32 %v7094, %v7398
      %v7415 = vmul.f32 %v7095, %v7399
      %v7416 = vmul.f32 %v7096, %v7400
      %v7417 = vmul.f32 %v7097, %v7401
      %v7418 = vmul.f32 %v7098, %v7402
      %v7419 = vmul.f32 %v7099, %v7403
      %v7420 = vmul.f32 %v7100, %v7404
      %v7421 = vmul.f32 %v7101, %v7405
      %v7422 = vmul.f32 %v7102, %v7406
      %v7423 = vmul.f32 %v7103, %v7407
      %v7424 = vmul.f32 %v7104, %v7408
      %v7425 = vadd.f32 %v7409, 1.0
      %v7426 = vadd.f32 %v7410, 1.0
      %v7427 = vadd.f32 %v7411, 1.0
      %v7428 = vadd.f32 %v7412, 1.0
      %v7429 = vadd.f32 %v7413, 1.0
      %v7430 = vadd.f32 %v7414, 1.0
      %v7431 = vadd.f32 %v7415, 1.0
      %v7432 = vadd.f32 %v7416, 1.0
      %v7433 = vadd.f32 %v7417, 1.0
      %v7434 = vadd.f32 %v7418, 1.0
      %v7435 = vadd.f32 %v7419, 1.0
      %v7436 = vadd.f32 %v7420, 1.0
      %v7437 = vadd.f32 %v7421, 1.0
      %v7438 = vadd.f32 %v7422, 1.0
      %v7439 = vadd.f32 %v7423, 1.0
      %v7440 = vadd.f32 %v7424, 1.0
      %v7441 = vmul.f32 %v7041, %v7425
      %v7442 = vmul.f32 %v7042, %v7426
      %v7443 = vmul.f32 %v7043, %v7427
      %v7444 = vmul.f32 %v7044, %v7428
      %v7445 = vmul.f32 %v7045, %v7429
      %v7446 = vmul.f32 %v7046, %v7430
      %v7447 = vmul.f32 %v7047, %v7431
      %v7448 = vmul.f32 %v7048, %v7432
      %v7449 = vmul.f32 %v7049, %v7433
      %v7450 = vmul.f32 %v7050, %v7434
      %v7451 = vmul.f32 %v7051, %v7435
      %v7452 = vmul.f32 %v7052, %v7436
      %v7453 = vmul.f32 %v7053, %v7437
      %v7454 = vmul.f32 %v7054, %v7438
      %v7455 = vmul.f32 %v7055, %v7439
      %v7456 = vmul.f32 %v7056, %v7440
      %v7457 = vpack.c.bf16 %v7442, %v7441
      %v7458 = vpack.c.bf16 %v7444, %v7443
      %v7459 = vpack.c.bf16 %v7446, %v7445
      %v7460 = vpack.c.bf16 %v7448, %v7447
      %v7461 = vpack.c.bf16 %v7450, %v7449
      %v7462 = vpack.c.bf16 %v7452, %v7451
      %v7463 = vpack.c.bf16 %v7454, %v7453
      %v7464 = vpack.c.bf16 %v7456, %v7455
      %v7465 = vld [vmem:[%s7] sm:$0xf]
      %v7466 = vld [vmem:[%s7 + $0x4] sm:$0xf]
      %v7467 = vld [vmem:[%s7 + $0x8] sm:$0xf]
      %v7468 = vld [vmem:[%s7 + $0xc] sm:$0xf]
      %v7469 = vld [vmem:[%s7 + $0x10] sm:$0xf]
      %v7470 = vld [vmem:[%s7 + $0x14] sm:$0xf]
      %v7471 = vld [vmem:[%s7 + $0x18] sm:$0xf]
      %v7472 = vld [vmem:[%s7 + $0x1c] sm:$0xf]
      %v7473 = vld [vmem:[%s9 + $0x6] sm:$0x1]
      %v7474 = vlaneseq
      %v7475 = vshrl.u32 %v7474, 7
      %v7476 = vsub.s32 0, %v7475
      %v7477 = vrot.slane %v7473, %v7476
      %v7486 = vunpack.c.l.b16 %v7465
      %v7487 = vunpack.c.l.b16 %v7466
      %v7488 = vunpack.c.l.b16 %v7467
      %v7489 = vunpack.c.l.b16 %v7468
      %v7490 = vunpack.c.l.b16 %v7469
      %v7491 = vunpack.c.l.b16 %v7470
      %v7492 = vunpack.c.l.b16 %v7471
      %v7493 = vunpack.c.l.b16 %v7472
      %v7494 = vpack.c.b16 %v7487, %v7486
      %v7495 = vpack.c.b16 %v7489, %v7488
      %v7496 = vpack.c.b16 %v7491, %v7490
      %v7497 = vpack.c.b16 %v7493, %v7492
      %vm7502 = vcmask 523264
      %v7504 = vsel %vm7502, %v7457, 0
      %v7507 = vsel %vm7502, %v7458, 0
      %v7510 = vsel %vm7502, %v7459, 0
      %v7513 = vsel %vm7502, %v7460, 0
      %v7516 = vsel %vm7502, %v7461, 0
      %v7519 = vsel %vm7502, %v7462, 0
      %v7522 = vsel %vm7502, %v7463, 0
      %v7525 = vsel %vm7502, %v7464, 0
      %7527 = vmatprep.subr.bf16.mxu0 0
      %7528 = vmatpush1.bf16.msra.mxu0 %v7494
      %7529 = vmatprep.subr.bf16.mxu0 0
      %7530 = vmatpush1.bf16.msra.mxu0 %v7495
      %7531 = vmatprep.subr.bf16.mxu0 0
      %7532 = vmatpush1.bf16.msra.mxu0 %v7496
      %7533 = vmatprep.subr.bf16.mxu0 0
      %7534 = vmatpush1.bf16.msra.mxu0 %v7497
      %7535 = vmatprep.subr.bf16.mxu0 0
      %7536 = vmatpush1.bf16.msra.mxu0 0
      %7537 = vmatprep.subr.bf16.mxu0 0
      %7538 = vmatpush1.bf16.msra.mxu0 0
      %7539 = vmatprep.subr.bf16.mxu0 0
      %7540 = vmatpush1.bf16.msra.mxu0 0
      %7541 = vmatprep.subr.bf16.mxu0 0
      %7542 = vmatpush1.bf16.msra.mxu0 0
      %7543 = vmatprep.subr.bf16.mxu0 0
      %7544 = vmatpush1.bf16.msra.mxu0 0
      %7545 = vmatprep.subr.bf16.mxu0 0
      %7546 = vmatpush1.bf16.msra.mxu0 0
      %7547 = vmatprep.subr.bf16.mxu0 0
      %7548 = vmatpush1.bf16.msra.mxu0 0
      %7549 = vmatprep.subr.bf16.mxu0 0
      %7550 = vmatpush1.bf16.msra.mxu0 0
      %7551 = vmatprep.subr.bf16.mxu0 0
      %7552 = vmatpush1.bf16.msra.mxu0 0
      %7553 = vmatprep.subr.bf16.mxu0 0
      %7554 = vmatpush1.bf16.msra.mxu0 0
      %7555 = vmatprep.subr.bf16.mxu0 0
      %7556 = vmatpush1.bf16.msra.mxu0 0
      %7557 = vmatprep.subr.bf16.mxu0 0
      %7558 = vmatpush1.bf16.msra.mxu0 0
      %7559 = vmatprep.mubr.bf16.mxu0 0
      %7560 = vmatmul.mubr.bf16.gmra.mrb[0].mxu0 %v7504
      %v7561 = vpop.f32.mrb[0].mxu0
      %v7562 = vadd.f32 %v7477, %v7561
      %v7563 = vpop.f32.mrb[0].mxu0
      %v7564 = vpop.f32.mrb[0].mxu0
      %v7565 = vadd.f32 %v7477, %v7564
      %v7566 = vpop.f32.mrb[0].mxu0
      %7567 = vmatprep.mubr.bf16.mxu0 0
      %7568 = vmatmul.mubr.bf16.gmra.mrb[0].mxu0 %v7507
      %v7569 = vpop.f32.mrb[0].mxu0
      %v7570 = vadd.f32 %v7477, %v7569
      %v7571 = vpop.f32.mrb[0].mxu0
      %v7572 = vpop.f32.mrb[0].mxu0
      %v7573 = vadd.f32 %v7477, %v7572
      %v7574 = vpop.f32.mrb[0].mxu0
      %7575 = vmatprep.mubr.bf16.mxu0 0
      %7576 = vmatmul.mubr.bf16.gmra.mrb[0].mxu0 %v7510
      %v7577 = vpop.f32.mrb[0].mxu0
      %v7578 = vadd.f32 %v7477, %v7577
      %v7579 = vpop.f32.mrb[0].mxu0
      %v7580 = vpop.f32.mrb[0].mxu0
      %v7581 = vadd.f32 %v7477, %v7580
      %v7582 = vpop.f32.mrb[0].mxu0
      %7583 = vmatprep.mubr.bf16.mxu0 0
      %7584 = vmatmul.mubr.bf16.gmra.mrb[0].mxu0 %v7513
      %v7585 = vpop.f32.mrb[0].mxu0
      %v7586 = vadd.f32 %v7477, %v7585
      %v7587 = vpop.f32.mrb[0].mxu0
      %v7588 = vpop.f32.mrb[0].mxu0
      %v7589 = vadd.f32 %v7477, %v7588
      %v7590 = vpop.f32.mrb[0].mxu0
      %7591 = vmatprep.mubr.bf16.mxu0 0
      %7592 = vmatmul.mubr.bf16.gmra.mrb[0].mxu0 %v7516
      %v7593 = vpop.f32.mrb[0].mxu0
      %v7594 = vadd.f32 %v7477, %v7593
      %v7595 = vpop.f32.mrb[0].mxu0
      %v7596 = vpop.f32.mrb[0].mxu0
      %v7597 = vadd.f32 %v7477, %v7596
      %v7598 = vpop.f32.mrb[0].mxu0
      %7599 = vmatprep.mubr.bf16.mxu0 0
      %7600 = vmatmul.mubr.bf16.gmra.mrb[0].mxu0 %v7519
      %v7601 = vpop.f32.mrb[0].mxu0
      %v7602 = vadd.f32 %v7477, %v7601
      %v7603 = vpop.f32.mrb[0].mxu0
      %v7604 = vpop.f32.mrb[0].mxu0
      %v7605 = vadd.f32 %v7477, %v7604
      %v7606 = vpop.f32.mrb[0].mxu0
      %7607 = vmatprep.mubr.bf16.mxu0 0
      %7608 = vmatmul.mubr.bf16.gmra.mrb[0].mxu0 %v7522
      %v7609 = vpop.f32.mrb[0].mxu0
      %v7610 = vadd.f32 %v7477, %v7609
      %v7611 = vpop.f32.mrb[0].mxu0
      %v7612 = vpop.f32.mrb[0].mxu0
      %v7613 = vadd.f32 %v7477, %v7612
      %v7614 = vpop.f32.mrb[0].mxu0
      %7615 = vmatprep.mubr.bf16.mxu0 0
      %7616 = vmatmul.mubr.bf16.gmra.mrb[0].mxu0 %v7525
      %v7617 = vpop.f32.mrb[0].mxu0
      %v7618 = vadd.f32 %v7477, %v7617
      %v7619 = vpop.f32.mrb[0].mxu0
      %v7620 = vpop.f32.mrb[0].mxu0
      %v7621 = vadd.f32 %v7477, %v7620
      %v7622 = vpop.f32.mrb[0].mxu0
      %7623 = vdwg.mxu0
      %v7624 = vadd.f32 %v6625, %v7562
      %v7625 = vadd.f32 %v6626, %v7565
      %v7626 = vadd.f32 %v6627, %v7570
      %v7627 = vadd.f32 %v6628, %v7573
      %v7628 = vadd.f32 %v6629, %v7578
      %v7629 = vadd.f32 %v6630, %v7581
      %v7630 = vadd.f32 %v6631, %v7586
      %v7631 = vadd.f32 %v6632, %v7589
      %v7632 = vadd.f32 %v6633, %v7594
      %v7633 = vadd.f32 %v6634, %v7597
      %v7634 = vadd.f32 %v6635, %v7602
      %v7635 = vadd.f32 %v6636, %v7605
      %v7636 = vadd.f32 %v6637, %v7610
      %v7637 = vadd.f32 %v6638, %v7613
      %v7638 = vadd.f32 %v6639, %v7618
      %v7639 = vadd.f32 %v6640, %v7621
      %v7640 = vld [vmem:[%s9 + $0x7] sm:$0x1]
      %v7641 = vld [vmem:[%s9 + $0x8] sm:$0x1]
      %v7642 = vsel %vm581, %v7624, 0.0
      %7643 = vadd.xlane.f32.xlu0 %v7642
      %v7644 = vpop.xlane.xlu0 %7643
      %v7645 = vsel %vm581, %v7625, 0.0
      %7646 = vadd.xlane.f32.xlu0 %v7645
      %v7647 = vpop.xlane.xlu0 %7646
      %v7648 = vsel %vm581, %v7626, 0.0
      %7649 = vadd.xlane.f32.xlu0 %v7648
      %v7650 = vpop.xlane.xlu0 %7649
      %v7651 = vsel %vm581, %v7627, 0.0
      %7652 = vadd.xlane.f32.xlu0 %v7651
      %v7653 = vpop.xlane.xlu0 %7652
      %v7654 = vsel %vm581, %v7628, 0.0
      %7655 = vadd.xlane.f32.xlu0 %v7654
      %v7656 = vpop.xlane.xlu0 %7655
      %v7657 = vsel %vm581, %v7629, 0.0
      %7658 = vadd.xlane.f32.xlu0 %v7657
      %v7659 = vpop.xlane.xlu0 %7658
      %v7660 = vsel %vm581, %v7630, 0.0
      %7661 = vadd.xlane.f32.xlu0 %v7660
      %v7662 = vpop.xlane.xlu0 %7661
      %v7663 = vsel %vm581, %v7631, 0.0
      %7664 = vadd.xlane.f32.xlu0 %v7663
      %v7665 = vpop.xlane.xlu0 %7664
      %v7666 = vsel %vm581, %v7632, 0.0
      %7667 = vadd.xlane.f32.xlu0 %v7666
      %v7668 = vpop.xlane.xlu0 %7667
      %v7669 = vsel %vm581, %v7633, 0.0
      %7670 = vadd.xlane.f32.xlu0 %v7669
      %v7671 = vpop.xlane.xlu0 %7670
      %v7672 = vsel %vm581, %v7634, 0.0
      %7673 = vadd.xlane.f32.xlu0 %v7672
      %v7674 = vpop.xlane.xlu0 %7673
      %v7675 = vsel %vm581, %v7635, 0.0
      %7676 = vadd.xlane.f32.xlu0 %v7675
      %v7677 = vpop.xlane.xlu0 %7676
      %v7678 = vsel %vm581, %v7636, 0.0
      %7679 = vadd.xlane.f32.xlu0 %v7678
      %v7680 = vpop.xlane.xlu0 %7679
      %v7681 = vsel %vm581, %v7637, 0.0
      %7682 = vadd.xlane.f32.xlu0 %v7681
      %v7683 = vpop.xlane.xlu0 %7682
      %v7684 = vsel %vm581, %v7638, 0.0
      %7685 = vadd.xlane.f32.xlu0 %v7684
      %v7686 = vpop.xlane.xlu0 %7685
      %v7687 = vsel %vm581, %v7639, 0.0
      %7688 = vadd.xlane.f32.xlu0 %v7687
      %v7689 = vpop.xlane.xlu0 %7688
      %v7690 = vmul.f32 %v7644, %v630
      %v7691 = vmul.f32 %v7647, %v630
      %v7692 = vmul.f32 %v7650, %v630
      %v7693 = vmul.f32 %v7653, %v630
      %v7694 = vmul.f32 %v7656, %v630
      %v7695 = vmul.f32 %v7659, %v630
      %v7696 = vmul.f32 %v7662, %v630
      %v7697 = vmul.f32 %v7665, %v630
      %v7698 = vmul.f32 %v7668, %v630
      %v7699 = vmul.f32 %v7671, %v630
      %v7700 = vmul.f32 %v7674, %v630
      %v7701 = vmul.f32 %v7677, %v630
      %v7702 = vmul.f32 %v7680, %v630
      %v7703 = vmul.f32 %v7683, %v630
      %v7704 = vmul.f32 %v7686, %v630
      %v7705 = vmul.f32 %v7689, %v630
      %v7706 = vsub.f32 %v7624, %v7690
      %v7707 = vsub.f32 %v7625, %v7691
      %v7708 = vsub.f32 %v7626, %v7692
      %v7709 = vsub.f32 %v7627, %v7693
      %v7710 = vsub.f32 %v7628, %v7694
      %v7711 = vsub.f32 %v7629, %v7695
      %v7712 = vsub.f32 %v7630, %v7696
      %v7713 = vsub.f32 %v7631, %v7697
      %v7714 = vsub.f32 %v7632, %v7698
      %v7715 = vsub.f32 %v7633, %v7699
      %v7716 = vsub.f32 %v7634, %v7700
      %v7717 = vsub.f32 %v7635, %v7701
      %v7718 = vsub.f32 %v7636, %v7702
      %v7719 = vsub.f32 %v7637, %v7703
      %v7720 = vsub.f32 %v7638, %v7704
      %v7721 = vsub.f32 %v7639, %v7705
      %v7722 = vmul.f32 %v7706, %v7706
      %v7723 = vmul.f32 %v7707, %v7707
      %v7724 = vmul.f32 %v7708, %v7708
      %v7725 = vmul.f32 %v7709, %v7709
      %v7726 = vmul.f32 %v7710, %v7710
      %v7727 = vmul.f32 %v7711, %v7711
      %v7728 = vmul.f32 %v7712, %v7712
      %v7729 = vmul.f32 %v7713, %v7713
      %v7730 = vmul.f32 %v7714, %v7714
      %v7731 = vmul.f32 %v7715, %v7715
      %v7732 = vmul.f32 %v7716, %v7716
      %v7733 = vmul.f32 %v7717, %v7717
      %v7734 = vmul.f32 %v7718, %v7718
      %v7735 = vmul.f32 %v7719, %v7719
      %v7736 = vmul.f32 %v7720, %v7720
      %v7737 = vmul.f32 %v7721, %v7721
      %v7738 = vsel %vm581, %v7722, 0.0
      %7739 = vadd.xlane.f32.xlu0 %v7738
      %v7740 = vpop.xlane.xlu0 %7739
      %v7741 = vsel %vm581, %v7723, 0.0
      %7742 = vadd.xlane.f32.xlu0 %v7741
      %v7743 = vpop.xlane.xlu0 %7742
      %v7744 = vsel %vm581, %v7724, 0.0
      %7745 = vadd.xlane.f32.xlu0 %v7744
      %v7746 = vpop.xlane.xlu0 %7745
      %v7747 = vsel %vm581, %v7725, 0.0
      %7748 = vadd.xlane.f32.xlu0 %v7747
      %v7749 = vpop.xlane.xlu0 %7748
      %v7750 = vsel %vm581, %v7726, 0.0
      %7751 = vadd.xlane.f32.xlu0 %v7750
      %v7752 = vpop.xlane.xlu0 %7751
      %v7753 = vsel %vm581, %v7727, 0.0
      %7754 = vadd.xlane.f32.xlu0 %v7753
      %v7755 = vpop.xlane.xlu0 %7754
      %v7756 = vsel %vm581, %v7728, 0.0
      %7757 = vadd.xlane.f32.xlu0 %v7756
      %v7758 = vpop.xlane.xlu0 %7757
      %v7759 = vsel %vm581, %v7729, 0.0
      %7760 = vadd.xlane.f32.xlu0 %v7759
      %v7761 = vpop.xlane.xlu0 %7760
      %v7762 = vsel %vm581, %v7730, 0.0
      %7763 = vadd.xlane.f32.xlu0 %v7762
      %v7764 = vpop.xlane.xlu0 %7763
      %v7765 = vsel %vm581, %v7731, 0.0
      %7766 = vadd.xlane.f32.xlu0 %v7765
      %v7767 = vpop.xlane.xlu0 %7766
      %v7768 = vsel %vm581, %v7732, 0.0
      %7769 = vadd.xlane.f32.xlu0 %v7768
      %v7770 = vpop.xlane.xlu0 %7769
      %v7771 = vsel %vm581, %v7733, 0.0
      %7772 = vadd.xlane.f32.xlu0 %v7771
      %v7773 = vpop.xlane.xlu0 %7772
      %v7774 = vsel %vm581, %v7734, 0.0
      %7775 = vadd.xlane.f32.xlu0 %v7774
      %v7776 = vpop.xlane.xlu0 %7775
      %v7777 = vsel %vm581, %v7735, 0.0
      %7778 = vadd.xlane.f32.xlu0 %v7777
      %v7779 = vpop.xlane.xlu0 %7778
      %v7780 = vsel %vm581, %v7736, 0.0
      %7781 = vadd.xlane.f32.xlu0 %v7780
      %v7782 = vpop.xlane.xlu0 %7781
      %v7783 = vsel %vm581, %v7737, 0.0
      %7784 = vadd.xlane.f32.xlu0 %v7783
      %v7785 = vpop.xlane.xlu0 %7784
      %v7786 = vmul.f32 %v7740, %v630
      %v7787 = vmul.f32 %v7743, %v630
      %v7788 = vmul.f32 %v7746, %v630
      %v7789 = vmul.f32 %v7749, %v630
      %v7790 = vmul.f32 %v7752, %v630
      %v7791 = vmul.f32 %v7755, %v630
      %v7792 = vmul.f32 %v7758, %v630
      %v7793 = vmul.f32 %v7761, %v630
      %v7794 = vmul.f32 %v7764, %v630
      %v7795 = vmul.f32 %v7767, %v630
      %v7796 = vmul.f32 %v7770, %v630
      %v7797 = vmul.f32 %v7773, %v630
      %v7798 = vmul.f32 %v7776, %v630
      %v7799 = vmul.f32 %v7779, %v630
      %v7800 = vmul.f32 %v7782, %v630
      %v7801 = vmul.f32 %v7785, %v630
      %v7802 = vadd.f32 %v7786, 1e-06
      %v7803 = vadd.f32 %v7787, 1e-06
      %v7804 = vadd.f32 %v7788, 1e-06
      %v7805 = vadd.f32 %v7789, 1e-06
      %v7806 = vadd.f32 %v7790, 1e-06
      %v7807 = vadd.f32 %v7791, 1e-06
      %v7808 = vadd.f32 %v7792, 1e-06
      %v7809 = vadd.f32 %v7793, 1e-06
      %v7810 = vadd.f32 %v7794, 1e-06
      %v7811 = vadd.f32 %v7795, 1e-06
      %v7812 = vadd.f32 %v7796, 1e-06
      %v7813 = vadd.f32 %v7797, 1e-06
      %v7814 = vadd.f32 %v7798, 1e-06
      %v7815 = vadd.f32 %v7799, 1e-06
      %v7816 = vadd.f32 %v7800, 1e-06
      %v7817 = vadd.f32 %v7801, 1e-06
      %v7818 = vrsqrt.pop %v7802
      %v7819 = vrsqrt.pop %v7803
      %v7820 = vrsqrt.pop %v7804
      %v7821 = vrsqrt.pop %v7805
      %v7822 = vrsqrt.pop %v7806
      %v7823 = vrsqrt.pop %v7807
      %v7824 = vrsqrt.pop %v7808
      %v7825 = vrsqrt.pop %v7809
      %v7826 = vrsqrt.pop %v7810
      %v7827 = vrsqrt.pop %v7811
      %v7828 = vrsqrt.pop %v7812
      %v7829 = vrsqrt.pop %v7813
      %v7830 = vrsqrt.pop %v7814
      %v7831 = vrsqrt.pop %v7815
      %v7832 = vrsqrt.pop %v7816
      %v7833 = vrsqrt.pop %v7817
      %v7834 = vmul.f32 %v7706, %v7818
      %v7835 = vmul.f32 %v7707, %v7819
      %v7836 = vmul.f32 %v7708, %v7820
      %v7837 = vmul.f32 %v7709, %v7821
      %v7838 = vmul.f32 %v7710, %v7822
      %v7839 = vmul.f32 %v7711, %v7823
      %v7840 = vmul.f32 %v7712, %v7824
      %v7841 = vmul.f32 %v7713, %v7825
      %v7842 = vmul.f32 %v7714, %v7826
      %v7843 = vmul.f32 %v7715, %v7827
      %v7844 = vmul.f32 %v7716, %v7828
      %v7845 = vmul.f32 %v7717, %v7829
      %v7846 = vmul.f32 %v7718, %v7830
      %v7847 = vmul.f32 %v7719, %v7831
      %v7848 = vmul.f32 %v7720, %v7832
      %v7849 = vmul.f32 %v7721, %v7833
      %v7850 = vlaneseq
      %v7851 = vshrl.u32 %v7850, 7
      %v7852 = vsub.s32 0, %v7851
      %v7853 = vrot.slane %v7640, %v7852
      %v7854 = vmul.f32 %v7834, %v7853
      %v7855 = vmul.f32 %v7835, %v7853
      %v7856 = vmul.f32 %v7836, %v7853
      %v7857 = vmul.f32 %v7837, %v7853
      %v7858 = vmul.f32 %v7838, %v7853
      %v7859 = vmul.f32 %v7839, %v7853
      %v7860 = vmul.f32 %v7840, %v7853
      %v7861 = vmul.f32 %v7841, %v7853
      %v7862 = vmul.f32 %v7842, %v7853
      %v7863 = vmul.f32 %v7843, %v7853
      %v7864 = vmul.f32 %v7844, %v7853
      %v7865 = vmul.f32 %v7845, %v7853
      %v7866 = vmul.f32 %v7846, %v7853
      %v7867 = vmul.f32 %v7847, %v7853
      %v7868 = vmul.f32 %v7848, %v7853
      %v7869 = vmul.f32 %v7849, %v7853
      %v7870 = vlaneseq
      %v7871 = vshrl.u32 %v7870, 7
      %v7872 = vsub.s32 0, %v7871
      %v7873 = vrot.slane %v7641, %v7872
      %v7874 = vadd.f32 %v7854, %v7873
      %v7875 = vadd.f32 %v7855, %v7873
      %v7876 = vadd.f32 %v7856, %v7873
      %v7877 = vadd.f32 %v7857, %v7873
      %v7878 = vadd.f32 %v7858, %v7873
      %v7879 = vadd.f32 %v7859, %v7873
      %v7880 = vadd.f32 %v7860, %v7873
      %v7881 = vadd.f32 %v7861, %v7873
      %v7882 = vadd.f32 %v7862, %v7873
      %v7883 = vadd.f32 %v7863, %v7873
      %v7884 = vadd.f32 %v7864, %v7873
      %v7885 = vadd.f32 %v7865, %v7873
      %v7886 = vadd.f32 %v7866, %v7873
      %v7887 = vadd.f32 %v7867, %v7873
      %v7888 = vadd.f32 %v7868, %v7873
      %v7889 = vadd.f32 %v7869, %v7873
      %v7890 = vsel %vm581, %v7874, 0.0
      %v7891 = vsel %vm581, %v7875, 0.0
      %v7892 = vadd.f32 %v7890, %v7891
      %v7893 = vrot.slane %v7892, 4
      %v7894 = vadd.f32 %v7892, %v7893
      %v7895 = vrot.slane %v7894, 2
      %v7896 = vadd.f32 %v7894, %v7895
      %v7897 = vrot.slane %v7896, 1
      %v7898 = vadd.f32 %v7896, %v7897
      %v7899 = vsel %vm581, %v7876, 0.0
      %v7900 = vsel %vm581, %v7877, 0.0
      %v7901 = vadd.f32 %v7899, %v7900
      %v7902 = vrot.slane %v7901, 4
      %v7903 = vadd.f32 %v7901, %v7902
      %v7904 = vrot.slane %v7903, 2
      %v7905 = vadd.f32 %v7903, %v7904
      %v7906 = vrot.slane %v7905, 1
      %v7907 = vadd.f32 %v7905, %v7906
      %v7908 = vsel %vm581, %v7878, 0.0
      %v7909 = vsel %vm581, %v7879, 0.0
      %v7910 = vadd.f32 %v7908, %v7909
      %v7911 = vrot.slane %v7910, 4
      %v7912 = vadd.f32 %v7910, %v7911
      %v7913 = vrot.slane %v7912, 2
      %v7914 = vadd.f32 %v7912, %v7913
      %v7915 = vrot.slane %v7914, 1
      %v7916 = vadd.f32 %v7914, %v7915
      %v7917 = vsel %vm581, %v7880, 0.0
      %v7918 = vsel %vm581, %v7881, 0.0
      %v7919 = vadd.f32 %v7917, %v7918
      %v7920 = vrot.slane %v7919, 4
      %v7921 = vadd.f32 %v7919, %v7920
      %v7922 = vrot.slane %v7921, 2
      %v7923 = vadd.f32 %v7921, %v7922
      %v7924 = vrot.slane %v7923, 1
      %v7925 = vadd.f32 %v7923, %v7924
      %v7926 = vsel %vm581, %v7882, 0.0
      %v7927 = vsel %vm581, %v7883, 0.0
      %v7928 = vadd.f32 %v7926, %v7927
      %v7929 = vrot.slane %v7928, 4
      %v7930 = vadd.f32 %v7928, %v7929
      %v7931 = vrot.slane %v7930, 2
      %v7932 = vadd.f32 %v7930, %v7931
      %v7933 = vrot.slane %v7932, 1
      %v7934 = vadd.f32 %v7932, %v7933
      %v7935 = vsel %vm581, %v7884, 0.0
      %v7936 = vsel %vm581, %v7885, 0.0
      %v7937 = vadd.f32 %v7935, %v7936
      %v7938 = vrot.slane %v7937, 4
      %v7939 = vadd.f32 %v7937, %v7938
      %v7940 = vrot.slane %v7939, 2
      %v7941 = vadd.f32 %v7939, %v7940
      %v7942 = vrot.slane %v7941, 1
      %v7943 = vadd.f32 %v7941, %v7942
      %v7944 = vsel %vm581, %v7886, 0.0
      %v7945 = vsel %vm581, %v7887, 0.0
      %v7946 = vadd.f32 %v7944, %v7945
      %v7947 = vrot.slane %v7946, 4
      %v7948 = vadd.f32 %v7946, %v7947
      %v7949 = vrot.slane %v7948, 2
      %v7950 = vadd.f32 %v7948, %v7949
      %v7951 = vrot.slane %v7950, 1
      %v7952 = vadd.f32 %v7950, %v7951
      %v7953 = vsel %vm581, %v7888, 0.0
      %v7954 = vsel %vm581, %v7889, 0.0
      %v7955 = vadd.f32 %v7953, %v7954
      %v7956 = vrot.slane %v7955, 4
      %v7957 = vadd.f32 %v7955, %v7956
      %v7958 = vrot.slane %v7957, 2
      %v7959 = vadd.f32 %v7957, %v7958
      %v7960 = vrot.slane %v7959, 1
      %v7961 = vadd.f32 %v7959, %v7960
      %v7962 = vrcp.pop 16.0
      %v7963 = vmul.f32 %v7898, %v7962
      %v7964 = vmul.f32 %v7907, %v7962
      %v7965 = vmul.f32 %v7916, %v7962
      %v7966 = vmul.f32 %v7925, %v7962
      %v7967 = vmul.f32 %v7934, %v7962
      %v7968 = vmul.f32 %v7943, %v7962
      %v7969 = vmul.f32 %v7952, %v7962
      %v7970 = vmul.f32 %v7961, %v7962
      %v7971 = vpack.c.bf16 %v7963, %v7963
      %v7972 = vpack.c.bf16 %v7964, %v7964
      %v7973 = vpack.c.bf16 %v7965, %v7965
      %v7974 = vpack.c.bf16 %v7966, %v7966
      %v7975 = vpack.c.bf16 %v7967, %v7967
      %v7976 = vpack.c.bf16 %v7968, %v7968
      %v7977 = vpack.c.bf16 %v7969, %v7969
      %v7978 = vpack.c.bf16 %v7970, %v7970
      %v7979 = vld [vmem:[%s8] sm:$0xf]
      %v7980 = vld [vmem:[%s8 + $0x4] sm:$0xf]
      %v7981 = vld [vmem:[%s8 + $0x8] sm:$0xf]
      %v7982 = vld [vmem:[%s8 + $0xc] sm:$0xf]
      %v7983 = vld [vmem:[%s9 + $0x9] sm:$0x1]
      %v7984 = vlaneseq
      %v7985 = vshrl.u32 %v7984, 7
      %v7986 = vsub.s32 0, %v7985
      %v7987 = vrot.slane %v7983, %v7986
      %v7996 = vunpack.c.l.b16 %v7971
      %v7997 = vunpack.c.l.b16 %v7972
      %v7998 = vunpack.c.l.b16 %v7973
      %v7999 = vunpack.c.l.b16 %v7974
      %v8000 = vunpack.c.l.b16 %v7975
      %v8001 = vunpack.c.l.b16 %v7976
      %v8002 = vunpack.c.l.b16 %v7977
      %v8003 = vunpack.c.l.b16 %v7978
      %vm8004 = vcmask 1041409
      %v8005 = vsel %vm8004, %v7997, %v7996
      %vm8006 = vcmask 1042434
      %v8007 = vsel %vm8006, %v7998, %v8005
      %vm8008 = vcmask 1043459
      %v8009 = vsel %vm8008, %v7999, %v8007
      %vm8010 = vcmask 1044484
      %v8011 = vsel %vm8010, %v8000, %v8009
      %vm8012 = vcmask 1045509
      %v8013 = vsel %vm8012, %v8001, %v8011
      %vm8014 = vcmask 1046534
      %v8015 = vsel %vm8014, %v8002, %v8013
      %vm8016 = vcmask 1047559
      %v8017 = vsel %vm8016, %v8003, %v8015
      %v8018 = vpack.c.b16 %v8017, %v8017
      %v8023 = vunpack.c.l.b16 %v7979
      %v8024 = vunpack.c.l.b16 %v7980
      %v8025 = vunpack.c.l.b16 %v7981
      %v8026 = vunpack.c.l.b16 %v7982
      %v8027 = vpack.c.b16 %v8024, %v8023
      %v8028 = vpack.c.b16 %v8026, %v8025
      %v8032 = vsel %vm581, %v8018, 0
      %8034 = vmatprep.subr.bf16.mxu0 0
      %8035 = vmatpush1.bf16.msra.mxu0 %v8027
      %8036 = vmatprep.subr.bf16.mxu0 0
      %8037 = vmatpush1.bf16.msra.mxu0 %v8028
      %8038 = vmatprep.subr.bf16.mxu0 0
      %8039 = vmatpush1.bf16.msra.mxu0 0
      %8040 = vmatprep.subr.bf16.mxu0 0
      %8041 = vmatpush1.bf16.msra.mxu0 0
      %8042 = vmatprep.subr.bf16.mxu0 0
      %8043 = vmatpush1.bf16.msra.mxu0 0
      %8044 = vmatprep.subr.bf16.mxu0 0
      %8045 = vmatpush1.bf16.msra.mxu0 0
      %8046 = vmatprep.subr.bf16.mxu0 0
      %8047 = vmatpush1.bf16.msra.mxu0 0
      %8048 = vmatprep.subr.bf16.mxu0 0
      %8049 = vmatpush1.bf16.msra.mxu0 0
      %8050 = vmatprep.subr.bf16.mxu0 0
      %8051 = vmatpush1.bf16.msra.mxu0 0
      %8052 = vmatprep.subr.bf16.mxu0 0
      %8053 = vmatpush1.bf16.msra.mxu0 0
      %8054 = vmatprep.subr.bf16.mxu0 0
      %8055 = vmatpush1.bf16.msra.mxu0 0
      %8056 = vmatprep.subr.bf16.mxu0 0
      %8057 = vmatpush1.bf16.msra.mxu0 0
      %8058 = vmatprep.subr.bf16.mxu0 0
      %8059 = vmatpush1.bf16.msra.mxu0 0
      %8060 = vmatprep.subr.bf16.mxu0 0
      %8061 = vmatpush1.bf16.msra.mxu0 0
      %8062 = vmatprep.subr.bf16.mxu0 0
      %8063 = vmatpush1.bf16.msra.mxu0 0
      %8064 = vmatprep.subr.bf16.mxu0 0
      %8065 = vmatpush1.bf16.msra.mxu0 0
      %8066 = vmatprep.mubr.bf16.mxu0 0
      %8067 = vmatmul.mubr.bf16.gmra.mrb[0].mxu0 %v8032
      %v8068 = vpop.f32.mrb[0].mxu0
      %v8069 = vadd.f32 %v7987, %v8068
      %v8070 = vpop.f32.mrb[0].mxu0
      %v8071 = vpop.f32.mrb[0].mxu0
      %v8072 = vpop.f32.mrb[0].mxu0
      %8073 = vdwg.mxu0
      %8074 = vst [vmem:[%s359] sm:$0xff] %v8069
      %p8075 = scmp.lt.s32.totalorder %s21, 1
      %s8076 = scalar_select %p8075, %s21, 1
      %s8077 = smul.addr %s8076, 8
      %s8078 = scalar_lea.vmem %s10, %s8077
      // Predicated region
      $region61: #{transformer_model_forward.1} parent=59 // pred_check
        %p8079 = pneg %p254
      $region62: #{transformer_model_forward.1} parent=59 // pred_check_branch
        %8081 = sbr.rel (%p8079) target = $region64
      $region63: #{transformer_model_forward.1} parent=59 // pred_region
        _
      $region64: #{transformer_model_forward.1} parent=59 // pred_fallthru
        _
    $region60: #{transformer_model_forward.1} parent=5 // pred_fallthru
      _
    %p8082 = scmp.le.s32.totalorder 2, %s16
    // Predicated region
    $region65: #{transformer_model_forward.1} parent=5 // pred_check
      %p8083 = pneg %p8082
    $region66: #{transformer_model_forward.1} parent=5 // pred_check_branch
      %8085 = sbr.rel (%p8083) target = $region68
    $region67: #{transformer_model_forward.1} parent=5 // pred_region
      %s8086 = ssub.s32 %s16, 2
      // Predicated region
      $region69: #{transformer_model_forward.1} parent=67 // pred_check
        %p8087 = pneg %p260
      $region70: #{transformer_model_forward.1} parent=67 // pred_check_branch
        %8089 = sbr.rel (%p8087) target = $region72
      $region71: #{transformer_model_forward.1} parent=67 // pred_region
        %p8090 = scmp.lt.s32.totalorder %s22, 1
        %s8091 = scalar_select %p8090, %s22, 1
        %s8092 = smul.addr %s8091, 8
        %s8093 = scalar_lea.vmem %s10, %s8092
      $region72: #{transformer_model_forward.1} parent=67 // pred_fallthru
        _
    $region68: #{transformer_model_forward.1} parent=5 // pred_fallthru
      _
  $region6: #{transformer_model_forward.1} parent=0 // loop_footer
    %s20 = sadd.s32 1, %s16
  $region7: #{transformer_model_forward.1} parent=0 // loop_footer_branch
    %15 = sbr.rel target = $region3
  $region8: #{transformer_model_forward.1} parent=0 // loop_exit
    _

</llo_original>
